<compile_context>
chip_gen: v5e
topology: v5e:2x2
jax: 0.10.0
libtpu: 0.0.40
codegen_flags: <defaults>
</compile_context>

<pallas_src>
import jax
import jax.numpy as jnp
from jax.experimental import pallas as pl
from jax.experimental.pallas import tpu as pltpu


def _round_up(x, m):
    return ((x + m - 1) // m) * m


# ----------------------------- in-kernel building blocks ---------------------------- #
# Activation layout inside the kernel: a zero-padded image (Hpad, Wpad=W+2, C) lives in
# VMEM as a flat 2D (Hpad*Wpad, C) matrix (C on lanes).  Real data occupies padded rows
# 1..H, cols 1..W; everything else is zero.  Hpad = H+3 (one spare zero row) so that the
# shifted conv reads below never run past the buffer.

def _conv3x3_bias_relu(p_ref, w_ref, b_ref, o_ref, h, w):
    """3x3 conv (stride 1, pad 1) + bias + ReLU.

    p_ref: ((h+3)*(w+2), Cin) zero-padded flat input
    w_ref: (9, Cin, Cout) bf16 taps,  b_ref: (1, Cout) f32
    o_ref: (h*(w+2), Cout) f32 flat output (2 junk cols/row; never read back into
           valid results by the pool / head).
    """
    wp = w + 2
    m = h * wp
    for t in range(9):
        dh, dw = divmod(t, 3)
        xs = p_ref[pl.ds(dh * wp + dw, m), :].astype(w_ref.dtype)
        contrib = jnp.dot(xs, w_ref[t], preferred_element_type=jnp.float32)
        if t == 0:
            o_ref[...] = contrib
        else:
            o_ref[...] += contrib
    o_ref[...] = jnp.maximum(o_ref[...] + b_ref[...], 0.0)   # f32 epilogue (v5e-safe)


def _maxpool2x2_into(o_ref, p_next_ref, h, w):
    """2x2 / stride-2 max pool of the flat conv output, written into the interior
    (padded rows 1..h/2, cols 1..w/2) of the next stage's zero-padded flat buffer."""
    wp = w + 2
    ho, wo = h // 2, w // 2
    wp_next = wo + 2
    for i in range(ho):
        r0 = (2 * i) * wp
        r1 = (2 * i + 1) * wp
        a = o_ref[pl.ds(r0, wo, 2), :]       # (2i,   2j)
        b = o_ref[pl.ds(r0 + 1, wo, 2), :]   # (2i,   2j+1)
        c = o_ref[pl.ds(r1, wo, 2), :]       # (2i+1, 2j)
        d = o_ref[pl.ds(r1 + 1, wo, 2), :]   # (2i+1, 2j+1)
        p_next_ref[pl.ds((i + 1) * wp_next + 1, wo), :] = jnp.maximum(
            jnp.maximum(a, b), jnp.maximum(c, d))


def _avgpool_linear(o_ref, wl_ref, bl_ref, out_ref, h, w):
    """AdaptiveAvgPool2d((1,1)) over the h*w valid positions + flatten + Linear (f32)."""
    wp = w + 2
    c = o_ref.shape[-1]
    s = jnp.zeros((1, c), jnp.float32)
    for i in range(h):
        s = s + jnp.sum(o_ref[pl.ds(i * wp, w), :], axis=0, keepdims=True)
    pooled = s * (1.0 / float(h * w))
    out_ref[...] = (jnp.dot(pooled, wl_ref[...], preferred_element_type=jnp.float32)
                    + bl_ref[...])


# ------------------------------------- wrapper -------------------------------------- #

def vgg_forward(x_nchw, params):
    convs, (w_lin, b_lin) = params
    n, cin, h0, w0 = x_nchw.shape
    num_classes = w_lin.shape[-1]
    n_stages = len(convs)
    n_pools = n_stages - 1
    assert h0 % (2 ** n_pools) == 0 and w0 % (2 ** n_pools) == 0, \
        "spatial dims must be divisible by 2**(num pools)"
    assert w_lin.shape[0] == convs[-1][0].shape[-1]

    hw = [(h0 >> s, w0 >> s) for s in range(n_stages)]        # conv-input spatial sizes

    # --- minimal wrapper glue: NCHW->NHWC, 1px halo (+1 spare bottom row), flatten ---
    x = jnp.transpose(x_nchw, (0, 2, 3, 1)).astype(jnp.float32)
    xp = jnp.pad(x, ((0, 0), (1, 2), (1, 1), (0, 0)))
    rows0 = (h0 + 3) * (w0 + 2)
    x_flat = xp.reshape(n, rows0, cin)

    # --- zero-pad channels to lane-dense multiples of 128; conv weights -> bf16 taps ---
    w_args, spec_cio, couts_p = [], [], []
    ci_p = cin
    for wgt, bias in convs:                                   # wgt: (3, 3, ci, co) HWIO
        ci, co = wgt.shape[2], wgt.shape[3]
        co_p = _round_up(co, 128)
        wpad = jnp.pad(wgt, ((0, 0), (0, 0), (0, ci_p - ci), (0, co_p - co)))
        w_args.append(wpad.reshape(9, ci_p, co_p).astype(jnp.bfloat16))
        w_args.append(jnp.pad(bias, (0, co_p - co)).reshape(1, co_p).astype(jnp.float32))
        spec_cio.append((ci_p, co_p))
        couts_p.append(co_p)
        ci_p = co_p

    nc_p = _round_up(num_classes, 128)
    wl = jnp.pad(w_lin.astype(jnp.float32),
                 ((0, couts_p[-1] - w_lin.shape[0]), (0, nc_p - num_classes)))
    bl = jnp.pad(b_lin.astype(jnp.float32), (0, nc_p - num_classes)).reshape(1, nc_p)

    # --- VMEM scratch: padded inter-stage buffers + flat conv outputs (all < 1 MiB) ---
    scratch = []
    for s in range(1, n_stages):
        hs, ws = hw[s]
        scratch.append(pltpu.VMEM(((hs + 3) * (ws + 2), couts_p[s - 1]), jnp.float32))
    for s in range(n_stages):
        hs, ws = hw[s]
        scratch.append(pltpu.VMEM((hs * (ws + 2), couts_p[s]), jnp.float32))

    def kernel(*refs):
        x_ref = refs[0]
        wb = refs[1:1 + 2 * n_stages]
        wl_ref, bl_ref, out_ref = refs[1 + 2 * n_stages:4 + 2 * n_stages]
        scr = refs[4 + 2 * n_stages:]
        p_refs = [x_ref] + list(scr[:n_stages - 1])
        o_refs = list(scr[n_stages - 1:])

        # zero-pad borders of the inter-stage buffers on every grid step
        for pr in p_refs[1:]:
            pr[...] = jnp.zeros(pr.shape, pr.dtype)

        for s in range(n_stages):
            hs, ws = hw[s]
            _conv3x3_bias_relu(p_refs[s], wb[2 * s], wb[2 * s + 1], o_refs[s], hs, ws)
            if s < n_stages - 1:
                _maxpool2x2_into(o_refs[s], p_refs[s + 1], hs, ws)

        _avgpool_linear(o_refs[-1], wl_ref, bl_ref, out_ref, *hw[-1])

    in_specs = [pl.BlockSpec((None, rows0, cin), lambda b: (b, 0, 0))]
    for ci_s, co_s in spec_cio:
        in_specs.append(pl.BlockSpec((9, ci_s, co_s), lambda b: (0, 0, 0)))
        in_specs.append(pl.BlockSpec((1, co_s), lambda b: (0, 0)))
    in_specs.append(pl.BlockSpec((couts_p[-1], nc_p), lambda b: (0, 0)))
    in_specs.append(pl.BlockSpec((1, nc_p), lambda b: (0, 0)))

    out = pl.pallas_call(
        kernel,
        out_shape=jax.ShapeDtypeStruct((n, 1, nc_p), jnp.float32),
        grid=(n,),
        in_specs=in_specs,
        out_specs=pl.BlockSpec((None, 1, nc_p), lambda b: (b, 0, 0)),
        scratch_shapes=scratch,
        compiler_params=pltpu.CompilerParams(
            dimension_semantics=("parallel",),
            vmem_limit_bytes=32 * 1024 * 1024,
        ),
    )(x_flat, *w_args, wl, bl)

    return out[:, 0, :num_classes]


# --------------------------------- params / forward --------------------------------- #

def init_params(key, in_channels=4, num_classes=10):
    """Matches the PyTorch init: Conv2d kaiming_normal_(fan_out, relu) with zero bias;
    Linear ~ N(0, 0.01) with zero bias.  Conv weights stored HWIO."""
    channels = [in_channels, 32, 64, 128, 256]
    convs = []
    for i in range(4):
        cin, cout = channels[i], channels[i + 1]
        key, k = jax.random.split(key)
        fan_out = cout * 3 * 3
        w = jax.random.normal(k, (3, 3, cin, cout), jnp.float32) * jnp.sqrt(2.0 / fan_out)
        convs.append((w, jnp.zeros((cout,), jnp.float32)))
    key, k = jax.random.split(key)
    w_lin = 0.01 * jax.random.normal(k, (256, num_classes), jnp.float32)
    b_lin = jnp.zeros((num_classes,), jnp.float32)
    return convs, (w_lin, b_lin)


if __name__ == "__main__":
    key = jax.random.PRNGKey(0)
    key, kx = jax.random.split(key)
    x = jax.random.normal(kx, (2, 4, 16, 16), jnp.float32)  # NCHW, like PyTorch
    params = init_params(key, in_channels=4, num_classes=10)

    fwd = jax.jit(lambda inp: vgg_forward(inp, params))
    out = fwd(x)
    jax.block_until_ready(out)
    assert out.shape == (2, 10)
    assert bool(jnp.all(jnp.isfinite(out)))
    print("KERNEL_OK")
</pallas_src>

<mosaic_0001>
module attributes {stable_mosaic.version = 11 : i64} {
  func.func @kernel(%arg0: i32, %arg1: memref<1x342x4xf32, #tpu.memory_space<vmem>>, %arg2: memref<9x4x128xbf16, #tpu.memory_space<vmem>>, %arg3: memref<1x128xf32, #tpu.memory_space<vmem>>, %arg4: memref<9x128x128xbf16, #tpu.memory_space<vmem>>, %arg5: memref<1x128xf32, #tpu.memory_space<vmem>>, %arg6: memref<9x128x128xbf16, #tpu.memory_space<vmem>>, %arg7: memref<1x128xf32, #tpu.memory_space<vmem>>, %arg8: memref<9x128x256xbf16, #tpu.memory_space<vmem>>, %arg9: memref<1x256xf32, #tpu.memory_space<vmem>>, %arg10: memref<256x128xf32, #tpu.memory_space<vmem>>, %arg11: memref<1x128xf32, #tpu.memory_space<vmem>>, %arg12: memref<1x1x128xf32, #tpu.memory_space<vmem>>, %arg13: memref<110x128xf32, #tpu.memory_space<vmem>>, %arg14: memref<42x128xf32, #tpu.memory_space<vmem>>, %arg15: memref<20x128xf32, #tpu.memory_space<vmem>>, %arg16: memref<288x128xf32, #tpu.memory_space<vmem>>, %arg17: memref<80x128xf32, #tpu.memory_space<vmem>>, %arg18: memref<24x128xf32, #tpu.memory_space<vmem>>, %arg19: memref<8x256xf32, #tpu.memory_space<vmem>>) attributes {dimension_semantics = [#tpu.dimension_semantics<parallel>], iteration_bounds = array<i64: 2>, scalar_prefetch = 0 : i64, scratch_operands = 7 : i64, tpu.core_type = #tpu.core_type<tc>, window_params = [{transform_indices = @transform_0, window_bounds = array<i64: 1, 342, 4>}, {pipeline_mode = #tpu.pipeline_mode<synchronous>, transform_indices = @transform_1, window_bounds = array<i64: 9, 4, 128>}, {pipeline_mode = #tpu.pipeline_mode<synchronous>, transform_indices = @transform_2, window_bounds = array<i64: 1, 128>}, {pipeline_mode = #tpu.pipeline_mode<synchronous>, transform_indices = @transform_3, window_bounds = array<i64: 9, 128, 128>}, {pipeline_mode = #tpu.pipeline_mode<synchronous>, transform_indices = @transform_4, window_bounds = array<i64: 1, 128>}, {pipeline_mode = #tpu.pipeline_mode<synchronous>, transform_indices = @transform_5, window_bounds = array<i64: 9, 128, 128>}, {pipeline_mode = #tpu.pipeline_mode<synchronous>, transform_indices = @transform_6, window_bounds = array<i64: 1, 128>}, {pipeline_mode = #tpu.pipeline_mode<synchronous>, transform_indices = @transform_7, window_bounds = array<i64: 9, 128, 256>}, {pipeline_mode = #tpu.pipeline_mode<synchronous>, transform_indices = @transform_8, window_bounds = array<i64: 1, 256>}, {pipeline_mode = #tpu.pipeline_mode<synchronous>, transform_indices = @transform_9, window_bounds = array<i64: 256, 128>}, {pipeline_mode = #tpu.pipeline_mode<synchronous>, transform_indices = @transform_10, window_bounds = array<i64: 1, 128>}, {transform_indices = @transform_11, window_bounds = array<i64: 1, 1, 128>}]} {
    %cst = arith.constant 0.000000e+00 : f32
    %0 = vector.broadcast %cst : f32 to vector<110x128xf32>
    %c0 = arith.constant 0 : index
    %c0_0 = arith.constant 0 : index
    %1 = vector.load %arg13[%c0, %c0_0] : memref<110x128xf32, #tpu.memory_space<vmem>>, vector<110x128xf32>
    tpu.vector_store %arg13[%c0, %c0_0], %0 {strides = array<i32>} : memref<110x128xf32, #tpu.memory_space<vmem>>, vector<110x128xf32>,
    %cst_1 = arith.constant 0.000000e+00 : f32
    %2 = vector.broadcast %cst_1 : f32 to vector<42x128xf32>
    %c0_2 = arith.constant 0 : index
    %c0_3 = arith.constant 0 : index
    %3 = vector.load %arg14[%c0_2, %c0_3] : memref<42x128xf32, #tpu.memory_space<vmem>>, vector<42x128xf32>
    tpu.vector_store %arg14[%c0_2, %c0_3], %2 {strides = array<i32>} : memref<42x128xf32, #tpu.memory_space<vmem>>, vector<42x128xf32>,
    %cst_4 = arith.constant 0.000000e+00 : f32
    %4 = vector.broadcast %cst_4 : f32 to vector<20x128xf32>
    %c0_5 = arith.constant 0 : index
    %c0_6 = arith.constant 0 : index
    %5 = vector.load %arg15[%c0_5, %c0_6] : memref<20x128xf32, #tpu.memory_space<vmem>>, vector<20x128xf32>
    tpu.vector_store %arg15[%c0_5, %c0_6], %4 {strides = array<i32>} : memref<20x128xf32, #tpu.memory_space<vmem>>, vector<20x128xf32>,
    %c0_7 = arith.constant 0 : index
    %c0_8 = arith.constant 0 : index
    %c0_9 = arith.constant 0 : index
    %6 = vector.load %arg1[%c0_7, %c0_8, %c0_9] : memref<1x342x4xf32, #tpu.memory_space<vmem>>, vector<1x288x4xf32>
    %7 = vector.shape_cast %6 : vector<1x288x4xf32> to vector<288x4xf32>
    %8 = arith.truncf %7 : vector<288x4xf32> to vector<288x4xbf16>
    %c0_10 = arith.constant 0 : index
    %c0_11 = arith.constant 0 : index
    %c0_12 = arith.constant 0 : index
    %9 = vector.load %arg2[%c0_10, %c0_11, %c0_12] : memref<9x4x128xbf16, #tpu.memory_space<vmem>>, vector<1x4x128xbf16>
    %10 = vector.shape_cast %9 : vector<1x4x128xbf16> to vector<4x128xbf16>
    %cst_13 = arith.constant dense<0.000000e+00> : vector<288x128xf32>
    %11 = tpu.matmul %8, %10, %cst_13 {dimension_numbers = #tpu.dot_dimension_numbers<[1], [0], [0], [1], [0, 0, 1, 1], [], []>} : vector<288x4xbf16>, vector<4x128xbf16>, vector<288x128xf32> -> vector<288x128xf32>
    %c0_14 = arith.constant 0 : index
    %c0_15 = arith.constant 0 : index
    %12 = vector.load %arg16[%c0_14, %c0_15] : memref<288x128xf32, #tpu.memory_space<vmem>>, vector<288x128xf32>
    tpu.vector_store %arg16[%c0_14, %c0_15], %11 {strides = array<i32>} : memref<288x128xf32, #tpu.memory_space<vmem>>, vector<288x128xf32>,
    %c0_16 = arith.constant 0 : index
    %c1 = arith.constant 1 : index
    %c0_17 = arith.constant 0 : index
    %13 = vector.load %arg1[%c0_16, %c1, %c0_17] : memref<1x342x4xf32, #tpu.memory_space<vmem>>, vector<1x288x4xf32>
    %14 = vector.shape_cast %13 : vector<1x288x4xf32> to vector<288x4xf32>
    %15 = arith.truncf %14 : vector<288x4xf32> to vector<288x4xbf16>
    %c1_18 = arith.constant 1 : index
    %c0_19 = arith.constant 0 : index
    %c0_20 = arith.constant 0 : index
    %16 = vector.load %arg2[%c1_18, %c0_19, %c0_20] : memref<9x4x128xbf16, #tpu.memory_space<vmem>>, vector<1x4x128xbf16>
    %17 = vector.shape_cast %16 : vector<1x4x128xbf16> to vector<4x128xbf16>
    %cst_21 = arith.constant dense<0.000000e+00> : vector<288x128xf32>
    %18 = tpu.matmul %15, %17, %cst_21 {dimension_numbers = #tpu.dot_dimension_numbers<[1], [0], [0], [1], [0, 0, 1, 1], [], []>} : vector<288x4xbf16>, vector<4x128xbf16>, vector<288x128xf32> -> vector<288x128xf32>
    %c0_22 = arith.constant 0 : index
    %c0_23 = arith.constant 0 : index
    %19 = vector.load %arg16[%c0_22, %c0_23] : memref<288x128xf32, #tpu.memory_space<vmem>>, vector<288x128xf32>
    %20 = arith.addf %19, %18 : vector<288x128xf32>
    %c0_24 = arith.constant 0 : index
    %c0_25 = arith.constant 0 : index
    %21 = vector.load %arg16[%c0_24, %c0_25] : memref<288x128xf32, #tpu.memory_space<vmem>>, vector<288x128xf32>
    tpu.vector_store %arg16[%c0_24, %c0_25], %20 {strides = array<i32>} : memref<288x128xf32, #tpu.memory_space<vmem>>, vector<288x128xf32>,
    %c0_26 = arith.constant 0 : index
    %c2 = arith.constant 2 : index
    %c0_27 = arith.constant 0 : index
    %22 = vector.load %arg1[%c0_26, %c2, %c0_27] : memref<1x342x4xf32, #tpu.memory_space<vmem>>, vector<1x288x4xf32>
    %23 = vector.shape_cast %22 : vector<1x288x4xf32> to vector<288x4xf32>
    %24 = arith.truncf %23 : vector<288x4xf32> to vector<288x4xbf16>
    %c2_28 = arith.constant 2 : index
    %c0_29 = arith.constant 0 : index
    %c0_30 = arith.constant 0 : index
    %25 = vector.load %arg2[%c2_28, %c0_29, %c0_30] : memref<9x4x128xbf16, #tpu.memory_space<vmem>>, vector<1x4x128xbf16>
    %26 = vector.shape_cast %25 : vector<1x4x128xbf16> to vector<4x128xbf16>
    %cst_31 = arith.constant dense<0.000000e+00> : vector<288x128xf32>
    %27 = tpu.matmul %24, %26, %cst_31 {dimension_numbers = #tpu.dot_dimension_numbers<[1], [0], [0], [1], [0, 0, 1, 1], [], []>} : vector<288x4xbf16>, vector<4x128xbf16>, vector<288x128xf32> -> vector<288x128xf32>
    %c0_32 = arith.constant 0 : index
    %c0_33 = arith.constant 0 : index
    %28 = vector.load %arg16[%c0_32, %c0_33] : memref<288x128xf32, #tpu.memory_space<vmem>>, vector<288x128xf32>
    %29 = arith.addf %28, %27 : vector<288x128xf32>
    %c0_34 = arith.constant 0 : index
    %c0_35 = arith.constant 0 : index
    %30 = vector.load %arg16[%c0_34, %c0_35] : memref<288x128xf32, #tpu.memory_space<vmem>>, vector<288x128xf32>
    tpu.vector_store %arg16[%c0_34, %c0_35], %29 {strides = array<i32>} : memref<288x128xf32, #tpu.memory_space<vmem>>, vector<288x128xf32>,
    %c0_36 = arith.constant 0 : index
    %c18 = arith.constant 18 : index
    %c0_37 = arith.constant 0 : index
    %31 = vector.load %arg1[%c0_36, %c18, %c0_37] : memref<1x342x4xf32, #tpu.memory_space<vmem>>, vector<1x288x4xf32>
    %32 = vector.shape_cast %31 : vector<1x288x4xf32> to vector<288x4xf32>
    %33 = arith.truncf %32 : vector<288x4xf32> to vector<288x4xbf16>
    %c3 = arith.constant 3 : index
    %c0_38 = arith.constant 0 : index
    %c0_39 = arith.constant 0 : index
    %34 = vector.load %arg2[%c3, %c0_38, %c0_39] : memref<9x4x128xbf16, #tpu.memory_space<vmem>>, vector<1x4x128xbf16>
    %35 = vector.shape_cast %34 : vector<1x4x128xbf16> to vector<4x128xbf16>
    %cst_40 = arith.constant dense<0.000000e+00> : vector<288x128xf32>
    %36 = tpu.matmul %33, %35, %cst_40 {dimension_numbers = #tpu.dot_dimension_numbers<[1], [0], [0], [1], [0, 0, 1, 1], [], []>} : vector<288x4xbf16>, vector<4x128xbf16>, vector<288x128xf32> -> vector<288x128xf32>
    %c0_41 = arith.constant 0 : index
    %c0_42 = arith.constant 0 : index
    %37 = vector.load %arg16[%c0_41, %c0_42] : memref<288x128xf32, #tpu.memory_space<vmem>>, vector<288x128xf32>
    %38 = arith.addf %37, %36 : vector<288x128xf32>
    %c0_43 = arith.constant 0 : index
    %c0_44 = arith.constant 0 : index
    %39 = vector.load %arg16[%c0_43, %c0_44] : memref<288x128xf32, #tpu.memory_space<vmem>>, vector<288x128xf32>
    tpu.vector_store %arg16[%c0_43, %c0_44], %38 {strides = array<i32>} : memref<288x128xf32, #tpu.memory_space<vmem>>, vector<288x128xf32>,
    %c0_45 = arith.constant 0 : index
    %c19 = arith.constant 19 : index
    %c0_46 = arith.constant 0 : index
    %40 = vector.load %arg1[%c0_45, %c19, %c0_46] : memref<1x342x4xf32, #tpu.memory_space<vmem>>, vector<1x288x4xf32>
    %41 = vector.shape_cast %40 : vector<1x288x4xf32> to vector<288x4xf32>
    %42 = arith.truncf %41 : vector<288x4xf32> to vector<288x4xbf16>
    %c4 = arith.constant 4 : index
    %c0_47 = arith.constant 0 : index
    %c0_48 = arith.constant 0 : index
    %43 = vector.load %arg2[%c4, %c0_47, %c0_48] : memref<9x4x128xbf16, #tpu.memory_space<vmem>>, vector<1x4x128xbf16>
    %44 = vector.shape_cast %43 : vector<1x4x128xbf16> to vector<4x128xbf16>
    %cst_49 = arith.constant dense<0.000000e+00> : vector<288x128xf32>
    %45 = tpu.matmul %42, %44, %cst_49 {dimension_numbers = #tpu.dot_dimension_numbers<[1], [0], [0], [1], [0, 0, 1, 1], [], []>} : vector<288x4xbf16>, vector<4x128xbf16>, vector<288x128xf32> -> vector<288x128xf32>
    %c0_50 = arith.constant 0 : index
    %c0_51 = arith.constant 0 : index
    %46 = vector.load %arg16[%c0_50, %c0_51] : memref<288x128xf32, #tpu.memory_space<vmem>>, vector<288x128xf32>
    %47 = arith.addf %46, %45 : vector<288x128xf32>
    %c0_52 = arith.constant 0 : index
    %c0_53 = arith.constant 0 : index
    %48 = vector.load %arg16[%c0_52, %c0_53] : memref<288x128xf32, #tpu.memory_space<vmem>>, vector<288x128xf32>
    tpu.vector_store %arg16[%c0_52, %c0_53], %47 {strides = array<i32>} : memref<288x128xf32, #tpu.memory_space<vmem>>, vector<288x128xf32>,
    %c0_54 = arith.constant 0 : index
    %c20 = arith.constant 20 : index
    %c0_55 = arith.constant 0 : index
    %49 = vector.load %arg1[%c0_54, %c20, %c0_55] : memref<1x342x4xf32, #tpu.memory_space<vmem>>, vector<1x288x4xf32>
    %50 = vector.shape_cast %49 : vector<1x288x4xf32> to vector<288x4xf32>
    %51 = arith.truncf %50 : vector<288x4xf32> to vector<288x4xbf16>
    %c5 = arith.constant 5 : index
    %c0_56 = arith.constant 0 : index
    %c0_57 = arith.constant 0 : index
    %52 = vector.load %arg2[%c5, %c0_56, %c0_57] : memref<9x4x128xbf16, #tpu.memory_space<vmem>>, vector<1x4x128xbf16>
    %53 = vector.shape_cast %52 : vector<1x4x128xbf16> to vector<4x128xbf16>
    %cst_58 = arith.constant dense<0.000000e+00> : vector<288x128xf32>
    %54 = tpu.matmul %51, %53, %cst_58 {dimension_numbers = #tpu.dot_dimension_numbers<[1], [0], [0], [1], [0, 0, 1, 1], [], []>} : vector<288x4xbf16>, vector<4x128xbf16>, vector<288x128xf32> -> vector<288x128xf32>
    %c0_59 = arith.constant 0 : index
    %c0_60 = arith.constant 0 : index
    %55 = vector.load %arg16[%c0_59, %c0_60] : memref<288x128xf32, #tpu.memory_space<vmem>>, vector<288x128xf32>
    %56 = arith.addf %55, %54 : vector<288x128xf32>
    %c0_61 = arith.constant 0 : index
    %c0_62 = arith.constant 0 : index
    %57 = vector.load %arg16[%c0_61, %c0_62] : memref<288x128xf32, #tpu.memory_space<vmem>>, vector<288x128xf32>
    tpu.vector_store %arg16[%c0_61, %c0_62], %56 {strides = array<i32>} : memref<288x128xf32, #tpu.memory_space<vmem>>, vector<288x128xf32>,
    %c0_63 = arith.constant 0 : index
    %c36 = arith.constant 36 : index
    %c0_64 = arith.constant 0 : index
    %58 = vector.load %arg1[%c0_63, %c36, %c0_64] : memref<1x342x4xf32, #tpu.memory_space<vmem>>, vector<1x288x4xf32>
    %59 = vector.shape_cast %58 : vector<1x288x4xf32> to vector<288x4xf32>
    %60 = arith.truncf %59 : vector<288x4xf32> to vector<288x4xbf16>
    %c6 = arith.constant 6 : index
    %c0_65 = arith.constant 0 : index
    %c0_66 = arith.constant 0 : index
    %61 = vector.load %arg2[%c6, %c0_65, %c0_66] : memref<9x4x128xbf16, #tpu.memory_space<vmem>>, vector<1x4x128xbf16>
    %62 = vector.shape_cast %61 : vector<1x4x128xbf16> to vector<4x128xbf16>
    %cst_67 = arith.constant dense<0.000000e+00> : vector<288x128xf32>
    %63 = tpu.matmul %60, %62, %cst_67 {dimension_numbers = #tpu.dot_dimension_numbers<[1], [0], [0], [1], [0, 0, 1, 1], [], []>} : vector<288x4xbf16>, vector<4x128xbf16>, vector<288x128xf32> -> vector<288x128xf32>
    %c0_68 = arith.constant 0 : index
    %c0_69 = arith.constant 0 : index
    %64 = vector.load %arg16[%c0_68, %c0_69] : memref<288x128xf32, #tpu.memory_space<vmem>>, vector<288x128xf32>
    %65 = arith.addf %64, %63 : vector<288x128xf32>
    %c0_70 = arith.constant 0 : index
    %c0_71 = arith.constant 0 : index
    %66 = vector.load %arg16[%c0_70, %c0_71] : memref<288x128xf32, #tpu.memory_space<vmem>>, vector<288x128xf32>
    tpu.vector_store %arg16[%c0_70, %c0_71], %65 {strides = array<i32>} : memref<288x128xf32, #tpu.memory_space<vmem>>, vector<288x128xf32>,
    %c0_72 = arith.constant 0 : index
    %c37 = arith.constant 37 : index
    %c0_73 = arith.constant 0 : index
    %67 = vector.load %arg1[%c0_72, %c37, %c0_73] : memref<1x342x4xf32, #tpu.memory_space<vmem>>, vector<1x288x4xf32>
    %68 = vector.shape_cast %67 : vector<1x288x4xf32> to vector<288x4xf32>
    %69 = arith.truncf %68 : vector<288x4xf32> to vector<288x4xbf16>
    %c7 = arith.constant 7 : index
    %c0_74 = arith.constant 0 : index
    %c0_75 = arith.constant 0 : index
    %70 = vector.load %arg2[%c7, %c0_74, %c0_75] : memref<9x4x128xbf16, #tpu.memory_space<vmem>>, vector<1x4x128xbf16>
    %71 = vector.shape_cast %70 : vector<1x4x128xbf16> to vector<4x128xbf16>
    %cst_76 = arith.constant dense<0.000000e+00> : vector<288x128xf32>
    %72 = tpu.matmul %69, %71, %cst_76 {dimension_numbers = #tpu.dot_dimension_numbers<[1], [0], [0], [1], [0, 0, 1, 1], [], []>} : vector<288x4xbf16>, vector<4x128xbf16>, vector<288x128xf32> -> vector<288x128xf32>
    %c0_77 = arith.constant 0 : index
    %c0_78 = arith.constant 0 : index
    %73 = vector.load %arg16[%c0_77, %c0_78] : memref<288x128xf32, #tpu.memory_space<vmem>>, vector<288x128xf32>
    %74 = arith.addf %73, %72 : vector<288x128xf32>
    %c0_79 = arith.constant 0 : index
    %c0_80 = arith.constant 0 : index
    %75 = vector.load %arg16[%c0_79, %c0_80] : memref<288x128xf32, #tpu.memory_space<vmem>>, vector<288x128xf32>
    tpu.vector_store %arg16[%c0_79, %c0_80], %74 {strides = array<i32>} : memref<288x128xf32, #tpu.memory_space<vmem>>, vector<288x128xf32>,
    %c0_81 = arith.constant 0 : index
    %c38 = arith.constant 38 : index
    %c0_82 = arith.constant 0 : index
    %76 = vector.load %arg1[%c0_81, %c38, %c0_82] : memref<1x342x4xf32, #tpu.memory_space<vmem>>, vector<1x288x4xf32>
    %77 = vector.shape_cast %76 : vector<1x288x4xf32> to vector<288x4xf32>
    %78 = arith.truncf %77 : vector<288x4xf32> to vector<288x4xbf16>
    %c8 = arith.constant 8 : index
    %c0_83 = arith.constant 0 : index
    %c0_84 = arith.constant 0 : index
    %79 = vector.load %arg2[%c8, %c0_83, %c0_84] : memref<9x4x128xbf16, #tpu.memory_space<vmem>>, vector<1x4x128xbf16>
    %80 = vector.shape_cast %79 : vector<1x4x128xbf16> to vector<4x128xbf16>
    %cst_85 = arith.constant dense<0.000000e+00> : vector<288x128xf32>
    %81 = tpu.matmul %78, %80, %cst_85 {dimension_numbers = #tpu.dot_dimension_numbers<[1], [0], [0], [1], [0, 0, 1, 1], [], []>} : vector<288x4xbf16>, vector<4x128xbf16>, vector<288x128xf32> -> vector<288x128xf32>
    %c0_86 = arith.constant 0 : index
    %c0_87 = arith.constant 0 : index
    %82 = vector.load %arg16[%c0_86, %c0_87] : memref<288x128xf32, #tpu.memory_space<vmem>>, vector<288x128xf32>
    %83 = arith.addf %82, %81 : vector<288x128xf32>
    %c0_88 = arith.constant 0 : index
    %c0_89 = arith.constant 0 : index
    %84 = vector.load %arg16[%c0_88, %c0_89] : memref<288x128xf32, #tpu.memory_space<vmem>>, vector<288x128xf32>
    tpu.vector_store %arg16[%c0_88, %c0_89], %83 {strides = array<i32>} : memref<288x128xf32, #tpu.memory_space<vmem>>, vector<288x128xf32>,
    %c0_90 = arith.constant 0 : index
    %c0_91 = arith.constant 0 : index
    %85 = vector.load %arg16[%c0_90, %c0_91] : memref<288x128xf32, #tpu.memory_space<vmem>>, vector<288x128xf32>
    %c0_92 = arith.constant 0 : index
    %c0_93 = arith.constant 0 : index
    %86 = vector.load %arg3[%c0_92, %c0_93] : memref<1x128xf32, #tpu.memory_space<vmem>>, vector<1x128xf32>
    %87 = vector.broadcast %86 : vector<1x128xf32> to vector<288x128xf32>
    %88 = arith.addf %85, %87 : vector<288x128xf32>
    %cst_94 = arith.constant 0.000000e+00 : f32
    %89 = vector.broadcast %cst_94 : f32 to vector<288x128xf32>
    %90 = arith.maximumf %88, %89 : vector<288x128xf32>
    %c0_95 = arith.constant 0 : index
    %c0_96 = arith.constant 0 : index
    %91 = vector.load %arg16[%c0_95, %c0_96] : memref<288x128xf32, #tpu.memory_space<vmem>>, vector<288x128xf32>
    tpu.vector_store %arg16[%c0_95, %c0_96], %90 {strides = array<i32>} : memref<288x128xf32, #tpu.memory_space<vmem>>, vector<288x128xf32>,
    %c0_97 = arith.constant 0 : index
    %c0_98 = arith.constant 0 : index
    %92 = tpu.strided_load %arg16[%c0_97, %c0_98] {strides = array<i32: 2, 1>} : memref<288x128xf32, #tpu.memory_space<vmem>>, vector<8x128xf32>
    %c1_99 = arith.constant 1 : index
    %c0_100 = arith.constant 0 : index
    %93 = tpu.strided_load %arg16[%c1_99, %c0_100] {strides = array<i32: 2, 1>} : memref<288x128xf32, #tpu.memory_space<vmem>>, vector<8x128xf32>
    %c18_101 = arith.constant 18 : index
    %c0_102 = arith.constant 0 : index
    %94 = tpu.strided_load %arg16[%c18_101, %c0_102] {strides = array<i32: 2, 1>} : memref<288x128xf32, #tpu.memory_space<vmem>>, vector<8x128xf32>
    %c19_103 = arith.constant 19 : index
    %c0_104 = arith.constant 0 : index
    %95 = tpu.strided_load %arg16[%c19_103, %c0_104] {strides = array<i32: 2, 1>} : memref<288x128xf32, #tpu.memory_space<vmem>>, vector<8x128xf32>
    %96 = arith.maximumf %92, %93 : vector<8x128xf32>
    %97 = arith.maximumf %94, %95 : vector<8x128xf32>
    %98 = arith.maximumf %96, %97 : vector<8x128xf32>
    %c11 = arith.constant 11 : index
    %c0_105 = arith.constant 0 : index
    %99 = vector.load %arg13[%c11, %c0_105] : memref<110x128xf32, #tpu.memory_space<vmem>>, vector<8x128xf32>
    tpu.vector_store %arg13[%c11, %c0_105], %98 {strides = array<i32>} : memref<110x128xf32, #tpu.memory_space<vmem>>, vector<8x128xf32>,
    %c36_106 = arith.constant 36 : index
    %c0_107 = arith.constant 0 : index
    %100 = tpu.strided_load %arg16[%c36_106, %c0_107] {strides = array<i32: 2, 1>} : memref<288x128xf32, #tpu.memory_space<vmem>>, vector<8x128xf32>
    %c37_108 = arith.constant 37 : index
    %c0_109 = arith.constant 0 : index
    %101 = tpu.strided_load %arg16[%c37_108, %c0_109] {strides = array<i32: 2, 1>} : memref<288x128xf32, #tpu.memory_space<vmem>>, vector<8x128xf32>
    %c54 = arith.constant 54 : index
    %c0_110 = arith.constant 0 : index
    %102 = tpu.strided_load %arg16[%c54, %c0_110] {strides = array<i32: 2, 1>} : memref<288x128xf32, #tpu.memory_space<vmem>>, vector<8x128xf32>
    %c55 = arith.constant 55 : index
    %c0_111 = arith.constant 0 : index
    %103 = tpu.strided_load %arg16[%c55, %c0_111] {strides = array<i32: 2, 1>} : memref<288x128xf32, #tpu.memory_space<vmem>>, vector<8x128xf32>
    %104 = arith.maximumf %100, %101 : vector<8x128xf32>
    %105 = arith.maximumf %102, %103 : vector<8x128xf32>
    %106 = arith.maximumf %104, %105 : vector<8x128xf32>
    %c21 = arith.constant 21 : index
    %c0_112 = arith.constant 0 : index
    %107 = vector.load %arg13[%c21, %c0_112] : memref<110x128xf32, #tpu.memory_space<vmem>>, vector<8x128xf32>
    tpu.vector_store %arg13[%c21, %c0_112], %106 {strides = array<i32>} : memref<110x128xf32, #tpu.memory_space<vmem>>, vector<8x128xf32>,
    %c72 = arith.constant 72 : index
    %c0_113 = arith.constant 0 : index
    %108 = tpu.strided_load %arg16[%c72, %c0_113] {strides = array<i32: 2, 1>} : memref<288x128xf32, #tpu.memory_space<vmem>>, vector<8x128xf32>
    %c73 = arith.constant 73 : index
    %c0_114 = arith.constant 0 : index
    %109 = tpu.strided_load %arg16[%c73, %c0_114] {strides = array<i32: 2, 1>} : memref<288x128xf32, #tpu.memory_space<vmem>>, vector<8x128xf32>
    %c90 = arith.constant 90 : index
    %c0_115 = arith.constant 0 : index
    %110 = tpu.strided_load %arg16[%c90, %c0_115] {strides = array<i32: 2, 1>} : memref<288x128xf32, #tpu.memory_space<vmem>>, vector<8x128xf32>
    %c91 = arith.constant 91 : index
    %c0_116 = arith.constant 0 : index
    %111 = tpu.strided_load %arg16[%c91, %c0_116] {strides = array<i32: 2, 1>} : memref<288x128xf32, #tpu.memory_space<vmem>>, vector<8x128xf32>
    %112 = arith.maximumf %108, %109 : vector<8x128xf32>
    %113 = arith.maximumf %110, %111 : vector<8x128xf32>
    %114 = arith.maximumf %112, %113 : vector<8x128xf32>
    %c31 = arith.constant 31 : index
    %c0_117 = arith.constant 0 : index
    %115 = vector.load %arg13[%c31, %c0_117] : memref<110x128xf32, #tpu.memory_space<vmem>>, vector<8x128xf32>
    tpu.vector_store %arg13[%c31, %c0_117], %114 {strides = array<i32>} : memref<110x128xf32, #tpu.memory_space<vmem>>, vector<8x128xf32>,
    %c108 = arith.constant 108 : index
    %c0_118 = arith.constant 0 : index
    %116 = tpu.strided_load %arg16[%c108, %c0_118] {strides = array<i32: 2, 1>} : memref<288x128xf32, #tpu.memory_space<vmem>>, vector<8x128xf32>
    %c109 = arith.constant 109 : index
    %c0_119 = arith.constant 0 : index
    %117 = tpu.strided_load %arg16[%c109, %c0_119] {strides = array<i32: 2, 1>} : memref<288x128xf32, #tpu.memory_space<vmem>>, vector<8x128xf32>
    %c126 = arith.constant 126 : index
    %c0_120 = arith.constant 0 : index
    %118 = tpu.strided_load %arg16[%c126, %c0_120] {strides = array<i32: 2, 1>} : memref<288x128xf32, #tpu.memory_space<vmem>>, vector<8x128xf32>
    %c127 = arith.constant 127 : index
    %c0_121 = arith.constant 0 : index
    %119 = tpu.strided_load %arg16[%c127, %c0_121] {strides = array<i32: 2, 1>} : memref<288x128xf32, #tpu.memory_space<vmem>>, vector<8x128xf32>
    %120 = arith.maximumf %116, %117 : vector<8x128xf32>
    %121 = arith.maximumf %118, %119 : vector<8x128xf32>
    %122 = arith.maximumf %120, %121 : vector<8x128xf32>
    %c41 = arith.constant 41 : index
    %c0_122 = arith.constant 0 : index
    %123 = vector.load %arg13[%c41, %c0_122] : memref<110x128xf32, #tpu.memory_space<vmem>>, vector<8x128xf32>
    tpu.vector_store %arg13[%c41, %c0_122], %122 {strides = array<i32>} : memref<110x128xf32, #tpu.memory_space<vmem>>, vector<8x128xf32>,
    %c144 = arith.constant 144 : index
    %c0_123 = arith.constant 0 : index
    %124 = tpu.strided_load %arg16[%c144, %c0_123] {strides = array<i32: 2, 1>} : memref<288x128xf32, #tpu.memory_space<vmem>>, vector<8x128xf32>
    %c145 = arith.constant 145 : index
    %c0_124 = arith.constant 0 : index
    %125 = tpu.strided_load %arg16[%c145, %c0_124] {strides = array<i32: 2, 1>} : memref<288x128xf32, #tpu.memory_space<vmem>>, vector<8x128xf32>
    %c162 = arith.constant 162 : index
    %c0_125 = arith.constant 0 : index
    %126 = tpu.strided_load %arg16[%c162, %c0_125] {strides = array<i32: 2, 1>} : memref<288x128xf32, #tpu.memory_space<vmem>>, vector<8x128xf32>
    %c163 = arith.constant 163 : index
    %c0_126 = arith.constant 0 : index
    %127 = tpu.strided_load %arg16[%c163, %c0_126] {strides = array<i32: 2, 1>} : memref<288x128xf32, #tpu.memory_space<vmem>>, vector<8x128xf32>
    %128 = arith.maximumf %124, %125 : vector<8x128xf32>
    %129 = arith.maximumf %126, %127 : vector<8x128xf32>
    %130 = arith.maximumf %128, %129 : vector<8x128xf32>
    %c51 = arith.constant 51 : index
    %c0_127 = arith.constant 0 : index
    %131 = vector.load %arg13[%c51, %c0_127] : memref<110x128xf32, #tpu.memory_space<vmem>>, vector<8x128xf32>
    tpu.vector_store %arg13[%c51, %c0_127], %130 {strides = array<i32>} : memref<110x128xf32, #tpu.memory_space<vmem>>, vector<8x128xf32>,
    %c180 = arith.constant 180 : index
    %c0_128 = arith.constant 0 : index
    %132 = tpu.strided_load %arg16[%c180, %c0_128] {strides = array<i32: 2, 1>} : memref<288x128xf32, #tpu.memory_space<vmem>>, vector<8x128xf32>
    %c181 = arith.constant 181 : index
    %c0_129 = arith.constant 0 : index
    %133 = tpu.strided_load %arg16[%c181, %c0_129] {strides = array<i32: 2, 1>} : memref<288x128xf32, #tpu.memory_space<vmem>>, vector<8x128xf32>
    %c198 = arith.constant 198 : index
    %c0_130 = arith.constant 0 : index
    %134 = tpu.strided_load %arg16[%c198, %c0_130] {strides = array<i32: 2, 1>} : memref<288x128xf32, #tpu.memory_space<vmem>>, vector<8x128xf32>
    %c199 = arith.constant 199 : index
    %c0_131 = arith.constant 0 : index
    %135 = tpu.strided_load %arg16[%c199, %c0_131] {strides = array<i32: 2, 1>} : memref<288x128xf32, #tpu.memory_space<vmem>>, vector<8x128xf32>
    %136 = arith.maximumf %132, %133 : vector<8x128xf32>
    %137 = arith.maximumf %134, %135 : vector<8x128xf32>
    %138 = arith.maximumf %136, %137 : vector<8x128xf32>
    %c61 = arith.constant 61 : index
    %c0_132 = arith.constant 0 : index
    %139 = vector.load %arg13[%c61, %c0_132] : memref<110x128xf32, #tpu.memory_space<vmem>>, vector<8x128xf32>
    tpu.vector_store %arg13[%c61, %c0_132], %138 {strides = array<i32>} : memref<110x128xf32, #tpu.memory_space<vmem>>, vector<8x128xf32>,
    %c216 = arith.constant 216 : index
    %c0_133 = arith.constant 0 : index
    %140 = tpu.strided_load %arg16[%c216, %c0_133] {strides = array<i32: 2, 1>} : memref<288x128xf32, #tpu.memory_space<vmem>>, vector<8x128xf32>
    %c217 = arith.constant 217 : index
    %c0_134 = arith.constant 0 : index
    %141 = tpu.strided_load %arg16[%c217, %c0_134] {strides = array<i32: 2, 1>} : memref<288x128xf32, #tpu.memory_space<vmem>>, vector<8x128xf32>
    %c234 = arith.constant 234 : index
    %c0_135 = arith.constant 0 : index
    %142 = tpu.strided_load %arg16[%c234, %c0_135] {strides = array<i32: 2, 1>} : memref<288x128xf32, #tpu.memory_space<vmem>>, vector<8x128xf32>
    %c235 = arith.constant 235 : index
    %c0_136 = arith.constant 0 : index
    %143 = tpu.strided_load %arg16[%c235, %c0_136] {strides = array<i32: 2, 1>} : memref<288x128xf32, #tpu.memory_space<vmem>>, vector<8x128xf32>
    %144 = arith.maximumf %140, %141 : vector<8x128xf32>
    %145 = arith.maximumf %142, %143 : vector<8x128xf32>
    %146 = arith.maximumf %144, %145 : vector<8x128xf32>
    %c71 = arith.constant 71 : index
    %c0_137 = arith.constant 0 : index
    %147 = vector.load %arg13[%c71, %c0_137] : memref<110x128xf32, #tpu.memory_space<vmem>>, vector<8x128xf32>
    tpu.vector_store %arg13[%c71, %c0_137], %146 {strides = array<i32>} : memref<110x128xf32, #tpu.memory_space<vmem>>, vector<8x128xf32>,
    %c252 = arith.constant 252 : index
    %c0_138 = arith.constant 0 : index
    %148 = tpu.strided_load %arg16[%c252, %c0_138] {strides = array<i32: 2, 1>} : memref<288x128xf32, #tpu.memory_space<vmem>>, vector<8x128xf32>
    %c253 = arith.constant 253 : index
    %c0_139 = arith.constant 0 : index
    %149 = tpu.strided_load %arg16[%c253, %c0_139] {strides = array<i32: 2, 1>} : memref<288x128xf32, #tpu.memory_space<vmem>>, vector<8x128xf32>
    %c270 = arith.constant 270 : index
    %c0_140 = arith.constant 0 : index
    %150 = tpu.strided_load %arg16[%c270, %c0_140] {strides = array<i32: 2, 1>} : memref<288x128xf32, #tpu.memory_space<vmem>>, vector<8x128xf32>
    %c271 = arith.constant 271 : index
    %c0_141 = arith.constant 0 : index
    %151 = tpu.strided_load %arg16[%c271, %c0_141] {strides = array<i32: 2, 1>} : memref<288x128xf32, #tpu.memory_space<vmem>>, vector<8x128xf32>
    %152 = arith.maximumf %148, %149 : vector<8x128xf32>
    %153 = arith.maximumf %150, %151 : vector<8x128xf32>
    %154 = arith.maximumf %152, %153 : vector<8x128xf32>
    %c81 = arith.constant 81 : index
    %c0_142 = arith.constant 0 : index
    %155 = vector.load %arg13[%c81, %c0_142] : memref<110x128xf32, #tpu.memory_space<vmem>>, vector<8x128xf32>
    tpu.vector_store %arg13[%c81, %c0_142], %154 {strides = array<i32>} : memref<110x128xf32, #tpu.memory_space<vmem>>, vector<8x128xf32>,
    %c0_143 = arith.constant 0 : index
    %c0_144 = arith.constant 0 : index
    %156 = vector.load %arg13[%c0_143, %c0_144] : memref<110x128xf32, #tpu.memory_space<vmem>>, vector<80x128xf32>
    %157 = arith.truncf %156 : vector<80x128xf32> to vector<80x128xbf16>
    %c0_145 = arith.constant 0 : index
    %c0_146 = arith.constant 0 : index
    %c0_147 = arith.constant 0 : index
    %158 = vector.load %arg4[%c0_145, %c0_146, %c0_147] : memref<9x128x128xbf16, #tpu.memory_space<vmem>>, vector<1x128x128xbf16>
    %159 = vector.shape_cast %158 : vector<1x128x128xbf16> to vector<128x128xbf16>
    %cst_148 = arith.constant dense<0.000000e+00> : vector<80x128xf32>
    %160 = tpu.matmul %157, %159, %cst_148 {dimension_numbers = #tpu.dot_dimension_numbers<[1], [0], [0], [1], [0, 0, 1, 1], [], []>} : vector<80x128xbf16>, vector<128x128xbf16>, vector<80x128xf32> -> vector<80x128xf32>
    %c0_149 = arith.constant 0 : index
    %c0_150 = arith.constant 0 : index
    %161 = vector.load %arg17[%c0_149, %c0_150] : memref<80x128xf32, #tpu.memory_space<vmem>>, vector<80x128xf32>
    tpu.vector_store %arg17[%c0_149, %c0_150], %160 {strides = array<i32>} : memref<80x128xf32, #tpu.memory_space<vmem>>, vector<80x128xf32>,
    %c1_151 = arith.constant 1 : index
    %c0_152 = arith.constant 0 : index
    %162 = vector.load %arg13[%c1_151, %c0_152] : memref<110x128xf32, #tpu.memory_space<vmem>>, vector<80x128xf32>
    %163 = arith.truncf %162 : vector<80x128xf32> to vector<80x128xbf16>
    %c1_153 = arith.constant 1 : index
    %c0_154 = arith.constant 0 : index
    %c0_155 = arith.constant 0 : index
    %164 = vector.load %arg4[%c1_153, %c0_154, %c0_155] : memref<9x128x128xbf16, #tpu.memory_space<vmem>>, vector<1x128x128xbf16>
    %165 = vector.shape_cast %164 : vector<1x128x128xbf16> to vector<128x128xbf16>
    %cst_156 = arith.constant dense<0.000000e+00> : vector<80x128xf32>
    %166 = tpu.matmul %163, %165, %cst_156 {dimension_numbers = #tpu.dot_dimension_numbers<[1], [0], [0], [1], [0, 0, 1, 1], [], []>} : vector<80x128xbf16>, vector<128x128xbf16>, vector<80x128xf32> -> vector<80x128xf32>
    %c0_157 = arith.constant 0 : index
    %c0_158 = arith.constant 0 : index
    %167 = vector.load %arg17[%c0_157, %c0_158] : memref<80x128xf32, #tpu.memory_space<vmem>>, vector<80x128xf32>
    %168 = arith.addf %167, %166 : vector<80x128xf32>
    %c0_159 = arith.constant 0 : index
    %c0_160 = arith.constant 0 : index
    %169 = vector.load %arg17[%c0_159, %c0_160] : memref<80x128xf32, #tpu.memory_space<vmem>>, vector<80x128xf32>
    tpu.vector_store %arg17[%c0_159, %c0_160], %168 {strides = array<i32>} : memref<80x128xf32, #tpu.memory_space<vmem>>, vector<80x128xf32>,
    %c2_161 = arith.constant 2 : index
    %c0_162 = arith.constant 0 : index
    %170 = vector.load %arg13[%c2_161, %c0_162] : memref<110x128xf32, #tpu.memory_space<vmem>>, vector<80x128xf32>
    %171 = arith.truncf %170 : vector<80x128xf32> to vector<80x128xbf16>
    %c2_163 = arith.constant 2 : index
    %c0_164 = arith.constant 0 : index
    %c0_165 = arith.constant 0 : index
    %172 = vector.load %arg4[%c2_163, %c0_164, %c0_165] : memref<9x128x128xbf16, #tpu.memory_space<vmem>>, vector<1x128x128xbf16>
    %173 = vector.shape_cast %172 : vector<1x128x128xbf16> to vector<128x128xbf16>
    %cst_166 = arith.constant dense<0.000000e+00> : vector<80x128xf32>
    %174 = tpu.matmul %171, %173, %cst_166 {dimension_numbers = #tpu.dot_dimension_numbers<[1], [0], [0], [1], [0, 0, 1, 1], [], []>} : vector<80x128xbf16>, vector<128x128xbf16>, vector<80x128xf32> -> vector<80x128xf32>
    %c0_167 = arith.constant 0 : index
    %c0_168 = arith.constant 0 : index
    %175 = vector.load %arg17[%c0_167, %c0_168] : memref<80x128xf32, #tpu.memory_space<vmem>>, vector<80x128xf32>
    %176 = arith.addf %175, %174 : vector<80x128xf32>
    %c0_169 = arith.constant 0 : index
    %c0_170 = arith.constant 0 : index
    %177 = vector.load %arg17[%c0_169, %c0_170] : memref<80x128xf32, #tpu.memory_space<vmem>>, vector<80x128xf32>
    tpu.vector_store %arg17[%c0_169, %c0_170], %176 {strides = array<i32>} : memref<80x128xf32, #tpu.memory_space<vmem>>, vector<80x128xf32>,
    %c10 = arith.constant 10 : index
    %c0_171 = arith.constant 0 : index
    %178 = vector.load %arg13[%c10, %c0_171] : memref<110x128xf32, #tpu.memory_space<vmem>>, vector<80x128xf32>
    %179 = arith.truncf %178 : vector<80x128xf32> to vector<80x128xbf16>
    %c3_172 = arith.constant 3 : index
    %c0_173 = arith.constant 0 : index
    %c0_174 = arith.constant 0 : index
    %180 = vector.load %arg4[%c3_172, %c0_173, %c0_174] : memref<9x128x128xbf16, #tpu.memory_space<vmem>>, vector<1x128x128xbf16>
    %181 = vector.shape_cast %180 : vector<1x128x128xbf16> to vector<128x128xbf16>
    %cst_175 = arith.constant dense<0.000000e+00> : vector<80x128xf32>
    %182 = tpu.matmul %179, %181, %cst_175 {dimension_numbers = #tpu.dot_dimension_numbers<[1], [0], [0], [1], [0, 0, 1, 1], [], []>} : vector<80x128xbf16>, vector<128x128xbf16>, vector<80x128xf32> -> vector<80x128xf32>
    %c0_176 = arith.constant 0 : index
    %c0_177 = arith.constant 0 : index
    %183 = vector.load %arg17[%c0_176, %c0_177] : memref<80x128xf32, #tpu.memory_space<vmem>>, vector<80x128xf32>
    %184 = arith.addf %183, %182 : vector<80x128xf32>
    %c0_178 = arith.constant 0 : index
    %c0_179 = arith.constant 0 : index
    %185 = vector.load %arg17[%c0_178, %c0_179] : memref<80x128xf32, #tpu.memory_space<vmem>>, vector<80x128xf32>
    tpu.vector_store %arg17[%c0_178, %c0_179], %184 {strides = array<i32>} : memref<80x128xf32, #tpu.memory_space<vmem>>, vector<80x128xf32>,
    %c11_180 = arith.constant 11 : index
    %c0_181 = arith.constant 0 : index
    %186 = vector.load %arg13[%c11_180, %c0_181] : memref<110x128xf32, #tpu.memory_space<vmem>>, vector<80x128xf32>
    %187 = arith.truncf %186 : vector<80x128xf32> to vector<80x128xbf16>
    %c4_182 = arith.constant 4 : index
    %c0_183 = arith.constant 0 : index
    %c0_184 = arith.constant 0 : index
    %188 = vector.load %arg4[%c4_182, %c0_183, %c0_184] : memref<9x128x128xbf16, #tpu.memory_space<vmem>>, vector<1x128x128xbf16>
    %189 = vector.shape_cast %188 : vector<1x128x128xbf16> to vector<128x128xbf16>
    %cst_185 = arith.constant dense<0.000000e+00> : vector<80x128xf32>
    %190 = tpu.matmul %187, %189, %cst_185 {dimension_numbers = #tpu.dot_dimension_numbers<[1], [0], [0], [1], [0, 0, 1, 1], [], []>} : vector<80x128xbf16>, vector<128x128xbf16>, vector<80x128xf32> -> vector<80x128xf32>
    %c0_186 = arith.constant 0 : index
    %c0_187 = arith.constant 0 : index
    %191 = vector.load %arg17[%c0_186, %c0_187] : memref<80x128xf32, #tpu.memory_space<vmem>>, vector<80x128xf32>
    %192 = arith.addf %191, %190 : vector<80x128xf32>
    %c0_188 = arith.constant 0 : index
    %c0_189 = arith.constant 0 : index
    %193 = vector.load %arg17[%c0_188, %c0_189] : memref<80x128xf32, #tpu.memory_space<vmem>>, vector<80x128xf32>
    tpu.vector_store %arg17[%c0_188, %c0_189], %192 {strides = array<i32>} : memref<80x128xf32, #tpu.memory_space<vmem>>, vector<80x128xf32>,
    %c12 = arith.constant 12 : index
    %c0_190 = arith.constant 0 : index
    %194 = vector.load %arg13[%c12, %c0_190] : memref<110x128xf32, #tpu.memory_space<vmem>>, vector<80x128xf32>
    %195 = arith.truncf %194 : vector<80x128xf32> to vector<80x128xbf16>
    %c5_191 = arith.constant 5 : index
    %c0_192 = arith.constant 0 : index
    %c0_193 = arith.constant 0 : index
    %196 = vector.load %arg4[%c5_191, %c0_192, %c0_193] : memref<9x128x128xbf16, #tpu.memory_space<vmem>>, vector<1x128x128xbf16>
    %197 = vector.shape_cast %196 : vector<1x128x128xbf16> to vector<128x128xbf16>
    %cst_194 = arith.constant dense<0.000000e+00> : vector<80x128xf32>
    %198 = tpu.matmul %195, %197, %cst_194 {dimension_numbers = #tpu.dot_dimension_numbers<[1], [0], [0], [1], [0, 0, 1, 1], [], []>} : vector<80x128xbf16>, vector<128x128xbf16>, vector<80x128xf32> -> vector<80x128xf32>
    %c0_195 = arith.constant 0 : index
    %c0_196 = arith.constant 0 : index
    %199 = vector.load %arg17[%c0_195, %c0_196] : memref<80x128xf32, #tpu.memory_space<vmem>>, vector<80x128xf32>
    %200 = arith.addf %199, %198 : vector<80x128xf32>
    %c0_197 = arith.constant 0 : index
    %c0_198 = arith.constant 0 : index
    %201 = vector.load %arg17[%c0_197, %c0_198] : memref<80x128xf32, #tpu.memory_space<vmem>>, vector<80x128xf32>
    tpu.vector_store %arg17[%c0_197, %c0_198], %200 {strides = array<i32>} : memref<80x128xf32, #tpu.memory_space<vmem>>, vector<80x128xf32>,
    %c20_199 = arith.constant 20 : index
    %c0_200 = arith.constant 0 : index
    %202 = vector.load %arg13[%c20_199, %c0_200] : memref<110x128xf32, #tpu.memory_space<vmem>>, vector<80x128xf32>
    %203 = arith.truncf %202 : vector<80x128xf32> to vector<80x128xbf16>
    %c6_201 = arith.constant 6 : index
    %c0_202 = arith.constant 0 : index
    %c0_203 = arith.constant 0 : index
    %204 = vector.load %arg4[%c6_201, %c0_202, %c0_203] : memref<9x128x128xbf16, #tpu.memory_space<vmem>>, vector<1x128x128xbf16>
    %205 = vector.shape_cast %204 : vector<1x128x128xbf16> to vector<128x128xbf16>
    %cst_204 = arith.constant dense<0.000000e+00> : vector<80x128xf32>
    %206 = tpu.matmul %203, %205, %cst_204 {dimension_numbers = #tpu.dot_dimension_numbers<[1], [0], [0], [1], [0, 0, 1, 1], [], []>} : vector<80x128xbf16>, vector<128x128xbf16>, vector<80x128xf32> -> vector<80x128xf32>
    %c0_205 = arith.constant 0 : index
    %c0_206 = arith.constant 0 : index
    %207 = vector.load %arg17[%c0_205, %c0_206] : memref<80x128xf32, #tpu.memory_space<vmem>>, vector<80x128xf32>
    %208 = arith.addf %207, %206 : vector<80x128xf32>
    %c0_207 = arith.constant 0 : index
    %c0_208 = arith.constant 0 : index
    %209 = vector.load %arg17[%c0_207, %c0_208] : memref<80x128xf32, #tpu.memory_space<vmem>>, vector<80x128xf32>
    tpu.vector_store %arg17[%c0_207, %c0_208], %208 {strides = array<i32>} : memref<80x128xf32, #tpu.memory_space<vmem>>, vector<80x128xf32>,
    %c21_209 = arith.constant 21 : index
    %c0_210 = arith.constant 0 : index
    %210 = vector.load %arg13[%c21_209, %c0_210] : memref<110x128xf32, #tpu.memory_space<vmem>>, vector<80x128xf32>
    %211 = arith.truncf %210 : vector<80x128xf32> to vector<80x128xbf16>
    %c7_211 = arith.constant 7 : index
    %c0_212 = arith.constant 0 : index
    %c0_213 = arith.constant 0 : index
    %212 = vector.load %arg4[%c7_211, %c0_212, %c0_213] : memref<9x128x128xbf16, #tpu.memory_space<vmem>>, vector<1x128x128xbf16>
    %213 = vector.shape_cast %212 : vector<1x128x128xbf16> to vector<128x128xbf16>
    %cst_214 = arith.constant dense<0.000000e+00> : vector<80x128xf32>
    %214 = tpu.matmul %211, %213, %cst_214 {dimension_numbers = #tpu.dot_dimension_numbers<[1], [0], [0], [1], [0, 0, 1, 1], [], []>} : vector<80x128xbf16>, vector<128x128xbf16>, vector<80x128xf32> -> vector<80x128xf32>
    %c0_215 = arith.constant 0 : index
    %c0_216 = arith.constant 0 : index
    %215 = vector.load %arg17[%c0_215, %c0_216] : memref<80x128xf32, #tpu.memory_space<vmem>>, vector<80x128xf32>
    %216 = arith.addf %215, %214 : vector<80x128xf32>
    %c0_217 = arith.constant 0 : index
    %c0_218 = arith.constant 0 : index
    %217 = vector.load %arg17[%c0_217, %c0_218] : memref<80x128xf32, #tpu.memory_space<vmem>>, vector<80x128xf32>
    tpu.vector_store %arg17[%c0_217, %c0_218], %216 {strides = array<i32>} : memref<80x128xf32, #tpu.memory_space<vmem>>, vector<80x128xf32>,
    %c22 = arith.constant 22 : index
    %c0_219 = arith.constant 0 : index
    %218 = vector.load %arg13[%c22, %c0_219] : memref<110x128xf32, #tpu.memory_space<vmem>>, vector<80x128xf32>
    %219 = arith.truncf %218 : vector<80x128xf32> to vector<80x128xbf16>
    %c8_220 = arith.constant 8 : index
    %c0_221 = arith.constant 0 : index
    %c0_222 = arith.constant 0 : index
    %220 = vector.load %arg4[%c8_220, %c0_221, %c0_222] : memref<9x128x128xbf16, #tpu.memory_space<vmem>>, vector<1x128x128xbf16>
    %221 = vector.shape_cast %220 : vector<1x128x128xbf16> to vector<128x128xbf16>
    %cst_223 = arith.constant dense<0.000000e+00> : vector<80x128xf32>
    %222 = tpu.matmul %219, %221, %cst_223 {dimension_numbers = #tpu.dot_dimension_numbers<[1], [0], [0], [1], [0, 0, 1, 1], [], []>} : vector<80x128xbf16>, vector<128x128xbf16>, vector<80x128xf32> -> vector<80x128xf32>
    %c0_224 = arith.constant 0 : index
    %c0_225 = arith.constant 0 : index
    %223 = vector.load %arg17[%c0_224, %c0_225] : memref<80x128xf32, #tpu.memory_space<vmem>>, vector<80x128xf32>
    %224 = arith.addf %223, %222 : vector<80x128xf32>
    %c0_226 = arith.constant 0 : index
    %c0_227 = arith.constant 0 : index
    %225 = vector.load %arg17[%c0_226, %c0_227] : memref<80x128xf32, #tpu.memory_space<vmem>>, vector<80x128xf32>
    tpu.vector_store %arg17[%c0_226, %c0_227], %224 {strides = array<i32>} : memref<80x128xf32, #tpu.memory_space<vmem>>, vector<80x128xf32>,
    %c0_228 = arith.constant 0 : index
    %c0_229 = arith.constant 0 : index
    %226 = vector.load %arg17[%c0_228, %c0_229] : memref<80x128xf32, #tpu.memory_space<vmem>>, vector<80x128xf32>
    %c0_230 = arith.constant 0 : index
    %c0_231 = arith.constant 0 : index
    %227 = vector.load %arg5[%c0_230, %c0_231] : memref<1x128xf32, #tpu.memory_space<vmem>>, vector<1x128xf32>
    %228 = vector.broadcast %227 : vector<1x128xf32> to vector<80x128xf32>
    %229 = arith.addf %226, %228 : vector<80x128xf32>
    %cst_232 = arith.constant 0.000000e+00 : f32
    %230 = vector.broadcast %cst_232 : f32 to vector<80x128xf32>
    %231 = arith.maximumf %229, %230 : vector<80x128xf32>
    %c0_233 = arith.constant 0 : index
    %c0_234 = arith.constant 0 : index
    %232 = vector.load %arg17[%c0_233, %c0_234] : memref<80x128xf32, #tpu.memory_space<vmem>>, vector<80x128xf32>
    tpu.vector_store %arg17[%c0_233, %c0_234], %231 {strides = array<i32>} : memref<80x128xf32, #tpu.memory_space<vmem>>, vector<80x128xf32>,
    %c0_235 = arith.constant 0 : index
    %c0_236 = arith.constant 0 : index
    %233 = tpu.strided_load %arg17[%c0_235, %c0_236] {strides = array<i32: 2, 1>} : memref<80x128xf32, #tpu.memory_space<vmem>>, vector<4x128xf32>
    %c1_237 = arith.constant 1 : index
    %c0_238 = arith.constant 0 : index
    %234 = tpu.strided_load %arg17[%c1_237, %c0_238] {strides = array<i32: 2, 1>} : memref<80x128xf32, #tpu.memory_space<vmem>>, vector<4x128xf32>
    %c10_239 = arith.constant 10 : index
    %c0_240 = arith.constant 0 : index
    %235 = tpu.strided_load %arg17[%c10_239, %c0_240] {strides = array<i32: 2, 1>} : memref<80x128xf32, #tpu.memory_space<vmem>>, vector<4x128xf32>
    %c11_241 = arith.constant 11 : index
    %c0_242 = arith.constant 0 : index
    %236 = tpu.strided_load %arg17[%c11_241, %c0_242] {strides = array<i32: 2, 1>} : memref<80x128xf32, #tpu.memory_space<vmem>>, vector<4x128xf32>
    %237 = arith.maximumf %233, %234 : vector<4x128xf32>
    %238 = arith.maximumf %235, %236 : vector<4x128xf32>
    %239 = arith.maximumf %237, %238 : vector<4x128xf32>
    %c7_243 = arith.constant 7 : index
    %c0_244 = arith.constant 0 : index
    %240 = vector.load %arg14[%c7_243, %c0_244] : memref<42x128xf32, #tpu.memory_space<vmem>>, vector<4x128xf32>
    tpu.vector_store %arg14[%c7_243, %c0_244], %239 {strides = array<i32>} : memref<42x128xf32, #tpu.memory_space<vmem>>, vector<4x128xf32>,
    %c20_245 = arith.constant 20 : index
    %c0_246 = arith.constant 0 : index
    %241 = tpu.strided_load %arg17[%c20_245, %c0_246] {strides = array<i32: 2, 1>} : memref<80x128xf32, #tpu.memory_space<vmem>>, vector<4x128xf32>
    %c21_247 = arith.constant 21 : index
    %c0_248 = arith.constant 0 : index
    %242 = tpu.strided_load %arg17[%c21_247, %c0_248] {strides = array<i32: 2, 1>} : memref<80x128xf32, #tpu.memory_space<vmem>>, vector<4x128xf32>
    %c30 = arith.constant 30 : index
    %c0_249 = arith.constant 0 : index
    %243 = tpu.strided_load %arg17[%c30, %c0_249] {strides = array<i32: 2, 1>} : memref<80x128xf32, #tpu.memory_space<vmem>>, vector<4x128xf32>
    %c31_250 = arith.constant 31 : index
    %c0_251 = arith.constant 0 : index
    %244 = tpu.strided_load %arg17[%c31_250, %c0_251] {strides = array<i32: 2, 1>} : memref<80x128xf32, #tpu.memory_space<vmem>>, vector<4x128xf32>
    %245 = arith.maximumf %241, %242 : vector<4x128xf32>
    %246 = arith.maximumf %243, %244 : vector<4x128xf32>
    %247 = arith.maximumf %245, %246 : vector<4x128xf32>
    %c13 = arith.constant 13 : index
    %c0_252 = arith.constant 0 : index
    %248 = vector.load %arg14[%c13, %c0_252] : memref<42x128xf32, #tpu.memory_space<vmem>>, vector<4x128xf32>
    tpu.vector_store %arg14[%c13, %c0_252], %247 {strides = array<i32>} : memref<42x128xf32, #tpu.memory_space<vmem>>, vector<4x128xf32>,
    %c40 = arith.constant 40 : index
    %c0_253 = arith.constant 0 : index
    %249 = tpu.strided_load %arg17[%c40, %c0_253] {strides = array<i32: 2, 1>} : memref<80x128xf32, #tpu.memory_space<vmem>>, vector<4x128xf32>
    %c41_254 = arith.constant 41 : index
    %c0_255 = arith.constant 0 : index
    %250 = tpu.strided_load %arg17[%c41_254, %c0_255] {strides = array<i32: 2, 1>} : memref<80x128xf32, #tpu.memory_space<vmem>>, vector<4x128xf32>
    %c50 = arith.constant 50 : index
    %c0_256 = arith.constant 0 : index
    %251 = tpu.strided_load %arg17[%c50, %c0_256] {strides = array<i32: 2, 1>} : memref<80x128xf32, #tpu.memory_space<vmem>>, vector<4x128xf32>
    %c51_257 = arith.constant 51 : index
    %c0_258 = arith.constant 0 : index
    %252 = tpu.strided_load %arg17[%c51_257, %c0_258] {strides = array<i32: 2, 1>} : memref<80x128xf32, #tpu.memory_space<vmem>>, vector<4x128xf32>
    %253 = arith.maximumf %249, %250 : vector<4x128xf32>
    %254 = arith.maximumf %251, %252 : vector<4x128xf32>
    %255 = arith.maximumf %253, %254 : vector<4x128xf32>
    %c19_259 = arith.constant 19 : index
    %c0_260 = arith.constant 0 : index
    %256 = vector.load %arg14[%c19_259, %c0_260] : memref<42x128xf32, #tpu.memory_space<vmem>>, vector<4x128xf32>
    tpu.vector_store %arg14[%c19_259, %c0_260], %255 {strides = array<i32>} : memref<42x128xf32, #tpu.memory_space<vmem>>, vector<4x128xf32>,
    %c60 = arith.constant 60 : index
    %c0_261 = arith.constant 0 : index
    %257 = tpu.strided_load %arg17[%c60, %c0_261] {strides = array<i32: 2, 1>} : memref<80x128xf32, #tpu.memory_space<vmem>>, vector<4x128xf32>
    %c61_262 = arith.constant 61 : index
    %c0_263 = arith.constant 0 : index
    %258 = tpu.strided_load %arg17[%c61_262, %c0_263] {strides = array<i32: 2, 1>} : memref<80x128xf32, #tpu.memory_space<vmem>>, vector<4x128xf32>
    %c70 = arith.constant 70 : index
    %c0_264 = arith.constant 0 : index
    %259 = tpu.strided_load %arg17[%c70, %c0_264] {strides = array<i32: 2, 1>} : memref<80x128xf32, #tpu.memory_space<vmem>>, vector<4x128xf32>
    %c71_265 = arith.constant 71 : index
    %c0_266 = arith.constant 0 : index
    %260 = tpu.strided_load %arg17[%c71_265, %c0_266] {strides = array<i32: 2, 1>} : memref<80x128xf32, #tpu.memory_space<vmem>>, vector<4x128xf32>
    %261 = arith.maximumf %257, %258 : vector<4x128xf32>
    %262 = arith.maximumf %259, %260 : vector<4x128xf32>
    %263 = arith.maximumf %261, %262 : vector<4x128xf32>
    %c25 = arith.constant 25 : index
    %c0_267 = arith.constant 0 : index
    %264 = vector.load %arg14[%c25, %c0_267] : memref<42x128xf32, #tpu.memory_space<vmem>>, vector<4x128xf32>
    tpu.vector_store %arg14[%c25, %c0_267], %263 {strides = array<i32>} : memref<42x128xf32, #tpu.memory_space<vmem>>, vector<4x128xf32>,
    %c0_268 = arith.constant 0 : index
    %c0_269 = arith.constant 0 : index
    %265 = vector.load %arg14[%c0_268, %c0_269] : memref<42x128xf32, #tpu.memory_space<vmem>>, vector<24x128xf32>
    %266 = arith.truncf %265 : vector<24x128xf32> to vector<24x128xbf16>
    %c0_270 = arith.constant 0 : index
    %c0_271 = arith.constant 0 : index
    %c0_272 = arith.constant 0 : index
    %267 = vector.load %arg6[%c0_270, %c0_271, %c0_272] : memref<9x128x128xbf16, #tpu.memory_space<vmem>>, vector<1x128x128xbf16>
    %268 = vector.shape_cast %267 : vector<1x128x128xbf16> to vector<128x128xbf16>
    %cst_273 = arith.constant dense<0.000000e+00> : vector<24x128xf32>
    %269 = tpu.matmul %266, %268, %cst_273 {dimension_numbers = #tpu.dot_dimension_numbers<[1], [0], [0], [1], [0, 0, 1, 1], [], []>} : vector<24x128xbf16>, vector<128x128xbf16>, vector<24x128xf32> -> vector<24x128xf32>
    %c0_274 = arith.constant 0 : index
    %c0_275 = arith.constant 0 : index
    %270 = vector.load %arg18[%c0_274, %c0_275] : memref<24x128xf32, #tpu.memory_space<vmem>>, vector<24x128xf32>
    tpu.vector_store %arg18[%c0_274, %c0_275], %269 {strides = array<i32>} : memref<24x128xf32, #tpu.memory_space<vmem>>, vector<24x128xf32>,
    %c1_276 = arith.constant 1 : index
    %c0_277 = arith.constant 0 : index
    %271 = vector.load %arg14[%c1_276, %c0_277] : memref<42x128xf32, #tpu.memory_space<vmem>>, vector<24x128xf32>
    %272 = arith.truncf %271 : vector<24x128xf32> to vector<24x128xbf16>
    %c1_278 = arith.constant 1 : index
    %c0_279 = arith.constant 0 : index
    %c0_280 = arith.constant 0 : index
    %273 = vector.load %arg6[%c1_278, %c0_279, %c0_280] : memref<9x128x128xbf16, #tpu.memory_space<vmem>>, vector<1x128x128xbf16>
    %274 = vector.shape_cast %273 : vector<1x128x128xbf16> to vector<128x128xbf16>
    %cst_281 = arith.constant dense<0.000000e+00> : vector<24x128xf32>
    %275 = tpu.matmul %272, %274, %cst_281 {dimension_numbers = #tpu.dot_dimension_numbers<[1], [0], [0], [1], [0, 0, 1, 1], [], []>} : vector<24x128xbf16>, vector<128x128xbf16>, vector<24x128xf32> -> vector<24x128xf32>
    %c0_282 = arith.constant 0 : index
    %c0_283 = arith.constant 0 : index
    %276 = vector.load %arg18[%c0_282, %c0_283] : memref<24x128xf32, #tpu.memory_space<vmem>>, vector<24x128xf32>
    %277 = arith.addf %276, %275 : vector<24x128xf32>
    %c0_284 = arith.constant 0 : index
    %c0_285 = arith.constant 0 : index
    %278 = vector.load %arg18[%c0_284, %c0_285] : memref<24x128xf32, #tpu.memory_space<vmem>>, vector<24x128xf32>
    tpu.vector_store %arg18[%c0_284, %c0_285], %277 {strides = array<i32>} : memref<24x128xf32, #tpu.memory_space<vmem>>, vector<24x128xf32>,
    %c2_286 = arith.constant 2 : index
    %c0_287 = arith.constant 0 : index
    %279 = vector.load %arg14[%c2_286, %c0_287] : memref<42x128xf32, #tpu.memory_space<vmem>>, vector<24x128xf32>
    %280 = arith.truncf %279 : vector<24x128xf32> to vector<24x128xbf16>
    %c2_288 = arith.constant 2 : index
    %c0_289 = arith.constant 0 : index
    %c0_290 = arith.constant 0 : index
    %281 = vector.load %arg6[%c2_288, %c0_289, %c0_290] : memref<9x128x128xbf16, #tpu.memory_space<vmem>>, vector<1x128x128xbf16>
    %282 = vector.shape_cast %281 : vector<1x128x128xbf16> to vector<128x128xbf16>
    %cst_291 = arith.constant dense<0.000000e+00> : vector<24x128xf32>
    %283 = tpu.matmul %280, %282, %cst_291 {dimension_numbers = #tpu.dot_dimension_numbers<[1], [0], [0], [1], [0, 0, 1, 1], [], []>} : vector<24x128xbf16>, vector<128x128xbf16>, vector<24x128xf32> -> vector<24x128xf32>
    %c0_292 = arith.constant 0 : index
    %c0_293 = arith.constant 0 : index
    %284 = vector.load %arg18[%c0_292, %c0_293] : memref<24x128xf32, #tpu.memory_space<vmem>>, vector<24x128xf32>
    %285 = arith.addf %284, %283 : vector<24x128xf32>
    %c0_294 = arith.constant 0 : index
    %c0_295 = arith.constant 0 : index
    %286 = vector.load %arg18[%c0_294, %c0_295] : memref<24x128xf32, #tpu.memory_space<vmem>>, vector<24x128xf32>
    tpu.vector_store %arg18[%c0_294, %c0_295], %285 {strides = array<i32>} : memref<24x128xf32, #tpu.memory_space<vmem>>, vector<24x128xf32>,
    %c6_296 = arith.constant 6 : index
    %c0_297 = arith.constant 0 : index
    %287 = vector.load %arg14[%c6_296, %c0_297] : memref<42x128xf32, #tpu.memory_space<vmem>>, vector<24x128xf32>
    %288 = arith.truncf %287 : vector<24x128xf32> to vector<24x128xbf16>
    %c3_298 = arith.constant 3 : index
    %c0_299 = arith.constant 0 : index
    %c0_300 = arith.constant 0 : index
    %289 = vector.load %arg6[%c3_298, %c0_299, %c0_300] : memref<9x128x128xbf16, #tpu.memory_space<vmem>>, vector<1x128x128xbf16>
    %290 = vector.shape_cast %289 : vector<1x128x128xbf16> to vector<128x128xbf16>
    %cst_301 = arith.constant dense<0.000000e+00> : vector<24x128xf32>
    %291 = tpu.matmul %288, %290, %cst_301 {dimension_numbers = #tpu.dot_dimension_numbers<[1], [0], [0], [1], [0, 0, 1, 1], [], []>} : vector<24x128xbf16>, vector<128x128xbf16>, vector<24x128xf32> -> vector<24x128xf32>
    %c0_302 = arith.constant 0 : index
    %c0_303 = arith.constant 0 : index
    %292 = vector.load %arg18[%c0_302, %c0_303] : memref<24x128xf32, #tpu.memory_space<vmem>>, vector<24x128xf32>
    %293 = arith.addf %292, %291 : vector<24x128xf32>
    %c0_304 = arith.constant 0 : index
    %c0_305 = arith.constant 0 : index
    %294 = vector.load %arg18[%c0_304, %c0_305] : memref<24x128xf32, #tpu.memory_space<vmem>>, vector<24x128xf32>
    tpu.vector_store %arg18[%c0_304, %c0_305], %293 {strides = array<i32>} : memref<24x128xf32, #tpu.memory_space<vmem>>, vector<24x128xf32>,
    %c7_306 = arith.constant 7 : index
    %c0_307 = arith.constant 0 : index
    %295 = vector.load %arg14[%c7_306, %c0_307] : memref<42x128xf32, #tpu.memory_space<vmem>>, vector<24x128xf32>
    %296 = arith.truncf %295 : vector<24x128xf32> to vector<24x128xbf16>
    %c4_308 = arith.constant 4 : index
    %c0_309 = arith.constant 0 : index
    %c0_310 = arith.constant 0 : index
    %297 = vector.load %arg6[%c4_308, %c0_309, %c0_310] : memref<9x128x128xbf16, #tpu.memory_space<vmem>>, vector<1x128x128xbf16>
    %298 = vector.shape_cast %297 : vector<1x128x128xbf16> to vector<128x128xbf16>
    %cst_311 = arith.constant dense<0.000000e+00> : vector<24x128xf32>
    %299 = tpu.matmul %296, %298, %cst_311 {dimension_numbers = #tpu.dot_dimension_numbers<[1], [0], [0], [1], [0, 0, 1, 1], [], []>} : vector<24x128xbf16>, vector<128x128xbf16>, vector<24x128xf32> -> vector<24x128xf32>
    %c0_312 = arith.constant 0 : index
    %c0_313 = arith.constant 0 : index
    %300 = vector.load %arg18[%c0_312, %c0_313] : memref<24x128xf32, #tpu.memory_space<vmem>>, vector<24x128xf32>
    %301 = arith.addf %300, %299 : vector<24x128xf32>
    %c0_314 = arith.constant 0 : index
    %c0_315 = arith.constant 0 : index
    %302 = vector.load %arg18[%c0_314, %c0_315] : memref<24x128xf32, #tpu.memory_space<vmem>>, vector<24x128xf32>
    tpu.vector_store %arg18[%c0_314, %c0_315], %301 {strides = array<i32>} : memref<24x128xf32, #tpu.memory_space<vmem>>, vector<24x128xf32>,
    %c8_316 = arith.constant 8 : index
    %c0_317 = arith.constant 0 : index
    %303 = vector.load %arg14[%c8_316, %c0_317] : memref<42x128xf32, #tpu.memory_space<vmem>>, vector<24x128xf32>
    %304 = arith.truncf %303 : vector<24x128xf32> to vector<24x128xbf16>
    %c5_318 = arith.constant 5 : index
    %c0_319 = arith.constant 0 : index
    %c0_320 = arith.constant 0 : index
    %305 = vector.load %arg6[%c5_318, %c0_319, %c0_320] : memref<9x128x128xbf16, #tpu.memory_space<vmem>>, vector<1x128x128xbf16>
    %306 = vector.shape_cast %305 : vector<1x128x128xbf16> to vector<128x128xbf16>
    %cst_321 = arith.constant dense<0.000000e+00> : vector<24x128xf32>
    %307 = tpu.matmul %304, %306, %cst_321 {dimension_numbers = #tpu.dot_dimension_numbers<[1], [0], [0], [1], [0, 0, 1, 1], [], []>} : vector<24x128xbf16>, vector<128x128xbf16>, vector<24x128xf32> -> vector<24x128xf32>
    %c0_322 = arith.constant 0 : index
    %c0_323 = arith.constant 0 : index
    %308 = vector.load %arg18[%c0_322, %c0_323] : memref<24x128xf32, #tpu.memory_space<vmem>>, vector<24x128xf32>
    %309 = arith.addf %308, %307 : vector<24x128xf32>
    %c0_324 = arith.constant 0 : index
    %c0_325 = arith.constant 0 : index
    %310 = vector.load %arg18[%c0_324, %c0_325] : memref<24x128xf32, #tpu.memory_space<vmem>>, vector<24x128xf32>
    tpu.vector_store %arg18[%c0_324, %c0_325], %309 {strides = array<i32>} : memref<24x128xf32, #tpu.memory_space<vmem>>, vector<24x128xf32>,
    %c12_326 = arith.constant 12 : index
    %c0_327 = arith.constant 0 : index
    %311 = vector.load %arg14[%c12_326, %c0_327] : memref<42x128xf32, #tpu.memory_space<vmem>>, vector<24x128xf32>
    %312 = arith.truncf %311 : vector<24x128xf32> to vector<24x128xbf16>
    %c6_328 = arith.constant 6 : index
    %c0_329 = arith.constant 0 : index
    %c0_330 = arith.constant 0 : index
    %313 = vector.load %arg6[%c6_328, %c0_329, %c0_330] : memref<9x128x128xbf16, #tpu.memory_space<vmem>>, vector<1x128x128xbf16>
    %314 = vector.shape_cast %313 : vector<1x128x128xbf16> to vector<128x128xbf16>
    %cst_331 = arith.constant dense<0.000000e+00> : vector<24x128xf32>
    %315 = tpu.matmul %312, %314, %cst_331 {dimension_numbers = #tpu.dot_dimension_numbers<[1], [0], [0], [1], [0, 0, 1, 1], [], []>} : vector<24x128xbf16>, vector<128x128xbf16>, vector<24x128xf32> -> vector<24x128xf32>
    %c0_332 = arith.constant 0 : index
    %c0_333 = arith.constant 0 : index
    %316 = vector.load %arg18[%c0_332, %c0_333] : memref<24x128xf32, #tpu.memory_space<vmem>>, vector<24x128xf32>
    %317 = arith.addf %316, %315 : vector<24x128xf32>
    %c0_334 = arith.constant 0 : index
    %c0_335 = arith.constant 0 : index
    %318 = vector.load %arg18[%c0_334, %c0_335] : memref<24x128xf32, #tpu.memory_space<vmem>>, vector<24x128xf32>
    tpu.vector_store %arg18[%c0_334, %c0_335], %317 {strides = array<i32>} : memref<24x128xf32, #tpu.memory_space<vmem>>, vector<24x128xf32>,
    %c13_336 = arith.constant 13 : index
    %c0_337 = arith.constant 0 : index
    %319 = vector.load %arg14[%c13_336, %c0_337] : memref<42x128xf32, #tpu.memory_space<vmem>>, vector<24x128xf32>
    %320 = arith.truncf %319 : vector<24x128xf32> to vector<24x128xbf16>
    %c7_338 = arith.constant 7 : index
    %c0_339 = arith.constant 0 : index
    %c0_340 = arith.constant 0 : index
    %321 = vector.load %arg6[%c7_338, %c0_339, %c0_340] : memref<9x128x128xbf16, #tpu.memory_space<vmem>>, vector<1x128x128xbf16>
    %322 = vector.shape_cast %321 : vector<1x128x128xbf16> to vector<128x128xbf16>
    %cst_341 = arith.constant dense<0.000000e+00> : vector<24x128xf32>
    %323 = tpu.matmul %320, %322, %cst_341 {dimension_numbers = #tpu.dot_dimension_numbers<[1], [0], [0], [1], [0, 0, 1, 1], [], []>} : vector<24x128xbf16>, vector<128x128xbf16>, vector<24x128xf32> -> vector<24x128xf32>
    %c0_342 = arith.constant 0 : index
    %c0_343 = arith.constant 0 : index
    %324 = vector.load %arg18[%c0_342, %c0_343] : memref<24x128xf32, #tpu.memory_space<vmem>>, vector<24x128xf32>
    %325 = arith.addf %324, %323 : vector<24x128xf32>
    %c0_344 = arith.constant 0 : index
    %c0_345 = arith.constant 0 : index
    %326 = vector.load %arg18[%c0_344, %c0_345] : memref<24x128xf32, #tpu.memory_space<vmem>>, vector<24x128xf32>
    tpu.vector_store %arg18[%c0_344, %c0_345], %325 {strides = array<i32>} : memref<24x128xf32, #tpu.memory_space<vmem>>, vector<24x128xf32>,
    %c14 = arith.constant 14 : index
    %c0_346 = arith.constant 0 : index
    %327 = vector.load %arg14[%c14, %c0_346] : memref<42x128xf32, #tpu.memory_space<vmem>>, vector<24x128xf32>
    %328 = arith.truncf %327 : vector<24x128xf32> to vector<24x128xbf16>
    %c8_347 = arith.constant 8 : index
    %c0_348 = arith.constant 0 : index
    %c0_349 = arith.constant 0 : index
    %329 = vector.load %arg6[%c8_347, %c0_348, %c0_349] : memref<9x128x128xbf16, #tpu.memory_space<vmem>>, vector<1x128x128xbf16>
    %330 = vector.shape_cast %329 : vector<1x128x128xbf16> to vector<128x128xbf16>
    %cst_350 = arith.constant dense<0.000000e+00> : vector<24x128xf32>
    %331 = tpu.matmul %328, %330, %cst_350 {dimension_numbers = #tpu.dot_dimension_numbers<[1], [0], [0], [1], [0, 0, 1, 1], [], []>} : vector<24x128xbf16>, vector<128x128xbf16>, vector<24x128xf32> -> vector<24x128xf32>
    %c0_351 = arith.constant 0 : index
    %c0_352 = arith.constant 0 : index
    %332 = vector.load %arg18[%c0_351, %c0_352] : memref<24x128xf32, #tpu.memory_space<vmem>>, vector<24x128xf32>
    %333 = arith.addf %332, %331 : vector<24x128xf32>
    %c0_353 = arith.constant 0 : index
    %c0_354 = arith.constant 0 : index
    %334 = vector.load %arg18[%c0_353, %c0_354] : memref<24x128xf32, #tpu.memory_space<vmem>>, vector<24x128xf32>
    tpu.vector_store %arg18[%c0_353, %c0_354], %333 {strides = array<i32>} : memref<24x128xf32, #tpu.memory_space<vmem>>, vector<24x128xf32>,
    %c0_355 = arith.constant 0 : index
    %c0_356 = arith.constant 0 : index
    %335 = vector.load %arg18[%c0_355, %c0_356] : memref<24x128xf32, #tpu.memory_space<vmem>>, vector<24x128xf32>
    %c0_357 = arith.constant 0 : index
    %c0_358 = arith.constant 0 : index
    %336 = vector.load %arg7[%c0_357, %c0_358] : memref<1x128xf32, #tpu.memory_space<vmem>>, vector<1x128xf32>
    %337 = vector.broadcast %336 : vector<1x128xf32> to vector<24x128xf32>
    %338 = arith.addf %335, %337 : vector<24x128xf32>
    %cst_359 = arith.constant 0.000000e+00 : f32
    %339 = vector.broadcast %cst_359 : f32 to vector<24x128xf32>
    %340 = arith.maximumf %338, %339 : vector<24x128xf32>
    %c0_360 = arith.constant 0 : index
    %c0_361 = arith.constant 0 : index
    %341 = vector.load %arg18[%c0_360, %c0_361] : memref<24x128xf32, #tpu.memory_space<vmem>>, vector<24x128xf32>
    tpu.vector_store %arg18[%c0_360, %c0_361], %340 {strides = array<i32>} : memref<24x128xf32, #tpu.memory_space<vmem>>, vector<24x128xf32>,
    %c0_362 = arith.constant 0 : index
    %c0_363 = arith.constant 0 : index
    %342 = tpu.strided_load %arg18[%c0_362, %c0_363] {strides = array<i32: 2, 1>} : memref<24x128xf32, #tpu.memory_space<vmem>>, vector<2x128xf32>
    %c1_364 = arith.constant 1 : index
    %c0_365 = arith.constant 0 : index
    %343 = tpu.strided_load %arg18[%c1_364, %c0_365] {strides = array<i32: 2, 1>} : memref<24x128xf32, #tpu.memory_space<vmem>>, vector<2x128xf32>
    %c6_366 = arith.constant 6 : index
    %c0_367 = arith.constant 0 : index
    %344 = tpu.strided_load %arg18[%c6_366, %c0_367] {strides = array<i32: 2, 1>} : memref<24x128xf32, #tpu.memory_space<vmem>>, vector<2x128xf32>
    %c7_368 = arith.constant 7 : index
    %c0_369 = arith.constant 0 : index
    %345 = tpu.strided_load %arg18[%c7_368, %c0_369] {strides = array<i32: 2, 1>} : memref<24x128xf32, #tpu.memory_space<vmem>>, vector<2x128xf32>
    %346 = arith.maximumf %342, %343 : vector<2x128xf32>
    %347 = arith.maximumf %344, %345 : vector<2x128xf32>
    %348 = arith.maximumf %346, %347 : vector<2x128xf32>
    %c5_370 = arith.constant 5 : index
    %c0_371 = arith.constant 0 : index
    %349 = vector.load %arg15[%c5_370, %c0_371] : memref<20x128xf32, #tpu.memory_space<vmem>>, vector<2x128xf32>
    tpu.vector_store %arg15[%c5_370, %c0_371], %348 {strides = array<i32>} : memref<20x128xf32, #tpu.memory_space<vmem>>, vector<2x128xf32>,
    %c12_372 = arith.constant 12 : index
    %c0_373 = arith.constant 0 : index
    %350 = tpu.strided_load %arg18[%c12_372, %c0_373] {strides = array<i32: 2, 1>} : memref<24x128xf32, #tpu.memory_space<vmem>>, vector<2x128xf32>
    %c13_374 = arith.constant 13 : index
    %c0_375 = arith.constant 0 : index
    %351 = tpu.strided_load %arg18[%c13_374, %c0_375] {strides = array<i32: 2, 1>} : memref<24x128xf32, #tpu.memory_space<vmem>>, vector<2x128xf32>
    %c18_376 = arith.constant 18 : index
    %c0_377 = arith.constant 0 : index
    %352 = tpu.strided_load %arg18[%c18_376, %c0_377] {strides = array<i32: 2, 1>} : memref<24x128xf32, #tpu.memory_space<vmem>>, vector<2x128xf32>
    %c19_378 = arith.constant 19 : index
    %c0_379 = arith.constant 0 : index
    %353 = tpu.strided_load %arg18[%c19_378, %c0_379] {strides = array<i32: 2, 1>} : memref<24x128xf32, #tpu.memory_space<vmem>>, vector<2x128xf32>
    %354 = arith.maximumf %350, %351 : vector<2x128xf32>
    %355 = arith.maximumf %352, %353 : vector<2x128xf32>
    %356 = arith.maximumf %354, %355 : vector<2x128xf32>
    %c9 = arith.constant 9 : index
    %c0_380 = arith.constant 0 : index
    %357 = vector.load %arg15[%c9, %c0_380] : memref<20x128xf32, #tpu.memory_space<vmem>>, vector<2x128xf32>
    tpu.vector_store %arg15[%c9, %c0_380], %356 {strides = array<i32>} : memref<20x128xf32, #tpu.memory_space<vmem>>, vector<2x128xf32>,
    %c0_381 = arith.constant 0 : index
    %c0_382 = arith.constant 0 : index
    %358 = vector.load %arg15[%c0_381, %c0_382] : memref<20x128xf32, #tpu.memory_space<vmem>>, vector<8x128xf32>
    %359 = arith.truncf %358 : vector<8x128xf32> to vector<8x128xbf16>
    %c0_383 = arith.constant 0 : index
    %c0_384 = arith.constant 0 : index
    %c0_385 = arith.constant 0 : index
    %360 = vector.load %arg8[%c0_383, %c0_384, %c0_385] : memref<9x128x256xbf16, #tpu.memory_space<vmem>>, vector<1x128x256xbf16>
    %361 = vector.shape_cast %360 : vector<1x128x256xbf16> to vector<128x256xbf16>
    %cst_386 = arith.constant dense<0.000000e+00> : vector<8x256xf32>
    %362 = tpu.matmul %359, %361, %cst_386 {dimension_numbers = #tpu.dot_dimension_numbers<[1], [0], [0], [1], [0, 0, 1, 1], [], []>} : vector<8x128xbf16>, vector<128x256xbf16>, vector<8x256xf32> -> vector<8x256xf32>
    %c0_387 = arith.constant 0 : index
    %c0_388 = arith.constant 0 : index
    %363 = vector.load %arg19[%c0_387, %c0_388] : memref<8x256xf32, #tpu.memory_space<vmem>>, vector<8x256xf32>
    tpu.vector_store %arg19[%c0_387, %c0_388], %362 {strides = array<i32>} : memref<8x256xf32, #tpu.memory_space<vmem>>, vector<8x256xf32>,
    %c1_389 = arith.constant 1 : index
    %c0_390 = arith.constant 0 : index
    %364 = vector.load %arg15[%c1_389, %c0_390] : memref<20x128xf32, #tpu.memory_space<vmem>>, vector<8x128xf32>
    %365 = arith.truncf %364 : vector<8x128xf32> to vector<8x128xbf16>
    %c1_391 = arith.constant 1 : index
    %c0_392 = arith.constant 0 : index
    %c0_393 = arith.constant 0 : index
    %366 = vector.load %arg8[%c1_391, %c0_392, %c0_393] : memref<9x128x256xbf16, #tpu.memory_space<vmem>>, vector<1x128x256xbf16>
    %367 = vector.shape_cast %366 : vector<1x128x256xbf16> to vector<128x256xbf16>
    %cst_394 = arith.constant dense<0.000000e+00> : vector<8x256xf32>
    %368 = tpu.matmul %365, %367, %cst_394 {dimension_numbers = #tpu.dot_dimension_numbers<[1], [0], [0], [1], [0, 0, 1, 1], [], []>} : vector<8x128xbf16>, vector<128x256xbf16>, vector<8x256xf32> -> vector<8x256xf32>
    %c0_395 = arith.constant 0 : index
    %c0_396 = arith.constant 0 : index
    %369 = vector.load %arg19[%c0_395, %c0_396] : memref<8x256xf32, #tpu.memory_space<vmem>>, vector<8x256xf32>
    %370 = arith.addf %369, %368 : vector<8x256xf32>
    %c0_397 = arith.constant 0 : index
    %c0_398 = arith.constant 0 : index
    %371 = vector.load %arg19[%c0_397, %c0_398] : memref<8x256xf32, #tpu.memory_space<vmem>>, vector<8x256xf32>
    tpu.vector_store %arg19[%c0_397, %c0_398], %370 {strides = array<i32>} : memref<8x256xf32, #tpu.memory_space<vmem>>, vector<8x256xf32>,
    %c2_399 = arith.constant 2 : index
    %c0_400 = arith.constant 0 : index
    %372 = vector.load %arg15[%c2_399, %c0_400] : memref<20x128xf32, #tpu.memory_space<vmem>>, vector<8x128xf32>
    %373 = arith.truncf %372 : vector<8x128xf32> to vector<8x128xbf16>
    %c2_401 = arith.constant 2 : index
    %c0_402 = arith.constant 0 : index
    %c0_403 = arith.constant 0 : index
    %374 = vector.load %arg8[%c2_401, %c0_402, %c0_403] : memref<9x128x256xbf16, #tpu.memory_space<vmem>>, vector<1x128x256xbf16>
    %375 = vector.shape_cast %374 : vector<1x128x256xbf16> to vector<128x256xbf16>
    %cst_404 = arith.constant dense<0.000000e+00> : vector<8x256xf32>
    %376 = tpu.matmul %373, %375, %cst_404 {dimension_numbers = #tpu.dot_dimension_numbers<[1], [0], [0], [1], [0, 0, 1, 1], [], []>} : vector<8x128xbf16>, vector<128x256xbf16>, vector<8x256xf32> -> vector<8x256xf32>
    %c0_405 = arith.constant 0 : index
    %c0_406 = arith.constant 0 : index
    %377 = vector.load %arg19[%c0_405, %c0_406] : memref<8x256xf32, #tpu.memory_space<vmem>>, vector<8x256xf32>
    %378 = arith.addf %377, %376 : vector<8x256xf32>
    %c0_407 = arith.constant 0 : index
    %c0_408 = arith.constant 0 : index
    %379 = vector.load %arg19[%c0_407, %c0_408] : memref<8x256xf32, #tpu.memory_space<vmem>>, vector<8x256xf32>
    tpu.vector_store %arg19[%c0_407, %c0_408], %378 {strides = array<i32>} : memref<8x256xf32, #tpu.memory_space<vmem>>, vector<8x256xf32>,
    %c4_409 = arith.constant 4 : index
    %c0_410 = arith.constant 0 : index
    %380 = vector.load %arg15[%c4_409, %c0_410] : memref<20x128xf32, #tpu.memory_space<vmem>>, vector<8x128xf32>
    %381 = arith.truncf %380 : vector<8x128xf32> to vector<8x128xbf16>
    %c3_411 = arith.constant 3 : index
    %c0_412 = arith.constant 0 : index
    %c0_413 = arith.constant 0 : index
    %382 = vector.load %arg8[%c3_411, %c0_412, %c0_413] : memref<9x128x256xbf16, #tpu.memory_space<vmem>>, vector<1x128x256xbf16>
    %383 = vector.shape_cast %382 : vector<1x128x256xbf16> to vector<128x256xbf16>
    %cst_414 = arith.constant dense<0.000000e+00> : vector<8x256xf32>
    %384 = tpu.matmul %381, %383, %cst_414 {dimension_numbers = #tpu.dot_dimension_numbers<[1], [0], [0], [1], [0, 0, 1, 1], [], []>} : vector<8x128xbf16>, vector<128x256xbf16>, vector<8x256xf32> -> vector<8x256xf32>
    %c0_415 = arith.constant 0 : index
    %c0_416 = arith.constant 0 : index
    %385 = vector.load %arg19[%c0_415, %c0_416] : memref<8x256xf32, #tpu.memory_space<vmem>>, vector<8x256xf32>
    %386 = arith.addf %385, %384 : vector<8x256xf32>
    %c0_417 = arith.constant 0 : index
    %c0_418 = arith.constant 0 : index
    %387 = vector.load %arg19[%c0_417, %c0_418] : memref<8x256xf32, #tpu.memory_space<vmem>>, vector<8x256xf32>
    tpu.vector_store %arg19[%c0_417, %c0_418], %386 {strides = array<i32>} : memref<8x256xf32, #tpu.memory_space<vmem>>, vector<8x256xf32>,
    %c5_419 = arith.constant 5 : index
    %c0_420 = arith.constant 0 : index
    %388 = vector.load %arg15[%c5_419, %c0_420] : memref<20x128xf32, #tpu.memory_space<vmem>>, vector<8x128xf32>
    %389 = arith.truncf %388 : vector<8x128xf32> to vector<8x128xbf16>
    %c4_421 = arith.constant 4 : index
    %c0_422 = arith.constant 0 : index
    %c0_423 = arith.constant 0 : index
    %390 = vector.load %arg8[%c4_421, %c0_422, %c0_423] : memref<9x128x256xbf16, #tpu.memory_space<vmem>>, vector<1x128x256xbf16>
    %391 = vector.shape_cast %390 : vector<1x128x256xbf16> to vector<128x256xbf16>
    %cst_424 = arith.constant dense<0.000000e+00> : vector<8x256xf32>
    %392 = tpu.matmul %389, %391, %cst_424 {dimension_numbers = #tpu.dot_dimension_numbers<[1], [0], [0], [1], [0, 0, 1, 1], [], []>} : vector<8x128xbf16>, vector<128x256xbf16>, vector<8x256xf32> -> vector<8x256xf32>
    %c0_425 = arith.constant 0 : index
    %c0_426 = arith.constant 0 : index
    %393 = vector.load %arg19[%c0_425, %c0_426] : memref<8x256xf32, #tpu.memory_space<vmem>>, vector<8x256xf32>
    %394 = arith.addf %393, %392 : vector<8x256xf32>
    %c0_427 = arith.constant 0 : index
    %c0_428 = arith.constant 0 : index
    %395 = vector.load %arg19[%c0_427, %c0_428] : memref<8x256xf32, #tpu.memory_space<vmem>>, vector<8x256xf32>
    tpu.vector_store %arg19[%c0_427, %c0_428], %394 {strides = array<i32>} : memref<8x256xf32, #tpu.memory_space<vmem>>, vector<8x256xf32>,
    %c6_429 = arith.constant 6 : index
    %c0_430 = arith.constant 0 : index
    %396 = vector.load %arg15[%c6_429, %c0_430] : memref<20x128xf32, #tpu.memory_space<vmem>>, vector<8x128xf32>
    %397 = arith.truncf %396 : vector<8x128xf32> to vector<8x128xbf16>
    %c5_431 = arith.constant 5 : index
    %c0_432 = arith.constant 0 : index
    %c0_433 = arith.constant 0 : index
    %398 = vector.load %arg8[%c5_431, %c0_432, %c0_433] : memref<9x128x256xbf16, #tpu.memory_space<vmem>>, vector<1x128x256xbf16>
    %399 = vector.shape_cast %398 : vector<1x128x256xbf16> to vector<128x256xbf16>
    %cst_434 = arith.constant dense<0.000000e+00> : vector<8x256xf32>
    %400 = tpu.matmul %397, %399, %cst_434 {dimension_numbers = #tpu.dot_dimension_numbers<[1], [0], [0], [1], [0, 0, 1, 1], [], []>} : vector<8x128xbf16>, vector<128x256xbf16>, vector<8x256xf32> -> vector<8x256xf32>
    %c0_435 = arith.constant 0 : index
    %c0_436 = arith.constant 0 : index
    %401 = vector.load %arg19[%c0_435, %c0_436] : memref<8x256xf32, #tpu.memory_space<vmem>>, vector<8x256xf32>
    %402 = arith.addf %401, %400 : vector<8x256xf32>
    %c0_437 = arith.constant 0 : index
    %c0_438 = arith.constant 0 : index
    %403 = vector.load %arg19[%c0_437, %c0_438] : memref<8x256xf32, #tpu.memory_space<vmem>>, vector<8x256xf32>
    tpu.vector_store %arg19[%c0_437, %c0_438], %402 {strides = array<i32>} : memref<8x256xf32, #tpu.memory_space<vmem>>, vector<8x256xf32>,
    %c8_439 = arith.constant 8 : index
    %c0_440 = arith.constant 0 : index
    %404 = vector.load %arg15[%c8_439, %c0_440] : memref<20x128xf32, #tpu.memory_space<vmem>>, vector<8x128xf32>
    %405 = arith.truncf %404 : vector<8x128xf32> to vector<8x128xbf16>
    %c6_441 = arith.constant 6 : index
    %c0_442 = arith.constant 0 : index
    %c0_443 = arith.constant 0 : index
    %406 = vector.load %arg8[%c6_441, %c0_442, %c0_443] : memref<9x128x256xbf16, #tpu.memory_space<vmem>>, vector<1x128x256xbf16>
    %407 = vector.shape_cast %406 : vector<1x128x256xbf16> to vector<128x256xbf16>
    %cst_444 = arith.constant dense<0.000000e+00> : vector<8x256xf32>
    %408 = tpu.matmul %405, %407, %cst_444 {dimension_numbers = #tpu.dot_dimension_numbers<[1], [0], [0], [1], [0, 0, 1, 1], [], []>} : vector<8x128xbf16>, vector<128x256xbf16>, vector<8x256xf32> -> vector<8x256xf32>
    %c0_445 = arith.constant 0 : index
    %c0_446 = arith.constant 0 : index
    %409 = vector.load %arg19[%c0_445, %c0_446] : memref<8x256xf32, #tpu.memory_space<vmem>>, vector<8x256xf32>
    %410 = arith.addf %409, %408 : vector<8x256xf32>
    %c0_447 = arith.constant 0 : index
    %c0_448 = arith.constant 0 : index
    %411 = vector.load %arg19[%c0_447, %c0_448] : memref<8x256xf32, #tpu.memory_space<vmem>>, vector<8x256xf32>
    tpu.vector_store %arg19[%c0_447, %c0_448], %410 {strides = array<i32>} : memref<8x256xf32, #tpu.memory_space<vmem>>, vector<8x256xf32>,
    %c9_449 = arith.constant 9 : index
    %c0_450 = arith.constant 0 : index
    %412 = vector.load %arg15[%c9_449, %c0_450] : memref<20x128xf32, #tpu.memory_space<vmem>>, vector<8x128xf32>
    %413 = arith.truncf %412 : vector<8x128xf32> to vector<8x128xbf16>
    %c7_451 = arith.constant 7 : index
    %c0_452 = arith.constant 0 : index
    %c0_453 = arith.constant 0 : index
    %414 = vector.load %arg8[%c7_451, %c0_452, %c0_453] : memref<9x128x256xbf16, #tpu.memory_space<vmem>>, vector<1x128x256xbf16>
    %415 = vector.shape_cast %414 : vector<1x128x256xbf16> to vector<128x256xbf16>
    %cst_454 = arith.constant dense<0.000000e+00> : vector<8x256xf32>
    %416 = tpu.matmul %413, %415, %cst_454 {dimension_numbers = #tpu.dot_dimension_numbers<[1], [0], [0], [1], [0, 0, 1, 1], [], []>} : vector<8x128xbf16>, vector<128x256xbf16>, vector<8x256xf32> -> vector<8x256xf32>
    %c0_455 = arith.constant 0 : index
    %c0_456 = arith.constant 0 : index
    %417 = vector.load %arg19[%c0_455, %c0_456] : memref<8x256xf32, #tpu.memory_space<vmem>>, vector<8x256xf32>
    %418 = arith.addf %417, %416 : vector<8x256xf32>
    %c0_457 = arith.constant 0 : index
    %c0_458 = arith.constant 0 : index
    %419 = vector.load %arg19[%c0_457, %c0_458] : memref<8x256xf32, #tpu.memory_space<vmem>>, vector<8x256xf32>
    tpu.vector_store %arg19[%c0_457, %c0_458], %418 {strides = array<i32>} : memref<8x256xf32, #tpu.memory_space<vmem>>, vector<8x256xf32>,
    %c10_459 = arith.constant 10 : index
    %c0_460 = arith.constant 0 : index
    %420 = vector.load %arg15[%c10_459, %c0_460] : memref<20x128xf32, #tpu.memory_space<vmem>>, vector<8x128xf32>
    %421 = arith.truncf %420 : vector<8x128xf32> to vector<8x128xbf16>
    %c8_461 = arith.constant 8 : index
    %c0_462 = arith.constant 0 : index
    %c0_463 = arith.constant 0 : index
    %422 = vector.load %arg8[%c8_461, %c0_462, %c0_463] : memref<9x128x256xbf16, #tpu.memory_space<vmem>>, vector<1x128x256xbf16>
    %423 = vector.shape_cast %422 : vector<1x128x256xbf16> to vector<128x256xbf16>
    %cst_464 = arith.constant dense<0.000000e+00> : vector<8x256xf32>
    %424 = tpu.matmul %421, %423, %cst_464 {dimension_numbers = #tpu.dot_dimension_numbers<[1], [0], [0], [1], [0, 0, 1, 1], [], []>} : vector<8x128xbf16>, vector<128x256xbf16>, vector<8x256xf32> -> vector<8x256xf32>
    %c0_465 = arith.constant 0 : index
    %c0_466 = arith.constant 0 : index
    %425 = vector.load %arg19[%c0_465, %c0_466] : memref<8x256xf32, #tpu.memory_space<vmem>>, vector<8x256xf32>
    %426 = arith.addf %425, %424 : vector<8x256xf32>
    %c0_467 = arith.constant 0 : index
    %c0_468 = arith.constant 0 : index
    %427 = vector.load %arg19[%c0_467, %c0_468] : memref<8x256xf32, #tpu.memory_space<vmem>>, vector<8x256xf32>
    tpu.vector_store %arg19[%c0_467, %c0_468], %426 {strides = array<i32>} : memref<8x256xf32, #tpu.memory_space<vmem>>, vector<8x256xf32>,
    %c0_469 = arith.constant 0 : index
    %c0_470 = arith.constant 0 : index
    %428 = vector.load %arg19[%c0_469, %c0_470] : memref<8x256xf32, #tpu.memory_space<vmem>>, vector<8x256xf32>
    %c0_471 = arith.constant 0 : index
    %c0_472 = arith.constant 0 : index
    %429 = vector.load %arg9[%c0_471, %c0_472] : memref<1x256xf32, #tpu.memory_space<vmem>>, vector<1x256xf32>
    %430 = vector.broadcast %429 : vector<1x256xf32> to vector<8x256xf32>
    %431 = arith.addf %428, %430 : vector<8x256xf32>
    %cst_473 = arith.constant 0.000000e+00 : f32
    %432 = vector.broadcast %cst_473 : f32 to vector<8x256xf32>
    %433 = arith.maximumf %431, %432 : vector<8x256xf32>
    %c0_474 = arith.constant 0 : index
    %c0_475 = arith.constant 0 : index
    %434 = vector.load %arg19[%c0_474, %c0_475] : memref<8x256xf32, #tpu.memory_space<vmem>>, vector<8x256xf32>
    tpu.vector_store %arg19[%c0_474, %c0_475], %433 {strides = array<i32>} : memref<8x256xf32, #tpu.memory_space<vmem>>, vector<8x256xf32>,
    %cst_476 = arith.constant 0.000000e+00 : f32
    %435 = vector.broadcast %cst_476 : f32 to vector<1x256xf32>
    %c0_477 = arith.constant 0 : index
    %c0_478 = arith.constant 0 : index
    %436 = vector.load %arg19[%c0_477, %c0_478] : memref<8x256xf32, #tpu.memory_space<vmem>>, vector<2x256xf32>
    %cst_479 = arith.constant dense<0.000000e+00> : vector<256xf32>
    %437 = vector.multi_reduction <add>, %436, %cst_479 [0] : vector<2x256xf32> to vector<256xf32>
    %438 = vector.shape_cast %437 : vector<256xf32> to vector<1x256xf32>
    %439 = arith.addf %435, %438 : vector<1x256xf32>
    %c4_480 = arith.constant 4 : index
    %c0_481 = arith.constant 0 : index
    %440 = vector.load %arg19[%c4_480, %c0_481] : memref<8x256xf32, #tpu.memory_space<vmem>>, vector<2x256xf32>
    %cst_482 = arith.constant dense<0.000000e+00> : vector<256xf32>
    %441 = vector.multi_reduction <add>, %440, %cst_482 [0] : vector<2x256xf32> to vector<256xf32>
    %442 = vector.shape_cast %441 : vector<256xf32> to vector<1x256xf32>
    %443 = arith.addf %439, %442 : vector<1x256xf32>
    %cst_483 = arith.constant 2.500000e-01 : f32
    %444 = vector.broadcast %cst_483 : f32 to vector<1x256xf32>
    %445 = arith.mulf %443, %444 : vector<1x256xf32>
    %c0_484 = arith.constant 0 : index
    %c0_485 = arith.constant 0 : index
    %446 = vector.load %arg10[%c0_484, %c0_485] : memref<256x128xf32, #tpu.memory_space<vmem>>, vector<256x128xf32>
    %cst_486 = arith.constant dense<0.000000e+00> : vector<1x128xf32>
    %447 = tpu.matmul %445, %446, %cst_486 {dimension_numbers = #tpu.dot_dimension_numbers<[1], [0], [0], [1], [0, 0, 1, 1], [], []>} : vector<1x256xf32>, vector<256x128xf32>, vector<1x128xf32> -> vector<1x128xf32>
    %c0_487 = arith.constant 0 : index
    %c0_488 = arith.constant 0 : index
    %448 = vector.load %arg11[%c0_487, %c0_488] : memref<1x128xf32, #tpu.memory_space<vmem>>, vector<1x128xf32>
    %449 = arith.addf %447, %448 : vector<1x128xf32>
    %c0_489 = arith.constant 0 : index
    %c0_490 = arith.constant 0 : index
    %c0_491 = arith.constant 0 : index
    %450 = vector.load %arg12[%c0_489, %c0_490, %c0_491] : memref<1x1x128xf32, #tpu.memory_space<vmem>>, vector<1x1x128xf32>
    %451 = vector.shape_cast %450 : vector<1x1x128xf32> to vector<1x128xf32>
    %452 = vector.shape_cast %449 : vector<1x128xf32> to vector<1x1x128xf32>
    tpu.vector_store %arg12[%c0_489, %c0_490, %c0_491], %452 {strides = array<i32>} : memref<1x1x128xf32, #tpu.memory_space<vmem>>, vector<1x1x128xf32>,
    return
  }
  func.func @transform_0(%arg0: i32) -> (i32, i32, i32) {
    %c0_i32 = arith.constant 0 : i32
    %c0_i32_0 = arith.constant 0 : i32
    %c0_i32_1 = arith.constant 0 : i32
    return %arg0, %c0_i32, %c0_i32_0 : i32, i32, i32
  }
  func.func @transform_1(%arg0: i32) -> (i32, i32, i32) {
    %c0_i32 = arith.constant 0 : i32
    %c0_i32_0 = arith.constant 0 : i32
    %c0_i32_1 = arith.constant 0 : i32
    %c0_i32_2 = arith.constant 0 : i32
    return %c0_i32, %c0_i32_0, %c0_i32_1 : i32, i32, i32
  }
  func.func @transform_2(%arg0: i32) -> (i32, i32) {
    %c0_i32 = arith.constant 0 : i32
    %c0_i32_0 = arith.constant 0 : i32
    %c0_i32_1 = arith.constant 0 : i32
    return %c0_i32, %c0_i32_0 : i32, i32
  }
  func.func @transform_3(%arg0: i32) -> (i32, i32, i32) {
    %c0_i32 = arith.constant 0 : i32
    %c0_i32_0 = arith.constant 0 : i32
    %c0_i32_1 = arith.constant 0 : i32
    %c0_i32_2 = arith.constant 0 : i32
    return %c0_i32, %c0_i32_0, %c0_i32_1 : i32, i32, i32
  }
  func.func @transform_4(%arg0: i32) -> (i32, i32) {
    %c0_i32 = arith.constant 0 : i32
    %c0_i32_0 = arith.constant 0 : i32
    %c0_i32_1 = arith.constant 0 : i32
    return %c0_i32, %c0_i32_0 : i32, i32
  }
  func.func @transform_5(%arg0: i32) -> (i32, i32, i32) {
    %c0_i32 = arith.constant 0 : i32
    %c0_i32_0 = arith.constant 0 : i32
    %c0_i32_1 = arith.constant 0 : i32
    %c0_i32_2 = arith.constant 0 : i32
    return %c0_i32, %c0_i32_0, %c0_i32_1 : i32, i32, i32
  }
  func.func @transform_6(%arg0: i32) -> (i32, i32) {
    %c0_i32 = arith.constant 0 : i32
    %c0_i32_0 = arith.constant 0 : i32
    %c0_i32_1 = arith.constant 0 : i32
    return %c0_i32, %c0_i32_0 : i32, i32
  }
  func.func @transform_7(%arg0: i32) -> (i32, i32, i32) {
    %c0_i32 = arith.constant 0 : i32
    %c0_i32_0 = arith.constant 0 : i32
    %c0_i32_1 = arith.constant 0 : i32
    %c0_i32_2 = arith.constant 0 : i32
    return %c0_i32, %c0_i32_0, %c0_i32_1 : i32, i32, i32
  }
  func.func @transform_8(%arg0: i32) -> (i32, i32) {
    %c0_i32 = arith.constant 0 : i32
    %c0_i32_0 = arith.constant 0 : i32
    %c0_i32_1 = arith.constant 0 : i32
    return %c0_i32, %c0_i32_0 : i32, i32
  }
  func.func @transform_9(%arg0: i32) -> (i32, i32) {
    %c0_i32 = arith.constant 0 : i32
    %c0_i32_0 = arith.constant 0 : i32
    %c0_i32_1 = arith.constant 0 : i32
    return %c0_i32, %c0_i32_0 : i32, i32
  }
  func.func @transform_10(%arg0: i32) -> (i32, i32) {
    %c0_i32 = arith.constant 0 : i32
    %c0_i32_0 = arith.constant 0 : i32
    %c0_i32_1 = arith.constant 0 : i32
    return %c0_i32, %c0_i32_0 : i32, i32
  }
  func.func @transform_11(%arg0: i32) -> (i32, i32, i32) {
    %c0_i32 = arith.constant 0 : i32
    %c0_i32_0 = arith.constant 0 : i32
    %c0_i32_1 = arith.constant 0 : i32
    return %arg0, %c0_i32, %c0_i32_0 : i32, i32, i32
  }
}

</mosaic_0001>

<llo_original>
// kernel: _lambda_.1
$region0: #{_lambda_.1}
  #allocation0 [shape = 'u32[]', space=smem, size = 0x4, offset = 0x4, fixed_abs, tag = 'smem constant byte address 0x4 - core index']
  #allocation1 [shape = 'u32[72,128]{1,0:T(1,128)}', space=vmem, size = 0x9000, scoped, tag = 'internal scratch']
  #allocation2 [shape = 'f32[110,128]{1,0:T(8,128)}', space=vmem, size = 0xe000, scoped, tag = 'scratch operand']
  #allocation3 [shape = 'f32[42,128]{1,0:T(8,128)}', space=vmem, size = 0x6000, scoped, tag = 'scratch operand']
  #allocation4 [shape = 'f32[20,128]{1,0:T(8,128)}', space=vmem, size = 0x3000, scoped, tag = 'scratch operand']
  #allocation5 [shape = 'f32[288,128]{1,0:T(8,128)}', space=vmem, size = 0x24000, scoped, tag = 'scratch operand']
  #allocation6 [shape = 'f32[80,128]{1,0:T(8,128)}', space=vmem, size = 0xa000, scoped, tag = 'scratch operand']
  #allocation7 [shape = 'f32[24,128]{1,0:T(8,128)}', space=vmem, size = 0x3000, scoped, tag = 'scratch operand']
  #allocation8 [shape = 'f32[8,256]{1,0:T(8,128)}', space=vmem, size = 0x2000, scoped, tag = 'scratch operand']
  %s0 = inlined_call_operand.vmem [shape: f32[2,342,4], index: 0, kind: input, shape index: {}]
  %s1 = inlined_call_operand.vmem [shape: bf16[9,4,128], index: 1, kind: input, shape index: {}]
  %s2 = inlined_call_operand.vmem [shape: f32[1,128], index: 2, kind: input, shape index: {}]
  %s3 = inlined_call_operand.hbm [shape: bf16[9,128,128], index: 3, kind: input, shape index: {}]
  %s4 = inlined_call_operand.vmem [shape: f32[1,128], index: 4, kind: input, shape index: {}]
  %s5 = inlined_call_operand.hbm [shape: bf16[9,128,128], index: 5, kind: input, shape index: {}]
  %s6 = inlined_call_operand.vmem [shape: f32[1,128], index: 6, kind: input, shape index: {}]
  %s7 = inlined_call_operand.vmem [shape: bf16[9,128,256], index: 7, kind: input, shape index: {}]
  %s8 = inlined_call_operand.vmem [shape: f32[1,256], index: 8, kind: input, shape index: {}]
  %s9 = inlined_call_operand.hbm [shape: f32[256,128], index: 9, kind: input, shape index: {}]
  %s10 = inlined_call_operand.vmem [shape: f32[1,128], index: 10, kind: input, shape index: {}]
  %s11 = inlined_call_operand.hbm [shape: f32[2,1,128], index: 11, kind: output, shape index: {}]
  %s12 = sld [smem:[#allocation0]]
  $region89: #{_lambda_.1} parent=0
    _
  %s14 = ssub.s32 1, %s12
  %s15 = scalar_select 0, %s14, %s12
  $region1: #{_lambda_.1} parent=0
    #allocation9 [shape = 'u8[294912]{0}', space=vmem, size = 0x48000, scoped, tag = 'input window, operand 3, single buffered']
    #allocation10 [shape = 's32[2]{0}', space=sflag, size = 0x8, scoped, tag = 'scoped memory for _lambda_.1']
    #allocation11 [shape = 's32[2]{0}', space=sflag, size = 0x8, scoped, tag = 'scoped memory for _lambda_.1']
    #allocation12 [shape = 'u8[294912]{0}', space=vmem, size = 0x48000, scoped, tag = 'input window, operand 5, single buffered']
    #allocation13 [shape = 's32[1]{0}', space=sflag, size = 0x4, scoped, tag = 'scoped memory for _lambda_.1']
    #allocation14 [shape = 'u8[131072]{0}', space=vmem, size = 0x20000, scoped, tag = 'input window, operand 9, single buffered']
    #allocation15 [shape = 'u8[1024]{0}', space=vmem, size = 0x400, scoped, tag = 'output window, operand 0']
    %16 = vsyncpa [#allocation10], 0
    %17 = vsyncpa [#allocation13], 0
    %18 = vsyncpa [#allocation11], 0
    %s19 = scalar_lea.sflag [#allocation11], 1
    %20 = vsyncpa %s19, 0
    loop: start=0, step=1, limit=4
    $region2: #{_lambda_.1} parent=1 // loop_pre_header
      _
    $region3: #{_lambda_.1} parent=1 // loop_header
      %s22 = sphi 0, %s26
      %p23 = scmp.ge.s32.totalorder %s22, 4
      %s32 = sphi 0, %s34
      %s35 = sphi 0, %s32
      %s36 = sphi 0, %s35
      %s52 = sphi 0, %s36
      %s56 = sphi 0, %s56
      %s58 = sphi 0, %s56
      %s59 = sphi 0, %s58
      %s73 = sphi 0, %s59
      %s77 = sphi 0, %s77
      %s79 = sphi 0, %s77
      %s80 = sphi 0, %s79
      %s94 = sphi 0, %s80
      %s98 = sphi 0, %s98
      %s100 = sphi 0, %s98
      %s101 = sphi 0, %s100
      %s115 = sphi 0, %s101
      %s119 = sphi 0, %s119
      %s121 = sphi 0, %s119
      %s122 = sphi 0, %s121
      %s136 = sphi 0, %s122
      %s140 = sphi 0, %s140
      %s142 = sphi 0, %s140
      %s143 = sphi 0, %s142
      %s157 = sphi 0, %s143
      %s161 = sphi 0, %s161
      %s163 = sphi 0, %s161
      %s164 = sphi 0, %s163
      %s178 = sphi 0, %s164
      %s182 = sphi 0, %s182
      %s184 = sphi 0, %s182
      %s185 = sphi 0, %s184
      %s199 = sphi 0, %s185
      %s203 = sphi 0, %s203
      %s205 = sphi 0, %s203
      %s206 = sphi 0, %s205
      %s220 = sphi 0, %s206
      %s224 = sphi 0, %s224
      %s226 = sphi 0, %s224
      %s227 = sphi 0, %s226
      %s241 = sphi 0, %s227
      %s245 = sphi 0, %s245
      %s247 = sphi 0, %s245
      %s248 = sphi 0, %s247
      %s262 = sphi 0, %s248
      %s268 = sphi 0, %s270
      %s271 = sphi 0, %s268
      %s272 = sphi 0, %s271
      %s288 = sphi 0, %s272
    $region4: #{_lambda_.1} parent=1 // loop_header_branch
      %25 = sbr.rel (%p23) target = $region8
    $region5: #{_lambda_.1} parent=1 // loop_body
      %s27 = ssub.s32 %s22, 1
      %s28 = ssub.s32 %s22, 2
      %s29 = sadd.s32 %s22, 1
      %s30 = ssub.s32 %s22, %s29
      %p31 = scmp.eq.s32.totalorder %s30, 0
      %s33 = sadd.s32 %s32, 1
      %s34 = scalar_select %p31, %s32, %s33
      %p37 = pneg %p31
      %p38 = scmp.eq.s32.totalorder %s22, 1
      %p39 = por %p37, %p38
      %p40 = scmp.ne.s32.totalorder %s32, %s35
      %p41 = scmp.eq.s32.totalorder %s22, 0
      %p42 = por %p40, %p41
      %p43 = scmp.ne.s32.totalorder %s32, %s35
      %p44 = scmp.eq.s32.totalorder %s27, 1
      %p45 = por %p43, %p44
      %p46 = scmp.ne.s32.totalorder %s35, %s36
      %p47 = scmp.eq.s32.totalorder %s27, 0
      %p48 = por %p46, %p47
      %p49 = scmp.ne.s32.totalorder %s35, %s36
      %p50 = scmp.eq.s32.totalorder %s28, 1
      %p51 = por %p49, %p50
      %p53 = scmp.ne.s32.totalorder %s36, %s52
      %p54 = scmp.eq.s32.totalorder %s28, 0
      %p55 = por %p53, %p54
      %s57 = sadd.s32 %s56, 1
      %p60 = scmp.eq.s32.totalorder %s22, 1
      %p61 = scmp.ne.s32.totalorder %s56, %s58
      %p62 = scmp.eq.s32.totalorder %s22, 0
      %p63 = por %p61, %p62
      %p64 = scmp.ne.s32.totalorder %s56, %s58
      %p65 = scmp.eq.s32.totalorder %s27, 1
      %p66 = por %p64, %p65
      %p67 = scmp.ne.s32.totalorder %s58, %s59
      %p68 = scmp.eq.s32.totalorder %s27, 0
      %p69 = por %p67, %p68
      %p70 = scmp.ne.s32.totalorder %s58, %s59
      %p71 = scmp.eq.s32.totalorder %s28, 1
      %p72 = por %p70, %p71
      %p74 = scmp.ne.s32.totalorder %s59, %s73
      %p75 = scmp.eq.s32.totalorder %s28, 0
      %p76 = por %p74, %p75
      %s78 = sadd.s32 %s77, 1
      %p81 = scmp.eq.s32.totalorder %s22, 1
      %p82 = scmp.ne.s32.totalorder %s77, %s79
      %p83 = scmp.eq.s32.totalorder %s22, 0
      %p84 = por %p82, %p83
      %p85 = scmp.ne.s32.totalorder %s77, %s79
      %p86 = scmp.eq.s32.totalorder %s27, 1
      %p87 = por %p85, %p86
      %p88 = scmp.ne.s32.totalorder %s79, %s80
      %p89 = scmp.eq.s32.totalorder %s27, 0
      %p90 = por %p88, %p89
      %p91 = scmp.ne.s32.totalorder %s79, %s80
      %p92 = scmp.eq.s32.totalorder %s28, 1
      %p93 = por %p91, %p92
      %p95 = scmp.ne.s32.totalorder %s80, %s94
      %p96 = scmp.eq.s32.totalorder %s28, 0
      %p97 = por %p95, %p96
      %s99 = sadd.s32 %s98, 1
      %p102 = scmp.eq.s32.totalorder %s22, 1
      %p103 = scmp.ne.s32.totalorder %s98, %s100
      %p104 = scmp.eq.s32.totalorder %s22, 0
      %p105 = por %p103, %p104
      %p106 = scmp.ne.s32.totalorder %s98, %s100
      %p107 = scmp.eq.s32.totalorder %s27, 1
      %p108 = por %p106, %p107
      %p109 = scmp.ne.s32.totalorder %s100, %s101
      %p110 = scmp.eq.s32.totalorder %s27, 0
      %p111 = por %p109, %p110
      %p112 = scmp.ne.s32.totalorder %s100, %s101
      %p113 = scmp.eq.s32.totalorder %s28, 1
      %p114 = por %p112, %p113
      %p116 = scmp.ne.s32.totalorder %s101, %s115
      %p117 = scmp.eq.s32.totalorder %s28, 0
      %p118 = por %p116, %p117
      %s120 = sadd.s32 %s119, 1
      %p123 = scmp.eq.s32.totalorder %s22, 1
      %p124 = scmp.ne.s32.totalorder %s119, %s121
      %p125 = scmp.eq.s32.totalorder %s22, 0
      %p126 = por %p124, %p125
      %p127 = scmp.ne.s32.totalorder %s119, %s121
      %p128 = scmp.eq.s32.totalorder %s27, 1
      %p129 = por %p127, %p128
      %p130 = scmp.ne.s32.totalorder %s121, %s122
      %p131 = scmp.eq.s32.totalorder %s27, 0
      %p132 = por %p130, %p131
      %p133 = scmp.ne.s32.totalorder %s121, %s122
      %p134 = scmp.eq.s32.totalorder %s28, 1
      %p135 = por %p133, %p134
      %p137 = scmp.ne.s32.totalorder %s122, %s136
      %p138 = scmp.eq.s32.totalorder %s28, 0
      %p139 = por %p137, %p138
      %s141 = sadd.s32 %s140, 1
      %p144 = scmp.eq.s32.totalorder %s22, 1
      %p145 = scmp.ne.s32.totalorder %s140, %s142
      %p146 = scmp.eq.s32.totalorder %s22, 0
      %p147 = por %p145, %p146
      %p148 = scmp.ne.s32.totalorder %s140, %s142
      %p149 = scmp.eq.s32.totalorder %s27, 1
      %p150 = por %p148, %p149
      %p151 = scmp.ne.s32.totalorder %s142, %s143
      %p152 = scmp.eq.s32.totalorder %s27, 0
      %p153 = por %p151, %p152
      %p154 = scmp.ne.s32.totalorder %s142, %s143
      %p155 = scmp.eq.s32.totalorder %s28, 1
      %p156 = por %p154, %p155
      %p158 = scmp.ne.s32.totalorder %s143, %s157
      %p159 = scmp.eq.s32.totalorder %s28, 0
      %p160 = por %p158, %p159
      %s162 = sadd.s32 %s161, 1
      %p165 = scmp.eq.s32.totalorder %s22, 1
      %p166 = scmp.ne.s32.totalorder %s161, %s163
      %p167 = scmp.eq.s32.totalorder %s22, 0
      %p168 = por %p166, %p167
      %p169 = scmp.ne.s32.totalorder %s161, %s163
      %p170 = scmp.eq.s32.totalorder %s27, 1
      %p171 = por %p169, %p170
      %p172 = scmp.ne.s32.totalorder %s163, %s164
      %p173 = scmp.eq.s32.totalorder %s27, 0
      %p174 = por %p172, %p173
      %p175 = scmp.ne.s32.totalorder %s163, %s164
      %p176 = scmp.eq.s32.totalorder %s28, 1
      %p177 = por %p175, %p176
      %p179 = scmp.ne.s32.totalorder %s164, %s178
      %p180 = scmp.eq.s32.totalorder %s28, 0
      %p181 = por %p179, %p180
      %s183 = sadd.s32 %s182, 1
      %p186 = scmp.eq.s32.totalorder %s22, 1
      %p187 = scmp.ne.s32.totalorder %s182, %s184
      %p188 = scmp.eq.s32.totalorder %s22, 0
      %p189 = por %p187, %p188
      %p190 = scmp.ne.s32.totalorder %s182, %s184
      %p191 = scmp.eq.s32.totalorder %s27, 1
      %p192 = por %p190, %p191
      %p193 = scmp.ne.s32.totalorder %s184, %s185
      %p194 = scmp.eq.s32.totalorder %s27, 0
      %p195 = por %p193, %p194
      %p196 = scmp.ne.s32.totalorder %s184, %s185
      %p197 = scmp.eq.s32.totalorder %s28, 1
      %p198 = por %p196, %p197
      %p200 = scmp.ne.s32.totalorder %s185, %s199
      %p201 = scmp.eq.s32.totalorder %s28, 0
      %p202 = por %p200, %p201
      %s204 = sadd.s32 %s203, 1
      %p207 = scmp.eq.s32.totalorder %s22, 1
      %p208 = scmp.ne.s32.totalorder %s203, %s205
      %p209 = scmp.eq.s32.totalorder %s22, 0
      %p210 = por %p208, %p209
      %p211 = scmp.ne.s32.totalorder %s203, %s205
      %p212 = scmp.eq.s32.totalorder %s27, 1
      %p213 = por %p211, %p212
      %p214 = scmp.ne.s32.totalorder %s205, %s206
      %p215 = scmp.eq.s32.totalorder %s27, 0
      %p216 = por %p214, %p215
      %p217 = scmp.ne.s32.totalorder %s205, %s206
      %p218 = scmp.eq.s32.totalorder %s28, 1
      %p219 = por %p217, %p218
      %p221 = scmp.ne.s32.totalorder %s206, %s220
      %p222 = scmp.eq.s32.totalorder %s28, 0
      %p223 = por %p221, %p222
      %s225 = sadd.s32 %s224, 1
      %p228 = scmp.eq.s32.totalorder %s22, 1
      %p229 = scmp.ne.s32.totalorder %s224, %s226
      %p230 = scmp.eq.s32.totalorder %s22, 0
      %p231 = por %p229, %p230
      %p232 = scmp.ne.s32.totalorder %s224, %s226
      %p233 = scmp.eq.s32.totalorder %s27, 1
      %p234 = por %p232, %p233
      %p235 = scmp.ne.s32.totalorder %s226, %s227
      %p236 = scmp.eq.s32.totalorder %s27, 0
      %p237 = por %p235, %p236
      %p238 = scmp.ne.s32.totalorder %s226, %s227
      %p239 = scmp.eq.s32.totalorder %s28, 1
      %p240 = por %p238, %p239
      %p242 = scmp.ne.s32.totalorder %s227, %s241
      %p243 = scmp.eq.s32.totalorder %s28, 0
      %p244 = por %p242, %p243
      %s246 = sadd.s32 %s245, 1
      %p249 = scmp.eq.s32.totalorder %s22, 1
      %p250 = scmp.ne.s32.totalorder %s245, %s247
      %p251 = scmp.eq.s32.totalorder %s22, 0
      %p252 = por %p250, %p251
      %p253 = scmp.ne.s32.totalorder %s245, %s247
      %p254 = scmp.eq.s32.totalorder %s27, 1
      %p255 = por %p253, %p254
      %p256 = scmp.ne.s32.totalorder %s247, %s248
      %p257 = scmp.eq.s32.totalorder %s27, 0
      %p258 = por %p256, %p257
      %p259 = scmp.ne.s32.totalorder %s247, %s248
      %p260 = scmp.eq.s32.totalorder %s28, 1
      %p261 = por %p259, %p260
      %p263 = scmp.ne.s32.totalorder %s248, %s262
      %p264 = scmp.eq.s32.totalorder %s28, 0
      %p265 = por %p263, %p264
      %s266 = ssub.s32 %s22, %s29
      %p267 = scmp.eq.s32.totalorder %s266, 0
      %s269 = sadd.s32 %s268, 1
      %s270 = scalar_select %p267, %s268, %s269
      %p273 = pneg %p267
      %p274 = scmp.eq.s32.totalorder %s22, 1
      %p275 = por %p273, %p274
      %p276 = scmp.ne.s32.totalorder %s268, %s271
      %p277 = scmp.eq.s32.totalorder %s22, 0
      %p278 = por %p276, %p277
      %p279 = scmp.ne.s32.totalorder %s268, %s271
      %p280 = scmp.eq.s32.totalorder %s27, 1
      %p281 = por %p279, %p280
      %p282 = scmp.ne.s32.totalorder %s271, %s272
      %p283 = scmp.eq.s32.totalorder %s27, 0
      %p284 = por %p282, %p283
      %p285 = scmp.ne.s32.totalorder %s271, %s272
      %p286 = scmp.eq.s32.totalorder %s28, 1
      %p287 = por %p285, %p286
      %p289 = scmp.ne.s32.totalorder %s272, %s288
      %p290 = scmp.eq.s32.totalorder %s28, 0
      %p291 = por %p289, %p290
      %p292 = scmp.le.s32.totalorder 1, %s22
      %p293 = scmp.lt.s32.totalorder %s22, 3
      %p294 = pnand %p292, %p293
      %p295 = pneg %p294
      // Predicated region
      $region9: #{_lambda_.1} parent=5 // pred_check
        _
      $region10: #{_lambda_.1} parent=5 // pred_check_branch
        %297 = sbr.rel (%p294) target = $region12
      $region11: #{_lambda_.1} parent=5 // pred_region
        %s298 = ssub.s32 %s22, 1
        // Predicated region
        $region13: #{_lambda_.1} parent=11 // pred_check
          %p299 = pneg %p69
        $region14: #{_lambda_.1} parent=11 // pred_check_branch
          %301 = sbr.rel (%p299) target = $region16
        $region15: #{_lambda_.1} parent=11 // pred_region
          _
        $region16: #{_lambda_.1} parent=11 // pred_fallthru
          _
        // Predicated region
        $region17: #{_lambda_.1} parent=11 // pred_check
          %p302 = pneg %p90
        $region18: #{_lambda_.1} parent=11 // pred_check_branch
          %304 = sbr.rel (%p302) target = $region20
        $region19: #{_lambda_.1} parent=11 // pred_region
          _
        $region20: #{_lambda_.1} parent=11 // pred_fallthru
          _
        // Predicated region
        $region21: #{_lambda_.1} parent=11 // pred_check
          %p305 = pneg %p111
        $region22: #{_lambda_.1} parent=11 // pred_check_branch
          %307 = sbr.rel (%p305) target = $region24
        $region23: #{_lambda_.1} parent=11 // pred_region
          %309 = vsyncadd [#allocation10], 0
          %s310 = sshll.u32 %s3, 4
          %s311 = int_to_ptr.hbm [resolvable:$true] %s310
          %s312 = sshll.u32 [#allocation9], 4
          %s313 = int_to_ptr.vmem [resolvable:$true] %s312
          %318 = dma.hbm_to_vmem [thread:$0]  %s311, 9216, %s313, [#allocation10], 64, 64, 4
        $region24: #{_lambda_.1} parent=11 // pred_fallthru
          _
        // Predicated region
        $region25: #{_lambda_.1} parent=11 // pred_check
          %p319 = pneg %p132
        $region26: #{_lambda_.1} parent=11 // pred_check_branch
          %321 = sbr.rel (%p319) target = $region28
        $region27: #{_lambda_.1} parent=11 // pred_region
          _
        $region28: #{_lambda_.1} parent=11 // pred_fallthru
          _
        // Predicated region
        $region29: #{_lambda_.1} parent=11 // pred_check
          %p322 = pneg %p153
        $region30: #{_lambda_.1} parent=11 // pred_check_branch
          %324 = sbr.rel (%p322) target = $region32
        $region31: #{_lambda_.1} parent=11 // pred_region
          %326 = vsyncadd [#allocation13], 0
          %s327 = sshll.u32 %s5, 4
          %s328 = int_to_ptr.hbm [resolvable:$true] %s327
          %s329 = sshll.u32 [#allocation12], 4
          %s330 = int_to_ptr.vmem [resolvable:$true] %s329
          %335 = dma.hbm_to_vmem [thread:$0]  %s328, 9216, %s330, [#allocation13], 64, 64, 4
        $region32: #{_lambda_.1} parent=11 // pred_fallthru
          _
        // Predicated region
        $region33: #{_lambda_.1} parent=11 // pred_check
          %p336 = pneg %p174
        $region34: #{_lambda_.1} parent=11 // pred_check_branch
          %338 = sbr.rel (%p336) target = $region36
        $region35: #{_lambda_.1} parent=11 // pred_region
          _
        $region36: #{_lambda_.1} parent=11 // pred_fallthru
          _
        // Predicated region
        $region37: #{_lambda_.1} parent=11 // pred_check
          %p339 = pneg %p195
        $region38: #{_lambda_.1} parent=11 // pred_check_branch
          %341 = sbr.rel (%p339) target = $region40
        $region39: #{_lambda_.1} parent=11 // pred_region
          _
        $region40: #{_lambda_.1} parent=11 // pred_fallthru
          _
        // Predicated region
        $region41: #{_lambda_.1} parent=11 // pred_check
          %p342 = pneg %p216
        $region42: #{_lambda_.1} parent=11 // pred_check_branch
          %344 = sbr.rel (%p342) target = $region44
        $region43: #{_lambda_.1} parent=11 // pred_region
          _
        $region44: #{_lambda_.1} parent=11 // pred_fallthru
          _
        // Predicated region
        $region45: #{_lambda_.1} parent=11 // pred_check
          %p345 = pneg %p237
        $region46: #{_lambda_.1} parent=11 // pred_check_branch
          %347 = sbr.rel (%p345) target = $region48
        $region47: #{_lambda_.1} parent=11 // pred_region
          %349 = vsyncadd [#allocation13], 0
          %s350 = sshll.u32 %s9, 4
          %s351 = int_to_ptr.hbm [resolvable:$true] %s350
          %s352 = sshll.u32 [#allocation14], 4
          %s353 = int_to_ptr.vmem [resolvable:$true] %s352
          %358 = dma.hbm_to_vmem [thread:$0]  %s351, 4096, %s353, [#allocation13], 128, 128, 8
        $region48: #{_lambda_.1} parent=11 // pred_fallthru
          _
        // Predicated region
        $region49: #{_lambda_.1} parent=11 // pred_check
          %p359 = pneg %p258
        $region50: #{_lambda_.1} parent=11 // pred_check_branch
          %361 = sbr.rel (%p359) target = $region52
        $region51: #{_lambda_.1} parent=11 // pred_region
          _
        $region52: #{_lambda_.1} parent=11 // pred_fallthru
          _
      $region12: #{_lambda_.1} parent=5 // pred_fallthru
        _
      %p362 = scmp.lt.s32.totalorder %s22, 2
      // Predicated region
      $region53: #{_lambda_.1} parent=5 // pred_check
        %p363 = pneg %p362
      $region54: #{_lambda_.1} parent=5 // pred_check_branch
        %365 = sbr.rel (%p363) target = $region56
      $region55: #{_lambda_.1} parent=5 // pred_region
        // Predicated region
        $region57: #{_lambda_.1} parent=55 // pred_check
          %p366 = pneg %p42
        $region58: #{_lambda_.1} parent=55 // pred_check_branch
          %368 = sbr.rel (%p366) target = $region60
        $region59: #{_lambda_.1} parent=55 // pred_region
          %p369 = scmp.lt.s32.totalorder %s22, 1
          %s370 = scalar_select %p369, %s22, 1
          %s371 = smul.addr %s370, 43
          %s372 = smul.addr %s371, 8
          %s373 = scalar_lea.vmem %s0, %s372
        $region60: #{_lambda_.1} parent=55 // pred_fallthru
          _
      $region56: #{_lambda_.1} parent=5 // pred_fallthru
        _
      %p374 = scmp.le.s32.totalorder 1, %s22
      %p375 = scmp.lt.s32.totalorder %s22, 3
      %p376 = pnand %p374, %p375
      %p377 = pneg %p376
      // Predicated region
      $region61: #{_lambda_.1} parent=5 // pred_check
        _
      $region62: #{_lambda_.1} parent=5 // pred_check_branch
        %379 = sbr.rel (%p376) target = $region64
      $region63: #{_lambda_.1} parent=5 // pred_region
        %s380 = ssub.s32 %s22, 1
        // Predicated region
        $region65: #{_lambda_.1} parent=63 // pred_check
          %p381 = pneg %p111
        $region66: #{_lambda_.1} parent=63 // pred_check_branch
          %383 = sbr.rel (%p381) target = $region68
        $region67: #{_lambda_.1} parent=63 // pred_region
          %385 = dma.done [#allocation10], 9216
        $region68: #{_lambda_.1} parent=63 // pred_fallthru
          _
        // Predicated region
        $region69: #{_lambda_.1} parent=63 // pred_check
          %p386 = pneg %p153
        $region70: #{_lambda_.1} parent=63 // pred_check_branch
          %388 = sbr.rel (%p386) target = $region72
        $region71: #{_lambda_.1} parent=63 // pred_region
          %390 = dma.done [#allocation13], 9216
        $region72: #{_lambda_.1} parent=63 // pred_fallthru
          _
        // Predicated region
        $region73: #{_lambda_.1} parent=63 // pred_check
          %p391 = pneg %p237
        $region74: #{_lambda_.1} parent=63 // pred_check_branch
          %393 = sbr.rel (%p391) target = $region76
        $region75: #{_lambda_.1} parent=63 // pred_region
          %395 = dma.done [#allocation13], 4096
        $region76: #{_lambda_.1} parent=63 // pred_fallthru
          _
        %p396 = scmp.lt.s32.totalorder %s27, 1
        %s397 = scalar_select %p396, %s27, 1
        %s398 = smul.addr %s397, 43
        %s399 = smul.addr %s398, 8
        %s400 = scalar_lea.vmem %s0, %s399
        %p401 = pneg %p48
        %p402 = pneg %p45
        %p403 = pneg %p69
        %p404 = pneg %p66
        %p405 = pneg %p90
        %p406 = pneg %p87
        %p407 = pneg %p111
        %p408 = pneg %p108
        %p409 = pneg %p132
        %p410 = pneg %p129
        %p411 = pneg %p153
        %p412 = pneg %p150
        %p413 = pneg %p174
        %p414 = pneg %p171
        %p415 = pneg %p195
        %p416 = pneg %p192
        %p417 = pneg %p216
        %p418 = pneg %p213
        %p419 = pneg %p237
        %p420 = pneg %p234
        %p421 = pneg %p258
        %p422 = pneg %p255
        %p423 = pneg %p284
        %p424 = pneg %p281
        %s425 = sand.u32 %s271, 1
        %s426 = scalar_lea.sflag [#allocation11], %s425
        %s427 = sand.u32 %s271, 1
        %s428 = scalar_lea.vmem [#allocation15], %s427
        %p429 = scmp.lt.s32.totalorder %s27, 1
        %s430 = scalar_select %p429, %s27, 1
        %s431 = smul.addr %s430, 43
        %s432 = smul.addr %s431, 8
        %s433 = scalar_lea.vmem %s0, %s432
        %435 = vst [vmem:[#allocation2] sm:$0xff] 0.0
        %436 = vst [vmem:[#allocation2 + $0x8] sm:$0xff] 0.0
        %437 = vst [vmem:[#allocation2 + $0x10] sm:$0xff] 0.0
        %438 = vst [vmem:[#allocation2 + $0x18] sm:$0xff] 0.0
        %439 = vst [vmem:[#allocation2 + $0x20] sm:$0xff] 0.0
        %440 = vst [vmem:[#allocation2 + $0x28] sm:$0xff] 0.0
        %441 = vst [vmem:[#allocation2 + $0x30] sm:$0xff] 0.0
        %442 = vst [vmem:[#allocation2 + $0x38] sm:$0xff] 0.0
        %443 = vst [vmem:[#allocation2 + $0x40] sm:$0xff] 0.0
        %444 = vst [vmem:[#allocation2 + $0x48] sm:$0xff] 0.0
        %445 = vst [vmem:[#allocation2 + $0x50] sm:$0xff] 0.0
        %446 = vst [vmem:[#allocation2 + $0x58] sm:$0xff] 0.0
        %447 = vst [vmem:[#allocation2 + $0x60] sm:$0xff] 0.0
        %448 = vst [vmem:[#allocation2 + $0x68] sm:$0x3f] 0.0
        %449 = vst [vmem:[#allocation3] sm:$0xff] 0.0
        %450 = vst [vmem:[#allocation3 + $0x8] sm:$0xff] 0.0
        %451 = vst [vmem:[#allocation3 + $0x10] sm:$0xff] 0.0
        %452 = vst [vmem:[#allocation3 + $0x18] sm:$0xff] 0.0
        %453 = vst [vmem:[#allocation3 + $0x20] sm:$0xff] 0.0
        %454 = vst [vmem:[#allocation3 + $0x28] sm:$0x3] 0.0
        %455 = vst [vmem:[#allocation4] sm:$0xff] 0.0
        %456 = vst [vmem:[#allocation4 + $0x8] sm:$0xff] 0.0
        %457 = vst [vmem:[#allocation4 + $0x10] sm:$0xf] 0.0
        %v458 = vld [vmem:[%s433] sm:$0xff]
        %v459 = vld [vmem:[%s433 + $0x8] sm:$0xff]
        %v460 = vld [vmem:[%s433 + $0x10] sm:$0xff]
        %v461 = vld [vmem:[%s433 + $0x18] sm:$0xff]
        %v462 = vld [vmem:[%s433 + $0x20] sm:$0xff]
        %v463 = vld [vmem:[%s433 + $0x28] sm:$0xff]
        %v464 = vld [vmem:[%s433 + $0x30] sm:$0xff]
        %v465 = vld [vmem:[%s433 + $0x38] sm:$0xff]
        %v466 = vld [vmem:[%s433 + $0x40] sm:$0xff]
        %v467 = vld [vmem:[%s433 + $0x48] sm:$0xff]
        %v468 = vld [vmem:[%s433 + $0x50] sm:$0xff]
        %v469 = vld [vmem:[%s433 + $0x58] sm:$0xff]
        %v470 = vld [vmem:[%s433 + $0x60] sm:$0xff]
        %v471 = vld [vmem:[%s433 + $0x68] sm:$0xff]
        %v472 = vld [vmem:[%s433 + $0x70] sm:$0xff]
        %v473 = vld [vmem:[%s433 + $0x78] sm:$0xff]
        %v474 = vld [vmem:[%s433 + $0x80] sm:$0xff]
        %v475 = vld [vmem:[%s433 + $0x88] sm:$0xff]
        %v476 = vld [vmem:[%s433 + $0x90] sm:$0xff]
        %v477 = vld [vmem:[%s433 + $0x98] sm:$0xff]
        %v478 = vld [vmem:[%s433 + $0xa0] sm:$0xff]
        %v479 = vld [vmem:[%s433 + $0xa8] sm:$0xff]
        %v480 = vld [vmem:[%s433 + $0xb0] sm:$0xff]
        %v481 = vld [vmem:[%s433 + $0xb8] sm:$0xff]
        %v482 = vld [vmem:[%s433 + $0xc0] sm:$0xff]
        %v483 = vld [vmem:[%s433 + $0xc8] sm:$0xff]
        %v484 = vld [vmem:[%s433 + $0xd0] sm:$0xff]
        %v485 = vld [vmem:[%s433 + $0xd8] sm:$0xff]
        %v486 = vld [vmem:[%s433 + $0xe0] sm:$0xff]
        %v487 = vld [vmem:[%s433 + $0xe8] sm:$0xff]
        %v488 = vld [vmem:[%s433 + $0xf0] sm:$0xff]
        %v489 = vld [vmem:[%s433 + $0xf8] sm:$0xff]
        %v490 = vld [vmem:[%s433 + $0x100] sm:$0xff]
        %v491 = vld [vmem:[%s433 + $0x108] sm:$0xff]
        %v492 = vld [vmem:[%s433 + $0x110] sm:$0xff]
        %v493 = vld [vmem:[%s433 + $0x118] sm:$0xff]
        %v494 = vpack.c.bf16 %v459, %v458
        %v495 = vpack.c.bf16 %v461, %v460
        %v496 = vpack.c.bf16 %v463, %v462
        %v497 = vpack.c.bf16 %v465, %v464
        %v498 = vpack.c.bf16 %v467, %v466
        %v499 = vpack.c.bf16 %v469, %v468
        %v500 = vpack.c.bf16 %v471, %v470
        %v501 = vpack.c.bf16 %v473, %v472
        %v502 = vpack.c.bf16 %v475, %v474
        %v503 = vpack.c.bf16 %v477, %v476
        %v504 = vpack.c.bf16 %v479, %v478
        %v505 = vpack.c.bf16 %v481, %v480
        %v506 = vpack.c.bf16 %v483, %v482
        %v507 = vpack.c.bf16 %v485, %v484
        %v508 = vpack.c.bf16 %v487, %v486
        %v509 = vpack.c.bf16 %v489, %v488
        %v510 = vpack.c.bf16 %v491, %v490
        %v511 = vpack.c.bf16 %v493, %v492
        %v512 = vld [vmem:[%s1] sm:$0x3]
        %vm513 = vcmask 31744
        %v515 = vsel %vm513, %v494, 0
        %v518 = vsel %vm513, %v495, 0
        %v521 = vsel %vm513, %v496, 0
        %v524 = vsel %vm513, %v497, 0
        %v527 = vsel %vm513, %v498, 0
        %v530 = vsel %vm513, %v499, 0
        %v533 = vsel %vm513, %v500, 0
        %v536 = vsel %vm513, %v501, 0
        %v539 = vsel %vm513, %v502, 0
        %v542 = vsel %vm513, %v503, 0
        %v545 = vsel %vm513, %v504, 0
        %v548 = vsel %vm513, %v505, 0
        %v551 = vsel %vm513, %v506, 0
        %v554 = vsel %vm513, %v507, 0
        %v557 = vsel %vm513, %v508, 0
        %v560 = vsel %vm513, %v509, 0
        %v563 = vsel %vm513, %v510, 0
        %v566 = vsel %vm513, %v511, 0
        %vm568 = vcmask 1041408
        %v570 = vsel %vm568, %v512, 0
        %572 = vmatpush.bf16.msra.mxu0 0
        %573 = vmatpush.bf16.msra.mxu0 0
        %574 = vmatpush.bf16.msra.mxu0 0
        %575 = vmatpush.bf16.msra.mxu0 0
        %576 = vmatpush.bf16.msra.mxu0 0
        %577 = vmatpush.bf16.msra.mxu0 0
        %578 = vmatpush.bf16.msra.mxu0 0
        %579 = vmatpush.bf16.msra.mxu0 %v570
        %580 = vmatmul.bf16.gmra.mxu0 %v515
        %v581 = vpop.f32.mrf.mxu0
        %v582 = vadd.f32 0.0, %v581
        %v583 = vpop.f32.mrf.mxu0
        %v584 = vadd.f32 0.0, %v583
        %585 = vmatmul.bf16.gmra.mxu0 %v518
        %v586 = vpop.f32.mrf.mxu0
        %v587 = vadd.f32 0.0, %v586
        %v588 = vpop.f32.mrf.mxu0
        %v589 = vadd.f32 0.0, %v588
        %590 = vmatmul.bf16.gmra.mxu0 %v521
        %v591 = vpop.f32.mrf.mxu0
        %v592 = vadd.f32 0.0, %v591
        %v593 = vpop.f32.mrf.mxu0
        %v594 = vadd.f32 0.0, %v593
        %595 = vmatmul.bf16.gmra.mxu0 %v524
        %v596 = vpop.f32.mrf.mxu0
        %v597 = vadd.f32 0.0, %v596
        %v598 = vpop.f32.mrf.mxu0
        %v599 = vadd.f32 0.0, %v598
        %600 = vmatmul.bf16.gmra.mxu0 %v527
        %v601 = vpop.f32.mrf.mxu0
        %v602 = vadd.f32 0.0, %v601
        %v603 = vpop.f32.mrf.mxu0
        %v604 = vadd.f32 0.0, %v603
        %605 = vmatmul.bf16.gmra.mxu0 %v530
        %v606 = vpop.f32.mrf.mxu0
        %v607 = vadd.f32 0.0, %v606
        %v608 = vpop.f32.mrf.mxu0
        %v609 = vadd.f32 0.0, %v608
        %610 = vmatmul.bf16.gmra.mxu0 %v533
        %v611 = vpop.f32.mrf.mxu0
        %v612 = vadd.f32 0.0, %v611
        %v613 = vpop.f32.mrf.mxu0
        %v614 = vadd.f32 0.0, %v613
        %615 = vmatmul.bf16.gmra.mxu0 %v536
        %v616 = vpop.f32.mrf.mxu0
        %v617 = vadd.f32 0.0, %v616
        %v618 = vpop.f32.mrf.mxu0
        %v619 = vadd.f32 0.0, %v618
        %620 = vmatmul.bf16.gmra.mxu0 %v539
        %v621 = vpop.f32.mrf.mxu0
        %v622 = vadd.f32 0.0, %v621
        %v623 = vpop.f32.mrf.mxu0
        %v624 = vadd.f32 0.0, %v623
        %625 = vmatmul.bf16.gmra.mxu0 %v542
        %v626 = vpop.f32.mrf.mxu0
        %v627 = vadd.f32 0.0, %v626
        %v628 = vpop.f32.mrf.mxu0
        %v629 = vadd.f32 0.0, %v628
        %630 = vmatmul.bf16.gmra.mxu0 %v545
        %v631 = vpop.f32.mrf.mxu0
        %v632 = vadd.f32 0.0, %v631
        %v633 = vpop.f32.mrf.mxu0
        %v634 = vadd.f32 0.0, %v633
        %635 = vmatmul.bf16.gmra.mxu0 %v548
        %v636 = vpop.f32.mrf.mxu0
        %v637 = vadd.f32 0.0, %v636
        %v638 = vpop.f32.mrf.mxu0
        %v639 = vadd.f32 0.0, %v638
        %640 = vmatmul.bf16.gmra.mxu0 %v551
        %v641 = vpop.f32.mrf.mxu0
        %v642 = vadd.f32 0.0, %v641
        %v643 = vpop.f32.mrf.mxu0
        %v644 = vadd.f32 0.0, %v643
        %645 = vmatmul.bf16.gmra.mxu0 %v554
        %v646 = vpop.f32.mrf.mxu0
        %v647 = vadd.f32 0.0, %v646
        %v648 = vpop.f32.mrf.mxu0
        %v649 = vadd.f32 0.0, %v648
        %650 = vmatmul.bf16.gmra.mxu0 %v557
        %v651 = vpop.f32.mrf.mxu0
        %v652 = vadd.f32 0.0, %v651
        %v653 = vpop.f32.mrf.mxu0
        %v654 = vadd.f32 0.0, %v653
        %655 = vmatmul.bf16.gmra.mxu0 %v560
        %v656 = vpop.f32.mrf.mxu0
        %v657 = vadd.f32 0.0, %v656
        %v658 = vpop.f32.mrf.mxu0
        %v659 = vadd.f32 0.0, %v658
        %660 = vmatmul.bf16.gmra.mxu0 %v563
        %v661 = vpop.f32.mrf.mxu0
        %v662 = vadd.f32 0.0, %v661
        %v663 = vpop.f32.mrf.mxu0
        %v664 = vadd.f32 0.0, %v663
        %665 = vmatmul.bf16.gmra.mxu0 %v566
        %v666 = vpop.f32.mrf.mxu0
        %v667 = vadd.f32 0.0, %v666
        %v668 = vpop.f32.mrf.mxu0
        %v669 = vadd.f32 0.0, %v668
        %670 = vdwg.mxu0
        %671 = vst [vmem:[#allocation5] sm:$0xff] %v582
        %672 = vst [vmem:[#allocation5 + $0x8] sm:$0xff] %v584
        %673 = vst [vmem:[#allocation5 + $0x10] sm:$0xff] %v587
        %674 = vst [vmem:[#allocation5 + $0x18] sm:$0xff] %v589
        %675 = vst [vmem:[#allocation5 + $0x20] sm:$0xff] %v592
        %676 = vst [vmem:[#allocation5 + $0x28] sm:$0xff] %v594
        %677 = vst [vmem:[#allocation5 + $0x30] sm:$0xff] %v597
        %678 = vst [vmem:[#allocation5 + $0x38] sm:$0xff] %v599
        %679 = vst [vmem:[#allocation5 + $0x40] sm:$0xff] %v602
        %680 = vst [vmem:[#allocation5 + $0x48] sm:$0xff] %v604
        %681 = vst [vmem:[#allocation5 + $0x50] sm:$0xff] %v607
        %682 = vst [vmem:[#allocation5 + $0x58] sm:$0xff] %v609
        %683 = vst [vmem:[#allocation5 + $0x60] sm:$0xff] %v612
        %684 = vst [vmem:[#allocation5 + $0x68] sm:$0xff] %v614
        %685 = vst [vmem:[#allocation5 + $0x70] sm:$0xff] %v617
        %686 = vst [vmem:[#allocation5 + $0x78] sm:$0xff] %v619
        %687 = vst [vmem:[#allocation5 + $0x80] sm:$0xff] %v622
        %688 = vst [vmem:[#allocation5 + $0x88] sm:$0xff] %v624
        %689 = vst [vmem:[#allocation5 + $0x90] sm:$0xff] %v627
        %690 = vst [vmem:[#allocation5 + $0x98] sm:$0xff] %v629
        %691 = vst [vmem:[#allocation5 + $0xa0] sm:$0xff] %v632
        %692 = vst [vmem:[#allocation5 + $0xa8] sm:$0xff] %v634
        %693 = vst [vmem:[#allocation5 + $0xb0] sm:$0xff] %v637
        %694 = vst [vmem:[#allocation5 + $0xb8] sm:$0xff] %v639
        %695 = vst [vmem:[#allocation5 + $0xc0] sm:$0xff] %v642
        %696 = vst [vmem:[#allocation5 + $0xc8] sm:$0xff] %v644
        %697 = vst [vmem:[#allocation5 + $0xd0] sm:$0xff] %v647
        %698 = vst [vmem:[#allocation5 + $0xd8] sm:$0xff] %v649
        %699 = vst [vmem:[#allocation5 + $0xe0] sm:$0xff] %v652
        %700 = vst [vmem:[#allocation5 + $0xe8] sm:$0xff] %v654
        %701 = vst [vmem:[#allocation5 + $0xf0] sm:$0xff] %v657
        %702 = vst [vmem:[#allocation5 + $0xf8] sm:$0xff] %v659
        %703 = vst [vmem:[#allocation5 + $0x100] sm:$0xff] %v662
        %704 = vst [vmem:[#allocation5 + $0x108] sm:$0xff] %v664
        %705 = vst [vmem:[#allocation5 + $0x110] sm:$0xff] %v667
        %706 = vst [vmem:[#allocation5 + $0x118] sm:$0xff] %v669
        %v707 = vld [vmem:[%s433 + $0x1] sm:$0xff]
        %v708 = vld [vmem:[%s433 + $0x9] sm:$0xff]
        %v709 = vld [vmem:[%s433 + $0x11] sm:$0xff]
        %v710 = vld [vmem:[%s433 + $0x19] sm:$0xff]
        %v711 = vld [vmem:[%s433 + $0x21] sm:$0xff]
        %v712 = vld [vmem:[%s433 + $0x29] sm:$0xff]
        %v713 = vld [vmem:[%s433 + $0x31] sm:$0xff]
        %v714 = vld [vmem:[%s433 + $0x39] sm:$0xff]
        %v715 = vld [vmem:[%s433 + $0x41] sm:$0xff]
        %v716 = vld [vmem:[%s433 + $0x49] sm:$0xff]
        %v717 = vld [vmem:[%s433 + $0x51] sm:$0xff]
        %v718 = vld [vmem:[%s433 + $0x59] sm:$0xff]
        %v719 = vld [vmem:[%s433 + $0x61] sm:$0xff]
        %v720 = vld [vmem:[%s433 + $0x69] sm:$0xff]
        %v721 = vld [vmem:[%s433 + $0x71] sm:$0xff]
        %v722 = vld [vmem:[%s433 + $0x79] sm:$0xff]
        %v723 = vld [vmem:[%s433 + $0x81] sm:$0xff]
        %v724 = vld [vmem:[%s433 + $0x89] sm:$0xff]
        %v725 = vld [vmem:[%s433 + $0x91] sm:$0xff]
        %v726 = vld [vmem:[%s433 + $0x99] sm:$0xff]
        %v727 = vld [vmem:[%s433 + $0xa1] sm:$0xff]
        %v728 = vld [vmem:[%s433 + $0xa9] sm:$0xff]
        %v729 = vld [vmem:[%s433 + $0xb1] sm:$0xff]
        %v730 = vld [vmem:[%s433 + $0xb9] sm:$0xff]
        %v731 = vld [vmem:[%s433 + $0xc1] sm:$0xff]
        %v732 = vld [vmem:[%s433 + $0xc9] sm:$0xff]
        %v733 = vld [vmem:[%s433 + $0xd1] sm:$0xff]
        %v734 = vld [vmem:[%s433 + $0xd9] sm:$0xff]
        %v735 = vld [vmem:[%s433 + $0xe1] sm:$0xff]
        %v736 = vld [vmem:[%s433 + $0xe9] sm:$0xff]
        %v737 = vld [vmem:[%s433 + $0xf1] sm:$0xff]
        %v738 = vld [vmem:[%s433 + $0xf9] sm:$0xff]
        %v739 = vld [vmem:[%s433 + $0x101] sm:$0xff]
        %v740 = vld [vmem:[%s433 + $0x109] sm:$0xff]
        %v741 = vld [vmem:[%s433 + $0x111] sm:$0xff]
        %v742 = vld [vmem:[%s433 + $0x119] sm:$0xff]
        %v743 = vpack.c.bf16 %v708, %v707
        %v744 = vpack.c.bf16 %v710, %v709
        %v745 = vpack.c.bf16 %v712, %v711
        %v746 = vpack.c.bf16 %v714, %v713
        %v747 = vpack.c.bf16 %v716, %v715
        %v748 = vpack.c.bf16 %v718, %v717
        %v749 = vpack.c.bf16 %v720, %v719
        %v750 = vpack.c.bf16 %v722, %v721
        %v751 = vpack.c.bf16 %v724, %v723
        %v752 = vpack.c.bf16 %v726, %v725
        %v753 = vpack.c.bf16 %v728, %v727
        %v754 = vpack.c.bf16 %v730, %v729
        %v755 = vpack.c.bf16 %v732, %v731
        %v756 = vpack.c.bf16 %v734, %v733
        %v757 = vpack.c.bf16 %v736, %v735
        %v758 = vpack.c.bf16 %v738, %v737
        %v759 = vpack.c.bf16 %v740, %v739
        %v760 = vpack.c.bf16 %v742, %v741
        %s761 = scalar_lea.vmem %s1, 2
        %v762 = vld [vmem:[%s761] sm:$0x3]
        %v764 = vsel %vm513, %v743, 0
        %v767 = vsel %vm513, %v744, 0
        %v770 = vsel %vm513, %v745, 0
        %v773 = vsel %vm513, %v746, 0
        %v776 = vsel %vm513, %v747, 0
        %v779 = vsel %vm513, %v748, 0
        %v782 = vsel %vm513, %v749, 0
        %v785 = vsel %vm513, %v750, 0
        %v788 = vsel %vm513, %v751, 0
        %v791 = vsel %vm513, %v752, 0
        %v794 = vsel %vm513, %v753, 0
        %v797 = vsel %vm513, %v754, 0
        %v800 = vsel %vm513, %v755, 0
        %v803 = vsel %vm513, %v756, 0
        %v806 = vsel %vm513, %v757, 0
        %v809 = vsel %vm513, %v758, 0
        %v812 = vsel %vm513, %v759, 0
        %v815 = vsel %vm513, %v760, 0
        %v818 = vsel %vm568, %v762, 0
        %820 = vmatpush.bf16.msra.mxu0 0
        %821 = vmatpush.bf16.msra.mxu0 0
        %822 = vmatpush.bf16.msra.mxu0 0
        %823 = vmatpush.bf16.msra.mxu0 0
        %824 = vmatpush.bf16.msra.mxu0 0
        %825 = vmatpush.bf16.msra.mxu0 0
        %826 = vmatpush.bf16.msra.mxu0 0
        %827 = vmatpush.bf16.msra.mxu0 %v818
        %828 = vmatmul.bf16.gmra.mxu0 %v764
        %v829 = vpop.f32.mrf.mxu0
        %v830 = vadd.f32 0.0, %v829
        %v831 = vpop.f32.mrf.mxu0
        %v832 = vadd.f32 0.0, %v831
        %833 = vmatmul.bf16.gmra.mxu0 %v767
        %v834 = vpop.f32.mrf.mxu0
        %v835 = vadd.f32 0.0, %v834
        %v836 = vpop.f32.mrf.mxu0
        %v837 = vadd.f32 0.0, %v836
        %838 = vmatmul.bf16.gmra.mxu0 %v770
        %v839 = vpop.f32.mrf.mxu0
        %v840 = vadd.f32 0.0, %v839
        %v841 = vpop.f32.mrf.mxu0
        %v842 = vadd.f32 0.0, %v841
        %843 = vmatmul.bf16.gmra.mxu0 %v773
        %v844 = vpop.f32.mrf.mxu0
        %v845 = vadd.f32 0.0, %v844
        %v846 = vpop.f32.mrf.mxu0
        %v847 = vadd.f32 0.0, %v846
        %848 = vmatmul.bf16.gmra.mxu0 %v776
        %v849 = vpop.f32.mrf.mxu0
        %v850 = vadd.f32 0.0, %v849
        %v851 = vpop.f32.mrf.mxu0
        %v852 = vadd.f32 0.0, %v851
        %853 = vmatmul.bf16.gmra.mxu0 %v779
        %v854 = vpop.f32.mrf.mxu0
        %v855 = vadd.f32 0.0, %v854
        %v856 = vpop.f32.mrf.mxu0
        %v857 = vadd.f32 0.0, %v856
        %858 = vmatmul.bf16.gmra.mxu0 %v782
        %v859 = vpop.f32.mrf.mxu0
        %v860 = vadd.f32 0.0, %v859
        %v861 = vpop.f32.mrf.mxu0
        %v862 = vadd.f32 0.0, %v861
        %863 = vmatmul.bf16.gmra.mxu0 %v785
        %v864 = vpop.f32.mrf.mxu0
        %v865 = vadd.f32 0.0, %v864
        %v866 = vpop.f32.mrf.mxu0
        %v867 = vadd.f32 0.0, %v866
        %868 = vmatmul.bf16.gmra.mxu0 %v788
        %v869 = vpop.f32.mrf.mxu0
        %v870 = vadd.f32 0.0, %v869
        %v871 = vpop.f32.mrf.mxu0
        %v872 = vadd.f32 0.0, %v871
        %873 = vmatmul.bf16.gmra.mxu0 %v791
        %v874 = vpop.f32.mrf.mxu0
        %v875 = vadd.f32 0.0, %v874
        %v876 = vpop.f32.mrf.mxu0
        %v877 = vadd.f32 0.0, %v876
        %878 = vmatmul.bf16.gmra.mxu0 %v794
        %v879 = vpop.f32.mrf.mxu0
        %v880 = vadd.f32 0.0, %v879
        %v881 = vpop.f32.mrf.mxu0
        %v882 = vadd.f32 0.0, %v881
        %883 = vmatmul.bf16.gmra.mxu0 %v797
        %v884 = vpop.f32.mrf.mxu0
        %v885 = vadd.f32 0.0, %v884
        %v886 = vpop.f32.mrf.mxu0
        %v887 = vadd.f32 0.0, %v886
        %888 = vmatmul.bf16.gmra.mxu0 %v800
        %v889 = vpop.f32.mrf.mxu0
        %v890 = vadd.f32 0.0, %v889
        %v891 = vpop.f32.mrf.mxu0
        %v892 = vadd.f32 0.0, %v891
        %893 = vmatmul.bf16.gmra.mxu0 %v803
        %v894 = vpop.f32.mrf.mxu0
        %v895 = vadd.f32 0.0, %v894
        %v896 = vpop.f32.mrf.mxu0
        %v897 = vadd.f32 0.0, %v896
        %898 = vmatmul.bf16.gmra.mxu0 %v806
        %v899 = vpop.f32.mrf.mxu0
        %v900 = vadd.f32 0.0, %v899
        %v901 = vpop.f32.mrf.mxu0
        %v902 = vadd.f32 0.0, %v901
        %903 = vmatmul.bf16.gmra.mxu0 %v809
        %v904 = vpop.f32.mrf.mxu0
        %v905 = vadd.f32 0.0, %v904
        %v906 = vpop.f32.mrf.mxu0
        %v907 = vadd.f32 0.0, %v906
        %908 = vmatmul.bf16.gmra.mxu0 %v812
        %v909 = vpop.f32.mrf.mxu0
        %v910 = vadd.f32 0.0, %v909
        %v911 = vpop.f32.mrf.mxu0
        %v912 = vadd.f32 0.0, %v911
        %913 = vmatmul.bf16.gmra.mxu0 %v815
        %v914 = vpop.f32.mrf.mxu0
        %v915 = vadd.f32 0.0, %v914
        %v916 = vpop.f32.mrf.mxu0
        %v917 = vadd.f32 0.0, %v916
        %918 = vdwg.mxu0
        %v919 = vld [vmem:[#allocation5] sm:$0xff]
        %v920 = vld [vmem:[#allocation5 + $0x8] sm:$0xff]
        %v921 = vld [vmem:[#allocation5 + $0x10] sm:$0xff]
        %v922 = vld [vmem:[#allocation5 + $0x18] sm:$0xff]
        %v923 = vld [vmem:[#allocation5 + $0x20] sm:$0xff]
        %v924 = vld [vmem:[#allocation5 + $0x28] sm:$0xff]
        %v925 = vld [vmem:[#allocation5 + $0x30] sm:$0xff]
        %v926 = vld [vmem:[#allocation5 + $0x38] sm:$0xff]
        %v927 = vld [vmem:[#allocation5 + $0x40] sm:$0xff]
        %v928 = vld [vmem:[#allocation5 + $0x48] sm:$0xff]
        %v929 = vld [vmem:[#allocation5 + $0x50] sm:$0xff]
        %v930 = vld [vmem:[#allocation5 + $0x58] sm:$0xff]
        %v931 = vld [vmem:[#allocation5 + $0x60] sm:$0xff]
        %v932 = vld [vmem:[#allocation5 + $0x68] sm:$0xff]
        %v933 = vld [vmem:[#allocation5 + $0x70] sm:$0xff]
        %v934 = vld [vmem:[#allocation5 + $0x78] sm:$0xff]
        %v935 = vld [vmem:[#allocation5 + $0x80] sm:$0xff]
        %v936 = vld [vmem:[#allocation5 + $0x88] sm:$0xff]
        %v937 = vld [vmem:[#allocation5 + $0x90] sm:$0xff]
        %v938 = vld [vmem:[#allocation5 + $0x98] sm:$0xff]
        %v939 = vld [vmem:[#allocation5 + $0xa0] sm:$0xff]
        %v940 = vld [vmem:[#allocation5 + $0xa8] sm:$0xff]
        %v941 = vld [vmem:[#allocation5 + $0xb0] sm:$0xff]
        %v942 = vld [vmem:[#allocation5 + $0xb8] sm:$0xff]
        %v943 = vld [vmem:[#allocation5 + $0xc0] sm:$0xff]
        %v944 = vld [vmem:[#allocation5 + $0xc8] sm:$0xff]
        %v945 = vld [vmem:[#allocation5 + $0xd0] sm:$0xff]
        %v946 = vld [vmem:[#allocation5 + $0xd8] sm:$0xff]
        %v947 = vld [vmem:[#allocation5 + $0xe0] sm:$0xff]
        %v948 = vld [vmem:[#allocation5 + $0xe8] sm:$0xff]
        %v949 = vld [vmem:[#allocation5 + $0xf0] sm:$0xff]
        %v950 = vld [vmem:[#allocation5 + $0xf8] sm:$0xff]
        %v951 = vld [vmem:[#allocation5 + $0x100] sm:$0xff]
        %v952 = vld [vmem:[#allocation5 + $0x108] sm:$0xff]
        %v953 = vld [vmem:[#allocation5 + $0x110] sm:$0xff]
        %v954 = vld [vmem:[#allocation5 + $0x118] sm:$0xff]
        %v955 = vadd.f32 %v919, %v830
        %v956 = vadd.f32 %v920, %v832
        %v957 = vadd.f32 %v921, %v835
        %v958 = vadd.f32 %v922, %v837
        %v959 = vadd.f32 %v923, %v840
        %v960 = vadd.f32 %v924, %v842
        %v961 = vadd.f32 %v925, %v845
        %v962 = vadd.f32 %v926, %v847
        %v963 = vadd.f32 %v927, %v850
        %v964 = vadd.f32 %v928, %v852
        %v965 = vadd.f32 %v929, %v855
        %v966 = vadd.f32 %v930, %v857
        %v967 = vadd.f32 %v931, %v860
        %v968 = vadd.f32 %v932, %v862
        %v969 = vadd.f32 %v933, %v865
        %v970 = vadd.f32 %v934, %v867
        %v971 = vadd.f32 %v935, %v870
        %v972 = vadd.f32 %v936, %v872
        %v973 = vadd.f32 %v937, %v875
        %v974 = vadd.f32 %v938, %v877
        %v975 = vadd.f32 %v939, %v880
        %v976 = vadd.f32 %v940, %v882
        %v977 = vadd.f32 %v941, %v885
        %v978 = vadd.f32 %v942, %v887
        %v979 = vadd.f32 %v943, %v890
        %v980 = vadd.f32 %v944, %v892
        %v981 = vadd.f32 %v945, %v895
        %v982 = vadd.f32 %v946, %v897
        %v983 = vadd.f32 %v947, %v900
        %v984 = vadd.f32 %v948, %v902
        %v985 = vadd.f32 %v949, %v905
        %v986 = vadd.f32 %v950, %v907
        %v987 = vadd.f32 %v951, %v910
        %v988 = vadd.f32 %v952, %v912
        %v989 = vadd.f32 %v953, %v915
        %v990 = vadd.f32 %v954, %v917
        %991 = vst [vmem:[#allocation5] sm:$0xff] %v955
        %992 = vst [vmem:[#allocation5 + $0x8] sm:$0xff] %v956
        %993 = vst [vmem:[#allocation5 + $0x10] sm:$0xff] %v957
        %994 = vst [vmem:[#allocation5 + $0x18] sm:$0xff] %v958
        %995 = vst [vmem:[#allocation5 + $0x20] sm:$0xff] %v959
        %996 = vst [vmem:[#allocation5 + $0x28] sm:$0xff] %v960
        %997 = vst [vmem:[#allocation5 + $0x30] sm:$0xff] %v961
        %998 = vst [vmem:[#allocation5 + $0x38] sm:$0xff] %v962
        %999 = vst [vmem:[#allocation5 + $0x40] sm:$0xff] %v963
        %1000 = vst [vmem:[#allocation5 + $0x48] sm:$0xff] %v964
        %1001 = vst [vmem:[#allocation5 + $0x50] sm:$0xff] %v965
        %1002 = vst [vmem:[#allocation5 + $0x58] sm:$0xff] %v966
        %1003 = vst [vmem:[#allocation5 + $0x60] sm:$0xff] %v967
        %1004 = vst [vmem:[#allocation5 + $0x68] sm:$0xff] %v968
        %1005 = vst [vmem:[#allocation5 + $0x70] sm:$0xff] %v969
        %1006 = vst [vmem:[#allocation5 + $0x78] sm:$0xff] %v970
        %1007 = vst [vmem:[#allocation5 + $0x80] sm:$0xff] %v971
        %1008 = vst [vmem:[#allocation5 + $0x88] sm:$0xff] %v972
        %1009 = vst [vmem:[#allocation5 + $0x90] sm:$0xff] %v973
        %1010 = vst [vmem:[#allocation5 + $0x98] sm:$0xff] %v974
        %1011 = vst [vmem:[#allocation5 + $0xa0] sm:$0xff] %v975
        %1012 = vst [vmem:[#allocation5 + $0xa8] sm:$0xff] %v976
        %1013 = vst [vmem:[#allocation5 + $0xb0] sm:$0xff] %v977
        %1014 = vst [vmem:[#allocation5 + $0xb8] sm:$0xff] %v978
        %1015 = vst [vmem:[#allocation5 + $0xc0] sm:$0xff] %v979
        %1016 = vst [vmem:[#allocation5 + $0xc8] sm:$0xff] %v980
        %1017 = vst [vmem:[#allocation5 + $0xd0] sm:$0xff] %v981
        %1018 = vst [vmem:[#allocation5 + $0xd8] sm:$0xff] %v982
        %1019 = vst [vmem:[#allocation5 + $0xe0] sm:$0xff] %v983
        %1020 = vst [vmem:[#allocation5 + $0xe8] sm:$0xff] %v984
        %1021 = vst [vmem:[#allocation5 + $0xf0] sm:$0xff] %v985
        %1022 = vst [vmem:[#allocation5 + $0xf8] sm:$0xff] %v986
        %1023 = vst [vmem:[#allocation5 + $0x100] sm:$0xff] %v987
        %1024 = vst [vmem:[#allocation5 + $0x108] sm:$0xff] %v988
        %1025 = vst [vmem:[#allocation5 + $0x110] sm:$0xff] %v989
        %1026 = vst [vmem:[#allocation5 + $0x118] sm:$0xff] %v990
        %v1027 = vld [vmem:[%s433 + $0x2] sm:$0xff]
        %v1028 = vld [vmem:[%s433 + $0xa] sm:$0xff]
        %v1029 = vld [vmem:[%s433 + $0x12] sm:$0xff]
        %v1030 = vld [vmem:[%s433 + $0x1a] sm:$0xff]
        %v1031 = vld [vmem:[%s433 + $0x22] sm:$0xff]
        %v1032 = vld [vmem:[%s433 + $0x2a] sm:$0xff]
        %v1033 = vld [vmem:[%s433 + $0x32] sm:$0xff]
        %v1034 = vld [vmem:[%s433 + $0x3a] sm:$0xff]
        %v1035 = vld [vmem:[%s433 + $0x42] sm:$0xff]
        %v1036 = vld [vmem:[%s433 + $0x4a] sm:$0xff]
        %v1037 = vld [vmem:[%s433 + $0x52] sm:$0xff]
        %v1038 = vld [vmem:[%s433 + $0x5a] sm:$0xff]
        %v1039 = vld [vmem:[%s433 + $0x62] sm:$0xff]
        %v1040 = vld [vmem:[%s433 + $0x6a] sm:$0xff]
        %v1041 = vld [vmem:[%s433 + $0x72] sm:$0xff]
        %v1042 = vld [vmem:[%s433 + $0x7a] sm:$0xff]
        %v1043 = vld [vmem:[%s433 + $0x82] sm:$0xff]
        %v1044 = vld [vmem:[%s433 + $0x8a] sm:$0xff]
        %v1045 = vld [vmem:[%s433 + $0x92] sm:$0xff]
        %v1046 = vld [vmem:[%s433 + $0x9a] sm:$0xff]
        %v1047 = vld [vmem:[%s433 + $0xa2] sm:$0xff]
        %v1048 = vld [vmem:[%s433 + $0xaa] sm:$0xff]
        %v1049 = vld [vmem:[%s433 + $0xb2] sm:$0xff]
        %v1050 = vld [vmem:[%s433 + $0xba] sm:$0xff]
        %v1051 = vld [vmem:[%s433 + $0xc2] sm:$0xff]
        %v1052 = vld [vmem:[%s433 + $0xca] sm:$0xff]
        %v1053 = vld [vmem:[%s433 + $0xd2] sm:$0xff]
        %v1054 = vld [vmem:[%s433 + $0xda] sm:$0xff]
        %v1055 = vld [vmem:[%s433 + $0xe2] sm:$0xff]
        %v1056 = vld [vmem:[%s433 + $0xea] sm:$0xff]
        %v1057 = vld [vmem:[%s433 + $0xf2] sm:$0xff]
        %v1058 = vld [vmem:[%s433 + $0xfa] sm:$0xff]
        %v1059 = vld [vmem:[%s433 + $0x102] sm:$0xff]
        %v1060 = vld [vmem:[%s433 + $0x10a] sm:$0xff]
        %v1061 = vld [vmem:[%s433 + $0x112] sm:$0xff]
        %v1062 = vld [vmem:[%s433 + $0x11a] sm:$0xff]
        %v1063 = vpack.c.bf16 %v1028, %v1027
        %v1064 = vpack.c.bf16 %v1030, %v1029
        %v1065 = vpack.c.bf16 %v1032, %v1031
        %v1066 = vpack.c.bf16 %v1034, %v1033
        %v1067 = vpack.c.bf16 %v1036, %v1035
        %v1068 = vpack.c.bf16 %v1038, %v1037
        %v1069 = vpack.c.bf16 %v1040, %v1039
        %v1070 = vpack.c.bf16 %v1042, %v1041
        %v1071 = vpack.c.bf16 %v1044, %v1043
        %v1072 = vpack.c.bf16 %v1046, %v1045
        %v1073 = vpack.c.bf16 %v1048, %v1047
        %v1074 = vpack.c.bf16 %v1050, %v1049
        %v1075 = vpack.c.bf16 %v1052, %v1051
        %v1076 = vpack.c.bf16 %v1054, %v1053
        %v1077 = vpack.c.bf16 %v1056, %v1055
        %v1078 = vpack.c.bf16 %v1058, %v1057
        %v1079 = vpack.c.bf16 %v1060, %v1059
        %v1080 = vpack.c.bf16 %v1062, %v1061
        %s1081 = scalar_lea.vmem %s1, 4
        %v1082 = vld [vmem:[%s1081] sm:$0x3]
        %v1084 = vsel %vm513, %v1063, 0
        %v1087 = vsel %vm513, %v1064, 0
        %v1090 = vsel %vm513, %v1065, 0
        %v1093 = vsel %vm513, %v1066, 0
        %v1096 = vsel %vm513, %v1067, 0
        %v1099 = vsel %vm513, %v1068, 0
        %v1102 = vsel %vm513, %v1069, 0
        %v1105 = vsel %vm513, %v1070, 0
        %v1108 = vsel %vm513, %v1071, 0
        %v1111 = vsel %vm513, %v1072, 0
        %v1114 = vsel %vm513, %v1073, 0
        %v1117 = vsel %vm513, %v1074, 0
        %v1120 = vsel %vm513, %v1075, 0
        %v1123 = vsel %vm513, %v1076, 0
        %v1126 = vsel %vm513, %v1077, 0
        %v1129 = vsel %vm513, %v1078, 0
        %v1132 = vsel %vm513, %v1079, 0
        %v1135 = vsel %vm513, %v1080, 0
        %v1138 = vsel %vm568, %v1082, 0
        %1140 = vmatpush.bf16.msra.mxu0 0
        %1141 = vmatpush.bf16.msra.mxu0 0
        %1142 = vmatpush.bf16.msra.mxu0 0
        %1143 = vmatpush.bf16.msra.mxu0 0
        %1144 = vmatpush.bf16.msra.mxu0 0
        %1145 = vmatpush.bf16.msra.mxu0 0
        %1146 = vmatpush.bf16.msra.mxu0 0
        %1147 = vmatpush.bf16.msra.mxu0 %v1138
        %1148 = vmatmul.bf16.gmra.mxu0 %v1084
        %v1149 = vpop.f32.mrf.mxu0
        %v1150 = vadd.f32 0.0, %v1149
        %v1151 = vpop.f32.mrf.mxu0
        %v1152 = vadd.f32 0.0, %v1151
        %1153 = vmatmul.bf16.gmra.mxu0 %v1087
        %v1154 = vpop.f32.mrf.mxu0
        %v1155 = vadd.f32 0.0, %v1154
        %v1156 = vpop.f32.mrf.mxu0
        %v1157 = vadd.f32 0.0, %v1156
        %1158 = vmatmul.bf16.gmra.mxu0 %v1090
        %v1159 = vpop.f32.mrf.mxu0
        %v1160 = vadd.f32 0.0, %v1159
        %v1161 = vpop.f32.mrf.mxu0
        %v1162 = vadd.f32 0.0, %v1161
        %1163 = vmatmul.bf16.gmra.mxu0 %v1093
        %v1164 = vpop.f32.mrf.mxu0
        %v1165 = vadd.f32 0.0, %v1164
        %v1166 = vpop.f32.mrf.mxu0
        %v1167 = vadd.f32 0.0, %v1166
        %1168 = vmatmul.bf16.gmra.mxu0 %v1096
        %v1169 = vpop.f32.mrf.mxu0
        %v1170 = vadd.f32 0.0, %v1169
        %v1171 = vpop.f32.mrf.mxu0
        %v1172 = vadd.f32 0.0, %v1171
        %1173 = vmatmul.bf16.gmra.mxu0 %v1099
        %v1174 = vpop.f32.mrf.mxu0
        %v1175 = vadd.f32 0.0, %v1174
        %v1176 = vpop.f32.mrf.mxu0
        %v1177 = vadd.f32 0.0, %v1176
        %1178 = vmatmul.bf16.gmra.mxu0 %v1102
        %v1179 = vpop.f32.mrf.mxu0
        %v1180 = vadd.f32 0.0, %v1179
        %v1181 = vpop.f32.mrf.mxu0
        %v1182 = vadd.f32 0.0, %v1181
        %1183 = vmatmul.bf16.gmra.mxu0 %v1105
        %v1184 = vpop.f32.mrf.mxu0
        %v1185 = vadd.f32 0.0, %v1184
        %v1186 = vpop.f32.mrf.mxu0
        %v1187 = vadd.f32 0.0, %v1186
        %1188 = vmatmul.bf16.gmra.mxu0 %v1108
        %v1189 = vpop.f32.mrf.mxu0
        %v1190 = vadd.f32 0.0, %v1189
        %v1191 = vpop.f32.mrf.mxu0
        %v1192 = vadd.f32 0.0, %v1191
        %1193 = vmatmul.bf16.gmra.mxu0 %v1111
        %v1194 = vpop.f32.mrf.mxu0
        %v1195 = vadd.f32 0.0, %v1194
        %v1196 = vpop.f32.mrf.mxu0
        %v1197 = vadd.f32 0.0, %v1196
        %1198 = vmatmul.bf16.gmra.mxu0 %v1114
        %v1199 = vpop.f32.mrf.mxu0
        %v1200 = vadd.f32 0.0, %v1199
        %v1201 = vpop.f32.mrf.mxu0
        %v1202 = vadd.f32 0.0, %v1201
        %1203 = vmatmul.bf16.gmra.mxu0 %v1117
        %v1204 = vpop.f32.mrf.mxu0
        %v1205 = vadd.f32 0.0, %v1204
        %v1206 = vpop.f32.mrf.mxu0
        %v1207 = vadd.f32 0.0, %v1206
        %1208 = vmatmul.bf16.gmra.mxu0 %v1120
        %v1209 = vpop.f32.mrf.mxu0
        %v1210 = vadd.f32 0.0, %v1209
        %v1211 = vpop.f32.mrf.mxu0
        %v1212 = vadd.f32 0.0, %v1211
        %1213 = vmatmul.bf16.gmra.mxu0 %v1123
        %v1214 = vpop.f32.mrf.mxu0
        %v1215 = vadd.f32 0.0, %v1214
        %v1216 = vpop.f32.mrf.mxu0
        %v1217 = vadd.f32 0.0, %v1216
        %1218 = vmatmul.bf16.gmra.mxu0 %v1126
        %v1219 = vpop.f32.mrf.mxu0
        %v1220 = vadd.f32 0.0, %v1219
        %v1221 = vpop.f32.mrf.mxu0
        %v1222 = vadd.f32 0.0, %v1221
        %1223 = vmatmul.bf16.gmra.mxu0 %v1129
        %v1224 = vpop.f32.mrf.mxu0
        %v1225 = vadd.f32 0.0, %v1224
        %v1226 = vpop.f32.mrf.mxu0
        %v1227 = vadd.f32 0.0, %v1226
        %1228 = vmatmul.bf16.gmra.mxu0 %v1132
        %v1229 = vpop.f32.mrf.mxu0
        %v1230 = vadd.f32 0.0, %v1229
        %v1231 = vpop.f32.mrf.mxu0
        %v1232 = vadd.f32 0.0, %v1231
        %1233 = vmatmul.bf16.gmra.mxu0 %v1135
        %v1234 = vpop.f32.mrf.mxu0
        %v1235 = vadd.f32 0.0, %v1234
        %v1236 = vpop.f32.mrf.mxu0
        %v1237 = vadd.f32 0.0, %v1236
        %1238 = vdwg.mxu0
        %v1239 = vld [vmem:[#allocation5] sm:$0xff]
        %v1240 = vld [vmem:[#allocation5 + $0x8] sm:$0xff]
        %v1241 = vld [vmem:[#allocation5 + $0x10] sm:$0xff]
        %v1242 = vld [vmem:[#allocation5 + $0x18] sm:$0xff]
        %v1243 = vld [vmem:[#allocation5 + $0x20] sm:$0xff]
        %v1244 = vld [vmem:[#allocation5 + $0x28] sm:$0xff]
        %v1245 = vld [vmem:[#allocation5 + $0x30] sm:$0xff]
        %v1246 = vld [vmem:[#allocation5 + $0x38] sm:$0xff]
        %v1247 = vld [vmem:[#allocation5 + $0x40] sm:$0xff]
        %v1248 = vld [vmem:[#allocation5 + $0x48] sm:$0xff]
        %v1249 = vld [vmem:[#allocation5 + $0x50] sm:$0xff]
        %v1250 = vld [vmem:[#allocation5 + $0x58] sm:$0xff]
        %v1251 = vld [vmem:[#allocation5 + $0x60] sm:$0xff]
        %v1252 = vld [vmem:[#allocation5 + $0x68] sm:$0xff]
        %v1253 = vld [vmem:[#allocation5 + $0x70] sm:$0xff]
        %v1254 = vld [vmem:[#allocation5 + $0x78] sm:$0xff]
        %v1255 = vld [vmem:[#allocation5 + $0x80] sm:$0xff]
        %v1256 = vld [vmem:[#allocation5 + $0x88] sm:$0xff]
        %v1257 = vld [vmem:[#allocation5 + $0x90] sm:$0xff]
        %v1258 = vld [vmem:[#allocation5 + $0x98] sm:$0xff]
        %v1259 = vld [vmem:[#allocation5 + $0xa0] sm:$0xff]
        %v1260 = vld [vmem:[#allocation5 + $0xa8] sm:$0xff]
        %v1261 = vld [vmem:[#allocation5 + $0xb0] sm:$0xff]
        %v1262 = vld [vmem:[#allocation5 + $0xb8] sm:$0xff]
        %v1263 = vld [vmem:[#allocation5 + $0xc0] sm:$0xff]
        %v1264 = vld [vmem:[#allocation5 + $0xc8] sm:$0xff]
        %v1265 = vld [vmem:[#allocation5 + $0xd0] sm:$0xff]
        %v1266 = vld [vmem:[#allocation5 + $0xd8] sm:$0xff]
        %v1267 = vld [vmem:[#allocation5 + $0xe0] sm:$0xff]
        %v1268 = vld [vmem:[#allocation5 + $0xe8] sm:$0xff]
        %v1269 = vld [vmem:[#allocation5 + $0xf0] sm:$0xff]
        %v1270 = vld [vmem:[#allocation5 + $0xf8] sm:$0xff]
        %v1271 = vld [vmem:[#allocation5 + $0x100] sm:$0xff]
        %v1272 = vld [vmem:[#allocation5 + $0x108] sm:$0xff]
        %v1273 = vld [vmem:[#allocation5 + $0x110] sm:$0xff]
        %v1274 = vld [vmem:[#allocation5 + $0x118] sm:$0xff]
        %v1275 = vadd.f32 %v1239, %v1150
        %v1276 = vadd.f32 %v1240, %v1152
        %v1277 = vadd.f32 %v1241, %v1155
        %v1278 = vadd.f32 %v1242, %v1157
        %v1279 = vadd.f32 %v1243, %v1160
        %v1280 = vadd.f32 %v1244, %v1162
        %v1281 = vadd.f32 %v1245, %v1165
        %v1282 = vadd.f32 %v1246, %v1167
        %v1283 = vadd.f32 %v1247, %v1170
        %v1284 = vadd.f32 %v1248, %v1172
        %v1285 = vadd.f32 %v1249, %v1175
        %v1286 = vadd.f32 %v1250, %v1177
        %v1287 = vadd.f32 %v1251, %v1180
        %v1288 = vadd.f32 %v1252, %v1182
        %v1289 = vadd.f32 %v1253, %v1185
        %v1290 = vadd.f32 %v1254, %v1187
        %v1291 = vadd.f32 %v1255, %v1190
        %v1292 = vadd.f32 %v1256, %v1192
        %v1293 = vadd.f32 %v1257, %v1195
        %v1294 = vadd.f32 %v1258, %v1197
        %v1295 = vadd.f32 %v1259, %v1200
        %v1296 = vadd.f32 %v1260, %v1202
        %v1297 = vadd.f32 %v1261, %v1205
        %v1298 = vadd.f32 %v1262, %v1207
        %v1299 = vadd.f32 %v1263, %v1210
        %v1300 = vadd.f32 %v1264, %v1212
        %v1301 = vadd.f32 %v1265, %v1215
        %v1302 = vadd.f32 %v1266, %v1217
        %v1303 = vadd.f32 %v1267, %v1220
        %v1304 = vadd.f32 %v1268, %v1222
        %v1305 = vadd.f32 %v1269, %v1225
        %v1306 = vadd.f32 %v1270, %v1227
        %v1307 = vadd.f32 %v1271, %v1230
        %v1308 = vadd.f32 %v1272, %v1232
        %v1309 = vadd.f32 %v1273, %v1235
        %v1310 = vadd.f32 %v1274, %v1237
        %1311 = vst [vmem:[#allocation5] sm:$0xff] %v1275
        %1312 = vst [vmem:[#allocation5 + $0x8] sm:$0xff] %v1276
        %1313 = vst [vmem:[#allocation5 + $0x10] sm:$0xff] %v1277
        %1314 = vst [vmem:[#allocation5 + $0x18] sm:$0xff] %v1278
        %1315 = vst [vmem:[#allocation5 + $0x20] sm:$0xff] %v1279
        %1316 = vst [vmem:[#allocation5 + $0x28] sm:$0xff] %v1280
        %1317 = vst [vmem:[#allocation5 + $0x30] sm:$0xff] %v1281
        %1318 = vst [vmem:[#allocation5 + $0x38] sm:$0xff] %v1282
        %1319 = vst [vmem:[#allocation5 + $0x40] sm:$0xff] %v1283
        %1320 = vst [vmem:[#allocation5 + $0x48] sm:$0xff] %v1284
        %1321 = vst [vmem:[#allocation5 + $0x50] sm:$0xff] %v1285
        %1322 = vst [vmem:[#allocation5 + $0x58] sm:$0xff] %v1286
        %1323 = vst [vmem:[#allocation5 + $0x60] sm:$0xff] %v1287
        %1324 = vst [vmem:[#allocation5 + $0x68] sm:$0xff] %v1288
        %1325 = vst [vmem:[#allocation5 + $0x70] sm:$0xff] %v1289
        %1326 = vst [vmem:[#allocation5 + $0x78] sm:$0xff] %v1290
        %1327 = vst [vmem:[#allocation5 + $0x80] sm:$0xff] %v1291
        %1328 = vst [vmem:[#allocation5 + $0x88] sm:$0xff] %v1292
        %1329 = vst [vmem:[#allocation5 + $0x90] sm:$0xff] %v1293
        %1330 = vst [vmem:[#allocation5 + $0x98] sm:$0xff] %v1294
        %1331 = vst [vmem:[#allocation5 + $0xa0] sm:$0xff] %v1295
        %1332 = vst [vmem:[#allocation5 + $0xa8] sm:$0xff] %v1296
        %1333 = vst [vmem:[#allocation5 + $0xb0] sm:$0xff] %v1297
        %1334 = vst [vmem:[#allocation5 + $0xb8] sm:$0xff] %v1298
        %1335 = vst [vmem:[#allocation5 + $0xc0] sm:$0xff] %v1299
        %1336 = vst [vmem:[#allocation5 + $0xc8] sm:$0xff] %v1300
        %1337 = vst [vmem:[#allocation5 + $0xd0] sm:$0xff] %v1301
        %1338 = vst [vmem:[#allocation5 + $0xd8] sm:$0xff] %v1302
        %1339 = vst [vmem:[#allocation5 + $0xe0] sm:$0xff] %v1303
        %1340 = vst [vmem:[#allocation5 + $0xe8] sm:$0xff] %v1304
        %1341 = vst [vmem:[#allocation5 + $0xf0] sm:$0xff] %v1305
        %1342 = vst [vmem:[#allocation5 + $0xf8] sm:$0xff] %v1306
        %1343 = vst [vmem:[#allocation5 + $0x100] sm:$0xff] %v1307
        %1344 = vst [vmem:[#allocation5 + $0x108] sm:$0xff] %v1308
        %1345 = vst [vmem:[#allocation5 + $0x110] sm:$0xff] %v1309
        %1346 = vst [vmem:[#allocation5 + $0x118] sm:$0xff] %v1310
        %v1347 = vld [vmem:[%s433 + $0x12] sm:$0xff]
        %v1348 = vld [vmem:[%s433 + $0x1a] sm:$0xff]
        %v1349 = vld [vmem:[%s433 + $0x22] sm:$0xff]
        %v1350 = vld [vmem:[%s433 + $0x2a] sm:$0xff]
        %v1351 = vld [vmem:[%s433 + $0x32] sm:$0xff]
        %v1352 = vld [vmem:[%s433 + $0x3a] sm:$0xff]
        %v1353 = vld [vmem:[%s433 + $0x42] sm:$0xff]
        %v1354 = vld [vmem:[%s433 + $0x4a] sm:$0xff]
        %v1355 = vld [vmem:[%s433 + $0x52] sm:$0xff]
        %v1356 = vld [vmem:[%s433 + $0x5a] sm:$0xff]
        %v1357 = vld [vmem:[%s433 + $0x62] sm:$0xff]
        %v1358 = vld [vmem:[%s433 + $0x6a] sm:$0xff]
        %v1359 = vld [vmem:[%s433 + $0x72] sm:$0xff]
        %v1360 = vld [vmem:[%s433 + $0x7a] sm:$0xff]
        %v1361 = vld [vmem:[%s433 + $0x82] sm:$0xff]
        %v1362 = vld [vmem:[%s433 + $0x8a] sm:$0xff]
        %v1363 = vld [vmem:[%s433 + $0x92] sm:$0xff]
        %v1364 = vld [vmem:[%s433 + $0x9a] sm:$0xff]
        %v1365 = vld [vmem:[%s433 + $0xa2] sm:$0xff]
        %v1366 = vld [vmem:[%s433 + $0xaa] sm:$0xff]
        %v1367 = vld [vmem:[%s433 + $0xb2] sm:$0xff]
        %v1368 = vld [vmem:[%s433 + $0xba] sm:$0xff]
        %v1369 = vld [vmem:[%s433 + $0xc2] sm:$0xff]
        %v1370 = vld [vmem:[%s433 + $0xca] sm:$0xff]
        %v1371 = vld [vmem:[%s433 + $0xd2] sm:$0xff]
        %v1372 = vld [vmem:[%s433 + $0xda] sm:$0xff]
        %v1373 = vld [vmem:[%s433 + $0xe2] sm:$0xff]
        %v1374 = vld [vmem:[%s433 + $0xea] sm:$0xff]
        %v1375 = vld [vmem:[%s433 + $0xf2] sm:$0xff]
        %v1376 = vld [vmem:[%s433 + $0xfa] sm:$0xff]
        %v1377 = vld [vmem:[%s433 + $0x102] sm:$0xff]
        %v1378 = vld [vmem:[%s433 + $0x10a] sm:$0xff]
        %v1379 = vld [vmem:[%s433 + $0x112] sm:$0xff]
        %v1380 = vld [vmem:[%s433 + $0x11a] sm:$0xff]
        %v1381 = vld [vmem:[%s433 + $0x122] sm:$0xff]
        %v1382 = vld [vmem:[%s433 + $0x12a] sm:$0xff]
        %v1383 = vpack.c.bf16 %v1348, %v1347
        %v1384 = vpack.c.bf16 %v1350, %v1349
        %v1385 = vpack.c.bf16 %v1352, %v1351
        %v1386 = vpack.c.bf16 %v1354, %v1353
        %v1387 = vpack.c.bf16 %v1356, %v1355
        %v1388 = vpack.c.bf16 %v1358, %v1357
        %v1389 = vpack.c.bf16 %v1360, %v1359
        %v1390 = vpack.c.bf16 %v1362, %v1361
        %v1391 = vpack.c.bf16 %v1364, %v1363
        %v1392 = vpack.c.bf16 %v1366, %v1365
        %v1393 = vpack.c.bf16 %v1368, %v1367
        %v1394 = vpack.c.bf16 %v1370, %v1369
        %v1395 = vpack.c.bf16 %v1372, %v1371
        %v1396 = vpack.c.bf16 %v1374, %v1373
        %v1397 = vpack.c.bf16 %v1376, %v1375
        %v1398 = vpack.c.bf16 %v1378, %v1377
        %v1399 = vpack.c.bf16 %v1380, %v1379
        %v1400 = vpack.c.bf16 %v1382, %v1381
        %s1401 = scalar_lea.vmem %s1, 6
        %v1402 = vld [vmem:[%s1401] sm:$0x3]
        %v1404 = vsel %vm513, %v1383, 0
        %v1407 = vsel %vm513, %v1384, 0
        %v1410 = vsel %vm513, %v1385, 0
        %v1413 = vsel %vm513, %v1386, 0
        %v1416 = vsel %vm513, %v1387, 0
        %v1419 = vsel %vm513, %v1388, 0
        %v1422 = vsel %vm513, %v1389, 0
        %v1425 = vsel %vm513, %v1390, 0
        %v1428 = vsel %vm513, %v1391, 0
        %v1431 = vsel %vm513, %v1392, 0
        %v1434 = vsel %vm513, %v1393, 0
        %v1437 = vsel %vm513, %v1394, 0
        %v1440 = vsel %vm513, %v1395, 0
        %v1443 = vsel %vm513, %v1396, 0
        %v1446 = vsel %vm513, %v1397, 0
        %v1449 = vsel %vm513, %v1398, 0
        %v1452 = vsel %vm513, %v1399, 0
        %v1455 = vsel %vm513, %v1400, 0
        %v1458 = vsel %vm568, %v1402, 0
        %1460 = vmatpush.bf16.msra.mxu0 0
        %1461 = vmatpush.bf16.msra.mxu0 0
        %1462 = vmatpush.bf16.msra.mxu0 0
        %1463 = vmatpush.bf16.msra.mxu0 0
        %1464 = vmatpush.bf16.msra.mxu0 0
        %1465 = vmatpush.bf16.msra.mxu0 0
        %1466 = vmatpush.bf16.msra.mxu0 0
        %1467 = vmatpush.bf16.msra.mxu0 %v1458
        %1468 = vmatmul.bf16.gmra.mxu0 %v1404
        %v1469 = vpop.f32.mrf.mxu0
        %v1470 = vadd.f32 0.0, %v1469
        %v1471 = vpop.f32.mrf.mxu0
        %v1472 = vadd.f32 0.0, %v1471
        %1473 = vmatmul.bf16.gmra.mxu0 %v1407
        %v1474 = vpop.f32.mrf.mxu0
        %v1475 = vadd.f32 0.0, %v1474
        %v1476 = vpop.f32.mrf.mxu0
        %v1477 = vadd.f32 0.0, %v1476
        %1478 = vmatmul.bf16.gmra.mxu0 %v1410
        %v1479 = vpop.f32.mrf.mxu0
        %v1480 = vadd.f32 0.0, %v1479
        %v1481 = vpop.f32.mrf.mxu0
        %v1482 = vadd.f32 0.0, %v1481
        %1483 = vmatmul.bf16.gmra.mxu0 %v1413
        %v1484 = vpop.f32.mrf.mxu0
        %v1485 = vadd.f32 0.0, %v1484
        %v1486 = vpop.f32.mrf.mxu0
        %v1487 = vadd.f32 0.0, %v1486
        %1488 = vmatmul.bf16.gmra.mxu0 %v1416
        %v1489 = vpop.f32.mrf.mxu0
        %v1490 = vadd.f32 0.0, %v1489
        %v1491 = vpop.f32.mrf.mxu0
        %v1492 = vadd.f32 0.0, %v1491
        %1493 = vmatmul.bf16.gmra.mxu0 %v1419
        %v1494 = vpop.f32.mrf.mxu0
        %v1495 = vadd.f32 0.0, %v1494
        %v1496 = vpop.f32.mrf.mxu0
        %v1497 = vadd.f32 0.0, %v1496
        %1498 = vmatmul.bf16.gmra.mxu0 %v1422
        %v1499 = vpop.f32.mrf.mxu0
        %v1500 = vadd.f32 0.0, %v1499
        %v1501 = vpop.f32.mrf.mxu0
        %v1502 = vadd.f32 0.0, %v1501
        %1503 = vmatmul.bf16.gmra.mxu0 %v1425
        %v1504 = vpop.f32.mrf.mxu0
        %v1505 = vadd.f32 0.0, %v1504
        %v1506 = vpop.f32.mrf.mxu0
        %v1507 = vadd.f32 0.0, %v1506
        %1508 = vmatmul.bf16.gmra.mxu0 %v1428
        %v1509 = vpop.f32.mrf.mxu0
        %v1510 = vadd.f32 0.0, %v1509
        %v1511 = vpop.f32.mrf.mxu0
        %v1512 = vadd.f32 0.0, %v1511
        %1513 = vmatmul.bf16.gmra.mxu0 %v1431
        %v1514 = vpop.f32.mrf.mxu0
        %v1515 = vadd.f32 0.0, %v1514
        %v1516 = vpop.f32.mrf.mxu0
        %v1517 = vadd.f32 0.0, %v1516
        %1518 = vmatmul.bf16.gmra.mxu0 %v1434
        %v1519 = vpop.f32.mrf.mxu0
        %v1520 = vadd.f32 0.0, %v1519
        %v1521 = vpop.f32.mrf.mxu0
        %v1522 = vadd.f32 0.0, %v1521
        %1523 = vmatmul.bf16.gmra.mxu0 %v1437
        %v1524 = vpop.f32.mrf.mxu0
        %v1525 = vadd.f32 0.0, %v1524
        %v1526 = vpop.f32.mrf.mxu0
        %v1527 = vadd.f32 0.0, %v1526
        %1528 = vmatmul.bf16.gmra.mxu0 %v1440
        %v1529 = vpop.f32.mrf.mxu0
        %v1530 = vadd.f32 0.0, %v1529
        %v1531 = vpop.f32.mrf.mxu0
        %v1532 = vadd.f32 0.0, %v1531
        %1533 = vmatmul.bf16.gmra.mxu0 %v1443
        %v1534 = vpop.f32.mrf.mxu0
        %v1535 = vadd.f32 0.0, %v1534
        %v1536 = vpop.f32.mrf.mxu0
        %v1537 = vadd.f32 0.0, %v1536
        %1538 = vmatmul.bf16.gmra.mxu0 %v1446
        %v1539 = vpop.f32.mrf.mxu0
        %v1540 = vadd.f32 0.0, %v1539
        %v1541 = vpop.f32.mrf.mxu0
        %v1542 = vadd.f32 0.0, %v1541
        %1543 = vmatmul.bf16.gmra.mxu0 %v1449
        %v1544 = vpop.f32.mrf.mxu0
        %v1545 = vadd.f32 0.0, %v1544
        %v1546 = vpop.f32.mrf.mxu0
        %v1547 = vadd.f32 0.0, %v1546
        %1548 = vmatmul.bf16.gmra.mxu0 %v1452
        %v1549 = vpop.f32.mrf.mxu0
        %v1550 = vadd.f32 0.0, %v1549
        %v1551 = vpop.f32.mrf.mxu0
        %v1552 = vadd.f32 0.0, %v1551
        %1553 = vmatmul.bf16.gmra.mxu0 %v1455
        %v1554 = vpop.f32.mrf.mxu0
        %v1555 = vadd.f32 0.0, %v1554
        %v1556 = vpop.f32.mrf.mxu0
        %v1557 = vadd.f32 0.0, %v1556
        %1558 = vdwg.mxu0
        %v1559 = vld [vmem:[#allocation5] sm:$0xff]
        %v1560 = vld [vmem:[#allocation5 + $0x8] sm:$0xff]
        %v1561 = vld [vmem:[#allocation5 + $0x10] sm:$0xff]
        %v1562 = vld [vmem:[#allocation5 + $0x18] sm:$0xff]
        %v1563 = vld [vmem:[#allocation5 + $0x20] sm:$0xff]
        %v1564 = vld [vmem:[#allocation5 + $0x28] sm:$0xff]
        %v1565 = vld [vmem:[#allocation5 + $0x30] sm:$0xff]
        %v1566 = vld [vmem:[#allocation5 + $0x38] sm:$0xff]
        %v1567 = vld [vmem:[#allocation5 + $0x40] sm:$0xff]
        %v1568 = vld [vmem:[#allocation5 + $0x48] sm:$0xff]
        %v1569 = vld [vmem:[#allocation5 + $0x50] sm:$0xff]
        %v1570 = vld [vmem:[#allocation5 + $0x58] sm:$0xff]
        %v1571 = vld [vmem:[#allocation5 + $0x60] sm:$0xff]
        %v1572 = vld [vmem:[#allocation5 + $0x68] sm:$0xff]
        %v1573 = vld [vmem:[#allocation5 + $0x70] sm:$0xff]
        %v1574 = vld [vmem:[#allocation5 + $0x78] sm:$0xff]
        %v1575 = vld [vmem:[#allocation5 + $0x80] sm:$0xff]
        %v1576 = vld [vmem:[#allocation5 + $0x88] sm:$0xff]
        %v1577 = vld [vmem:[#allocation5 + $0x90] sm:$0xff]
        %v1578 = vld [vmem:[#allocation5 + $0x98] sm:$0xff]
        %v1579 = vld [vmem:[#allocation5 + $0xa0] sm:$0xff]
        %v1580 = vld [vmem:[#allocation5 + $0xa8] sm:$0xff]
        %v1581 = vld [vmem:[#allocation5 + $0xb0] sm:$0xff]
        %v1582 = vld [vmem:[#allocation5 + $0xb8] sm:$0xff]
        %v1583 = vld [vmem:[#allocation5 + $0xc0] sm:$0xff]
        %v1584 = vld [vmem:[#allocation5 + $0xc8] sm:$0xff]
        %v1585 = vld [vmem:[#allocation5 + $0xd0] sm:$0xff]
        %v1586 = vld [vmem:[#allocation5 + $0xd8] sm:$0xff]
        %v1587 = vld [vmem:[#allocation5 + $0xe0] sm:$0xff]
        %v1588 = vld [vmem:[#allocation5 + $0xe8] sm:$0xff]
        %v1589 = vld [vmem:[#allocation5 + $0xf0] sm:$0xff]
        %v1590 = vld [vmem:[#allocation5 + $0xf8] sm:$0xff]
        %v1591 = vld [vmem:[#allocation5 + $0x100] sm:$0xff]
        %v1592 = vld [vmem:[#allocation5 + $0x108] sm:$0xff]
        %v1593 = vld [vmem:[#allocation5 + $0x110] sm:$0xff]
        %v1594 = vld [vmem:[#allocation5 + $0x118] sm:$0xff]
        %v1595 = vadd.f32 %v1559, %v1470
        %v1596 = vadd.f32 %v1560, %v1472
        %v1597 = vadd.f32 %v1561, %v1475
        %v1598 = vadd.f32 %v1562, %v1477
        %v1599 = vadd.f32 %v1563, %v1480
        %v1600 = vadd.f32 %v1564, %v1482
        %v1601 = vadd.f32 %v1565, %v1485
        %v1602 = vadd.f32 %v1566, %v1487
        %v1603 = vadd.f32 %v1567, %v1490
        %v1604 = vadd.f32 %v1568, %v1492
        %v1605 = vadd.f32 %v1569, %v1495
        %v1606 = vadd.f32 %v1570, %v1497
        %v1607 = vadd.f32 %v1571, %v1500
        %v1608 = vadd.f32 %v1572, %v1502
        %v1609 = vadd.f32 %v1573, %v1505
        %v1610 = vadd.f32 %v1574, %v1507
        %v1611 = vadd.f32 %v1575, %v1510
        %v1612 = vadd.f32 %v1576, %v1512
        %v1613 = vadd.f32 %v1577, %v1515
        %v1614 = vadd.f32 %v1578, %v1517
        %v1615 = vadd.f32 %v1579, %v1520
        %v1616 = vadd.f32 %v1580, %v1522
        %v1617 = vadd.f32 %v1581, %v1525
        %v1618 = vadd.f32 %v1582, %v1527
        %v1619 = vadd.f32 %v1583, %v1530
        %v1620 = vadd.f32 %v1584, %v1532
        %v1621 = vadd.f32 %v1585, %v1535
        %v1622 = vadd.f32 %v1586, %v1537
        %v1623 = vadd.f32 %v1587, %v1540
        %v1624 = vadd.f32 %v1588, %v1542
        %v1625 = vadd.f32 %v1589, %v1545
        %v1626 = vadd.f32 %v1590, %v1547
        %v1627 = vadd.f32 %v1591, %v1550
        %v1628 = vadd.f32 %v1592, %v1552
        %v1629 = vadd.f32 %v1593, %v1555
        %v1630 = vadd.f32 %v1594, %v1557
        %1631 = vst [vmem:[#allocation5] sm:$0xff] %v1595
        %1632 = vst [vmem:[#allocation5 + $0x8] sm:$0xff] %v1596
        %1633 = vst [vmem:[#allocation5 + $0x10] sm:$0xff] %v1597
        %1634 = vst [vmem:[#allocation5 + $0x18] sm:$0xff] %v1598
        %1635 = vst [vmem:[#allocation5 + $0x20] sm:$0xff] %v1599
        %1636 = vst [vmem:[#allocation5 + $0x28] sm:$0xff] %v1600
        %1637 = vst [vmem:[#allocation5 + $0x30] sm:$0xff] %v1601
        %1638 = vst [vmem:[#allocation5 + $0x38] sm:$0xff] %v1602
        %1639 = vst [vmem:[#allocation5 + $0x40] sm:$0xff] %v1603
        %1640 = vst [vmem:[#allocation5 + $0x48] sm:$0xff] %v1604
        %1641 = vst [vmem:[#allocation5 + $0x50] sm:$0xff] %v1605
        %1642 = vst [vmem:[#allocation5 + $0x58] sm:$0xff] %v1606
        %1643 = vst [vmem:[#allocation5 + $0x60] sm:$0xff] %v1607
        %1644 = vst [vmem:[#allocation5 + $0x68] sm:$0xff] %v1608
        %1645 = vst [vmem:[#allocation5 + $0x70] sm:$0xff] %v1609
        %1646 = vst [vmem:[#allocation5 + $0x78] sm:$0xff] %v1610
        %1647 = vst [vmem:[#allocation5 + $0x80] sm:$0xff] %v1611
        %1648 = vst [vmem:[#allocation5 + $0x88] sm:$0xff] %v1612
        %1649 = vst [vmem:[#allocation5 + $0x90] sm:$0xff] %v1613
        %1650 = vst [vmem:[#allocation5 + $0x98] sm:$0xff] %v1614
        %1651 = vst [vmem:[#allocation5 + $0xa0] sm:$0xff] %v1615
        %1652 = vst [vmem:[#allocation5 + $0xa8] sm:$0xff] %v1616
        %1653 = vst [vmem:[#allocation5 + $0xb0] sm:$0xff] %v1617
        %1654 = vst [vmem:[#allocation5 + $0xb8] sm:$0xff] %v1618
        %1655 = vst [vmem:[#allocation5 + $0xc0] sm:$0xff] %v1619
        %1656 = vst [vmem:[#allocation5 + $0xc8] sm:$0xff] %v1620
        %1657 = vst [vmem:[#allocation5 + $0xd0] sm:$0xff] %v1621
        %1658 = vst [vmem:[#allocation5 + $0xd8] sm:$0xff] %v1622
        %1659 = vst [vmem:[#allocation5 + $0xe0] sm:$0xff] %v1623
        %1660 = vst [vmem:[#allocation5 + $0xe8] sm:$0xff] %v1624
        %1661 = vst [vmem:[#allocation5 + $0xf0] sm:$0xff] %v1625
        %1662 = vst [vmem:[#allocation5 + $0xf8] sm:$0xff] %v1626
        %1663 = vst [vmem:[#allocation5 + $0x100] sm:$0xff] %v1627
        %1664 = vst [vmem:[#allocation5 + $0x108] sm:$0xff] %v1628
        %1665 = vst [vmem:[#allocation5 + $0x110] sm:$0xff] %v1629
        %1666 = vst [vmem:[#allocation5 + $0x118] sm:$0xff] %v1630
        %v1667 = vld [vmem:[%s433 + $0x13] sm:$0xff]
        %v1668 = vld [vmem:[%s433 + $0x1b] sm:$0xff]
        %v1669 = vld [vmem:[%s433 + $0x23] sm:$0xff]
        %v1670 = vld [vmem:[%s433 + $0x2b] sm:$0xff]
        %v1671 = vld [vmem:[%s433 + $0x33] sm:$0xff]
        %v1672 = vld [vmem:[%s433 + $0x3b] sm:$0xff]
        %v1673 = vld [vmem:[%s433 + $0x43] sm:$0xff]
        %v1674 = vld [vmem:[%s433 + $0x4b] sm:$0xff]
        %v1675 = vld [vmem:[%s433 + $0x53] sm:$0xff]
        %v1676 = vld [vmem:[%s433 + $0x5b] sm:$0xff]
        %v1677 = vld [vmem:[%s433 + $0x63] sm:$0xff]
        %v1678 = vld [vmem:[%s433 + $0x6b] sm:$0xff]
        %v1679 = vld [vmem:[%s433 + $0x73] sm:$0xff]
        %v1680 = vld [vmem:[%s433 + $0x7b] sm:$0xff]
        %v1681 = vld [vmem:[%s433 + $0x83] sm:$0xff]
        %v1682 = vld [vmem:[%s433 + $0x8b] sm:$0xff]
        %v1683 = vld [vmem:[%s433 + $0x93] sm:$0xff]
        %v1684 = vld [vmem:[%s433 + $0x9b] sm:$0xff]
        %v1685 = vld [vmem:[%s433 + $0xa3] sm:$0xff]
        %v1686 = vld [vmem:[%s433 + $0xab] sm:$0xff]
        %v1687 = vld [vmem:[%s433 + $0xb3] sm:$0xff]
        %v1688 = vld [vmem:[%s433 + $0xbb] sm:$0xff]
        %v1689 = vld [vmem:[%s433 + $0xc3] sm:$0xff]
        %v1690 = vld [vmem:[%s433 + $0xcb] sm:$0xff]
        %v1691 = vld [vmem:[%s433 + $0xd3] sm:$0xff]
        %v1692 = vld [vmem:[%s433 + $0xdb] sm:$0xff]
        %v1693 = vld [vmem:[%s433 + $0xe3] sm:$0xff]
        %v1694 = vld [vmem:[%s433 + $0xeb] sm:$0xff]
        %v1695 = vld [vmem:[%s433 + $0xf3] sm:$0xff]
        %v1696 = vld [vmem:[%s433 + $0xfb] sm:$0xff]
        %v1697 = vld [vmem:[%s433 + $0x103] sm:$0xff]
        %v1698 = vld [vmem:[%s433 + $0x10b] sm:$0xff]
        %v1699 = vld [vmem:[%s433 + $0x113] sm:$0xff]
        %v1700 = vld [vmem:[%s433 + $0x11b] sm:$0xff]
        %v1701 = vld [vmem:[%s433 + $0x123] sm:$0xff]
        %v1702 = vld [vmem:[%s433 + $0x12b] sm:$0xff]
        %v1703 = vpack.c.bf16 %v1668, %v1667
        %v1704 = vpack.c.bf16 %v1670, %v1669
        %v1705 = vpack.c.bf16 %v1672, %v1671
        %v1706 = vpack.c.bf16 %v1674, %v1673
        %v1707 = vpack.c.bf16 %v1676, %v1675
        %v1708 = vpack.c.bf16 %v1678, %v1677
        %v1709 = vpack.c.bf16 %v1680, %v1679
        %v1710 = vpack.c.bf16 %v1682, %v1681
        %v1711 = vpack.c.bf16 %v1684, %v1683
        %v1712 = vpack.c.bf16 %v1686, %v1685
        %v1713 = vpack.c.bf16 %v1688, %v1687
        %v1714 = vpack.c.bf16 %v1690, %v1689
        %v1715 = vpack.c.bf16 %v1692, %v1691
        %v1716 = vpack.c.bf16 %v1694, %v1693
        %v1717 = vpack.c.bf16 %v1696, %v1695
        %v1718 = vpack.c.bf16 %v1698, %v1697
        %v1719 = vpack.c.bf16 %v1700, %v1699
        %v1720 = vpack.c.bf16 %v1702, %v1701
        %s1721 = scalar_lea.vmem %s1, 8
        %v1722 = vld [vmem:[%s1721] sm:$0x3]
        %v1724 = vsel %vm513, %v1703, 0
        %v1727 = vsel %vm513, %v1704, 0
        %v1730 = vsel %vm513, %v1705, 0
        %v1733 = vsel %vm513, %v1706, 0
        %v1736 = vsel %vm513, %v1707, 0
        %v1739 = vsel %vm513, %v1708, 0
        %v1742 = vsel %vm513, %v1709, 0
        %v1745 = vsel %vm513, %v1710, 0
        %v1748 = vsel %vm513, %v1711, 0
        %v1751 = vsel %vm513, %v1712, 0
        %v1754 = vsel %vm513, %v1713, 0
        %v1757 = vsel %vm513, %v1714, 0
        %v1760 = vsel %vm513, %v1715, 0
        %v1763 = vsel %vm513, %v1716, 0
        %v1766 = vsel %vm513, %v1717, 0
        %v1769 = vsel %vm513, %v1718, 0
        %v1772 = vsel %vm513, %v1719, 0
        %v1775 = vsel %vm513, %v1720, 0
        %v1778 = vsel %vm568, %v1722, 0
        %1780 = vmatpush.bf16.msra.mxu0 0
        %1781 = vmatpush.bf16.msra.mxu0 0
        %1782 = vmatpush.bf16.msra.mxu0 0
        %1783 = vmatpush.bf16.msra.mxu0 0
        %1784 = vmatpush.bf16.msra.mxu0 0
        %1785 = vmatpush.bf16.msra.mxu0 0
        %1786 = vmatpush.bf16.msra.mxu0 0
        %1787 = vmatpush.bf16.msra.mxu0 %v1778
        %1788 = vmatmul.bf16.gmra.mxu0 %v1724
        %v1789 = vpop.f32.mrf.mxu0
        %v1790 = vadd.f32 0.0, %v1789
        %v1791 = vpop.f32.mrf.mxu0
        %v1792 = vadd.f32 0.0, %v1791
        %1793 = vmatmul.bf16.gmra.mxu0 %v1727
        %v1794 = vpop.f32.mrf.mxu0
        %v1795 = vadd.f32 0.0, %v1794
        %v1796 = vpop.f32.mrf.mxu0
        %v1797 = vadd.f32 0.0, %v1796
        %1798 = vmatmul.bf16.gmra.mxu0 %v1730
        %v1799 = vpop.f32.mrf.mxu0
        %v1800 = vadd.f32 0.0, %v1799
        %v1801 = vpop.f32.mrf.mxu0
        %v1802 = vadd.f32 0.0, %v1801
        %1803 = vmatmul.bf16.gmra.mxu0 %v1733
        %v1804 = vpop.f32.mrf.mxu0
        %v1805 = vadd.f32 0.0, %v1804
        %v1806 = vpop.f32.mrf.mxu0
        %v1807 = vadd.f32 0.0, %v1806
        %1808 = vmatmul.bf16.gmra.mxu0 %v1736
        %v1809 = vpop.f32.mrf.mxu0
        %v1810 = vadd.f32 0.0, %v1809
        %v1811 = vpop.f32.mrf.mxu0
        %v1812 = vadd.f32 0.0, %v1811
        %1813 = vmatmul.bf16.gmra.mxu0 %v1739
        %v1814 = vpop.f32.mrf.mxu0
        %v1815 = vadd.f32 0.0, %v1814
        %v1816 = vpop.f32.mrf.mxu0
        %v1817 = vadd.f32 0.0, %v1816
        %1818 = vmatmul.bf16.gmra.mxu0 %v1742
        %v1819 = vpop.f32.mrf.mxu0
        %v1820 = vadd.f32 0.0, %v1819
        %v1821 = vpop.f32.mrf.mxu0
        %v1822 = vadd.f32 0.0, %v1821
        %1823 = vmatmul.bf16.gmra.mxu0 %v1745
        %v1824 = vpop.f32.mrf.mxu0
        %v1825 = vadd.f32 0.0, %v1824
        %v1826 = vpop.f32.mrf.mxu0
        %v1827 = vadd.f32 0.0, %v1826
        %1828 = vmatmul.bf16.gmra.mxu0 %v1748
        %v1829 = vpop.f32.mrf.mxu0
        %v1830 = vadd.f32 0.0, %v1829
        %v1831 = vpop.f32.mrf.mxu0
        %v1832 = vadd.f32 0.0, %v1831
        %1833 = vmatmul.bf16.gmra.mxu0 %v1751
        %v1834 = vpop.f32.mrf.mxu0
        %v1835 = vadd.f32 0.0, %v1834
        %v1836 = vpop.f32.mrf.mxu0
        %v1837 = vadd.f32 0.0, %v1836
        %1838 = vmatmul.bf16.gmra.mxu0 %v1754
        %v1839 = vpop.f32.mrf.mxu0
        %v1840 = vadd.f32 0.0, %v1839
        %v1841 = vpop.f32.mrf.mxu0
        %v1842 = vadd.f32 0.0, %v1841
        %1843 = vmatmul.bf16.gmra.mxu0 %v1757
        %v1844 = vpop.f32.mrf.mxu0
        %v1845 = vadd.f32 0.0, %v1844
        %v1846 = vpop.f32.mrf.mxu0
        %v1847 = vadd.f32 0.0, %v1846
        %1848 = vmatmul.bf16.gmra.mxu0 %v1760
        %v1849 = vpop.f32.mrf.mxu0
        %v1850 = vadd.f32 0.0, %v1849
        %v1851 = vpop.f32.mrf.mxu0
        %v1852 = vadd.f32 0.0, %v1851
        %1853 = vmatmul.bf16.gmra.mxu0 %v1763
        %v1854 = vpop.f32.mrf.mxu0
        %v1855 = vadd.f32 0.0, %v1854
        %v1856 = vpop.f32.mrf.mxu0
        %v1857 = vadd.f32 0.0, %v1856
        %1858 = vmatmul.bf16.gmra.mxu0 %v1766
        %v1859 = vpop.f32.mrf.mxu0
        %v1860 = vadd.f32 0.0, %v1859
        %v1861 = vpop.f32.mrf.mxu0
        %v1862 = vadd.f32 0.0, %v1861
        %1863 = vmatmul.bf16.gmra.mxu0 %v1769
        %v1864 = vpop.f32.mrf.mxu0
        %v1865 = vadd.f32 0.0, %v1864
        %v1866 = vpop.f32.mrf.mxu0
        %v1867 = vadd.f32 0.0, %v1866
        %1868 = vmatmul.bf16.gmra.mxu0 %v1772
        %v1869 = vpop.f32.mrf.mxu0
        %v1870 = vadd.f32 0.0, %v1869
        %v1871 = vpop.f32.mrf.mxu0
        %v1872 = vadd.f32 0.0, %v1871
        %1873 = vmatmul.bf16.gmra.mxu0 %v1775
        %v1874 = vpop.f32.mrf.mxu0
        %v1875 = vadd.f32 0.0, %v1874
        %v1876 = vpop.f32.mrf.mxu0
        %v1877 = vadd.f32 0.0, %v1876
        %1878 = vdwg.mxu0
        %v1879 = vld [vmem:[#allocation5] sm:$0xff]
        %v1880 = vld [vmem:[#allocation5 + $0x8] sm:$0xff]
        %v1881 = vld [vmem:[#allocation5 + $0x10] sm:$0xff]
        %v1882 = vld [vmem:[#allocation5 + $0x18] sm:$0xff]
        %v1883 = vld [vmem:[#allocation5 + $0x20] sm:$0xff]
        %v1884 = vld [vmem:[#allocation5 + $0x28] sm:$0xff]
        %v1885 = vld [vmem:[#allocation5 + $0x30] sm:$0xff]
        %v1886 = vld [vmem:[#allocation5 + $0x38] sm:$0xff]
        %v1887 = vld [vmem:[#allocation5 + $0x40] sm:$0xff]
        %v1888 = vld [vmem:[#allocation5 + $0x48] sm:$0xff]
        %v1889 = vld [vmem:[#allocation5 + $0x50] sm:$0xff]
        %v1890 = vld [vmem:[#allocation5 + $0x58] sm:$0xff]
        %v1891 = vld [vmem:[#allocation5 + $0x60] sm:$0xff]
        %v1892 = vld [vmem:[#allocation5 + $0x68] sm:$0xff]
        %v1893 = vld [vmem:[#allocation5 + $0x70] sm:$0xff]
        %v1894 = vld [vmem:[#allocation5 + $0x78] sm:$0xff]
        %v1895 = vld [vmem:[#allocation5 + $0x80] sm:$0xff]
        %v1896 = vld [vmem:[#allocation5 + $0x88] sm:$0xff]
        %v1897 = vld [vmem:[#allocation5 + $0x90] sm:$0xff]
        %v1898 = vld [vmem:[#allocation5 + $0x98] sm:$0xff]
        %v1899 = vld [vmem:[#allocation5 + $0xa0] sm:$0xff]
        %v1900 = vld [vmem:[#allocation5 + $0xa8] sm:$0xff]
        %v1901 = vld [vmem:[#allocation5 + $0xb0] sm:$0xff]
        %v1902 = vld [vmem:[#allocation5 + $0xb8] sm:$0xff]
        %v1903 = vld [vmem:[#allocation5 + $0xc0] sm:$0xff]
        %v1904 = vld [vmem:[#allocation5 + $0xc8] sm:$0xff]
        %v1905 = vld [vmem:[#allocation5 + $0xd0] sm:$0xff]
        %v1906 = vld [vmem:[#allocation5 + $0xd8] sm:$0xff]
        %v1907 = vld [vmem:[#allocation5 + $0xe0] sm:$0xff]
        %v1908 = vld [vmem:[#allocation5 + $0xe8] sm:$0xff]
        %v1909 = vld [vmem:[#allocation5 + $0xf0] sm:$0xff]
        %v1910 = vld [vmem:[#allocation5 + $0xf8] sm:$0xff]
        %v1911 = vld [vmem:[#allocation5 + $0x100] sm:$0xff]
        %v1912 = vld [vmem:[#allocation5 + $0x108] sm:$0xff]
        %v1913 = vld [vmem:[#allocation5 + $0x110] sm:$0xff]
        %v1914 = vld [vmem:[#allocation5 + $0x118] sm:$0xff]
        %v1915 = vadd.f32 %v1879, %v1790
        %v1916 = vadd.f32 %v1880, %v1792
        %v1917 = vadd.f32 %v1881, %v1795
        %v1918 = vadd.f32 %v1882, %v1797
        %v1919 = vadd.f32 %v1883, %v1800
        %v1920 = vadd.f32 %v1884, %v1802
        %v1921 = vadd.f32 %v1885, %v1805
        %v1922 = vadd.f32 %v1886, %v1807
        %v1923 = vadd.f32 %v1887, %v1810
        %v1924 = vadd.f32 %v1888, %v1812
        %v1925 = vadd.f32 %v1889, %v1815
        %v1926 = vadd.f32 %v1890, %v1817
        %v1927 = vadd.f32 %v1891, %v1820
        %v1928 = vadd.f32 %v1892, %v1822
        %v1929 = vadd.f32 %v1893, %v1825
        %v1930 = vadd.f32 %v1894, %v1827
        %v1931 = vadd.f32 %v1895, %v1830
        %v1932 = vadd.f32 %v1896, %v1832
        %v1933 = vadd.f32 %v1897, %v1835
        %v1934 = vadd.f32 %v1898, %v1837
        %v1935 = vadd.f32 %v1899, %v1840
        %v1936 = vadd.f32 %v1900, %v1842
        %v1937 = vadd.f32 %v1901, %v1845
        %v1938 = vadd.f32 %v1902, %v1847
        %v1939 = vadd.f32 %v1903, %v1850
        %v1940 = vadd.f32 %v1904, %v1852
        %v1941 = vadd.f32 %v1905, %v1855
        %v1942 = vadd.f32 %v1906, %v1857
        %v1943 = vadd.f32 %v1907, %v1860
        %v1944 = vadd.f32 %v1908, %v1862
        %v1945 = vadd.f32 %v1909, %v1865
        %v1946 = vadd.f32 %v1910, %v1867
        %v1947 = vadd.f32 %v1911, %v1870
        %v1948 = vadd.f32 %v1912, %v1872
        %v1949 = vadd.f32 %v1913, %v1875
        %v1950 = vadd.f32 %v1914, %v1877
        %1951 = vst [vmem:[#allocation5] sm:$0xff] %v1915
        %1952 = vst [vmem:[#allocation5 + $0x8] sm:$0xff] %v1916
        %1953 = vst [vmem:[#allocation5 + $0x10] sm:$0xff] %v1917
        %1954 = vst [vmem:[#allocation5 + $0x18] sm:$0xff] %v1918
        %1955 = vst [vmem:[#allocation5 + $0x20] sm:$0xff] %v1919
        %1956 = vst [vmem:[#allocation5 + $0x28] sm:$0xff] %v1920
        %1957 = vst [vmem:[#allocation5 + $0x30] sm:$0xff] %v1921
        %1958 = vst [vmem:[#allocation5 + $0x38] sm:$0xff] %v1922
        %1959 = vst [vmem:[#allocation5 + $0x40] sm:$0xff] %v1923
        %1960 = vst [vmem:[#allocation5 + $0x48] sm:$0xff] %v1924
        %1961 = vst [vmem:[#allocation5 + $0x50] sm:$0xff] %v1925
        %1962 = vst [vmem:[#allocation5 + $0x58] sm:$0xff] %v1926
        %1963 = vst [vmem:[#allocation5 + $0x60] sm:$0xff] %v1927
        %1964 = vst [vmem:[#allocation5 + $0x68] sm:$0xff] %v1928
        %1965 = vst [vmem:[#allocation5 + $0x70] sm:$0xff] %v1929
        %1966 = vst [vmem:[#allocation5 + $0x78] sm:$0xff] %v1930
        %1967 = vst [vmem:[#allocation5 + $0x80] sm:$0xff] %v1931
        %1968 = vst [vmem:[#allocation5 + $0x88] sm:$0xff] %v1932
        %1969 = vst [vmem:[#allocation5 + $0x90] sm:$0xff] %v1933
        %1970 = vst [vmem:[#allocation5 + $0x98] sm:$0xff] %v1934
        %1971 = vst [vmem:[#allocation5 + $0xa0] sm:$0xff] %v1935
        %1972 = vst [vmem:[#allocation5 + $0xa8] sm:$0xff] %v1936
        %1973 = vst [vmem:[#allocation5 + $0xb0] sm:$0xff] %v1937
        %1974 = vst [vmem:[#allocation5 + $0xb8] sm:$0xff] %v1938
        %1975 = vst [vmem:[#allocation5 + $0xc0] sm:$0xff] %v1939
        %1976 = vst [vmem:[#allocation5 + $0xc8] sm:$0xff] %v1940
        %1977 = vst [vmem:[#allocation5 + $0xd0] sm:$0xff] %v1941
        %1978 = vst [vmem:[#allocation5 + $0xd8] sm:$0xff] %v1942
        %1979 = vst [vmem:[#allocation5 + $0xe0] sm:$0xff] %v1943
        %1980 = vst [vmem:[#allocation5 + $0xe8] sm:$0xff] %v1944
        %1981 = vst [vmem:[#allocation5 + $0xf0] sm:$0xff] %v1945
        %1982 = vst [vmem:[#allocation5 + $0xf8] sm:$0xff] %v1946
        %1983 = vst [vmem:[#allocation5 + $0x100] sm:$0xff] %v1947
        %1984 = vst [vmem:[#allocation5 + $0x108] sm:$0xff] %v1948
        %1985 = vst [vmem:[#allocation5 + $0x110] sm:$0xff] %v1949
        %1986 = vst [vmem:[#allocation5 + $0x118] sm:$0xff] %v1950
        %v1987 = vld [vmem:[%s433 + $0x14] sm:$0xff]
        %v1988 = vld [vmem:[%s433 + $0x1c] sm:$0xff]
        %v1989 = vld [vmem:[%s433 + $0x24] sm:$0xff]
        %v1990 = vld [vmem:[%s433 + $0x2c] sm:$0xff]
        %v1991 = vld [vmem:[%s433 + $0x34] sm:$0xff]
        %v1992 = vld [vmem:[%s433 + $0x3c] sm:$0xff]
        %v1993 = vld [vmem:[%s433 + $0x44] sm:$0xff]
        %v1994 = vld [vmem:[%s433 + $0x4c] sm:$0xff]
        %v1995 = vld [vmem:[%s433 + $0x54] sm:$0xff]
        %v1996 = vld [vmem:[%s433 + $0x5c] sm:$0xff]
        %v1997 = vld [vmem:[%s433 + $0x64] sm:$0xff]
        %v1998 = vld [vmem:[%s433 + $0x6c] sm:$0xff]
        %v1999 = vld [vmem:[%s433 + $0x74] sm:$0xff]
        %v2000 = vld [vmem:[%s433 + $0x7c] sm:$0xff]
        %v2001 = vld [vmem:[%s433 + $0x84] sm:$0xff]
        %v2002 = vld [vmem:[%s433 + $0x8c] sm:$0xff]
        %v2003 = vld [vmem:[%s433 + $0x94] sm:$0xff]
        %v2004 = vld [vmem:[%s433 + $0x9c] sm:$0xff]
        %v2005 = vld [vmem:[%s433 + $0xa4] sm:$0xff]
        %v2006 = vld [vmem:[%s433 + $0xac] sm:$0xff]
        %v2007 = vld [vmem:[%s433 + $0xb4] sm:$0xff]
        %v2008 = vld [vmem:[%s433 + $0xbc] sm:$0xff]
        %v2009 = vld [vmem:[%s433 + $0xc4] sm:$0xff]
        %v2010 = vld [vmem:[%s433 + $0xcc] sm:$0xff]
        %v2011 = vld [vmem:[%s433 + $0xd4] sm:$0xff]
        %v2012 = vld [vmem:[%s433 + $0xdc] sm:$0xff]
        %v2013 = vld [vmem:[%s433 + $0xe4] sm:$0xff]
        %v2014 = vld [vmem:[%s433 + $0xec] sm:$0xff]
        %v2015 = vld [vmem:[%s433 + $0xf4] sm:$0xff]
        %v2016 = vld [vmem:[%s433 + $0xfc] sm:$0xff]
        %v2017 = vld [vmem:[%s433 + $0x104] sm:$0xff]
        %v2018 = vld [vmem:[%s433 + $0x10c] sm:$0xff]
        %v2019 = vld [vmem:[%s433 + $0x114] sm:$0xff]
        %v2020 = vld [vmem:[%s433 + $0x11c] sm:$0xff]
        %v2021 = vld [vmem:[%s433 + $0x124] sm:$0xff]
        %v2022 = vld [vmem:[%s433 + $0x12c] sm:$0xff]
        %v2023 = vpack.c.bf16 %v1988, %v1987
        %v2024 = vpack.c.bf16 %v1990, %v1989
        %v2025 = vpack.c.bf16 %v1992, %v1991
        %v2026 = vpack.c.bf16 %v1994, %v1993
        %v2027 = vpack.c.bf16 %v1996, %v1995
        %v2028 = vpack.c.bf16 %v1998, %v1997
        %v2029 = vpack.c.bf16 %v2000, %v1999
        %v2030 = vpack.c.bf16 %v2002, %v2001
        %v2031 = vpack.c.bf16 %v2004, %v2003
        %v2032 = vpack.c.bf16 %v2006, %v2005
        %v2033 = vpack.c.bf16 %v2008, %v2007
        %v2034 = vpack.c.bf16 %v2010, %v2009
        %v2035 = vpack.c.bf16 %v2012, %v2011
        %v2036 = vpack.c.bf16 %v2014, %v2013
        %v2037 = vpack.c.bf16 %v2016, %v2015
        %v2038 = vpack.c.bf16 %v2018, %v2017
        %v2039 = vpack.c.bf16 %v2020, %v2019
        %v2040 = vpack.c.bf16 %v2022, %v2021
        %s2041 = scalar_lea.vmem %s1, 10
        %v2042 = vld [vmem:[%s2041] sm:$0x3]
        %v2044 = vsel %vm513, %v2023, 0
        %v2047 = vsel %vm513, %v2024, 0
        %v2050 = vsel %vm513, %v2025, 0
        %v2053 = vsel %vm513, %v2026, 0
        %v2056 = vsel %vm513, %v2027, 0
        %v2059 = vsel %vm513, %v2028, 0
        %v2062 = vsel %vm513, %v2029, 0
        %v2065 = vsel %vm513, %v2030, 0
        %v2068 = vsel %vm513, %v2031, 0
        %v2071 = vsel %vm513, %v2032, 0
        %v2074 = vsel %vm513, %v2033, 0
        %v2077 = vsel %vm513, %v2034, 0
        %v2080 = vsel %vm513, %v2035, 0
        %v2083 = vsel %vm513, %v2036, 0
        %v2086 = vsel %vm513, %v2037, 0
        %v2089 = vsel %vm513, %v2038, 0
        %v2092 = vsel %vm513, %v2039, 0
        %v2095 = vsel %vm513, %v2040, 0
        %v2098 = vsel %vm568, %v2042, 0
        %2100 = vmatpush.bf16.msra.mxu0 0
        %2101 = vmatpush.bf16.msra.mxu0 0
        %2102 = vmatpush.bf16.msra.mxu0 0
        %2103 = vmatpush.bf16.msra.mxu0 0
        %2104 = vmatpush.bf16.msra.mxu0 0
        %2105 = vmatpush.bf16.msra.mxu0 0
        %2106 = vmatpush.bf16.msra.mxu0 0
        %2107 = vmatpush.bf16.msra.mxu0 %v2098
        %2108 = vmatmul.bf16.gmra.mxu0 %v2044
        %v2109 = vpop.f32.mrf.mxu0
        %v2110 = vadd.f32 0.0, %v2109
        %v2111 = vpop.f32.mrf.mxu0
        %v2112 = vadd.f32 0.0, %v2111
        %2113 = vmatmul.bf16.gmra.mxu0 %v2047
        %v2114 = vpop.f32.mrf.mxu0
        %v2115 = vadd.f32 0.0, %v2114
        %v2116 = vpop.f32.mrf.mxu0
        %v2117 = vadd.f32 0.0, %v2116
        %2118 = vmatmul.bf16.gmra.mxu0 %v2050
        %v2119 = vpop.f32.mrf.mxu0
        %v2120 = vadd.f32 0.0, %v2119
        %v2121 = vpop.f32.mrf.mxu0
        %v2122 = vadd.f32 0.0, %v2121
        %2123 = vmatmul.bf16.gmra.mxu0 %v2053
        %v2124 = vpop.f32.mrf.mxu0
        %v2125 = vadd.f32 0.0, %v2124
        %v2126 = vpop.f32.mrf.mxu0
        %v2127 = vadd.f32 0.0, %v2126
        %2128 = vmatmul.bf16.gmra.mxu0 %v2056
        %v2129 = vpop.f32.mrf.mxu0
        %v2130 = vadd.f32 0.0, %v2129
        %v2131 = vpop.f32.mrf.mxu0
        %v2132 = vadd.f32 0.0, %v2131
        %2133 = vmatmul.bf16.gmra.mxu0 %v2059
        %v2134 = vpop.f32.mrf.mxu0
        %v2135 = vadd.f32 0.0, %v2134
        %v2136 = vpop.f32.mrf.mxu0
        %v2137 = vadd.f32 0.0, %v2136
        %2138 = vmatmul.bf16.gmra.mxu0 %v2062
        %v2139 = vpop.f32.mrf.mxu0
        %v2140 = vadd.f32 0.0, %v2139
        %v2141 = vpop.f32.mrf.mxu0
        %v2142 = vadd.f32 0.0, %v2141
        %2143 = vmatmul.bf16.gmra.mxu0 %v2065
        %v2144 = vpop.f32.mrf.mxu0
        %v2145 = vadd.f32 0.0, %v2144
        %v2146 = vpop.f32.mrf.mxu0
        %v2147 = vadd.f32 0.0, %v2146
        %2148 = vmatmul.bf16.gmra.mxu0 %v2068
        %v2149 = vpop.f32.mrf.mxu0
        %v2150 = vadd.f32 0.0, %v2149
        %v2151 = vpop.f32.mrf.mxu0
        %v2152 = vadd.f32 0.0, %v2151
        %2153 = vmatmul.bf16.gmra.mxu0 %v2071
        %v2154 = vpop.f32.mrf.mxu0
        %v2155 = vadd.f32 0.0, %v2154
        %v2156 = vpop.f32.mrf.mxu0
        %v2157 = vadd.f32 0.0, %v2156
        %2158 = vmatmul.bf16.gmra.mxu0 %v2074
        %v2159 = vpop.f32.mrf.mxu0
        %v2160 = vadd.f32 0.0, %v2159
        %v2161 = vpop.f32.mrf.mxu0
        %v2162 = vadd.f32 0.0, %v2161
        %2163 = vmatmul.bf16.gmra.mxu0 %v2077
        %v2164 = vpop.f32.mrf.mxu0
        %v2165 = vadd.f32 0.0, %v2164
        %v2166 = vpop.f32.mrf.mxu0
        %v2167 = vadd.f32 0.0, %v2166
        %2168 = vmatmul.bf16.gmra.mxu0 %v2080
        %v2169 = vpop.f32.mrf.mxu0
        %v2170 = vadd.f32 0.0, %v2169
        %v2171 = vpop.f32.mrf.mxu0
        %v2172 = vadd.f32 0.0, %v2171
        %2173 = vmatmul.bf16.gmra.mxu0 %v2083
        %v2174 = vpop.f32.mrf.mxu0
        %v2175 = vadd.f32 0.0, %v2174
        %v2176 = vpop.f32.mrf.mxu0
        %v2177 = vadd.f32 0.0, %v2176
        %2178 = vmatmul.bf16.gmra.mxu0 %v2086
        %v2179 = vpop.f32.mrf.mxu0
        %v2180 = vadd.f32 0.0, %v2179
        %v2181 = vpop.f32.mrf.mxu0
        %v2182 = vadd.f32 0.0, %v2181
        %2183 = vmatmul.bf16.gmra.mxu0 %v2089
        %v2184 = vpop.f32.mrf.mxu0
        %v2185 = vadd.f32 0.0, %v2184
        %v2186 = vpop.f32.mrf.mxu0
        %v2187 = vadd.f32 0.0, %v2186
        %2188 = vmatmul.bf16.gmra.mxu0 %v2092
        %v2189 = vpop.f32.mrf.mxu0
        %v2190 = vadd.f32 0.0, %v2189
        %v2191 = vpop.f32.mrf.mxu0
        %v2192 = vadd.f32 0.0, %v2191
        %2193 = vmatmul.bf16.gmra.mxu0 %v2095
        %v2194 = vpop.f32.mrf.mxu0
        %v2195 = vadd.f32 0.0, %v2194
        %v2196 = vpop.f32.mrf.mxu0
        %v2197 = vadd.f32 0.0, %v2196
        %2198 = vdwg.mxu0
        %v2199 = vld [vmem:[#allocation5] sm:$0xff]
        %v2200 = vld [vmem:[#allocation5 + $0x8] sm:$0xff]
        %v2201 = vld [vmem:[#allocation5 + $0x10] sm:$0xff]
        %v2202 = vld [vmem:[#allocation5 + $0x18] sm:$0xff]
        %v2203 = vld [vmem:[#allocation5 + $0x20] sm:$0xff]
        %v2204 = vld [vmem:[#allocation5 + $0x28] sm:$0xff]
        %v2205 = vld [vmem:[#allocation5 + $0x30] sm:$0xff]
        %v2206 = vld [vmem:[#allocation5 + $0x38] sm:$0xff]
        %v2207 = vld [vmem:[#allocation5 + $0x40] sm:$0xff]
        %v2208 = vld [vmem:[#allocation5 + $0x48] sm:$0xff]
        %v2209 = vld [vmem:[#allocation5 + $0x50] sm:$0xff]
        %v2210 = vld [vmem:[#allocation5 + $0x58] sm:$0xff]
        %v2211 = vld [vmem:[#allocation5 + $0x60] sm:$0xff]
        %v2212 = vld [vmem:[#allocation5 + $0x68] sm:$0xff]
        %v2213 = vld [vmem:[#allocation5 + $0x70] sm:$0xff]
        %v2214 = vld [vmem:[#allocation5 + $0x78] sm:$0xff]
        %v2215 = vld [vmem:[#allocation5 + $0x80] sm:$0xff]
        %v2216 = vld [vmem:[#allocation5 + $0x88] sm:$0xff]
        %v2217 = vld [vmem:[#allocation5 + $0x90] sm:$0xff]
        %v2218 = vld [vmem:[#allocation5 + $0x98] sm:$0xff]
        %v2219 = vld [vmem:[#allocation5 + $0xa0] sm:$0xff]
        %v2220 = vld [vmem:[#allocation5 + $0xa8] sm:$0xff]
        %v2221 = vld [vmem:[#allocation5 + $0xb0] sm:$0xff]
        %v2222 = vld [vmem:[#allocation5 + $0xb8] sm:$0xff]
        %v2223 = vld [vmem:[#allocation5 + $0xc0] sm:$0xff]
        %v2224 = vld [vmem:[#allocation5 + $0xc8] sm:$0xff]
        %v2225 = vld [vmem:[#allocation5 + $0xd0] sm:$0xff]
        %v2226 = vld [vmem:[#allocation5 + $0xd8] sm:$0xff]
        %v2227 = vld [vmem:[#allocation5 + $0xe0] sm:$0xff]
        %v2228 = vld [vmem:[#allocation5 + $0xe8] sm:$0xff]
        %v2229 = vld [vmem:[#allocation5 + $0xf0] sm:$0xff]
        %v2230 = vld [vmem:[#allocation5 + $0xf8] sm:$0xff]
        %v2231 = vld [vmem:[#allocation5 + $0x100] sm:$0xff]
        %v2232 = vld [vmem:[#allocation5 + $0x108] sm:$0xff]
        %v2233 = vld [vmem:[#allocation5 + $0x110] sm:$0xff]
        %v2234 = vld [vmem:[#allocation5 + $0x118] sm:$0xff]
        %v2235 = vadd.f32 %v2199, %v2110
        %v2236 = vadd.f32 %v2200, %v2112
        %v2237 = vadd.f32 %v2201, %v2115
        %v2238 = vadd.f32 %v2202, %v2117
        %v2239 = vadd.f32 %v2203, %v2120
        %v2240 = vadd.f32 %v2204, %v2122
        %v2241 = vadd.f32 %v2205, %v2125
        %v2242 = vadd.f32 %v2206, %v2127
        %v2243 = vadd.f32 %v2207, %v2130
        %v2244 = vadd.f32 %v2208, %v2132
        %v2245 = vadd.f32 %v2209, %v2135
        %v2246 = vadd.f32 %v2210, %v2137
        %v2247 = vadd.f32 %v2211, %v2140
        %v2248 = vadd.f32 %v2212, %v2142
        %v2249 = vadd.f32 %v2213, %v2145
        %v2250 = vadd.f32 %v2214, %v2147
        %v2251 = vadd.f32 %v2215, %v2150
        %v2252 = vadd.f32 %v2216, %v2152
        %v2253 = vadd.f32 %v2217, %v2155
        %v2254 = vadd.f32 %v2218, %v2157
        %v2255 = vadd.f32 %v2219, %v2160
        %v2256 = vadd.f32 %v2220, %v2162
        %v2257 = vadd.f32 %v2221, %v2165
        %v2258 = vadd.f32 %v2222, %v2167
        %v2259 = vadd.f32 %v2223, %v2170
        %v2260 = vadd.f32 %v2224, %v2172
        %v2261 = vadd.f32 %v2225, %v2175
        %v2262 = vadd.f32 %v2226, %v2177
        %v2263 = vadd.f32 %v2227, %v2180
        %v2264 = vadd.f32 %v2228, %v2182
        %v2265 = vadd.f32 %v2229, %v2185
        %v2266 = vadd.f32 %v2230, %v2187
        %v2267 = vadd.f32 %v2231, %v2190
        %v2268 = vadd.f32 %v2232, %v2192
        %v2269 = vadd.f32 %v2233, %v2195
        %v2270 = vadd.f32 %v2234, %v2197
        %2271 = vst [vmem:[#allocation5] sm:$0xff] %v2235
        %2272 = vst [vmem:[#allocation5 + $0x8] sm:$0xff] %v2236
        %2273 = vst [vmem:[#allocation5 + $0x10] sm:$0xff] %v2237
        %2274 = vst [vmem:[#allocation5 + $0x18] sm:$0xff] %v2238
        %2275 = vst [vmem:[#allocation5 + $0x20] sm:$0xff] %v2239
        %2276 = vst [vmem:[#allocation5 + $0x28] sm:$0xff] %v2240
        %2277 = vst [vmem:[#allocation5 + $0x30] sm:$0xff] %v2241
        %2278 = vst [vmem:[#allocation5 + $0x38] sm:$0xff] %v2242
        %2279 = vst [vmem:[#allocation5 + $0x40] sm:$0xff] %v2243
        %2280 = vst [vmem:[#allocation5 + $0x48] sm:$0xff] %v2244
        %2281 = vst [vmem:[#allocation5 + $0x50] sm:$0xff] %v2245
        %2282 = vst [vmem:[#allocation5 + $0x58] sm:$0xff] %v2246
        %2283 = vst [vmem:[#allocation5 + $0x60] sm:$0xff] %v2247
        %2284 = vst [vmem:[#allocation5 + $0x68] sm:$0xff] %v2248
        %2285 = vst [vmem:[#allocation5 + $0x70] sm:$0xff] %v2249
        %2286 = vst [vmem:[#allocation5 + $0x78] sm:$0xff] %v2250
        %2287 = vst [vmem:[#allocation5 + $0x80] sm:$0xff] %v2251
        %2288 = vst [vmem:[#allocation5 + $0x88] sm:$0xff] %v2252
        %2289 = vst [vmem:[#allocation5 + $0x90] sm:$0xff] %v2253
        %2290 = vst [vmem:[#allocation5 + $0x98] sm:$0xff] %v2254
        %2291 = vst [vmem:[#allocation5 + $0xa0] sm:$0xff] %v2255
        %2292 = vst [vmem:[#allocation5 + $0xa8] sm:$0xff] %v2256
        %2293 = vst [vmem:[#allocation5 + $0xb0] sm:$0xff] %v2257
        %2294 = vst [vmem:[#allocation5 + $0xb8] sm:$0xff] %v2258
        %2295 = vst [vmem:[#allocation5 + $0xc0] sm:$0xff] %v2259
        %2296 = vst [vmem:[#allocation5 + $0xc8] sm:$0xff] %v2260
        %2297 = vst [vmem:[#allocation5 + $0xd0] sm:$0xff] %v2261
        %2298 = vst [vmem:[#allocation5 + $0xd8] sm:$0xff] %v2262
        %2299 = vst [vmem:[#allocation5 + $0xe0] sm:$0xff] %v2263
        %2300 = vst [vmem:[#allocation5 + $0xe8] sm:$0xff] %v2264
        %2301 = vst [vmem:[#allocation5 + $0xf0] sm:$0xff] %v2265
        %2302 = vst [vmem:[#allocation5 + $0xf8] sm:$0xff] %v2266
        %2303 = vst [vmem:[#allocation5 + $0x100] sm:$0xff] %v2267
        %2304 = vst [vmem:[#allocation5 + $0x108] sm:$0xff] %v2268
        %2305 = vst [vmem:[#allocation5 + $0x110] sm:$0xff] %v2269
        %2306 = vst [vmem:[#allocation5 + $0x118] sm:$0xff] %v2270
        %v2307 = vld [vmem:[%s433 + $0x24] sm:$0xff]
        %v2308 = vld [vmem:[%s433 + $0x2c] sm:$0xff]
        %v2309 = vld [vmem:[%s433 + $0x34] sm:$0xff]
        %v2310 = vld [vmem:[%s433 + $0x3c] sm:$0xff]
        %v2311 = vld [vmem:[%s433 + $0x44] sm:$0xff]
        %v2312 = vld [vmem:[%s433 + $0x4c] sm:$0xff]
        %v2313 = vld [vmem:[%s433 + $0x54] sm:$0xff]
        %v2314 = vld [vmem:[%s433 + $0x5c] sm:$0xff]
        %v2315 = vld [vmem:[%s433 + $0x64] sm:$0xff]
        %v2316 = vld [vmem:[%s433 + $0x6c] sm:$0xff]
        %v2317 = vld [vmem:[%s433 + $0x74] sm:$0xff]
        %v2318 = vld [vmem:[%s433 + $0x7c] sm:$0xff]
        %v2319 = vld [vmem:[%s433 + $0x84] sm:$0xff]
        %v2320 = vld [vmem:[%s433 + $0x8c] sm:$0xff]
        %v2321 = vld [vmem:[%s433 + $0x94] sm:$0xff]
        %v2322 = vld [vmem:[%s433 + $0x9c] sm:$0xff]
        %v2323 = vld [vmem:[%s433 + $0xa4] sm:$0xff]
        %v2324 = vld [vmem:[%s433 + $0xac] sm:$0xff]
        %v2325 = vld [vmem:[%s433 + $0xb4] sm:$0xff]
        %v2326 = vld [vmem:[%s433 + $0xbc] sm:$0xff]
        %v2327 = vld [vmem:[%s433 + $0xc4] sm:$0xff]
        %v2328 = vld [vmem:[%s433 + $0xcc] sm:$0xff]
        %v2329 = vld [vmem:[%s433 + $0xd4] sm:$0xff]
        %v2330 = vld [vmem:[%s433 + $0xdc] sm:$0xff]
        %v2331 = vld [vmem:[%s433 + $0xe4] sm:$0xff]
        %v2332 = vld [vmem:[%s433 + $0xec] sm:$0xff]
        %v2333 = vld [vmem:[%s433 + $0xf4] sm:$0xff]
        %v2334 = vld [vmem:[%s433 + $0xfc] sm:$0xff]
        %v2335 = vld [vmem:[%s433 + $0x104] sm:$0xff]
        %v2336 = vld [vmem:[%s433 + $0x10c] sm:$0xff]
        %v2337 = vld [vmem:[%s433 + $0x114] sm:$0xff]
        %v2338 = vld [vmem:[%s433 + $0x11c] sm:$0xff]
        %v2339 = vld [vmem:[%s433 + $0x124] sm:$0xff]
        %v2340 = vld [vmem:[%s433 + $0x12c] sm:$0xff]
        %v2341 = vld [vmem:[%s433 + $0x134] sm:$0xff]
        %v2342 = vld [vmem:[%s433 + $0x13c] sm:$0xff]
        %v2343 = vpack.c.bf16 %v2308, %v2307
        %v2344 = vpack.c.bf16 %v2310, %v2309
        %v2345 = vpack.c.bf16 %v2312, %v2311
        %v2346 = vpack.c.bf16 %v2314, %v2313
        %v2347 = vpack.c.bf16 %v2316, %v2315
        %v2348 = vpack.c.bf16 %v2318, %v2317
        %v2349 = vpack.c.bf16 %v2320, %v2319
        %v2350 = vpack.c.bf16 %v2322, %v2321
        %v2351 = vpack.c.bf16 %v2324, %v2323
        %v2352 = vpack.c.bf16 %v2326, %v2325
        %v2353 = vpack.c.bf16 %v2328, %v2327
        %v2354 = vpack.c.bf16 %v2330, %v2329
        %v2355 = vpack.c.bf16 %v2332, %v2331
        %v2356 = vpack.c.bf16 %v2334, %v2333
        %v2357 = vpack.c.bf16 %v2336, %v2335
        %v2358 = vpack.c.bf16 %v2338, %v2337
        %v2359 = vpack.c.bf16 %v2340, %v2339
        %v2360 = vpack.c.bf16 %v2342, %v2341
        %s2361 = scalar_lea.vmem %s1, 12
        %v2362 = vld [vmem:[%s2361] sm:$0x3]
        %v2364 = vsel %vm513, %v2343, 0
        %v2367 = vsel %vm513, %v2344, 0
        %v2370 = vsel %vm513, %v2345, 0
        %v2373 = vsel %vm513, %v2346, 0
        %v2376 = vsel %vm513, %v2347, 0
        %v2379 = vsel %vm513, %v2348, 0
        %v2382 = vsel %vm513, %v2349, 0
        %v2385 = vsel %vm513, %v2350, 0
        %v2388 = vsel %vm513, %v2351, 0
        %v2391 = vsel %vm513, %v2352, 0
        %v2394 = vsel %vm513, %v2353, 0
        %v2397 = vsel %vm513, %v2354, 0
        %v2400 = vsel %vm513, %v2355, 0
        %v2403 = vsel %vm513, %v2356, 0
        %v2406 = vsel %vm513, %v2357, 0
        %v2409 = vsel %vm513, %v2358, 0
        %v2412 = vsel %vm513, %v2359, 0
        %v2415 = vsel %vm513, %v2360, 0
        %v2418 = vsel %vm568, %v2362, 0
        %2420 = vmatpush.bf16.msra.mxu0 0
        %2421 = vmatpush.bf16.msra.mxu0 0
        %2422 = vmatpush.bf16.msra.mxu0 0
        %2423 = vmatpush.bf16.msra.mxu0 0
        %2424 = vmatpush.bf16.msra.mxu0 0
        %2425 = vmatpush.bf16.msra.mxu0 0
        %2426 = vmatpush.bf16.msra.mxu0 0
        %2427 = vmatpush.bf16.msra.mxu0 %v2418
        %2428 = vmatmul.bf16.gmra.mxu0 %v2364
        %v2429 = vpop.f32.mrf.mxu0
        %v2430 = vadd.f32 0.0, %v2429
        %v2431 = vpop.f32.mrf.mxu0
        %v2432 = vadd.f32 0.0, %v2431
        %2433 = vmatmul.bf16.gmra.mxu0 %v2367
        %v2434 = vpop.f32.mrf.mxu0
        %v2435 = vadd.f32 0.0, %v2434
        %v2436 = vpop.f32.mrf.mxu0
        %v2437 = vadd.f32 0.0, %v2436
        %2438 = vmatmul.bf16.gmra.mxu0 %v2370
        %v2439 = vpop.f32.mrf.mxu0
        %v2440 = vadd.f32 0.0, %v2439
        %v2441 = vpop.f32.mrf.mxu0
        %v2442 = vadd.f32 0.0, %v2441
        %2443 = vmatmul.bf16.gmra.mxu0 %v2373
        %v2444 = vpop.f32.mrf.mxu0
        %v2445 = vadd.f32 0.0, %v2444
        %v2446 = vpop.f32.mrf.mxu0
        %v2447 = vadd.f32 0.0, %v2446
        %2448 = vmatmul.bf16.gmra.mxu0 %v2376
        %v2449 = vpop.f32.mrf.mxu0
        %v2450 = vadd.f32 0.0, %v2449
        %v2451 = vpop.f32.mrf.mxu0
        %v2452 = vadd.f32 0.0, %v2451
        %2453 = vmatmul.bf16.gmra.mxu0 %v2379
        %v2454 = vpop.f32.mrf.mxu0
        %v2455 = vadd.f32 0.0, %v2454
        %v2456 = vpop.f32.mrf.mxu0
        %v2457 = vadd.f32 0.0, %v2456
        %2458 = vmatmul.bf16.gmra.mxu0 %v2382
        %v2459 = vpop.f32.mrf.mxu0
        %v2460 = vadd.f32 0.0, %v2459
        %v2461 = vpop.f32.mrf.mxu0
        %v2462 = vadd.f32 0.0, %v2461
        %2463 = vmatmul.bf16.gmra.mxu0 %v2385
        %v2464 = vpop.f32.mrf.mxu0
        %v2465 = vadd.f32 0.0, %v2464
        %v2466 = vpop.f32.mrf.mxu0
        %v2467 = vadd.f32 0.0, %v2466
        %2468 = vmatmul.bf16.gmra.mxu0 %v2388
        %v2469 = vpop.f32.mrf.mxu0
        %v2470 = vadd.f32 0.0, %v2469
        %v2471 = vpop.f32.mrf.mxu0
        %v2472 = vadd.f32 0.0, %v2471
        %2473 = vmatmul.bf16.gmra.mxu0 %v2391
        %v2474 = vpop.f32.mrf.mxu0
        %v2475 = vadd.f32 0.0, %v2474
        %v2476 = vpop.f32.mrf.mxu0
        %v2477 = vadd.f32 0.0, %v2476
        %2478 = vmatmul.bf16.gmra.mxu0 %v2394
        %v2479 = vpop.f32.mrf.mxu0
        %v2480 = vadd.f32 0.0, %v2479
        %v2481 = vpop.f32.mrf.mxu0
        %v2482 = vadd.f32 0.0, %v2481
        %2483 = vmatmul.bf16.gmra.mxu0 %v2397
        %v2484 = vpop.f32.mrf.mxu0
        %v2485 = vadd.f32 0.0, %v2484
        %v2486 = vpop.f32.mrf.mxu0
        %v2487 = vadd.f32 0.0, %v2486
        %2488 = vmatmul.bf16.gmra.mxu0 %v2400
        %v2489 = vpop.f32.mrf.mxu0
        %v2490 = vadd.f32 0.0, %v2489
        %v2491 = vpop.f32.mrf.mxu0
        %v2492 = vadd.f32 0.0, %v2491
        %2493 = vmatmul.bf16.gmra.mxu0 %v2403
        %v2494 = vpop.f32.mrf.mxu0
        %v2495 = vadd.f32 0.0, %v2494
        %v2496 = vpop.f32.mrf.mxu0
        %v2497 = vadd.f32 0.0, %v2496
        %2498 = vmatmul.bf16.gmra.mxu0 %v2406
        %v2499 = vpop.f32.mrf.mxu0
        %v2500 = vadd.f32 0.0, %v2499
        %v2501 = vpop.f32.mrf.mxu0
        %v2502 = vadd.f32 0.0, %v2501
        %2503 = vmatmul.bf16.gmra.mxu0 %v2409
        %v2504 = vpop.f32.mrf.mxu0
        %v2505 = vadd.f32 0.0, %v2504
        %v2506 = vpop.f32.mrf.mxu0
        %v2507 = vadd.f32 0.0, %v2506
        %2508 = vmatmul.bf16.gmra.mxu0 %v2412
        %v2509 = vpop.f32.mrf.mxu0
        %v2510 = vadd.f32 0.0, %v2509
        %v2511 = vpop.f32.mrf.mxu0
        %v2512 = vadd.f32 0.0, %v2511
        %2513 = vmatmul.bf16.gmra.mxu0 %v2415
        %v2514 = vpop.f32.mrf.mxu0
        %v2515 = vadd.f32 0.0, %v2514
        %v2516 = vpop.f32.mrf.mxu0
        %v2517 = vadd.f32 0.0, %v2516
        %2518 = vdwg.mxu0
        %v2519 = vld [vmem:[#allocation5] sm:$0xff]
        %v2520 = vld [vmem:[#allocation5 + $0x8] sm:$0xff]
        %v2521 = vld [vmem:[#allocation5 + $0x10] sm:$0xff]
        %v2522 = vld [vmem:[#allocation5 + $0x18] sm:$0xff]
        %v2523 = vld [vmem:[#allocation5 + $0x20] sm:$0xff]
        %v2524 = vld [vmem:[#allocation5 + $0x28] sm:$0xff]
        %v2525 = vld [vmem:[#allocation5 + $0x30] sm:$0xff]
        %v2526 = vld [vmem:[#allocation5 + $0x38] sm:$0xff]
        %v2527 = vld [vmem:[#allocation5 + $0x40] sm:$0xff]
        %v2528 = vld [vmem:[#allocation5 + $0x48] sm:$0xff]
        %v2529 = vld [vmem:[#allocation5 + $0x50] sm:$0xff]
        %v2530 = vld [vmem:[#allocation5 + $0x58] sm:$0xff]
        %v2531 = vld [vmem:[#allocation5 + $0x60] sm:$0xff]
        %v2532 = vld [vmem:[#allocation5 + $0x68] sm:$0xff]
        %v2533 = vld [vmem:[#allocation5 + $0x70] sm:$0xff]
        %v2534 = vld [vmem:[#allocation5 + $0x78] sm:$0xff]
        %v2535 = vld [vmem:[#allocation5 + $0x80] sm:$0xff]
        %v2536 = vld [vmem:[#allocation5 + $0x88] sm:$0xff]
        %v2537 = vld [vmem:[#allocation5 + $0x90] sm:$0xff]
        %v2538 = vld [vmem:[#allocation5 + $0x98] sm:$0xff]
        %v2539 = vld [vmem:[#allocation5 + $0xa0] sm:$0xff]
        %v2540 = vld [vmem:[#allocation5 + $0xa8] sm:$0xff]
        %v2541 = vld [vmem:[#allocation5 + $0xb0] sm:$0xff]
        %v2542 = vld [vmem:[#allocation5 + $0xb8] sm:$0xff]
        %v2543 = vld [vmem:[#allocation5 + $0xc0] sm:$0xff]
        %v2544 = vld [vmem:[#allocation5 + $0xc8] sm:$0xff]
        %v2545 = vld [vmem:[#allocation5 + $0xd0] sm:$0xff]
        %v2546 = vld [vmem:[#allocation5 + $0xd8] sm:$0xff]
        %v2547 = vld [vmem:[#allocation5 + $0xe0] sm:$0xff]
        %v2548 = vld [vmem:[#allocation5 + $0xe8] sm:$0xff]
        %v2549 = vld [vmem:[#allocation5 + $0xf0] sm:$0xff]
        %v2550 = vld [vmem:[#allocation5 + $0xf8] sm:$0xff]
        %v2551 = vld [vmem:[#allocation5 + $0x100] sm:$0xff]
        %v2552 = vld [vmem:[#allocation5 + $0x108] sm:$0xff]
        %v2553 = vld [vmem:[#allocation5 + $0x110] sm:$0xff]
        %v2554 = vld [vmem:[#allocation5 + $0x118] sm:$0xff]
        %v2555 = vadd.f32 %v2519, %v2430
        %v2556 = vadd.f32 %v2520, %v2432
        %v2557 = vadd.f32 %v2521, %v2435
        %v2558 = vadd.f32 %v2522, %v2437
        %v2559 = vadd.f32 %v2523, %v2440
        %v2560 = vadd.f32 %v2524, %v2442
        %v2561 = vadd.f32 %v2525, %v2445
        %v2562 = vadd.f32 %v2526, %v2447
        %v2563 = vadd.f32 %v2527, %v2450
        %v2564 = vadd.f32 %v2528, %v2452
        %v2565 = vadd.f32 %v2529, %v2455
        %v2566 = vadd.f32 %v2530, %v2457
        %v2567 = vadd.f32 %v2531, %v2460
        %v2568 = vadd.f32 %v2532, %v2462
        %v2569 = vadd.f32 %v2533, %v2465
        %v2570 = vadd.f32 %v2534, %v2467
        %v2571 = vadd.f32 %v2535, %v2470
        %v2572 = vadd.f32 %v2536, %v2472
        %v2573 = vadd.f32 %v2537, %v2475
        %v2574 = vadd.f32 %v2538, %v2477
        %v2575 = vadd.f32 %v2539, %v2480
        %v2576 = vadd.f32 %v2540, %v2482
        %v2577 = vadd.f32 %v2541, %v2485
        %v2578 = vadd.f32 %v2542, %v2487
        %v2579 = vadd.f32 %v2543, %v2490
        %v2580 = vadd.f32 %v2544, %v2492
        %v2581 = vadd.f32 %v2545, %v2495
        %v2582 = vadd.f32 %v2546, %v2497
        %v2583 = vadd.f32 %v2547, %v2500
        %v2584 = vadd.f32 %v2548, %v2502
        %v2585 = vadd.f32 %v2549, %v2505
        %v2586 = vadd.f32 %v2550, %v2507
        %v2587 = vadd.f32 %v2551, %v2510
        %v2588 = vadd.f32 %v2552, %v2512
        %v2589 = vadd.f32 %v2553, %v2515
        %v2590 = vadd.f32 %v2554, %v2517
        %2591 = vst [vmem:[#allocation5] sm:$0xff] %v2555
        %2592 = vst [vmem:[#allocation5 + $0x8] sm:$0xff] %v2556
        %2593 = vst [vmem:[#allocation5 + $0x10] sm:$0xff] %v2557
        %2594 = vst [vmem:[#allocation5 + $0x18] sm:$0xff] %v2558
        %2595 = vst [vmem:[#allocation5 + $0x20] sm:$0xff] %v2559
        %2596 = vst [vmem:[#allocation5 + $0x28] sm:$0xff] %v2560
        %2597 = vst [vmem:[#allocation5 + $0x30] sm:$0xff] %v2561
        %2598 = vst [vmem:[#allocation5 + $0x38] sm:$0xff] %v2562
        %2599 = vst [vmem:[#allocation5 + $0x40] sm:$0xff] %v2563
        %2600 = vst [vmem:[#allocation5 + $0x48] sm:$0xff] %v2564
        %2601 = vst [vmem:[#allocation5 + $0x50] sm:$0xff] %v2565
        %2602 = vst [vmem:[#allocation5 + $0x58] sm:$0xff] %v2566
        %2603 = vst [vmem:[#allocation5 + $0x60] sm:$0xff] %v2567
        %2604 = vst [vmem:[#allocation5 + $0x68] sm:$0xff] %v2568
        %2605 = vst [vmem:[#allocation5 + $0x70] sm:$0xff] %v2569
        %2606 = vst [vmem:[#allocation5 + $0x78] sm:$0xff] %v2570
        %2607 = vst [vmem:[#allocation5 + $0x80] sm:$0xff] %v2571
        %2608 = vst [vmem:[#allocation5 + $0x88] sm:$0xff] %v2572
        %2609 = vst [vmem:[#allocation5 + $0x90] sm:$0xff] %v2573
        %2610 = vst [vmem:[#allocation5 + $0x98] sm:$0xff] %v2574
        %2611 = vst [vmem:[#allocation5 + $0xa0] sm:$0xff] %v2575
        %2612 = vst [vmem:[#allocation5 + $0xa8] sm:$0xff] %v2576
        %2613 = vst [vmem:[#allocation5 + $0xb0] sm:$0xff] %v2577
        %2614 = vst [vmem:[#allocation5 + $0xb8] sm:$0xff] %v2578
        %2615 = vst [vmem:[#allocation5 + $0xc0] sm:$0xff] %v2579
        %2616 = vst [vmem:[#allocation5 + $0xc8] sm:$0xff] %v2580
        %2617 = vst [vmem:[#allocation5 + $0xd0] sm:$0xff] %v2581
        %2618 = vst [vmem:[#allocation5 + $0xd8] sm:$0xff] %v2582
        %2619 = vst [vmem:[#allocation5 + $0xe0] sm:$0xff] %v2583
        %2620 = vst [vmem:[#allocation5 + $0xe8] sm:$0xff] %v2584
        %2621 = vst [vmem:[#allocation5 + $0xf0] sm:$0xff] %v2585
        %2622 = vst [vmem:[#allocation5 + $0xf8] sm:$0xff] %v2586
        %2623 = vst [vmem:[#allocation5 + $0x100] sm:$0xff] %v2587
        %2624 = vst [vmem:[#allocation5 + $0x108] sm:$0xff] %v2588
        %2625 = vst [vmem:[#allocation5 + $0x110] sm:$0xff] %v2589
        %2626 = vst [vmem:[#allocation5 + $0x118] sm:$0xff] %v2590
        %v2627 = vld [vmem:[%s433 + $0x25] sm:$0xff]
        %v2628 = vld [vmem:[%s433 + $0x2d] sm:$0xff]
        %v2629 = vld [vmem:[%s433 + $0x35] sm:$0xff]
        %v2630 = vld [vmem:[%s433 + $0x3d] sm:$0xff]
        %v2631 = vld [vmem:[%s433 + $0x45] sm:$0xff]
        %v2632 = vld [vmem:[%s433 + $0x4d] sm:$0xff]
        %v2633 = vld [vmem:[%s433 + $0x55] sm:$0xff]
        %v2634 = vld [vmem:[%s433 + $0x5d] sm:$0xff]
        %v2635 = vld [vmem:[%s433 + $0x65] sm:$0xff]
        %v2636 = vld [vmem:[%s433 + $0x6d] sm:$0xff]
        %v2637 = vld [vmem:[%s433 + $0x75] sm:$0xff]
        %v2638 = vld [vmem:[%s433 + $0x7d] sm:$0xff]
        %v2639 = vld [vmem:[%s433 + $0x85] sm:$0xff]
        %v2640 = vld [vmem:[%s433 + $0x8d] sm:$0xff]
        %v2641 = vld [vmem:[%s433 + $0x95] sm:$0xff]
        %v2642 = vld [vmem:[%s433 + $0x9d] sm:$0xff]
        %v2643 = vld [vmem:[%s433 + $0xa5] sm:$0xff]
        %v2644 = vld [vmem:[%s433 + $0xad] sm:$0xff]
        %v2645 = vld [vmem:[%s433 + $0xb5] sm:$0xff]
        %v2646 = vld [vmem:[%s433 + $0xbd] sm:$0xff]
        %v2647 = vld [vmem:[%s433 + $0xc5] sm:$0xff]
        %v2648 = vld [vmem:[%s433 + $0xcd] sm:$0xff]
        %v2649 = vld [vmem:[%s433 + $0xd5] sm:$0xff]
        %v2650 = vld [vmem:[%s433 + $0xdd] sm:$0xff]
        %v2651 = vld [vmem:[%s433 + $0xe5] sm:$0xff]
        %v2652 = vld [vmem:[%s433 + $0xed] sm:$0xff]
        %v2653 = vld [vmem:[%s433 + $0xf5] sm:$0xff]
        %v2654 = vld [vmem:[%s433 + $0xfd] sm:$0xff]
        %v2655 = vld [vmem:[%s433 + $0x105] sm:$0xff]
        %v2656 = vld [vmem:[%s433 + $0x10d] sm:$0xff]
        %v2657 = vld [vmem:[%s433 + $0x115] sm:$0xff]
        %v2658 = vld [vmem:[%s433 + $0x11d] sm:$0xff]
        %v2659 = vld [vmem:[%s433 + $0x125] sm:$0xff]
        %v2660 = vld [vmem:[%s433 + $0x12d] sm:$0xff]
        %v2661 = vld [vmem:[%s433 + $0x135] sm:$0xff]
        %v2662 = vld [vmem:[%s433 + $0x13d] sm:$0xff]
        %v2663 = vpack.c.bf16 %v2628, %v2627
        %v2664 = vpack.c.bf16 %v2630, %v2629
        %v2665 = vpack.c.bf16 %v2632, %v2631
        %v2666 = vpack.c.bf16 %v2634, %v2633
        %v2667 = vpack.c.bf16 %v2636, %v2635
        %v2668 = vpack.c.bf16 %v2638, %v2637
        %v2669 = vpack.c.bf16 %v2640, %v2639
        %v2670 = vpack.c.bf16 %v2642, %v2641
        %v2671 = vpack.c.bf16 %v2644, %v2643
        %v2672 = vpack.c.bf16 %v2646, %v2645
        %v2673 = vpack.c.bf16 %v2648, %v2647
        %v2674 = vpack.c.bf16 %v2650, %v2649
        %v2675 = vpack.c.bf16 %v2652, %v2651
        %v2676 = vpack.c.bf16 %v2654, %v2653
        %v2677 = vpack.c.bf16 %v2656, %v2655
        %v2678 = vpack.c.bf16 %v2658, %v2657
        %v2679 = vpack.c.bf16 %v2660, %v2659
        %v2680 = vpack.c.bf16 %v2662, %v2661
        %s2681 = scalar_lea.vmem %s1, 14
        %v2682 = vld [vmem:[%s2681] sm:$0x3]
        %v2684 = vsel %vm513, %v2663, 0
        %v2687 = vsel %vm513, %v2664, 0
        %v2690 = vsel %vm513, %v2665, 0
        %v2693 = vsel %vm513, %v2666, 0
        %v2696 = vsel %vm513, %v2667, 0
        %v2699 = vsel %vm513, %v2668, 0
        %v2702 = vsel %vm513, %v2669, 0
        %v2705 = vsel %vm513, %v2670, 0
        %v2708 = vsel %vm513, %v2671, 0
        %v2711 = vsel %vm513, %v2672, 0
        %v2714 = vsel %vm513, %v2673, 0
        %v2717 = vsel %vm513, %v2674, 0
        %v2720 = vsel %vm513, %v2675, 0
        %v2723 = vsel %vm513, %v2676, 0
        %v2726 = vsel %vm513, %v2677, 0
        %v2729 = vsel %vm513, %v2678, 0
        %v2732 = vsel %vm513, %v2679, 0
        %v2735 = vsel %vm513, %v2680, 0
        %v2738 = vsel %vm568, %v2682, 0
        %2740 = vmatpush.bf16.msra.mxu0 0
        %2741 = vmatpush.bf16.msra.mxu0 0
        %2742 = vmatpush.bf16.msra.mxu0 0
        %2743 = vmatpush.bf16.msra.mxu0 0
        %2744 = vmatpush.bf16.msra.mxu0 0
        %2745 = vmatpush.bf16.msra.mxu0 0
        %2746 = vmatpush.bf16.msra.mxu0 0
        %2747 = vmatpush.bf16.msra.mxu0 %v2738
        %2748 = vmatmul.bf16.gmra.mxu0 %v2684
        %v2749 = vpop.f32.mrf.mxu0
        %v2750 = vadd.f32 0.0, %v2749
        %v2751 = vpop.f32.mrf.mxu0
        %v2752 = vadd.f32 0.0, %v2751
        %2753 = vmatmul.bf16.gmra.mxu0 %v2687
        %v2754 = vpop.f32.mrf.mxu0
        %v2755 = vadd.f32 0.0, %v2754
        %v2756 = vpop.f32.mrf.mxu0
        %v2757 = vadd.f32 0.0, %v2756
        %2758 = vmatmul.bf16.gmra.mxu0 %v2690
        %v2759 = vpop.f32.mrf.mxu0
        %v2760 = vadd.f32 0.0, %v2759
        %v2761 = vpop.f32.mrf.mxu0
        %v2762 = vadd.f32 0.0, %v2761
        %2763 = vmatmul.bf16.gmra.mxu0 %v2693
        %v2764 = vpop.f32.mrf.mxu0
        %v2765 = vadd.f32 0.0, %v2764
        %v2766 = vpop.f32.mrf.mxu0
        %v2767 = vadd.f32 0.0, %v2766
        %2768 = vmatmul.bf16.gmra.mxu0 %v2696
        %v2769 = vpop.f32.mrf.mxu0
        %v2770 = vadd.f32 0.0, %v2769
        %v2771 = vpop.f32.mrf.mxu0
        %v2772 = vadd.f32 0.0, %v2771
        %2773 = vmatmul.bf16.gmra.mxu0 %v2699
        %v2774 = vpop.f32.mrf.mxu0
        %v2775 = vadd.f32 0.0, %v2774
        %v2776 = vpop.f32.mrf.mxu0
        %v2777 = vadd.f32 0.0, %v2776
        %2778 = vmatmul.bf16.gmra.mxu0 %v2702
        %v2779 = vpop.f32.mrf.mxu0
        %v2780 = vadd.f32 0.0, %v2779
        %v2781 = vpop.f32.mrf.mxu0
        %v2782 = vadd.f32 0.0, %v2781
        %2783 = vmatmul.bf16.gmra.mxu0 %v2705
        %v2784 = vpop.f32.mrf.mxu0
        %v2785 = vadd.f32 0.0, %v2784
        %v2786 = vpop.f32.mrf.mxu0
        %v2787 = vadd.f32 0.0, %v2786
        %2788 = vmatmul.bf16.gmra.mxu0 %v2708
        %v2789 = vpop.f32.mrf.mxu0
        %v2790 = vadd.f32 0.0, %v2789
        %v2791 = vpop.f32.mrf.mxu0
        %v2792 = vadd.f32 0.0, %v2791
        %2793 = vmatmul.bf16.gmra.mxu0 %v2711
        %v2794 = vpop.f32.mrf.mxu0
        %v2795 = vadd.f32 0.0, %v2794
        %v2796 = vpop.f32.mrf.mxu0
        %v2797 = vadd.f32 0.0, %v2796
        %2798 = vmatmul.bf16.gmra.mxu0 %v2714
        %v2799 = vpop.f32.mrf.mxu0
        %v2800 = vadd.f32 0.0, %v2799
        %v2801 = vpop.f32.mrf.mxu0
        %v2802 = vadd.f32 0.0, %v2801
        %2803 = vmatmul.bf16.gmra.mxu0 %v2717
        %v2804 = vpop.f32.mrf.mxu0
        %v2805 = vadd.f32 0.0, %v2804
        %v2806 = vpop.f32.mrf.mxu0
        %v2807 = vadd.f32 0.0, %v2806
        %2808 = vmatmul.bf16.gmra.mxu0 %v2720
        %v2809 = vpop.f32.mrf.mxu0
        %v2810 = vadd.f32 0.0, %v2809
        %v2811 = vpop.f32.mrf.mxu0
        %v2812 = vadd.f32 0.0, %v2811
        %2813 = vmatmul.bf16.gmra.mxu0 %v2723
        %v2814 = vpop.f32.mrf.mxu0
        %v2815 = vadd.f32 0.0, %v2814
        %v2816 = vpop.f32.mrf.mxu0
        %v2817 = vadd.f32 0.0, %v2816
        %2818 = vmatmul.bf16.gmra.mxu0 %v2726
        %v2819 = vpop.f32.mrf.mxu0
        %v2820 = vadd.f32 0.0, %v2819
        %v2821 = vpop.f32.mrf.mxu0
        %v2822 = vadd.f32 0.0, %v2821
        %2823 = vmatmul.bf16.gmra.mxu0 %v2729
        %v2824 = vpop.f32.mrf.mxu0
        %v2825 = vadd.f32 0.0, %v2824
        %v2826 = vpop.f32.mrf.mxu0
        %v2827 = vadd.f32 0.0, %v2826
        %2828 = vmatmul.bf16.gmra.mxu0 %v2732
        %v2829 = vpop.f32.mrf.mxu0
        %v2830 = vadd.f32 0.0, %v2829
        %v2831 = vpop.f32.mrf.mxu0
        %v2832 = vadd.f32 0.0, %v2831
        %2833 = vmatmul.bf16.gmra.mxu0 %v2735
        %v2834 = vpop.f32.mrf.mxu0
        %v2835 = vadd.f32 0.0, %v2834
        %v2836 = vpop.f32.mrf.mxu0
        %v2837 = vadd.f32 0.0, %v2836
        %2838 = vdwg.mxu0
        %v2839 = vld [vmem:[#allocation5] sm:$0xff]
        %v2840 = vld [vmem:[#allocation5 + $0x8] sm:$0xff]
        %v2841 = vld [vmem:[#allocation5 + $0x10] sm:$0xff]
        %v2842 = vld [vmem:[#allocation5 + $0x18] sm:$0xff]
        %v2843 = vld [vmem:[#allocation5 + $0x20] sm:$0xff]
        %v2844 = vld [vmem:[#allocation5 + $0x28] sm:$0xff]
        %v2845 = vld [vmem:[#allocation5 + $0x30] sm:$0xff]
        %v2846 = vld [vmem:[#allocation5 + $0x38] sm:$0xff]
        %v2847 = vld [vmem:[#allocation5 + $0x40] sm:$0xff]
        %v2848 = vld [vmem:[#allocation5 + $0x48] sm:$0xff]
        %v2849 = vld [vmem:[#allocation5 + $0x50] sm:$0xff]
        %v2850 = vld [vmem:[#allocation5 + $0x58] sm:$0xff]
        %v2851 = vld [vmem:[#allocation5 + $0x60] sm:$0xff]
        %v2852 = vld [vmem:[#allocation5 + $0x68] sm:$0xff]
        %v2853 = vld [vmem:[#allocation5 + $0x70] sm:$0xff]
        %v2854 = vld [vmem:[#allocation5 + $0x78] sm:$0xff]
        %v2855 = vld [vmem:[#allocation5 + $0x80] sm:$0xff]
        %v2856 = vld [vmem:[#allocation5 + $0x88] sm:$0xff]
        %v2857 = vld [vmem:[#allocation5 + $0x90] sm:$0xff]
        %v2858 = vld [vmem:[#allocation5 + $0x98] sm:$0xff]
        %v2859 = vld [vmem:[#allocation5 + $0xa0] sm:$0xff]
        %v2860 = vld [vmem:[#allocation5 + $0xa8] sm:$0xff]
        %v2861 = vld [vmem:[#allocation5 + $0xb0] sm:$0xff]
        %v2862 = vld [vmem:[#allocation5 + $0xb8] sm:$0xff]
        %v2863 = vld [vmem:[#allocation5 + $0xc0] sm:$0xff]
        %v2864 = vld [vmem:[#allocation5 + $0xc8] sm:$0xff]
        %v2865 = vld [vmem:[#allocation5 + $0xd0] sm:$0xff]
        %v2866 = vld [vmem:[#allocation5 + $0xd8] sm:$0xff]
        %v2867 = vld [vmem:[#allocation5 + $0xe0] sm:$0xff]
        %v2868 = vld [vmem:[#allocation5 + $0xe8] sm:$0xff]
        %v2869 = vld [vmem:[#allocation5 + $0xf0] sm:$0xff]
        %v2870 = vld [vmem:[#allocation5 + $0xf8] sm:$0xff]
        %v2871 = vld [vmem:[#allocation5 + $0x100] sm:$0xff]
        %v2872 = vld [vmem:[#allocation5 + $0x108] sm:$0xff]
        %v2873 = vld [vmem:[#allocation5 + $0x110] sm:$0xff]
        %v2874 = vld [vmem:[#allocation5 + $0x118] sm:$0xff]
        %v2875 = vadd.f32 %v2839, %v2750
        %v2876 = vadd.f32 %v2840, %v2752
        %v2877 = vadd.f32 %v2841, %v2755
        %v2878 = vadd.f32 %v2842, %v2757
        %v2879 = vadd.f32 %v2843, %v2760
        %v2880 = vadd.f32 %v2844, %v2762
        %v2881 = vadd.f32 %v2845, %v2765
        %v2882 = vadd.f32 %v2846, %v2767
        %v2883 = vadd.f32 %v2847, %v2770
        %v2884 = vadd.f32 %v2848, %v2772
        %v2885 = vadd.f32 %v2849, %v2775
        %v2886 = vadd.f32 %v2850, %v2777
        %v2887 = vadd.f32 %v2851, %v2780
        %v2888 = vadd.f32 %v2852, %v2782
        %v2889 = vadd.f32 %v2853, %v2785
        %v2890 = vadd.f32 %v2854, %v2787
        %v2891 = vadd.f32 %v2855, %v2790
        %v2892 = vadd.f32 %v2856, %v2792
        %v2893 = vadd.f32 %v2857, %v2795
        %v2894 = vadd.f32 %v2858, %v2797
        %v2895 = vadd.f32 %v2859, %v2800
        %v2896 = vadd.f32 %v2860, %v2802
        %v2897 = vadd.f32 %v2861, %v2805
        %v2898 = vadd.f32 %v2862, %v2807
        %v2899 = vadd.f32 %v2863, %v2810
        %v2900 = vadd.f32 %v2864, %v2812
        %v2901 = vadd.f32 %v2865, %v2815
        %v2902 = vadd.f32 %v2866, %v2817
        %v2903 = vadd.f32 %v2867, %v2820
        %v2904 = vadd.f32 %v2868, %v2822
        %v2905 = vadd.f32 %v2869, %v2825
        %v2906 = vadd.f32 %v2870, %v2827
        %v2907 = vadd.f32 %v2871, %v2830
        %v2908 = vadd.f32 %v2872, %v2832
        %v2909 = vadd.f32 %v2873, %v2835
        %v2910 = vadd.f32 %v2874, %v2837
        %2911 = vst [vmem:[#allocation5] sm:$0xff] %v2875
        %2912 = vst [vmem:[#allocation5 + $0x8] sm:$0xff] %v2876
        %2913 = vst [vmem:[#allocation5 + $0x10] sm:$0xff] %v2877
        %2914 = vst [vmem:[#allocation5 + $0x18] sm:$0xff] %v2878
        %2915 = vst [vmem:[#allocation5 + $0x20] sm:$0xff] %v2879
        %2916 = vst [vmem:[#allocation5 + $0x28] sm:$0xff] %v2880
        %2917 = vst [vmem:[#allocation5 + $0x30] sm:$0xff] %v2881
        %2918 = vst [vmem:[#allocation5 + $0x38] sm:$0xff] %v2882
        %2919 = vst [vmem:[#allocation5 + $0x40] sm:$0xff] %v2883
        %2920 = vst [vmem:[#allocation5 + $0x48] sm:$0xff] %v2884
        %2921 = vst [vmem:[#allocation5 + $0x50] sm:$0xff] %v2885
        %2922 = vst [vmem:[#allocation5 + $0x58] sm:$0xff] %v2886
        %2923 = vst [vmem:[#allocation5 + $0x60] sm:$0xff] %v2887
        %2924 = vst [vmem:[#allocation5 + $0x68] sm:$0xff] %v2888
        %2925 = vst [vmem:[#allocation5 + $0x70] sm:$0xff] %v2889
        %2926 = vst [vmem:[#allocation5 + $0x78] sm:$0xff] %v2890
        %2927 = vst [vmem:[#allocation5 + $0x80] sm:$0xff] %v2891
        %2928 = vst [vmem:[#allocation5 + $0x88] sm:$0xff] %v2892
        %2929 = vst [vmem:[#allocation5 + $0x90] sm:$0xff] %v2893
        %2930 = vst [vmem:[#allocation5 + $0x98] sm:$0xff] %v2894
        %2931 = vst [vmem:[#allocation5 + $0xa0] sm:$0xff] %v2895
        %2932 = vst [vmem:[#allocation5 + $0xa8] sm:$0xff] %v2896
        %2933 = vst [vmem:[#allocation5 + $0xb0] sm:$0xff] %v2897
        %2934 = vst [vmem:[#allocation5 + $0xb8] sm:$0xff] %v2898
        %2935 = vst [vmem:[#allocation5 + $0xc0] sm:$0xff] %v2899
        %2936 = vst [vmem:[#allocation5 + $0xc8] sm:$0xff] %v2900
        %2937 = vst [vmem:[#allocation5 + $0xd0] sm:$0xff] %v2901
        %2938 = vst [vmem:[#allocation5 + $0xd8] sm:$0xff] %v2902
        %2939 = vst [vmem:[#allocation5 + $0xe0] sm:$0xff] %v2903
        %2940 = vst [vmem:[#allocation5 + $0xe8] sm:$0xff] %v2904
        %2941 = vst [vmem:[#allocation5 + $0xf0] sm:$0xff] %v2905
        %2942 = vst [vmem:[#allocation5 + $0xf8] sm:$0xff] %v2906
        %2943 = vst [vmem:[#allocation5 + $0x100] sm:$0xff] %v2907
        %2944 = vst [vmem:[#allocation5 + $0x108] sm:$0xff] %v2908
        %2945 = vst [vmem:[#allocation5 + $0x110] sm:$0xff] %v2909
        %2946 = vst [vmem:[#allocation5 + $0x118] sm:$0xff] %v2910
        %v2947 = vld [vmem:[%s433 + $0x26] sm:$0xff]
        %v2948 = vld [vmem:[%s433 + $0x2e] sm:$0xff]
        %v2949 = vld [vmem:[%s433 + $0x36] sm:$0xff]
        %v2950 = vld [vmem:[%s433 + $0x3e] sm:$0xff]
        %v2951 = vld [vmem:[%s433 + $0x46] sm:$0xff]
        %v2952 = vld [vmem:[%s433 + $0x4e] sm:$0xff]
        %v2953 = vld [vmem:[%s433 + $0x56] sm:$0xff]
        %v2954 = vld [vmem:[%s433 + $0x5e] sm:$0xff]
        %v2955 = vld [vmem:[%s433 + $0x66] sm:$0xff]
        %v2956 = vld [vmem:[%s433 + $0x6e] sm:$0xff]
        %v2957 = vld [vmem:[%s433 + $0x76] sm:$0xff]
        %v2958 = vld [vmem:[%s433 + $0x7e] sm:$0xff]
        %v2959 = vld [vmem:[%s433 + $0x86] sm:$0xff]
        %v2960 = vld [vmem:[%s433 + $0x8e] sm:$0xff]
        %v2961 = vld [vmem:[%s433 + $0x96] sm:$0xff]
        %v2962 = vld [vmem:[%s433 + $0x9e] sm:$0xff]
        %v2963 = vld [vmem:[%s433 + $0xa6] sm:$0xff]
        %v2964 = vld [vmem:[%s433 + $0xae] sm:$0xff]
        %v2965 = vld [vmem:[%s433 + $0xb6] sm:$0xff]
        %v2966 = vld [vmem:[%s433 + $0xbe] sm:$0xff]
        %v2967 = vld [vmem:[%s433 + $0xc6] sm:$0xff]
        %v2968 = vld [vmem:[%s433 + $0xce] sm:$0xff]
        %v2969 = vld [vmem:[%s433 + $0xd6] sm:$0xff]
        %v2970 = vld [vmem:[%s433 + $0xde] sm:$0xff]
        %v2971 = vld [vmem:[%s433 + $0xe6] sm:$0xff]
        %v2972 = vld [vmem:[%s433 + $0xee] sm:$0xff]
        %v2973 = vld [vmem:[%s433 + $0xf6] sm:$0xff]
        %v2974 = vld [vmem:[%s433 + $0xfe] sm:$0xff]
        %v2975 = vld [vmem:[%s433 + $0x106] sm:$0xff]
        %v2976 = vld [vmem:[%s433 + $0x10e] sm:$0xff]
        %v2977 = vld [vmem:[%s433 + $0x116] sm:$0xff]
        %v2978 = vld [vmem:[%s433 + $0x11e] sm:$0xff]
        %v2979 = vld [vmem:[%s433 + $0x126] sm:$0xff]
        %v2980 = vld [vmem:[%s433 + $0x12e] sm:$0xff]
        %v2981 = vld [vmem:[%s433 + $0x136] sm:$0xff]
        %v2982 = vld [vmem:[%s433 + $0x13e] sm:$0xff]
        %v2983 = vpack.c.bf16 %v2948, %v2947
        %v2984 = vpack.c.bf16 %v2950, %v2949
        %v2985 = vpack.c.bf16 %v2952, %v2951
        %v2986 = vpack.c.bf16 %v2954, %v2953
        %v2987 = vpack.c.bf16 %v2956, %v2955
        %v2988 = vpack.c.bf16 %v2958, %v2957
        %v2989 = vpack.c.bf16 %v2960, %v2959
        %v2990 = vpack.c.bf16 %v2962, %v2961
        %v2991 = vpack.c.bf16 %v2964, %v2963
        %v2992 = vpack.c.bf16 %v2966, %v2965
        %v2993 = vpack.c.bf16 %v2968, %v2967
        %v2994 = vpack.c.bf16 %v2970, %v2969
        %v2995 = vpack.c.bf16 %v2972, %v2971
        %v2996 = vpack.c.bf16 %v2974, %v2973
        %v2997 = vpack.c.bf16 %v2976, %v2975
        %v2998 = vpack.c.bf16 %v2978, %v2977
        %v2999 = vpack.c.bf16 %v2980, %v2979
        %v3000 = vpack.c.bf16 %v2982, %v2981
        %s3001 = scalar_lea.vmem %s1, 16
        %v3002 = vld [vmem:[%s3001] sm:$0x3]
        %v3004 = vsel %vm513, %v2983, 0
        %v3007 = vsel %vm513, %v2984, 0
        %v3010 = vsel %vm513, %v2985, 0
        %v3013 = vsel %vm513, %v2986, 0
        %v3016 = vsel %vm513, %v2987, 0
        %v3019 = vsel %vm513, %v2988, 0
        %v3022 = vsel %vm513, %v2989, 0
        %v3025 = vsel %vm513, %v2990, 0
        %v3028 = vsel %vm513, %v2991, 0
        %v3031 = vsel %vm513, %v2992, 0
        %v3034 = vsel %vm513, %v2993, 0
        %v3037 = vsel %vm513, %v2994, 0
        %v3040 = vsel %vm513, %v2995, 0
        %v3043 = vsel %vm513, %v2996, 0
        %v3046 = vsel %vm513, %v2997, 0
        %v3049 = vsel %vm513, %v2998, 0
        %v3052 = vsel %vm513, %v2999, 0
        %v3055 = vsel %vm513, %v3000, 0
        %v3058 = vsel %vm568, %v3002, 0
        %3060 = vmatpush.bf16.msra.mxu0 0
        %3061 = vmatpush.bf16.msra.mxu0 0
        %3062 = vmatpush.bf16.msra.mxu0 0
        %3063 = vmatpush.bf16.msra.mxu0 0
        %3064 = vmatpush.bf16.msra.mxu0 0
        %3065 = vmatpush.bf16.msra.mxu0 0
        %3066 = vmatpush.bf16.msra.mxu0 0
        %3067 = vmatpush.bf16.msra.mxu0 %v3058
        %3068 = vmatmul.bf16.gmra.mxu0 %v3004
        %v3069 = vpop.f32.mrf.mxu0
        %v3070 = vadd.f32 0.0, %v3069
        %v3071 = vpop.f32.mrf.mxu0
        %v3072 = vadd.f32 0.0, %v3071
        %3073 = vmatmul.bf16.gmra.mxu0 %v3007
        %v3074 = vpop.f32.mrf.mxu0
        %v3075 = vadd.f32 0.0, %v3074
        %v3076 = vpop.f32.mrf.mxu0
        %v3077 = vadd.f32 0.0, %v3076
        %3078 = vmatmul.bf16.gmra.mxu0 %v3010
        %v3079 = vpop.f32.mrf.mxu0
        %v3080 = vadd.f32 0.0, %v3079
        %v3081 = vpop.f32.mrf.mxu0
        %v3082 = vadd.f32 0.0, %v3081
        %3083 = vmatmul.bf16.gmra.mxu0 %v3013
        %v3084 = vpop.f32.mrf.mxu0
        %v3085 = vadd.f32 0.0, %v3084
        %v3086 = vpop.f32.mrf.mxu0
        %v3087 = vadd.f32 0.0, %v3086
        %3088 = vmatmul.bf16.gmra.mxu0 %v3016
        %v3089 = vpop.f32.mrf.mxu0
        %v3090 = vadd.f32 0.0, %v3089
        %v3091 = vpop.f32.mrf.mxu0
        %v3092 = vadd.f32 0.0, %v3091
        %3093 = vmatmul.bf16.gmra.mxu0 %v3019
        %v3094 = vpop.f32.mrf.mxu0
        %v3095 = vadd.f32 0.0, %v3094
        %v3096 = vpop.f32.mrf.mxu0
        %v3097 = vadd.f32 0.0, %v3096
        %3098 = vmatmul.bf16.gmra.mxu0 %v3022
        %v3099 = vpop.f32.mrf.mxu0
        %v3100 = vadd.f32 0.0, %v3099
        %v3101 = vpop.f32.mrf.mxu0
        %v3102 = vadd.f32 0.0, %v3101
        %3103 = vmatmul.bf16.gmra.mxu0 %v3025
        %v3104 = vpop.f32.mrf.mxu0
        %v3105 = vadd.f32 0.0, %v3104
        %v3106 = vpop.f32.mrf.mxu0
        %v3107 = vadd.f32 0.0, %v3106
        %3108 = vmatmul.bf16.gmra.mxu0 %v3028
        %v3109 = vpop.f32.mrf.mxu0
        %v3110 = vadd.f32 0.0, %v3109
        %v3111 = vpop.f32.mrf.mxu0
        %v3112 = vadd.f32 0.0, %v3111
        %3113 = vmatmul.bf16.gmra.mxu0 %v3031
        %v3114 = vpop.f32.mrf.mxu0
        %v3115 = vadd.f32 0.0, %v3114
        %v3116 = vpop.f32.mrf.mxu0
        %v3117 = vadd.f32 0.0, %v3116
        %3118 = vmatmul.bf16.gmra.mxu0 %v3034
        %v3119 = vpop.f32.mrf.mxu0
        %v3120 = vadd.f32 0.0, %v3119
        %v3121 = vpop.f32.mrf.mxu0
        %v3122 = vadd.f32 0.0, %v3121
        %3123 = vmatmul.bf16.gmra.mxu0 %v3037
        %v3124 = vpop.f32.mrf.mxu0
        %v3125 = vadd.f32 0.0, %v3124
        %v3126 = vpop.f32.mrf.mxu0
        %v3127 = vadd.f32 0.0, %v3126
        %3128 = vmatmul.bf16.gmra.mxu0 %v3040
        %v3129 = vpop.f32.mrf.mxu0
        %v3130 = vadd.f32 0.0, %v3129
        %v3131 = vpop.f32.mrf.mxu0
        %v3132 = vadd.f32 0.0, %v3131
        %3133 = vmatmul.bf16.gmra.mxu0 %v3043
        %v3134 = vpop.f32.mrf.mxu0
        %v3135 = vadd.f32 0.0, %v3134
        %v3136 = vpop.f32.mrf.mxu0
        %v3137 = vadd.f32 0.0, %v3136
        %3138 = vmatmul.bf16.gmra.mxu0 %v3046
        %v3139 = vpop.f32.mrf.mxu0
        %v3140 = vadd.f32 0.0, %v3139
        %v3141 = vpop.f32.mrf.mxu0
        %v3142 = vadd.f32 0.0, %v3141
        %3143 = vmatmul.bf16.gmra.mxu0 %v3049
        %v3144 = vpop.f32.mrf.mxu0
        %v3145 = vadd.f32 0.0, %v3144
        %v3146 = vpop.f32.mrf.mxu0
        %v3147 = vadd.f32 0.0, %v3146
        %3148 = vmatmul.bf16.gmra.mxu0 %v3052
        %v3149 = vpop.f32.mrf.mxu0
        %v3150 = vadd.f32 0.0, %v3149
        %v3151 = vpop.f32.mrf.mxu0
        %v3152 = vadd.f32 0.0, %v3151
        %3153 = vmatmul.bf16.gmra.mxu0 %v3055
        %v3154 = vpop.f32.mrf.mxu0
        %v3155 = vadd.f32 0.0, %v3154
        %v3156 = vpop.f32.mrf.mxu0
        %v3157 = vadd.f32 0.0, %v3156
        %3158 = vdwg.mxu0
        %v3159 = vld [vmem:[#allocation5] sm:$0xff]
        %v3160 = vld [vmem:[#allocation5 + $0x8] sm:$0xff]
        %v3161 = vld [vmem:[#allocation5 + $0x10] sm:$0xff]
        %v3162 = vld [vmem:[#allocation5 + $0x18] sm:$0xff]
        %v3163 = vld [vmem:[#allocation5 + $0x20] sm:$0xff]
        %v3164 = vld [vmem:[#allocation5 + $0x28] sm:$0xff]
        %v3165 = vld [vmem:[#allocation5 + $0x30] sm:$0xff]
        %v3166 = vld [vmem:[#allocation5 + $0x38] sm:$0xff]
        %v3167 = vld [vmem:[#allocation5 + $0x40] sm:$0xff]
        %v3168 = vld [vmem:[#allocation5 + $0x48] sm:$0xff]
        %v3169 = vld [vmem:[#allocation5 + $0x50] sm:$0xff]
        %v3170 = vld [vmem:[#allocation5 + $0x58] sm:$0xff]
        %v3171 = vld [vmem:[#allocation5 + $0x60] sm:$0xff]
        %v3172 = vld [vmem:[#allocation5 + $0x68] sm:$0xff]
        %v3173 = vld [vmem:[#allocation5 + $0x70] sm:$0xff]
        %v3174 = vld [vmem:[#allocation5 + $0x78] sm:$0xff]
        %v3175 = vld [vmem:[#allocation5 + $0x80] sm:$0xff]
        %v3176 = vld [vmem:[#allocation5 + $0x88] sm:$0xff]
        %v3177 = vld [vmem:[#allocation5 + $0x90] sm:$0xff]
        %v3178 = vld [vmem:[#allocation5 + $0x98] sm:$0xff]
        %v3179 = vld [vmem:[#allocation5 + $0xa0] sm:$0xff]
        %v3180 = vld [vmem:[#allocation5 + $0xa8] sm:$0xff]
        %v3181 = vld [vmem:[#allocation5 + $0xb0] sm:$0xff]
        %v3182 = vld [vmem:[#allocation5 + $0xb8] sm:$0xff]
        %v3183 = vld [vmem:[#allocation5 + $0xc0] sm:$0xff]
        %v3184 = vld [vmem:[#allocation5 + $0xc8] sm:$0xff]
        %v3185 = vld [vmem:[#allocation5 + $0xd0] sm:$0xff]
        %v3186 = vld [vmem:[#allocation5 + $0xd8] sm:$0xff]
        %v3187 = vld [vmem:[#allocation5 + $0xe0] sm:$0xff]
        %v3188 = vld [vmem:[#allocation5 + $0xe8] sm:$0xff]
        %v3189 = vld [vmem:[#allocation5 + $0xf0] sm:$0xff]
        %v3190 = vld [vmem:[#allocation5 + $0xf8] sm:$0xff]
        %v3191 = vld [vmem:[#allocation5 + $0x100] sm:$0xff]
        %v3192 = vld [vmem:[#allocation5 + $0x108] sm:$0xff]
        %v3193 = vld [vmem:[#allocation5 + $0x110] sm:$0xff]
        %v3194 = vld [vmem:[#allocation5 + $0x118] sm:$0xff]
        %v3195 = vadd.f32 %v3159, %v3070
        %v3196 = vadd.f32 %v3160, %v3072
        %v3197 = vadd.f32 %v3161, %v3075
        %v3198 = vadd.f32 %v3162, %v3077
        %v3199 = vadd.f32 %v3163, %v3080
        %v3200 = vadd.f32 %v3164, %v3082
        %v3201 = vadd.f32 %v3165, %v3085
        %v3202 = vadd.f32 %v3166, %v3087
        %v3203 = vadd.f32 %v3167, %v3090
        %v3204 = vadd.f32 %v3168, %v3092
        %v3205 = vadd.f32 %v3169, %v3095
        %v3206 = vadd.f32 %v3170, %v3097
        %v3207 = vadd.f32 %v3171, %v3100
        %v3208 = vadd.f32 %v3172, %v3102
        %v3209 = vadd.f32 %v3173, %v3105
        %v3210 = vadd.f32 %v3174, %v3107
        %v3211 = vadd.f32 %v3175, %v3110
        %v3212 = vadd.f32 %v3176, %v3112
        %v3213 = vadd.f32 %v3177, %v3115
        %v3214 = vadd.f32 %v3178, %v3117
        %v3215 = vadd.f32 %v3179, %v3120
        %v3216 = vadd.f32 %v3180, %v3122
        %v3217 = vadd.f32 %v3181, %v3125
        %v3218 = vadd.f32 %v3182, %v3127
        %v3219 = vadd.f32 %v3183, %v3130
        %v3220 = vadd.f32 %v3184, %v3132
        %v3221 = vadd.f32 %v3185, %v3135
        %v3222 = vadd.f32 %v3186, %v3137
        %v3223 = vadd.f32 %v3187, %v3140
        %v3224 = vadd.f32 %v3188, %v3142
        %v3225 = vadd.f32 %v3189, %v3145
        %v3226 = vadd.f32 %v3190, %v3147
        %v3227 = vadd.f32 %v3191, %v3150
        %v3228 = vadd.f32 %v3192, %v3152
        %v3229 = vadd.f32 %v3193, %v3155
        %v3230 = vadd.f32 %v3194, %v3157
        %3231 = vst [vmem:[#allocation5] sm:$0xff] %v3195
        %3232 = vst [vmem:[#allocation5 + $0x8] sm:$0xff] %v3196
        %3233 = vst [vmem:[#allocation5 + $0x10] sm:$0xff] %v3197
        %3234 = vst [vmem:[#allocation5 + $0x18] sm:$0xff] %v3198
        %3235 = vst [vmem:[#allocation5 + $0x20] sm:$0xff] %v3199
        %3236 = vst [vmem:[#allocation5 + $0x28] sm:$0xff] %v3200
        %3237 = vst [vmem:[#allocation5 + $0x30] sm:$0xff] %v3201
        %3238 = vst [vmem:[#allocation5 + $0x38] sm:$0xff] %v3202
        %3239 = vst [vmem:[#allocation5 + $0x40] sm:$0xff] %v3203
        %3240 = vst [vmem:[#allocation5 + $0x48] sm:$0xff] %v3204
        %3241 = vst [vmem:[#allocation5 + $0x50] sm:$0xff] %v3205
        %3242 = vst [vmem:[#allocation5 + $0x58] sm:$0xff] %v3206
        %3243 = vst [vmem:[#allocation5 + $0x60] sm:$0xff] %v3207
        %3244 = vst [vmem:[#allocation5 + $0x68] sm:$0xff] %v3208
        %3245 = vst [vmem:[#allocation5 + $0x70] sm:$0xff] %v3209
        %3246 = vst [vmem:[#allocation5 + $0x78] sm:$0xff] %v3210
        %3247 = vst [vmem:[#allocation5 + $0x80] sm:$0xff] %v3211
        %3248 = vst [vmem:[#allocation5 + $0x88] sm:$0xff] %v3212
        %3249 = vst [vmem:[#allocation5 + $0x90] sm:$0xff] %v3213
        %3250 = vst [vmem:[#allocation5 + $0x98] sm:$0xff] %v3214
        %3251 = vst [vmem:[#allocation5 + $0xa0] sm:$0xff] %v3215
        %3252 = vst [vmem:[#allocation5 + $0xa8] sm:$0xff] %v3216
        %3253 = vst [vmem:[#allocation5 + $0xb0] sm:$0xff] %v3217
        %3254 = vst [vmem:[#allocation5 + $0xb8] sm:$0xff] %v3218
        %3255 = vst [vmem:[#allocation5 + $0xc0] sm:$0xff] %v3219
        %3256 = vst [vmem:[#allocation5 + $0xc8] sm:$0xff] %v3220
        %3257 = vst [vmem:[#allocation5 + $0xd0] sm:$0xff] %v3221
        %3258 = vst [vmem:[#allocation5 + $0xd8] sm:$0xff] %v3222
        %3259 = vst [vmem:[#allocation5 + $0xe0] sm:$0xff] %v3223
        %3260 = vst [vmem:[#allocation5 + $0xe8] sm:$0xff] %v3224
        %3261 = vst [vmem:[#allocation5 + $0xf0] sm:$0xff] %v3225
        %3262 = vst [vmem:[#allocation5 + $0xf8] sm:$0xff] %v3226
        %3263 = vst [vmem:[#allocation5 + $0x100] sm:$0xff] %v3227
        %3264 = vst [vmem:[#allocation5 + $0x108] sm:$0xff] %v3228
        %3265 = vst [vmem:[#allocation5 + $0x110] sm:$0xff] %v3229
        %3266 = vst [vmem:[#allocation5 + $0x118] sm:$0xff] %v3230
        %v3267 = vld [vmem:[#allocation5] sm:$0xff]
        %v3268 = vld [vmem:[#allocation5 + $0x8] sm:$0xff]
        %v3269 = vld [vmem:[#allocation5 + $0x10] sm:$0xff]
        %v3270 = vld [vmem:[#allocation5 + $0x18] sm:$0xff]
        %v3271 = vld [vmem:[#allocation5 + $0x20] sm:$0xff]
        %v3272 = vld [vmem:[#allocation5 + $0x28] sm:$0xff]
        %v3273 = vld [vmem:[#allocation5 + $0x30] sm:$0xff]
        %v3274 = vld [vmem:[#allocation5 + $0x38] sm:$0xff]
        %v3275 = vld [vmem:[#allocation5 + $0x40] sm:$0xff]
        %v3276 = vld [vmem:[#allocation5 + $0x48] sm:$0xff]
        %v3277 = vld [vmem:[#allocation5 + $0x50] sm:$0xff]
        %v3278 = vld [vmem:[#allocation5 + $0x58] sm:$0xff]
        %v3279 = vld [vmem:[#allocation5 + $0x60] sm:$0xff]
        %v3280 = vld [vmem:[#allocation5 + $0x68] sm:$0xff]
        %v3281 = vld [vmem:[#allocation5 + $0x70] sm:$0xff]
        %v3282 = vld [vmem:[#allocation5 + $0x78] sm:$0xff]
        %v3283 = vld [vmem:[#allocation5 + $0x80] sm:$0xff]
        %v3284 = vld [vmem:[#allocation5 + $0x88] sm:$0xff]
        %v3285 = vld [vmem:[#allocation5 + $0x90] sm:$0xff]
        %v3286 = vld [vmem:[#allocation5 + $0x98] sm:$0xff]
        %v3287 = vld [vmem:[#allocation5 + $0xa0] sm:$0xff]
        %v3288 = vld [vmem:[#allocation5 + $0xa8] sm:$0xff]
        %v3289 = vld [vmem:[#allocation5 + $0xb0] sm:$0xff]
        %v3290 = vld [vmem:[#allocation5 + $0xb8] sm:$0xff]
        %v3291 = vld [vmem:[#allocation5 + $0xc0] sm:$0xff]
        %v3292 = vld [vmem:[#allocation5 + $0xc8] sm:$0xff]
        %v3293 = vld [vmem:[#allocation5 + $0xd0] sm:$0xff]
        %v3294 = vld [vmem:[#allocation5 + $0xd8] sm:$0xff]
        %v3295 = vld [vmem:[#allocation5 + $0xe0] sm:$0xff]
        %v3296 = vld [vmem:[#allocation5 + $0xe8] sm:$0xff]
        %v3297 = vld [vmem:[#allocation5 + $0xf0] sm:$0xff]
        %v3298 = vld [vmem:[#allocation5 + $0xf8] sm:$0xff]
        %v3299 = vld [vmem:[#allocation5 + $0x100] sm:$0xff]
        %v3300 = vld [vmem:[#allocation5 + $0x108] sm:$0xff]
        %v3301 = vld [vmem:[#allocation5 + $0x110] sm:$0xff]
        %v3302 = vld [vmem:[#allocation5 + $0x118] sm:$0xff]
        %v3303 = vld [vmem:[%s2] sm:$0x1]
        %v3305 = vperm.slane %v3303, 0
        %v3307 = vadd.f32 %v3267, %v3305
        %v3308 = vadd.f32 %v3268, %v3305
        %v3309 = vadd.f32 %v3269, %v3305
        %v3310 = vadd.f32 %v3270, %v3305
        %v3311 = vadd.f32 %v3271, %v3305
        %v3312 = vadd.f32 %v3272, %v3305
        %v3313 = vadd.f32 %v3273, %v3305
        %v3314 = vadd.f32 %v3274, %v3305
        %v3315 = vadd.f32 %v3275, %v3305
        %v3316 = vadd.f32 %v3276, %v3305
        %v3317 = vadd.f32 %v3277, %v3305
        %v3318 = vadd.f32 %v3278, %v3305
        %v3319 = vadd.f32 %v3279, %v3305
        %v3320 = vadd.f32 %v3280, %v3305
        %v3321 = vadd.f32 %v3281, %v3305
        %v3322 = vadd.f32 %v3282, %v3305
        %v3323 = vadd.f32 %v3283, %v3305
        %v3324 = vadd.f32 %v3284, %v3305
        %v3325 = vadd.f32 %v3285, %v3305
        %v3326 = vadd.f32 %v3286, %v3305
        %v3327 = vadd.f32 %v3287, %v3305
        %v3328 = vadd.f32 %v3288, %v3305
        %v3329 = vadd.f32 %v3289, %v3305
        %v3330 = vadd.f32 %v3290, %v3305
        %v3331 = vadd.f32 %v3291, %v3305
        %v3332 = vadd.f32 %v3292, %v3305
        %v3333 = vadd.f32 %v3293, %v3305
        %v3334 = vadd.f32 %v3294, %v3305
        %v3335 = vadd.f32 %v3295, %v3305
        %v3336 = vadd.f32 %v3296, %v3305
        %v3337 = vadd.f32 %v3297, %v3305
        %v3338 = vadd.f32 %v3298, %v3305
        %v3339 = vadd.f32 %v3299, %v3305
        %v3340 = vadd.f32 %v3300, %v3305
        %v3341 = vadd.f32 %v3301, %v3305
        %v3342 = vadd.f32 %v3302, %v3305
        %v3343 = vmax.f32 %v3307, 0.0
        %v3344 = vmax.f32 %v3308, 0.0
        %v3345 = vmax.f32 %v3309, 0.0
        %v3346 = vmax.f32 %v3310, 0.0
        %v3347 = vmax.f32 %v3311, 0.0
        %v3348 = vmax.f32 %v3312, 0.0
        %v3349 = vmax.f32 %v3313, 0.0
        %v3350 = vmax.f32 %v3314, 0.0
        %v3351 = vmax.f32 %v3315, 0.0
        %v3352 = vmax.f32 %v3316, 0.0
        %v3353 = vmax.f32 %v3317, 0.0
        %v3354 = vmax.f32 %v3318, 0.0
        %v3355 = vmax.f32 %v3319, 0.0
        %v3356 = vmax.f32 %v3320, 0.0
        %v3357 = vmax.f32 %v3321, 0.0
        %v3358 = vmax.f32 %v3322, 0.0
        %v3359 = vmax.f32 %v3323, 0.0
        %v3360 = vmax.f32 %v3324, 0.0
        %v3361 = vmax.f32 %v3325, 0.0
        %v3362 = vmax.f32 %v3326, 0.0
        %v3363 = vmax.f32 %v3327, 0.0
        %v3364 = vmax.f32 %v3328, 0.0
        %v3365 = vmax.f32 %v3329, 0.0
        %v3366 = vmax.f32 %v3330, 0.0
        %v3367 = vmax.f32 %v3331, 0.0
        %v3368 = vmax.f32 %v3332, 0.0
        %v3369 = vmax.f32 %v3333, 0.0
        %v3370 = vmax.f32 %v3334, 0.0
        %v3371 = vmax.f32 %v3335, 0.0
        %v3372 = vmax.f32 %v3336, 0.0
        %v3373 = vmax.f32 %v3337, 0.0
        %v3374 = vmax.f32 %v3338, 0.0
        %v3375 = vmax.f32 %v3339, 0.0
        %v3376 = vmax.f32 %v3340, 0.0
        %v3377 = vmax.f32 %v3341, 0.0
        %v3378 = vmax.f32 %v3342, 0.0
        %3379 = vst [vmem:[#allocation5] sm:$0xff] %v3343
        %3380 = vst [vmem:[#allocation5 + $0x8] sm:$0xff] %v3344
        %3381 = vst [vmem:[#allocation5 + $0x10] sm:$0xff] %v3345
        %3382 = vst [vmem:[#allocation5 + $0x18] sm:$0xff] %v3346
        %3383 = vst [vmem:[#allocation5 + $0x20] sm:$0xff] %v3347
        %3384 = vst [vmem:[#allocation5 + $0x28] sm:$0xff] %v3348
        %3385 = vst [vmem:[#allocation5 + $0x30] sm:$0xff] %v3349
        %3386 = vst [vmem:[#allocation5 + $0x38] sm:$0xff] %v3350
        %3387 = vst [vmem:[#allocation5 + $0x40] sm:$0xff] %v3351
        %3388 = vst [vmem:[#allocation5 + $0x48] sm:$0xff] %v3352
        %3389 = vst [vmem:[#allocation5 + $0x50] sm:$0xff] %v3353
        %3390 = vst [vmem:[#allocation5 + $0x58] sm:$0xff] %v3354
        %3391 = vst [vmem:[#allocation5 + $0x60] sm:$0xff] %v3355
        %3392 = vst [vmem:[#allocation5 + $0x68] sm:$0xff] %v3356
        %3393 = vst [vmem:[#allocation5 + $0x70] sm:$0xff] %v3357
        %3394 = vst [vmem:[#allocation5 + $0x78] sm:$0xff] %v3358
        %3395 = vst [vmem:[#allocation5 + $0x80] sm:$0xff] %v3359
        %3396 = vst [vmem:[#allocation5 + $0x88] sm:$0xff] %v3360
        %3397 = vst [vmem:[#allocation5 + $0x90] sm:$0xff] %v3361
        %3398 = vst [vmem:[#allocation5 + $0x98] sm:$0xff] %v3362
        %3399 = vst [vmem:[#allocation5 + $0xa0] sm:$0xff] %v3363
        %3400 = vst [vmem:[#allocation5 + $0xa8] sm:$0xff] %v3364
        %3401 = vst [vmem:[#allocation5 + $0xb0] sm:$0xff] %v3365
        %3402 = vst [vmem:[#allocation5 + $0xb8] sm:$0xff] %v3366
        %3403 = vst [vmem:[#allocation5 + $0xc0] sm:$0xff] %v3367
        %3404 = vst [vmem:[#allocation5 + $0xc8] sm:$0xff] %v3368
        %3405 = vst [vmem:[#allocation5 + $0xd0] sm:$0xff] %v3369
        %3406 = vst [vmem:[#allocation5 + $0xd8] sm:$0xff] %v3370
        %3407 = vst [vmem:[#allocation5 + $0xe0] sm:$0xff] %v3371
        %3408 = vst [vmem:[#allocation5 + $0xe8] sm:$0xff] %v3372
        %3409 = vst [vmem:[#allocation5 + $0xf0] sm:$0xff] %v3373
        %3410 = vst [vmem:[#allocation5 + $0xf8] sm:$0xff] %v3374
        %3411 = vst [vmem:[#allocation5 + $0x100] sm:$0xff] %v3375
        %3412 = vst [vmem:[#allocation5 + $0x108] sm:$0xff] %v3376
        %3413 = vst [vmem:[#allocation5 + $0x110] sm:$0xff] %v3377
        %3414 = vst [vmem:[#allocation5 + $0x118] sm:$0xff] %v3378
        %v3415 = vld [vmem:[#allocation5] ss:$2 sm:$0xff]
        %s3416 = scalar_lea.vmem [#allocation5], 1
        %v3417 = vld [vmem:[%s3416] ss:$2 sm:$0xff]
        %s3418 = scalar_lea.vmem [#allocation5], 18
        %v3419 = vld [vmem:[%s3418] ss:$2 sm:$0xff]
        %s3420 = scalar_lea.vmem [#allocation5], 19
        %v3421 = vld [vmem:[%s3420] ss:$2 sm:$0xff]
        %v3422 = vmax.f32 %v3415, %v3417
        %v3423 = vmax.f32 %v3419, %v3421
        %v3424 = vmax.f32 %v3422, %v3423
        %3425 = vst [vmem:[#allocation2 + $0xb] sm:$0xff] %v3424
        %s3426 = scalar_lea.vmem [#allocation5], 36
        %v3427 = vld [vmem:[%s3426] ss:$2 sm:$0xff]
        %s3428 = scalar_lea.vmem [#allocation5], 37
        %v3429 = vld [vmem:[%s3428] ss:$2 sm:$0xff]
        %s3430 = scalar_lea.vmem [#allocation5], 54
        %v3431 = vld [vmem:[%s3430] ss:$2 sm:$0xff]
        %s3432 = scalar_lea.vmem [#allocation5], 55
        %v3433 = vld [vmem:[%s3432] ss:$2 sm:$0xff]
        %v3434 = vmax.f32 %v3427, %v3429
        %v3435 = vmax.f32 %v3431, %v3433
        %v3436 = vmax.f32 %v3434, %v3435
        %3437 = vst [vmem:[#allocation2 + $0x15] sm:$0xff] %v3436
        %s3438 = scalar_lea.vmem [#allocation5], 72
        %v3439 = vld [vmem:[%s3438] ss:$2 sm:$0xff]
        %s3440 = scalar_lea.vmem [#allocation5], 73
        %v3441 = vld [vmem:[%s3440] ss:$2 sm:$0xff]
        %s3442 = scalar_lea.vmem [#allocation5], 90
        %v3443 = vld [vmem:[%s3442] ss:$2 sm:$0xff]
        %s3444 = scalar_lea.vmem [#allocation5], 91
        %v3445 = vld [vmem:[%s3444] ss:$2 sm:$0xff]
        %v3446 = vmax.f32 %v3439, %v3441
        %v3447 = vmax.f32 %v3443, %v3445
        %v3448 = vmax.f32 %v3446, %v3447
        %3449 = vst [vmem:[#allocation2 + $0x1f] sm:$0xff] %v3448
        %s3450 = scalar_lea.vmem [#allocation5], 108
        %v3451 = vld [vmem:[%s3450] ss:$2 sm:$0xff]
        %s3452 = scalar_lea.vmem [#allocation5], 109
        %v3453 = vld [vmem:[%s3452] ss:$2 sm:$0xff]
        %s3454 = scalar_lea.vmem [#allocation5], 126
        %v3455 = vld [vmem:[%s3454] ss:$2 sm:$0xff]
        %s3456 = scalar_lea.vmem [#allocation5], 127
        %v3457 = vld [vmem:[%s3456] ss:$2 sm:$0xff]
        %v3458 = vmax.f32 %v3451, %v3453
        %v3459 = vmax.f32 %v3455, %v3457
        %v3460 = vmax.f32 %v3458, %v3459
        %3461 = vst [vmem:[#allocation2 + $0x29] sm:$0xff] %v3460
        %s3462 = scalar_lea.vmem [#allocation5], 144
        %v3463 = vld [vmem:[%s3462] ss:$2 sm:$0xff]
        %s3464 = scalar_lea.vmem [#allocation5], 145
        %v3465 = vld [vmem:[%s3464] ss:$2 sm:$0xff]
        %s3466 = scalar_lea.vmem [#allocation5], 162
        %v3467 = vld [vmem:[%s3466] ss:$2 sm:$0xff]
        %s3468 = scalar_lea.vmem [#allocation5], 163
        %v3469 = vld [vmem:[%s3468] ss:$2 sm:$0xff]
        %v3470 = vmax.f32 %v3463, %v3465
        %v3471 = vmax.f32 %v3467, %v3469
        %v3472 = vmax.f32 %v3470, %v3471
        %3473 = vst [vmem:[#allocation2 + $0x33] sm:$0xff] %v3472
        %s3474 = scalar_lea.vmem [#allocation5], 180
        %v3475 = vld [vmem:[%s3474] ss:$2 sm:$0xff]
        %s3476 = scalar_lea.vmem [#allocation5], 181
        %v3477 = vld [vmem:[%s3476] ss:$2 sm:$0xff]
        %s3478 = scalar_lea.vmem [#allocation5], 198
        %v3479 = vld [vmem:[%s3478] ss:$2 sm:$0xff]
        %s3480 = scalar_lea.vmem [#allocation5], 199
        %v3481 = vld [vmem:[%s3480] ss:$2 sm:$0xff]
        %v3482 = vmax.f32 %v3475, %v3477
        %v3483 = vmax.f32 %v3479, %v3481
        %v3484 = vmax.f32 %v3482, %v3483
        %3485 = vst [vmem:[#allocation2 + $0x3d] sm:$0xff] %v3484
        %s3486 = scalar_lea.vmem [#allocation5], 216
        %v3487 = vld [vmem:[%s3486] ss:$2 sm:$0xff]
        %s3488 = scalar_lea.vmem [#allocation5], 217
        %v3489 = vld [vmem:[%s3488] ss:$2 sm:$0xff]
        %s3490 = scalar_lea.vmem [#allocation5], 234
        %v3491 = vld [vmem:[%s3490] ss:$2 sm:$0xff]
        %s3492 = scalar_lea.vmem [#allocation5], 235
        %v3493 = vld [vmem:[%s3492] ss:$2 sm:$0xff]
        %v3494 = vmax.f32 %v3487, %v3489
        %v3495 = vmax.f32 %v3491, %v3493
        %v3496 = vmax.f32 %v3494, %v3495
        %3497 = vst [vmem:[#allocation2 + $0x47] sm:$0xff] %v3496
        %s3498 = scalar_lea.vmem [#allocation5], 252
        %v3499 = vld [vmem:[%s3498] ss:$2 sm:$0xff]
        %s3500 = scalar_lea.vmem [#allocation5], 253
        %v3501 = vld [vmem:[%s3500] ss:$2 sm:$0xff]
        %s3502 = scalar_lea.vmem [#allocation5], 270
        %v3503 = vld [vmem:[%s3502] ss:$2 sm:$0xff]
        %s3504 = scalar_lea.vmem [#allocation5], 271
        %v3505 = vld [vmem:[%s3504] ss:$2 sm:$0xff]
        %v3506 = vmax.f32 %v3499, %v3501
        %v3507 = vmax.f32 %v3503, %v3505
        %v3508 = vmax.f32 %v3506, %v3507
        %3509 = vst [vmem:[#allocation2 + $0x51] sm:$0xff] %v3508
        %v3510 = vld [vmem:[#allocation2] sm:$0xff]
        %v3511 = vld [vmem:[#allocation2 + $0x8] sm:$0xff]
        %v3512 = vld [vmem:[#allocation2 + $0x10] sm:$0xff]
        %v3513 = vld [vmem:[#allocation2 + $0x18] sm:$0xff]
        %v3514 = vld [vmem:[#allocation2 + $0x20] sm:$0xff]
        %v3515 = vld [vmem:[#allocation2 + $0x28] sm:$0xff]
        %v3516 = vld [vmem:[#allocation2 + $0x30] sm:$0xff]
        %v3517 = vld [vmem:[#allocation2 + $0x38] sm:$0xff]
        %v3518 = vld [vmem:[#allocation2 + $0x40] sm:$0xff]
        %v3519 = vld [vmem:[#allocation2 + $0x48] sm:$0xff]
        %v3520 = vpack.c.bf16 %v3511, %v3510
        %v3521 = vpack.c.bf16 %v3513, %v3512
        %v3522 = vpack.c.bf16 %v3515, %v3514
        %v3523 = vpack.c.bf16 %v3517, %v3516
        %v3524 = vpack.c.bf16 %v3519, %v3518
        %v3525 = vld [vmem:[#allocation9] sm:$0xf]
        %v3526 = vld [vmem:[#allocation9 + $0x4] sm:$0xf]
        %v3527 = vld [vmem:[#allocation9 + $0x8] sm:$0xf]
        %v3528 = vld [vmem:[#allocation9 + $0xc] sm:$0xf]
        %v3529 = vld [vmem:[#allocation9 + $0x10] sm:$0xf]
        %v3530 = vld [vmem:[#allocation9 + $0x14] sm:$0xf]
        %v3531 = vld [vmem:[#allocation9 + $0x18] sm:$0xf]
        %v3532 = vld [vmem:[#allocation9 + $0x1c] sm:$0xf]
        %v3533 = vld [vmem:[#allocation9 + $0x20] sm:$0xf]
        %v3534 = vld [vmem:[#allocation9 + $0x24] sm:$0xf]
        %v3535 = vld [vmem:[#allocation9 + $0x28] sm:$0xf]
        %v3536 = vld [vmem:[#allocation9 + $0x2c] sm:$0xf]
        %v3537 = vld [vmem:[#allocation9 + $0x30] sm:$0xf]
        %v3538 = vld [vmem:[#allocation9 + $0x34] sm:$0xf]
        %v3539 = vld [vmem:[#allocation9 + $0x38] sm:$0xf]
        %v3540 = vld [vmem:[#allocation9 + $0x3c] sm:$0xf]
        %v3557 = vunpack.c.l.b16 %v3525
        %v3558 = vunpack.c.l.b16 %v3526
        %v3559 = vunpack.c.l.b16 %v3527
        %v3560 = vunpack.c.l.b16 %v3528
        %v3561 = vunpack.c.l.b16 %v3529
        %v3562 = vunpack.c.l.b16 %v3530
        %v3563 = vunpack.c.l.b16 %v3531
        %v3564 = vunpack.c.l.b16 %v3532
        %v3565 = vunpack.c.l.b16 %v3533
        %v3566 = vunpack.c.l.b16 %v3534
        %v3567 = vunpack.c.l.b16 %v3535
        %v3568 = vunpack.c.l.b16 %v3536
        %v3569 = vunpack.c.l.b16 %v3537
        %v3570 = vunpack.c.l.b16 %v3538
        %v3571 = vunpack.c.l.b16 %v3539
        %v3572 = vunpack.c.l.b16 %v3540
        %v3573 = vpack.c.b16 %v3558, %v3557
        %v3574 = vpack.c.b16 %v3560, %v3559
        %v3575 = vpack.c.b16 %v3562, %v3561
        %v3576 = vpack.c.b16 %v3564, %v3563
        %v3577 = vpack.c.b16 %v3566, %v3565
        %v3578 = vpack.c.b16 %v3568, %v3567
        %v3579 = vpack.c.b16 %v3570, %v3569
        %v3580 = vpack.c.b16 %v3572, %v3571
        %3589 = vmatpush.bf16.msra.mxu0 %v3580
        %3590 = vmatpush.bf16.msra.mxu0 %v3579
        %3591 = vmatpush.bf16.msra.mxu0 %v3578
        %3592 = vmatpush.bf16.msra.mxu0 %v3577
        %3593 = vmatpush.bf16.msra.mxu0 %v3576
        %3594 = vmatpush.bf16.msra.mxu0 %v3575
        %3595 = vmatpush.bf16.msra.mxu0 %v3574
        %3596 = vmatpush.bf16.msra.mxu0 %v3573
        %3597 = vmatmul.bf16.gmra.mxu0 %v3520
        %v3598 = vpop.f32.mrf.mxu0
        %v3599 = vadd.f32 0.0, %v3598
        %v3600 = vpop.f32.mrf.mxu0
        %v3601 = vadd.f32 0.0, %v3600
        %3602 = vmatmul.bf16.gmra.mxu0 %v3521
        %v3603 = vpop.f32.mrf.mxu0
        %v3604 = vadd.f32 0.0, %v3603
        %v3605 = vpop.f32.mrf.mxu0
        %v3606 = vadd.f32 0.0, %v3605
        %3607 = vmatmul.bf16.gmra.mxu0 %v3522
        %v3608 = vpop.f32.mrf.mxu0
        %v3609 = vadd.f32 0.0, %v3608
        %v3610 = vpop.f32.mrf.mxu0
        %v3611 = vadd.f32 0.0, %v3610
        %3612 = vmatmul.bf16.gmra.mxu0 %v3523
        %v3613 = vpop.f32.mrf.mxu0
        %v3614 = vadd.f32 0.0, %v3613
        %v3615 = vpop.f32.mrf.mxu0
        %v3616 = vadd.f32 0.0, %v3615
        %3617 = vmatmul.bf16.gmra.mxu0 %v3524
        %v3618 = vpop.f32.mrf.mxu0
        %v3619 = vadd.f32 0.0, %v3618
        %v3620 = vpop.f32.mrf.mxu0
        %v3621 = vadd.f32 0.0, %v3620
        %3622 = vdwg.mxu0
        %3623 = vst [vmem:[#allocation6] sm:$0xff] %v3599
        %3624 = vst [vmem:[#allocation6 + $0x8] sm:$0xff] %v3601
        %3625 = vst [vmem:[#allocation6 + $0x10] sm:$0xff] %v3604
        %3626 = vst [vmem:[#allocation6 + $0x18] sm:$0xff] %v3606
        %3627 = vst [vmem:[#allocation6 + $0x20] sm:$0xff] %v3609
        %3628 = vst [vmem:[#allocation6 + $0x28] sm:$0xff] %v3611
        %3629 = vst [vmem:[#allocation6 + $0x30] sm:$0xff] %v3614
        %3630 = vst [vmem:[#allocation6 + $0x38] sm:$0xff] %v3616
        %3631 = vst [vmem:[#allocation6 + $0x40] sm:$0xff] %v3619
        %3632 = vst [vmem:[#allocation6 + $0x48] sm:$0xff] %v3621
        %v3633 = vld [vmem:[#allocation2 + $0x1] sm:$0xff]
        %v3634 = vld [vmem:[#allocation2 + $0x9] sm:$0xff]
        %v3635 = vld [vmem:[#allocation2 + $0x11] sm:$0xff]
        %v3636 = vld [vmem:[#allocation2 + $0x19] sm:$0xff]
        %v3637 = vld [vmem:[#allocation2 + $0x21] sm:$0xff]
        %v3638 = vld [vmem:[#allocation2 + $0x29] sm:$0xff]
        %v3639 = vld [vmem:[#allocation2 + $0x31] sm:$0xff]
        %v3640 = vld [vmem:[#allocation2 + $0x39] sm:$0xff]
        %v3641 = vld [vmem:[#allocation2 + $0x41] sm:$0xff]
        %v3642 = vld [vmem:[#allocation2 + $0x49] sm:$0xff]
        %v3643 = vpack.c.bf16 %v3634, %v3633
        %v3644 = vpack.c.bf16 %v3636, %v3635
        %v3645 = vpack.c.bf16 %v3638, %v3637
        %v3646 = vpack.c.bf16 %v3640, %v3639
        %v3647 = vpack.c.bf16 %v3642, %v3641
        %s3648 = scalar_lea.vmem [#allocation9], 64
        %v3649 = vld [vmem:[%s3648] sm:$0xf]
        %v3650 = vld [vmem:[%s3648 + $0x4] sm:$0xf]
        %v3651 = vld [vmem:[%s3648 + $0x8] sm:$0xf]
        %v3652 = vld [vmem:[%s3648 + $0xc] sm:$0xf]
        %v3653 = vld [vmem:[%s3648 + $0x10] sm:$0xf]
        %v3654 = vld [vmem:[%s3648 + $0x14] sm:$0xf]
        %v3655 = vld [vmem:[%s3648 + $0x18] sm:$0xf]
        %v3656 = vld [vmem:[%s3648 + $0x1c] sm:$0xf]
        %v3657 = vld [vmem:[%s3648 + $0x20] sm:$0xf]
        %v3658 = vld [vmem:[%s3648 + $0x24] sm:$0xf]
        %v3659 = vld [vmem:[%s3648 + $0x28] sm:$0xf]
        %v3660 = vld [vmem:[%s3648 + $0x2c] sm:$0xf]
        %v3661 = vld [vmem:[%s3648 + $0x30] sm:$0xf]
        %v3662 = vld [vmem:[%s3648 + $0x34] sm:$0xf]
        %v3663 = vld [vmem:[%s3648 + $0x38] sm:$0xf]
        %v3664 = vld [vmem:[%s3648 + $0x3c] sm:$0xf]
        %v3681 = vunpack.c.l.b16 %v3649
        %v3682 = vunpack.c.l.b16 %v3650
        %v3683 = vunpack.c.l.b16 %v3651
        %v3684 = vunpack.c.l.b16 %v3652
        %v3685 = vunpack.c.l.b16 %v3653
        %v3686 = vunpack.c.l.b16 %v3654
        %v3687 = vunpack.c.l.b16 %v3655
        %v3688 = vunpack.c.l.b16 %v3656
        %v3689 = vunpack.c.l.b16 %v3657
        %v3690 = vunpack.c.l.b16 %v3658
        %v3691 = vunpack.c.l.b16 %v3659
        %v3692 = vunpack.c.l.b16 %v3660
        %v3693 = vunpack.c.l.b16 %v3661
        %v3694 = vunpack.c.l.b16 %v3662
        %v3695 = vunpack.c.l.b16 %v3663
        %v3696 = vunpack.c.l.b16 %v3664
        %v3697 = vpack.c.b16 %v3682, %v3681
        %v3698 = vpack.c.b16 %v3684, %v3683
        %v3699 = vpack.c.b16 %v3686, %v3685
        %v3700 = vpack.c.b16 %v3688, %v3687
        %v3701 = vpack.c.b16 %v3690, %v3689
        %v3702 = vpack.c.b16 %v3692, %v3691
        %v3703 = vpack.c.b16 %v3694, %v3693
        %v3704 = vpack.c.b16 %v3696, %v3695
        %3713 = vmatpush.bf16.msra.mxu0 %v3704
        %3714 = vmatpush.bf16.msra.mxu0 %v3703
        %3715 = vmatpush.bf16.msra.mxu0 %v3702
        %3716 = vmatpush.bf16.msra.mxu0 %v3701
        %3717 = vmatpush.bf16.msra.mxu0 %v3700
        %3718 = vmatpush.bf16.msra.mxu0 %v3699
        %3719 = vmatpush.bf16.msra.mxu0 %v3698
        %3720 = vmatpush.bf16.msra.mxu0 %v3697
        %3721 = vmatmul.bf16.gmra.mxu0 %v3643
        %v3722 = vpop.f32.mrf.mxu0
        %v3723 = vadd.f32 0.0, %v3722
        %v3724 = vpop.f32.mrf.mxu0
        %v3725 = vadd.f32 0.0, %v3724
        %3726 = vmatmul.bf16.gmra.mxu0 %v3644
        %v3727 = vpop.f32.mrf.mxu0
        %v3728 = vadd.f32 0.0, %v3727
        %v3729 = vpop.f32.mrf.mxu0
        %v3730 = vadd.f32 0.0, %v3729
        %3731 = vmatmul.bf16.gmra.mxu0 %v3645
        %v3732 = vpop.f32.mrf.mxu0
        %v3733 = vadd.f32 0.0, %v3732
        %v3734 = vpop.f32.mrf.mxu0
        %v3735 = vadd.f32 0.0, %v3734
        %3736 = vmatmul.bf16.gmra.mxu0 %v3646
        %v3737 = vpop.f32.mrf.mxu0
        %v3738 = vadd.f32 0.0, %v3737
        %v3739 = vpop.f32.mrf.mxu0
        %v3740 = vadd.f32 0.0, %v3739
        %3741 = vmatmul.bf16.gmra.mxu0 %v3647
        %v3742 = vpop.f32.mrf.mxu0
        %v3743 = vadd.f32 0.0, %v3742
        %v3744 = vpop.f32.mrf.mxu0
        %v3745 = vadd.f32 0.0, %v3744
        %3746 = vdwg.mxu0
        %v3747 = vld [vmem:[#allocation6] sm:$0xff]
        %v3748 = vld [vmem:[#allocation6 + $0x8] sm:$0xff]
        %v3749 = vld [vmem:[#allocation6 + $0x10] sm:$0xff]
        %v3750 = vld [vmem:[#allocation6 + $0x18] sm:$0xff]
        %v3751 = vld [vmem:[#allocation6 + $0x20] sm:$0xff]
        %v3752 = vld [vmem:[#allocation6 + $0x28] sm:$0xff]
        %v3753 = vld [vmem:[#allocation6 + $0x30] sm:$0xff]
        %v3754 = vld [vmem:[#allocation6 + $0x38] sm:$0xff]
        %v3755 = vld [vmem:[#allocation6 + $0x40] sm:$0xff]
        %v3756 = vld [vmem:[#allocation6 + $0x48] sm:$0xff]
        %v3757 = vadd.f32 %v3747, %v3723
        %v3758 = vadd.f32 %v3748, %v3725
        %v3759 = vadd.f32 %v3749, %v3728
        %v3760 = vadd.f32 %v3750, %v3730
        %v3761 = vadd.f32 %v3751, %v3733
        %v3762 = vadd.f32 %v3752, %v3735
        %v3763 = vadd.f32 %v3753, %v3738
        %v3764 = vadd.f32 %v3754, %v3740
        %v3765 = vadd.f32 %v3755, %v3743
        %v3766 = vadd.f32 %v3756, %v3745
        %3767 = vst [vmem:[#allocation6] sm:$0xff] %v3757
        %3768 = vst [vmem:[#allocation6 + $0x8] sm:$0xff] %v3758
        %3769 = vst [vmem:[#allocation6 + $0x10] sm:$0xff] %v3759
        %3770 = vst [vmem:[#allocation6 + $0x18] sm:$0xff] %v3760
        %3771 = vst [vmem:[#allocation6 + $0x20] sm:$0xff] %v3761
        %3772 = vst [vmem:[#allocation6 + $0x28] sm:$0xff] %v3762
        %3773 = vst [vmem:[#allocation6 + $0x30] sm:$0xff] %v3763
        %3774 = vst [vmem:[#allocation6 + $0x38] sm:$0xff] %v3764
        %3775 = vst [vmem:[#allocation6 + $0x40] sm:$0xff] %v3765
        %3776 = vst [vmem:[#allocation6 + $0x48] sm:$0xff] %v3766
        %v3777 = vld [vmem:[#allocation2 + $0x2] sm:$0xff]
        %v3778 = vld [vmem:[#allocation2 + $0xa] sm:$0xff]
        %v3779 = vld [vmem:[#allocation2 + $0x12] sm:$0xff]
        %v3780 = vld [vmem:[#allocation2 + $0x1a] sm:$0xff]
        %v3781 = vld [vmem:[#allocation2 + $0x22] sm:$0xff]
        %v3782 = vld [vmem:[#allocation2 + $0x2a] sm:$0xff]
        %v3783 = vld [vmem:[#allocation2 + $0x32] sm:$0xff]
        %v3784 = vld [vmem:[#allocation2 + $0x3a] sm:$0xff]
        %v3785 = vld [vmem:[#allocation2 + $0x42] sm:$0xff]
        %v3786 = vld [vmem:[#allocation2 + $0x4a] sm:$0xff]
        %v3787 = vpack.c.bf16 %v3778, %v3777
        %v3788 = vpack.c.bf16 %v3780, %v3779
        %v3789 = vpack.c.bf16 %v3782, %v3781
        %v3790 = vpack.c.bf16 %v3784, %v3783
        %v3791 = vpack.c.bf16 %v3786, %v3785
        %s3792 = scalar_lea.vmem [#allocation9], 128
        %v3793 = vld [vmem:[%s3792] sm:$0xf]
        %v3794 = vld [vmem:[%s3792 + $0x4] sm:$0xf]
        %v3795 = vld [vmem:[%s3792 + $0x8] sm:$0xf]
        %v3796 = vld [vmem:[%s3792 + $0xc] sm:$0xf]
        %v3797 = vld [vmem:[%s3792 + $0x10] sm:$0xf]
        %v3798 = vld [vmem:[%s3792 + $0x14] sm:$0xf]
        %v3799 = vld [vmem:[%s3792 + $0x18] sm:$0xf]
        %v3800 = vld [vmem:[%s3792 + $0x1c] sm:$0xf]
        %v3801 = vld [vmem:[%s3792 + $0x20] sm:$0xf]
        %v3802 = vld [vmem:[%s3792 + $0x24] sm:$0xf]
        %v3803 = vld [vmem:[%s3792 + $0x28] sm:$0xf]
        %v3804 = vld [vmem:[%s3792 + $0x2c] sm:$0xf]
        %v3805 = vld [vmem:[%s3792 + $0x30] sm:$0xf]
        %v3806 = vld [vmem:[%s3792 + $0x34] sm:$0xf]
        %v3807 = vld [vmem:[%s3792 + $0x38] sm:$0xf]
        %v3808 = vld [vmem:[%s3792 + $0x3c] sm:$0xf]
        %v3825 = vunpack.c.l.b16 %v3793
        %v3826 = vunpack.c.l.b16 %v3794
        %v3827 = vunpack.c.l.b16 %v3795
        %v3828 = vunpack.c.l.b16 %v3796
        %v3829 = vunpack.c.l.b16 %v3797
        %v3830 = vunpack.c.l.b16 %v3798
        %v3831 = vunpack.c.l.b16 %v3799
        %v3832 = vunpack.c.l.b16 %v3800
        %v3833 = vunpack.c.l.b16 %v3801
        %v3834 = vunpack.c.l.b16 %v3802
        %v3835 = vunpack.c.l.b16 %v3803
        %v3836 = vunpack.c.l.b16 %v3804
        %v3837 = vunpack.c.l.b16 %v3805
        %v3838 = vunpack.c.l.b16 %v3806
        %v3839 = vunpack.c.l.b16 %v3807
        %v3840 = vunpack.c.l.b16 %v3808
        %v3841 = vpack.c.b16 %v3826, %v3825
        %v3842 = vpack.c.b16 %v3828, %v3827
        %v3843 = vpack.c.b16 %v3830, %v3829
        %v3844 = vpack.c.b16 %v3832, %v3831
        %v3845 = vpack.c.b16 %v3834, %v3833
        %v3846 = vpack.c.b16 %v3836, %v3835
        %v3847 = vpack.c.b16 %v3838, %v3837
        %v3848 = vpack.c.b16 %v3840, %v3839
        %3857 = vmatpush.bf16.msra.mxu0 %v3848
        %3858 = vmatpush.bf16.msra.mxu0 %v3847
        %3859 = vmatpush.bf16.msra.mxu0 %v3846
        %3860 = vmatpush.bf16.msra.mxu0 %v3845
        %3861 = vmatpush.bf16.msra.mxu0 %v3844
        %3862 = vmatpush.bf16.msra.mxu0 %v3843
        %3863 = vmatpush.bf16.msra.mxu0 %v3842
        %3864 = vmatpush.bf16.msra.mxu0 %v3841
        %3865 = vmatmul.bf16.gmra.mxu0 %v3787
        %v3866 = vpop.f32.mrf.mxu0
        %v3867 = vadd.f32 0.0, %v3866
        %v3868 = vpop.f32.mrf.mxu0
        %v3869 = vadd.f32 0.0, %v3868
        %3870 = vmatmul.bf16.gmra.mxu0 %v3788
        %v3871 = vpop.f32.mrf.mxu0
        %v3872 = vadd.f32 0.0, %v3871
        %v3873 = vpop.f32.mrf.mxu0
        %v3874 = vadd.f32 0.0, %v3873
        %3875 = vmatmul.bf16.gmra.mxu0 %v3789
        %v3876 = vpop.f32.mrf.mxu0
        %v3877 = vadd.f32 0.0, %v3876
        %v3878 = vpop.f32.mrf.mxu0
        %v3879 = vadd.f32 0.0, %v3878
        %3880 = vmatmul.bf16.gmra.mxu0 %v3790
        %v3881 = vpop.f32.mrf.mxu0
        %v3882 = vadd.f32 0.0, %v3881
        %v3883 = vpop.f32.mrf.mxu0
        %v3884 = vadd.f32 0.0, %v3883
        %3885 = vmatmul.bf16.gmra.mxu0 %v3791
        %v3886 = vpop.f32.mrf.mxu0
        %v3887 = vadd.f32 0.0, %v3886
        %v3888 = vpop.f32.mrf.mxu0
        %v3889 = vadd.f32 0.0, %v3888
        %3890 = vdwg.mxu0
        %v3891 = vld [vmem:[#allocation6] sm:$0xff]
        %v3892 = vld [vmem:[#allocation6 + $0x8] sm:$0xff]
        %v3893 = vld [vmem:[#allocation6 + $0x10] sm:$0xff]
        %v3894 = vld [vmem:[#allocation6 + $0x18] sm:$0xff]
        %v3895 = vld [vmem:[#allocation6 + $0x20] sm:$0xff]
        %v3896 = vld [vmem:[#allocation6 + $0x28] sm:$0xff]
        %v3897 = vld [vmem:[#allocation6 + $0x30] sm:$0xff]
        %v3898 = vld [vmem:[#allocation6 + $0x38] sm:$0xff]
        %v3899 = vld [vmem:[#allocation6 + $0x40] sm:$0xff]
        %v3900 = vld [vmem:[#allocation6 + $0x48] sm:$0xff]
        %v3901 = vadd.f32 %v3891, %v3867
        %v3902 = vadd.f32 %v3892, %v3869
        %v3903 = vadd.f32 %v3893, %v3872
        %v3904 = vadd.f32 %v3894, %v3874
        %v3905 = vadd.f32 %v3895, %v3877
        %v3906 = vadd.f32 %v3896, %v3879
        %v3907 = vadd.f32 %v3897, %v3882
        %v3908 = vadd.f32 %v3898, %v3884
        %v3909 = vadd.f32 %v3899, %v3887
        %v3910 = vadd.f32 %v3900, %v3889
        %3911 = vst [vmem:[#allocation6] sm:$0xff] %v3901
        %3912 = vst [vmem:[#allocation6 + $0x8] sm:$0xff] %v3902
        %3913 = vst [vmem:[#allocation6 + $0x10] sm:$0xff] %v3903
        %3914 = vst [vmem:[#allocation6 + $0x18] sm:$0xff] %v3904
        %3915 = vst [vmem:[#allocation6 + $0x20] sm:$0xff] %v3905
        %3916 = vst [vmem:[#allocation6 + $0x28] sm:$0xff] %v3906
        %3917 = vst [vmem:[#allocation6 + $0x30] sm:$0xff] %v3907
        %3918 = vst [vmem:[#allocation6 + $0x38] sm:$0xff] %v3908
        %3919 = vst [vmem:[#allocation6 + $0x40] sm:$0xff] %v3909
        %3920 = vst [vmem:[#allocation6 + $0x48] sm:$0xff] %v3910
        %v3921 = vld [vmem:[#allocation2 + $0xa] sm:$0xff]
        %v3922 = vld [vmem:[#allocation2 + $0x12] sm:$0xff]
        %v3923 = vld [vmem:[#allocation2 + $0x1a] sm:$0xff]
        %v3924 = vld [vmem:[#allocation2 + $0x22] sm:$0xff]
        %v3925 = vld [vmem:[#allocation2 + $0x2a] sm:$0xff]
        %v3926 = vld [vmem:[#allocation2 + $0x32] sm:$0xff]
        %v3927 = vld [vmem:[#allocation2 + $0x3a] sm:$0xff]
        %v3928 = vld [vmem:[#allocation2 + $0x42] sm:$0xff]
        %v3929 = vld [vmem:[#allocation2 + $0x4a] sm:$0xff]
        %v3930 = vld [vmem:[#allocation2 + $0x52] sm:$0xff]
        %v3931 = vpack.c.bf16 %v3922, %v3921
        %v3932 = vpack.c.bf16 %v3924, %v3923
        %v3933 = vpack.c.bf16 %v3926, %v3925
        %v3934 = vpack.c.bf16 %v3928, %v3927
        %v3935 = vpack.c.bf16 %v3930, %v3929
        %s3936 = scalar_lea.vmem [#allocation9], 192
        %v3937 = vld [vmem:[%s3936] sm:$0xf]
        %v3938 = vld [vmem:[%s3936 + $0x4] sm:$0xf]
        %v3939 = vld [vmem:[%s3936 + $0x8] sm:$0xf]
        %v3940 = vld [vmem:[%s3936 + $0xc] sm:$0xf]
        %v3941 = vld [vmem:[%s3936 + $0x10] sm:$0xf]
        %v3942 = vld [vmem:[%s3936 + $0x14] sm:$0xf]
        %v3943 = vld [vmem:[%s3936 + $0x18] sm:$0xf]
        %v3944 = vld [vmem:[%s3936 + $0x1c] sm:$0xf]
        %v3945 = vld [vmem:[%s3936 + $0x20] sm:$0xf]
        %v3946 = vld [vmem:[%s3936 + $0x24] sm:$0xf]
        %v3947 = vld [vmem:[%s3936 + $0x28] sm:$0xf]
        %v3948 = vld [vmem:[%s3936 + $0x2c] sm:$0xf]
        %v3949 = vld [vmem:[%s3936 + $0x30] sm:$0xf]
        %v3950 = vld [vmem:[%s3936 + $0x34] sm:$0xf]
        %v3951 = vld [vmem:[%s3936 + $0x38] sm:$0xf]
        %v3952 = vld [vmem:[%s3936 + $0x3c] sm:$0xf]
        %v3969 = vunpack.c.l.b16 %v3937
        %v3970 = vunpack.c.l.b16 %v3938
        %v3971 = vunpack.c.l.b16 %v3939
        %v3972 = vunpack.c.l.b16 %v3940
        %v3973 = vunpack.c.l.b16 %v3941
        %v3974 = vunpack.c.l.b16 %v3942
        %v3975 = vunpack.c.l.b16 %v3943
        %v3976 = vunpack.c.l.b16 %v3944
        %v3977 = vunpack.c.l.b16 %v3945
        %v3978 = vunpack.c.l.b16 %v3946
        %v3979 = vunpack.c.l.b16 %v3947
        %v3980 = vunpack.c.l.b16 %v3948
        %v3981 = vunpack.c.l.b16 %v3949
        %v3982 = vunpack.c.l.b16 %v3950
        %v3983 = vunpack.c.l.b16 %v3951
        %v3984 = vunpack.c.l.b16 %v3952
        %v3985 = vpack.c.b16 %v3970, %v3969
        %v3986 = vpack.c.b16 %v3972, %v3971
        %v3987 = vpack.c.b16 %v3974, %v3973
        %v3988 = vpack.c.b16 %v3976, %v3975
        %v3989 = vpack.c.b16 %v3978, %v3977
        %v3990 = vpack.c.b16 %v3980, %v3979
        %v3991 = vpack.c.b16 %v3982, %v3981
        %v3992 = vpack.c.b16 %v3984, %v3983
        %4001 = vmatpush.bf16.msra.mxu0 %v3992
        %4002 = vmatpush.bf16.msra.mxu0 %v3991
        %4003 = vmatpush.bf16.msra.mxu0 %v3990
        %4004 = vmatpush.bf16.msra.mxu0 %v3989
        %4005 = vmatpush.bf16.msra.mxu0 %v3988
        %4006 = vmatpush.bf16.msra.mxu0 %v3987
        %4007 = vmatpush.bf16.msra.mxu0 %v3986
        %4008 = vmatpush.bf16.msra.mxu0 %v3985
        %4009 = vmatmul.bf16.gmra.mxu0 %v3931
        %v4010 = vpop.f32.mrf.mxu0
        %v4011 = vadd.f32 0.0, %v4010
        %v4012 = vpop.f32.mrf.mxu0
        %v4013 = vadd.f32 0.0, %v4012
        %4014 = vmatmul.bf16.gmra.mxu0 %v3932
        %v4015 = vpop.f32.mrf.mxu0
        %v4016 = vadd.f32 0.0, %v4015
        %v4017 = vpop.f32.mrf.mxu0
        %v4018 = vadd.f32 0.0, %v4017
        %4019 = vmatmul.bf16.gmra.mxu0 %v3933
        %v4020 = vpop.f32.mrf.mxu0
        %v4021 = vadd.f32 0.0, %v4020
        %v4022 = vpop.f32.mrf.mxu0
        %v4023 = vadd.f32 0.0, %v4022
        %4024 = vmatmul.bf16.gmra.mxu0 %v3934
        %v4025 = vpop.f32.mrf.mxu0
        %v4026 = vadd.f32 0.0, %v4025
        %v4027 = vpop.f32.mrf.mxu0
        %v4028 = vadd.f32 0.0, %v4027
        %4029 = vmatmul.bf16.gmra.mxu0 %v3935
        %v4030 = vpop.f32.mrf.mxu0
        %v4031 = vadd.f32 0.0, %v4030
        %v4032 = vpop.f32.mrf.mxu0
        %v4033 = vadd.f32 0.0, %v4032
        %4034 = vdwg.mxu0
        %v4035 = vld [vmem:[#allocation6] sm:$0xff]
        %v4036 = vld [vmem:[#allocation6 + $0x8] sm:$0xff]
        %v4037 = vld [vmem:[#allocation6 + $0x10] sm:$0xff]
        %v4038 = vld [vmem:[#allocation6 + $0x18] sm:$0xff]
        %v4039 = vld [vmem:[#allocation6 + $0x20] sm:$0xff]
        %v4040 = vld [vmem:[#allocation6 + $0x28] sm:$0xff]
        %v4041 = vld [vmem:[#allocation6 + $0x30] sm:$0xff]
        %v4042 = vld [vmem:[#allocation6 + $0x38] sm:$0xff]
        %v4043 = vld [vmem:[#allocation6 + $0x40] sm:$0xff]
        %v4044 = vld [vmem:[#allocation6 + $0x48] sm:$0xff]
        %v4045 = vadd.f32 %v4035, %v4011
        %v4046 = vadd.f32 %v4036, %v4013
        %v4047 = vadd.f32 %v4037, %v4016
        %v4048 = vadd.f32 %v4038, %v4018
        %v4049 = vadd.f32 %v4039, %v4021
        %v4050 = vadd.f32 %v4040, %v4023
        %v4051 = vadd.f32 %v4041, %v4026
        %v4052 = vadd.f32 %v4042, %v4028
        %v4053 = vadd.f32 %v4043, %v4031
        %v4054 = vadd.f32 %v4044, %v4033
        %4055 = vst [vmem:[#allocation6] sm:$0xff] %v4045
        %4056 = vst [vmem:[#allocation6 + $0x8] sm:$0xff] %v4046
        %4057 = vst [vmem:[#allocation6 + $0x10] sm:$0xff] %v4047
        %4058 = vst [vmem:[#allocation6 + $0x18] sm:$0xff] %v4048
        %4059 = vst [vmem:[#allocation6 + $0x20] sm:$0xff] %v4049
        %4060 = vst [vmem:[#allocation6 + $0x28] sm:$0xff] %v4050
        %4061 = vst [vmem:[#allocation6 + $0x30] sm:$0xff] %v4051
        %4062 = vst [vmem:[#allocation6 + $0x38] sm:$0xff] %v4052
        %4063 = vst [vmem:[#allocation6 + $0x40] sm:$0xff] %v4053
        %4064 = vst [vmem:[#allocation6 + $0x48] sm:$0xff] %v4054
        %v4065 = vld [vmem:[#allocation2 + $0xb] sm:$0xff]
        %v4066 = vld [vmem:[#allocation2 + $0x13] sm:$0xff]
        %v4067 = vld [vmem:[#allocation2 + $0x1b] sm:$0xff]
        %v4068 = vld [vmem:[#allocation2 + $0x23] sm:$0xff]
        %v4069 = vld [vmem:[#allocation2 + $0x2b] sm:$0xff]
        %v4070 = vld [vmem:[#allocation2 + $0x33] sm:$0xff]
        %v4071 = vld [vmem:[#allocation2 + $0x3b] sm:$0xff]
        %v4072 = vld [vmem:[#allocation2 + $0x43] sm:$0xff]
        %v4073 = vld [vmem:[#allocation2 + $0x4b] sm:$0xff]
        %v4074 = vld [vmem:[#allocation2 + $0x53] sm:$0xff]
        %v4075 = vpack.c.bf16 %v4066, %v4065
        %v4076 = vpack.c.bf16 %v4068, %v4067
        %v4077 = vpack.c.bf16 %v4070, %v4069
        %v4078 = vpack.c.bf16 %v4072, %v4071
        %v4079 = vpack.c.bf16 %v4074, %v4073
        %s4080 = scalar_lea.vmem [#allocation9], 256
        %v4081 = vld [vmem:[%s4080] sm:$0xf]
        %v4082 = vld [vmem:[%s4080 + $0x4] sm:$0xf]
        %v4083 = vld [vmem:[%s4080 + $0x8] sm:$0xf]
        %v4084 = vld [vmem:[%s4080 + $0xc] sm:$0xf]
        %v4085 = vld [vmem:[%s4080 + $0x10] sm:$0xf]
        %v4086 = vld [vmem:[%s4080 + $0x14] sm:$0xf]
        %v4087 = vld [vmem:[%s4080 + $0x18] sm:$0xf]
        %v4088 = vld [vmem:[%s4080 + $0x1c] sm:$0xf]
        %v4089 = vld [vmem:[%s4080 + $0x20] sm:$0xf]
        %v4090 = vld [vmem:[%s4080 + $0x24] sm:$0xf]
        %v4091 = vld [vmem:[%s4080 + $0x28] sm:$0xf]
        %v4092 = vld [vmem:[%s4080 + $0x2c] sm:$0xf]
        %v4093 = vld [vmem:[%s4080 + $0x30] sm:$0xf]
        %v4094 = vld [vmem:[%s4080 + $0x34] sm:$0xf]
        %v4095 = vld [vmem:[%s4080 + $0x38] sm:$0xf]
        %v4096 = vld [vmem:[%s4080 + $0x3c] sm:$0xf]
        %v4113 = vunpack.c.l.b16 %v4081
        %v4114 = vunpack.c.l.b16 %v4082
        %v4115 = vunpack.c.l.b16 %v4083
        %v4116 = vunpack.c.l.b16 %v4084
        %v4117 = vunpack.c.l.b16 %v4085
        %v4118 = vunpack.c.l.b16 %v4086
        %v4119 = vunpack.c.l.b16 %v4087
        %v4120 = vunpack.c.l.b16 %v4088
        %v4121 = vunpack.c.l.b16 %v4089
        %v4122 = vunpack.c.l.b16 %v4090
        %v4123 = vunpack.c.l.b16 %v4091
        %v4124 = vunpack.c.l.b16 %v4092
        %v4125 = vunpack.c.l.b16 %v4093
        %v4126 = vunpack.c.l.b16 %v4094
        %v4127 = vunpack.c.l.b16 %v4095
        %v4128 = vunpack.c.l.b16 %v4096
        %v4129 = vpack.c.b16 %v4114, %v4113
        %v4130 = vpack.c.b16 %v4116, %v4115
        %v4131 = vpack.c.b16 %v4118, %v4117
        %v4132 = vpack.c.b16 %v4120, %v4119
        %v4133 = vpack.c.b16 %v4122, %v4121
        %v4134 = vpack.c.b16 %v4124, %v4123
        %v4135 = vpack.c.b16 %v4126, %v4125
        %v4136 = vpack.c.b16 %v4128, %v4127
        %4145 = vmatpush.bf16.msra.mxu0 %v4136
        %4146 = vmatpush.bf16.msra.mxu0 %v4135
        %4147 = vmatpush.bf16.msra.mxu0 %v4134
        %4148 = vmatpush.bf16.msra.mxu0 %v4133
        %4149 = vmatpush.bf16.msra.mxu0 %v4132
        %4150 = vmatpush.bf16.msra.mxu0 %v4131
        %4151 = vmatpush.bf16.msra.mxu0 %v4130
        %4152 = vmatpush.bf16.msra.mxu0 %v4129
        %4153 = vmatmul.bf16.gmra.mxu0 %v4075
        %v4154 = vpop.f32.mrf.mxu0
        %v4155 = vadd.f32 0.0, %v4154
        %v4156 = vpop.f32.mrf.mxu0
        %v4157 = vadd.f32 0.0, %v4156
        %4158 = vmatmul.bf16.gmra.mxu0 %v4076
        %v4159 = vpop.f32.mrf.mxu0
        %v4160 = vadd.f32 0.0, %v4159
        %v4161 = vpop.f32.mrf.mxu0
        %v4162 = vadd.f32 0.0, %v4161
        %4163 = vmatmul.bf16.gmra.mxu0 %v4077
        %v4164 = vpop.f32.mrf.mxu0
        %v4165 = vadd.f32 0.0, %v4164
        %v4166 = vpop.f32.mrf.mxu0
        %v4167 = vadd.f32 0.0, %v4166
        %4168 = vmatmul.bf16.gmra.mxu0 %v4078
        %v4169 = vpop.f32.mrf.mxu0
        %v4170 = vadd.f32 0.0, %v4169
        %v4171 = vpop.f32.mrf.mxu0
        %v4172 = vadd.f32 0.0, %v4171
        %4173 = vmatmul.bf16.gmra.mxu0 %v4079
        %v4174 = vpop.f32.mrf.mxu0
        %v4175 = vadd.f32 0.0, %v4174
        %v4176 = vpop.f32.mrf.mxu0
        %v4177 = vadd.f32 0.0, %v4176
        %4178 = vdwg.mxu0
        %v4179 = vld [vmem:[#allocation6] sm:$0xff]
        %v4180 = vld [vmem:[#allocation6 + $0x8] sm:$0xff]
        %v4181 = vld [vmem:[#allocation6 + $0x10] sm:$0xff]
        %v4182 = vld [vmem:[#allocation6 + $0x18] sm:$0xff]
        %v4183 = vld [vmem:[#allocation6 + $0x20] sm:$0xff]
        %v4184 = vld [vmem:[#allocation6 + $0x28] sm:$0xff]
        %v4185 = vld [vmem:[#allocation6 + $0x30] sm:$0xff]
        %v4186 = vld [vmem:[#allocation6 + $0x38] sm:$0xff]
        %v4187 = vld [vmem:[#allocation6 + $0x40] sm:$0xff]
        %v4188 = vld [vmem:[#allocation6 + $0x48] sm:$0xff]
        %v4189 = vadd.f32 %v4179, %v4155
        %v4190 = vadd.f32 %v4180, %v4157
        %v4191 = vadd.f32 %v4181, %v4160
        %v4192 = vadd.f32 %v4182, %v4162
        %v4193 = vadd.f32 %v4183, %v4165
        %v4194 = vadd.f32 %v4184, %v4167
        %v4195 = vadd.f32 %v4185, %v4170
        %v4196 = vadd.f32 %v4186, %v4172
        %v4197 = vadd.f32 %v4187, %v4175
        %v4198 = vadd.f32 %v4188, %v4177
        %4199 = vst [vmem:[#allocation6] sm:$0xff] %v4189
        %4200 = vst [vmem:[#allocation6 + $0x8] sm:$0xff] %v4190
        %4201 = vst [vmem:[#allocation6 + $0x10] sm:$0xff] %v4191
        %4202 = vst [vmem:[#allocation6 + $0x18] sm:$0xff] %v4192
        %4203 = vst [vmem:[#allocation6 + $0x20] sm:$0xff] %v4193
        %4204 = vst [vmem:[#allocation6 + $0x28] sm:$0xff] %v4194
        %4205 = vst [vmem:[#allocation6 + $0x30] sm:$0xff] %v4195
        %4206 = vst [vmem:[#allocation6 + $0x38] sm:$0xff] %v4196
        %4207 = vst [vmem:[#allocation6 + $0x40] sm:$0xff] %v4197
        %4208 = vst [vmem:[#allocation6 + $0x48] sm:$0xff] %v4198
        %v4209 = vld [vmem:[#allocation2 + $0xc] sm:$0xff]
        %v4210 = vld [vmem:[#allocation2 + $0x14] sm:$0xff]
        %v4211 = vld [vmem:[#allocation2 + $0x1c] sm:$0xff]
        %v4212 = vld [vmem:[#allocation2 + $0x24] sm:$0xff]
        %v4213 = vld [vmem:[#allocation2 + $0x2c] sm:$0xff]
        %v4214 = vld [vmem:[#allocation2 + $0x34] sm:$0xff]
        %v4215 = vld [vmem:[#allocation2 + $0x3c] sm:$0xff]
        %v4216 = vld [vmem:[#allocation2 + $0x44] sm:$0xff]
        %v4217 = vld [vmem:[#allocation2 + $0x4c] sm:$0xff]
        %v4218 = vld [vmem:[#allocation2 + $0x54] sm:$0xff]
        %v4219 = vpack.c.bf16 %v4210, %v4209
        %v4220 = vpack.c.bf16 %v4212, %v4211
        %v4221 = vpack.c.bf16 %v4214, %v4213
        %v4222 = vpack.c.bf16 %v4216, %v4215
        %v4223 = vpack.c.bf16 %v4218, %v4217
        %s4224 = scalar_lea.vmem [#allocation9], 320
        %v4225 = vld [vmem:[%s4224] sm:$0xf]
        %v4226 = vld [vmem:[%s4224 + $0x4] sm:$0xf]
        %v4227 = vld [vmem:[%s4224 + $0x8] sm:$0xf]
        %v4228 = vld [vmem:[%s4224 + $0xc] sm:$0xf]
        %v4229 = vld [vmem:[%s4224 + $0x10] sm:$0xf]
        %v4230 = vld [vmem:[%s4224 + $0x14] sm:$0xf]
        %v4231 = vld [vmem:[%s4224 + $0x18] sm:$0xf]
        %v4232 = vld [vmem:[%s4224 + $0x1c] sm:$0xf]
        %v4233 = vld [vmem:[%s4224 + $0x20] sm:$0xf]
        %v4234 = vld [vmem:[%s4224 + $0x24] sm:$0xf]
        %v4235 = vld [vmem:[%s4224 + $0x28] sm:$0xf]
        %v4236 = vld [vmem:[%s4224 + $0x2c] sm:$0xf]
        %v4237 = vld [vmem:[%s4224 + $0x30] sm:$0xf]
        %v4238 = vld [vmem:[%s4224 + $0x34] sm:$0xf]
        %v4239 = vld [vmem:[%s4224 + $0x38] sm:$0xf]
        %v4240 = vld [vmem:[%s4224 + $0x3c] sm:$0xf]
        %v4257 = vunpack.c.l.b16 %v4225
        %v4258 = vunpack.c.l.b16 %v4226
        %v4259 = vunpack.c.l.b16 %v4227
        %v4260 = vunpack.c.l.b16 %v4228
        %v4261 = vunpack.c.l.b16 %v4229
        %v4262 = vunpack.c.l.b16 %v4230
        %v4263 = vunpack.c.l.b16 %v4231
        %v4264 = vunpack.c.l.b16 %v4232
        %v4265 = vunpack.c.l.b16 %v4233
        %v4266 = vunpack.c.l.b16 %v4234
        %v4267 = vunpack.c.l.b16 %v4235
        %v4268 = vunpack.c.l.b16 %v4236
        %v4269 = vunpack.c.l.b16 %v4237
        %v4270 = vunpack.c.l.b16 %v4238
        %v4271 = vunpack.c.l.b16 %v4239
        %v4272 = vunpack.c.l.b16 %v4240
        %v4273 = vpack.c.b16 %v4258, %v4257
        %v4274 = vpack.c.b16 %v4260, %v4259
        %v4275 = vpack.c.b16 %v4262, %v4261
        %v4276 = vpack.c.b16 %v4264, %v4263
        %v4277 = vpack.c.b16 %v4266, %v4265
        %v4278 = vpack.c.b16 %v4268, %v4267
        %v4279 = vpack.c.b16 %v4270, %v4269
        %v4280 = vpack.c.b16 %v4272, %v4271
        %4289 = vmatpush.bf16.msra.mxu0 %v4280
        %4290 = vmatpush.bf16.msra.mxu0 %v4279
        %4291 = vmatpush.bf16.msra.mxu0 %v4278
        %4292 = vmatpush.bf16.msra.mxu0 %v4277
        %4293 = vmatpush.bf16.msra.mxu0 %v4276
        %4294 = vmatpush.bf16.msra.mxu0 %v4275
        %4295 = vmatpush.bf16.msra.mxu0 %v4274
        %4296 = vmatpush.bf16.msra.mxu0 %v4273
        %4297 = vmatmul.bf16.gmra.mxu0 %v4219
        %v4298 = vpop.f32.mrf.mxu0
        %v4299 = vadd.f32 0.0, %v4298
        %v4300 = vpop.f32.mrf.mxu0
        %v4301 = vadd.f32 0.0, %v4300
        %4302 = vmatmul.bf16.gmra.mxu0 %v4220
        %v4303 = vpop.f32.mrf.mxu0
        %v4304 = vadd.f32 0.0, %v4303
        %v4305 = vpop.f32.mrf.mxu0
        %v4306 = vadd.f32 0.0, %v4305
        %4307 = vmatmul.bf16.gmra.mxu0 %v4221
        %v4308 = vpop.f32.mrf.mxu0
        %v4309 = vadd.f32 0.0, %v4308
        %v4310 = vpop.f32.mrf.mxu0
        %v4311 = vadd.f32 0.0, %v4310
        %4312 = vmatmul.bf16.gmra.mxu0 %v4222
        %v4313 = vpop.f32.mrf.mxu0
        %v4314 = vadd.f32 0.0, %v4313
        %v4315 = vpop.f32.mrf.mxu0
        %v4316 = vadd.f32 0.0, %v4315
        %4317 = vmatmul.bf16.gmra.mxu0 %v4223
        %v4318 = vpop.f32.mrf.mxu0
        %v4319 = vadd.f32 0.0, %v4318
        %v4320 = vpop.f32.mrf.mxu0
        %v4321 = vadd.f32 0.0, %v4320
        %4322 = vdwg.mxu0
        %v4323 = vld [vmem:[#allocation6] sm:$0xff]
        %v4324 = vld [vmem:[#allocation6 + $0x8] sm:$0xff]
        %v4325 = vld [vmem:[#allocation6 + $0x10] sm:$0xff]
        %v4326 = vld [vmem:[#allocation6 + $0x18] sm:$0xff]
        %v4327 = vld [vmem:[#allocation6 + $0x20] sm:$0xff]
        %v4328 = vld [vmem:[#allocation6 + $0x28] sm:$0xff]
        %v4329 = vld [vmem:[#allocation6 + $0x30] sm:$0xff]
        %v4330 = vld [vmem:[#allocation6 + $0x38] sm:$0xff]
        %v4331 = vld [vmem:[#allocation6 + $0x40] sm:$0xff]
        %v4332 = vld [vmem:[#allocation6 + $0x48] sm:$0xff]
        %v4333 = vadd.f32 %v4323, %v4299
        %v4334 = vadd.f32 %v4324, %v4301
        %v4335 = vadd.f32 %v4325, %v4304
        %v4336 = vadd.f32 %v4326, %v4306
        %v4337 = vadd.f32 %v4327, %v4309
        %v4338 = vadd.f32 %v4328, %v4311
        %v4339 = vadd.f32 %v4329, %v4314
        %v4340 = vadd.f32 %v4330, %v4316
        %v4341 = vadd.f32 %v4331, %v4319
        %v4342 = vadd.f32 %v4332, %v4321
        %4343 = vst [vmem:[#allocation6] sm:$0xff] %v4333
        %4344 = vst [vmem:[#allocation6 + $0x8] sm:$0xff] %v4334
        %4345 = vst [vmem:[#allocation6 + $0x10] sm:$0xff] %v4335
        %4346 = vst [vmem:[#allocation6 + $0x18] sm:$0xff] %v4336
        %4347 = vst [vmem:[#allocation6 + $0x20] sm:$0xff] %v4337
        %4348 = vst [vmem:[#allocation6 + $0x28] sm:$0xff] %v4338
        %4349 = vst [vmem:[#allocation6 + $0x30] sm:$0xff] %v4339
        %4350 = vst [vmem:[#allocation6 + $0x38] sm:$0xff] %v4340
        %4351 = vst [vmem:[#allocation6 + $0x40] sm:$0xff] %v4341
        %4352 = vst [vmem:[#allocation6 + $0x48] sm:$0xff] %v4342
        %v4353 = vld [vmem:[#allocation2 + $0x14] sm:$0xff]
        %v4354 = vld [vmem:[#allocation2 + $0x1c] sm:$0xff]
        %v4355 = vld [vmem:[#allocation2 + $0x24] sm:$0xff]
        %v4356 = vld [vmem:[#allocation2 + $0x2c] sm:$0xff]
        %v4357 = vld [vmem:[#allocation2 + $0x34] sm:$0xff]
        %v4358 = vld [vmem:[#allocation2 + $0x3c] sm:$0xff]
        %v4359 = vld [vmem:[#allocation2 + $0x44] sm:$0xff]
        %v4360 = vld [vmem:[#allocation2 + $0x4c] sm:$0xff]
        %v4361 = vld [vmem:[#allocation2 + $0x54] sm:$0xff]
        %v4362 = vld [vmem:[#allocation2 + $0x5c] sm:$0xff]
        %v4363 = vpack.c.bf16 %v4354, %v4353
        %v4364 = vpack.c.bf16 %v4356, %v4355
        %v4365 = vpack.c.bf16 %v4358, %v4357
        %v4366 = vpack.c.bf16 %v4360, %v4359
        %v4367 = vpack.c.bf16 %v4362, %v4361
        %s4368 = scalar_lea.vmem [#allocation9], 384
        %v4369 = vld [vmem:[%s4368] sm:$0xf]
        %v4370 = vld [vmem:[%s4368 + $0x4] sm:$0xf]
        %v4371 = vld [vmem:[%s4368 + $0x8] sm:$0xf]
        %v4372 = vld [vmem:[%s4368 + $0xc] sm:$0xf]
        %v4373 = vld [vmem:[%s4368 + $0x10] sm:$0xf]
        %v4374 = vld [vmem:[%s4368 + $0x14] sm:$0xf]
        %v4375 = vld [vmem:[%s4368 + $0x18] sm:$0xf]
        %v4376 = vld [vmem:[%s4368 + $0x1c] sm:$0xf]
        %v4377 = vld [vmem:[%s4368 + $0x20] sm:$0xf]
        %v4378 = vld [vmem:[%s4368 + $0x24] sm:$0xf]
        %v4379 = vld [vmem:[%s4368 + $0x28] sm:$0xf]
        %v4380 = vld [vmem:[%s4368 + $0x2c] sm:$0xf]
        %v4381 = vld [vmem:[%s4368 + $0x30] sm:$0xf]
        %v4382 = vld [vmem:[%s4368 + $0x34] sm:$0xf]
        %v4383 = vld [vmem:[%s4368 + $0x38] sm:$0xf]
        %v4384 = vld [vmem:[%s4368 + $0x3c] sm:$0xf]
        %v4401 = vunpack.c.l.b16 %v4369
        %v4402 = vunpack.c.l.b16 %v4370
        %v4403 = vunpack.c.l.b16 %v4371
        %v4404 = vunpack.c.l.b16 %v4372
        %v4405 = vunpack.c.l.b16 %v4373
        %v4406 = vunpack.c.l.b16 %v4374
        %v4407 = vunpack.c.l.b16 %v4375
        %v4408 = vunpack.c.l.b16 %v4376
        %v4409 = vunpack.c.l.b16 %v4377
        %v4410 = vunpack.c.l.b16 %v4378
        %v4411 = vunpack.c.l.b16 %v4379
        %v4412 = vunpack.c.l.b16 %v4380
        %v4413 = vunpack.c.l.b16 %v4381
        %v4414 = vunpack.c.l.b16 %v4382
        %v4415 = vunpack.c.l.b16 %v4383
        %v4416 = vunpack.c.l.b16 %v4384
        %v4417 = vpack.c.b16 %v4402, %v4401
        %v4418 = vpack.c.b16 %v4404, %v4403
        %v4419 = vpack.c.b16 %v4406, %v4405
        %v4420 = vpack.c.b16 %v4408, %v4407
        %v4421 = vpack.c.b16 %v4410, %v4409
        %v4422 = vpack.c.b16 %v4412, %v4411
        %v4423 = vpack.c.b16 %v4414, %v4413
        %v4424 = vpack.c.b16 %v4416, %v4415
        %4433 = vmatpush.bf16.msra.mxu0 %v4424
        %4434 = vmatpush.bf16.msra.mxu0 %v4423
        %4435 = vmatpush.bf16.msra.mxu0 %v4422
        %4436 = vmatpush.bf16.msra.mxu0 %v4421
        %4437 = vmatpush.bf16.msra.mxu0 %v4420
        %4438 = vmatpush.bf16.msra.mxu0 %v4419
        %4439 = vmatpush.bf16.msra.mxu0 %v4418
        %4440 = vmatpush.bf16.msra.mxu0 %v4417
        %4441 = vmatmul.bf16.gmra.mxu0 %v4363
        %v4442 = vpop.f32.mrf.mxu0
        %v4443 = vadd.f32 0.0, %v4442
        %v4444 = vpop.f32.mrf.mxu0
        %v4445 = vadd.f32 0.0, %v4444
        %4446 = vmatmul.bf16.gmra.mxu0 %v4364
        %v4447 = vpop.f32.mrf.mxu0
        %v4448 = vadd.f32 0.0, %v4447
        %v4449 = vpop.f32.mrf.mxu0
        %v4450 = vadd.f32 0.0, %v4449
        %4451 = vmatmul.bf16.gmra.mxu0 %v4365
        %v4452 = vpop.f32.mrf.mxu0
        %v4453 = vadd.f32 0.0, %v4452
        %v4454 = vpop.f32.mrf.mxu0
        %v4455 = vadd.f32 0.0, %v4454
        %4456 = vmatmul.bf16.gmra.mxu0 %v4366
        %v4457 = vpop.f32.mrf.mxu0
        %v4458 = vadd.f32 0.0, %v4457
        %v4459 = vpop.f32.mrf.mxu0
        %v4460 = vadd.f32 0.0, %v4459
        %4461 = vmatmul.bf16.gmra.mxu0 %v4367
        %v4462 = vpop.f32.mrf.mxu0
        %v4463 = vadd.f32 0.0, %v4462
        %v4464 = vpop.f32.mrf.mxu0
        %v4465 = vadd.f32 0.0, %v4464
        %4466 = vdwg.mxu0
        %v4467 = vld [vmem:[#allocation6] sm:$0xff]
        %v4468 = vld [vmem:[#allocation6 + $0x8] sm:$0xff]
        %v4469 = vld [vmem:[#allocation6 + $0x10] sm:$0xff]
        %v4470 = vld [vmem:[#allocation6 + $0x18] sm:$0xff]
        %v4471 = vld [vmem:[#allocation6 + $0x20] sm:$0xff]
        %v4472 = vld [vmem:[#allocation6 + $0x28] sm:$0xff]
        %v4473 = vld [vmem:[#allocation6 + $0x30] sm:$0xff]
        %v4474 = vld [vmem:[#allocation6 + $0x38] sm:$0xff]
        %v4475 = vld [vmem:[#allocation6 + $0x40] sm:$0xff]
        %v4476 = vld [vmem:[#allocation6 + $0x48] sm:$0xff]
        %v4477 = vadd.f32 %v4467, %v4443
        %v4478 = vadd.f32 %v4468, %v4445
        %v4479 = vadd.f32 %v4469, %v4448
        %v4480 = vadd.f32 %v4470, %v4450
        %v4481 = vadd.f32 %v4471, %v4453
        %v4482 = vadd.f32 %v4472, %v4455
        %v4483 = vadd.f32 %v4473, %v4458
        %v4484 = vadd.f32 %v4474, %v4460
        %v4485 = vadd.f32 %v4475, %v4463
        %v4486 = vadd.f32 %v4476, %v4465
        %4487 = vst [vmem:[#allocation6] sm:$0xff] %v4477
        %4488 = vst [vmem:[#allocation6 + $0x8] sm:$0xff] %v4478
        %4489 = vst [vmem:[#allocation6 + $0x10] sm:$0xff] %v4479
        %4490 = vst [vmem:[#allocation6 + $0x18] sm:$0xff] %v4480
        %4491 = vst [vmem:[#allocation6 + $0x20] sm:$0xff] %v4481
        %4492 = vst [vmem:[#allocation6 + $0x28] sm:$0xff] %v4482
        %4493 = vst [vmem:[#allocation6 + $0x30] sm:$0xff] %v4483
        %4494 = vst [vmem:[#allocation6 + $0x38] sm:$0xff] %v4484
        %4495 = vst [vmem:[#allocation6 + $0x40] sm:$0xff] %v4485
        %4496 = vst [vmem:[#allocation6 + $0x48] sm:$0xff] %v4486
        %v4497 = vld [vmem:[#allocation2 + $0x15] sm:$0xff]
        %v4498 = vld [vmem:[#allocation2 + $0x1d] sm:$0xff]
        %v4499 = vld [vmem:[#allocation2 + $0x25] sm:$0xff]
        %v4500 = vld [vmem:[#allocation2 + $0x2d] sm:$0xff]
        %v4501 = vld [vmem:[#allocation2 + $0x35] sm:$0xff]
        %v4502 = vld [vmem:[#allocation2 + $0x3d] sm:$0xff]
        %v4503 = vld [vmem:[#allocation2 + $0x45] sm:$0xff]
        %v4504 = vld [vmem:[#allocation2 + $0x4d] sm:$0xff]
        %v4505 = vld [vmem:[#allocation2 + $0x55] sm:$0xff]
        %v4506 = vld [vmem:[#allocation2 + $0x5d] sm:$0xff]
        %v4507 = vpack.c.bf16 %v4498, %v4497
        %v4508 = vpack.c.bf16 %v4500, %v4499
        %v4509 = vpack.c.bf16 %v4502, %v4501
        %v4510 = vpack.c.bf16 %v4504, %v4503
        %v4511 = vpack.c.bf16 %v4506, %v4505
        %s4512 = scalar_lea.vmem [#allocation9], 448
        %v4513 = vld [vmem:[%s4512] sm:$0xf]
        %v4514 = vld [vmem:[%s4512 + $0x4] sm:$0xf]
        %v4515 = vld [vmem:[%s4512 + $0x8] sm:$0xf]
        %v4516 = vld [vmem:[%s4512 + $0xc] sm:$0xf]
        %v4517 = vld [vmem:[%s4512 + $0x10] sm:$0xf]
        %v4518 = vld [vmem:[%s4512 + $0x14] sm:$0xf]
        %v4519 = vld [vmem:[%s4512 + $0x18] sm:$0xf]
        %v4520 = vld [vmem:[%s4512 + $0x1c] sm:$0xf]
        %v4521 = vld [vmem:[%s4512 + $0x20] sm:$0xf]
        %v4522 = vld [vmem:[%s4512 + $0x24] sm:$0xf]
        %v4523 = vld [vmem:[%s4512 + $0x28] sm:$0xf]
        %v4524 = vld [vmem:[%s4512 + $0x2c] sm:$0xf]
        %v4525 = vld [vmem:[%s4512 + $0x30] sm:$0xf]
        %v4526 = vld [vmem:[%s4512 + $0x34] sm:$0xf]
        %v4527 = vld [vmem:[%s4512 + $0x38] sm:$0xf]
        %v4528 = vld [vmem:[%s4512 + $0x3c] sm:$0xf]
        %v4545 = vunpack.c.l.b16 %v4513
        %v4546 = vunpack.c.l.b16 %v4514
        %v4547 = vunpack.c.l.b16 %v4515
        %v4548 = vunpack.c.l.b16 %v4516
        %v4549 = vunpack.c.l.b16 %v4517
        %v4550 = vunpack.c.l.b16 %v4518
        %v4551 = vunpack.c.l.b16 %v4519
        %v4552 = vunpack.c.l.b16 %v4520
        %v4553 = vunpack.c.l.b16 %v4521
        %v4554 = vunpack.c.l.b16 %v4522
        %v4555 = vunpack.c.l.b16 %v4523
        %v4556 = vunpack.c.l.b16 %v4524
        %v4557 = vunpack.c.l.b16 %v4525
        %v4558 = vunpack.c.l.b16 %v4526
        %v4559 = vunpack.c.l.b16 %v4527
        %v4560 = vunpack.c.l.b16 %v4528
        %v4561 = vpack.c.b16 %v4546, %v4545
        %v4562 = vpack.c.b16 %v4548, %v4547
        %v4563 = vpack.c.b16 %v4550, %v4549
        %v4564 = vpack.c.b16 %v4552, %v4551
        %v4565 = vpack.c.b16 %v4554, %v4553
        %v4566 = vpack.c.b16 %v4556, %v4555
        %v4567 = vpack.c.b16 %v4558, %v4557
        %v4568 = vpack.c.b16 %v4560, %v4559
        %4577 = vmatpush.bf16.msra.mxu0 %v4568
        %4578 = vmatpush.bf16.msra.mxu0 %v4567
        %4579 = vmatpush.bf16.msra.mxu0 %v4566
        %4580 = vmatpush.bf16.msra.mxu0 %v4565
        %4581 = vmatpush.bf16.msra.mxu0 %v4564
        %4582 = vmatpush.bf16.msra.mxu0 %v4563
        %4583 = vmatpush.bf16.msra.mxu0 %v4562
        %4584 = vmatpush.bf16.msra.mxu0 %v4561
        %4585 = vmatmul.bf16.gmra.mxu0 %v4507
        %v4586 = vpop.f32.mrf.mxu0
        %v4587 = vadd.f32 0.0, %v4586
        %v4588 = vpop.f32.mrf.mxu0
        %v4589 = vadd.f32 0.0, %v4588
        %4590 = vmatmul.bf16.gmra.mxu0 %v4508
        %v4591 = vpop.f32.mrf.mxu0
        %v4592 = vadd.f32 0.0, %v4591
        %v4593 = vpop.f32.mrf.mxu0
        %v4594 = vadd.f32 0.0, %v4593
        %4595 = vmatmul.bf16.gmra.mxu0 %v4509
        %v4596 = vpop.f32.mrf.mxu0
        %v4597 = vadd.f32 0.0, %v4596
        %v4598 = vpop.f32.mrf.mxu0
        %v4599 = vadd.f32 0.0, %v4598
        %4600 = vmatmul.bf16.gmra.mxu0 %v4510
        %v4601 = vpop.f32.mrf.mxu0
        %v4602 = vadd.f32 0.0, %v4601
        %v4603 = vpop.f32.mrf.mxu0
        %v4604 = vadd.f32 0.0, %v4603
        %4605 = vmatmul.bf16.gmra.mxu0 %v4511
        %v4606 = vpop.f32.mrf.mxu0
        %v4607 = vadd.f32 0.0, %v4606
        %v4608 = vpop.f32.mrf.mxu0
        %v4609 = vadd.f32 0.0, %v4608
        %4610 = vdwg.mxu0
        %v4611 = vld [vmem:[#allocation6] sm:$0xff]
        %v4612 = vld [vmem:[#allocation6 + $0x8] sm:$0xff]
        %v4613 = vld [vmem:[#allocation6 + $0x10] sm:$0xff]
        %v4614 = vld [vmem:[#allocation6 + $0x18] sm:$0xff]
        %v4615 = vld [vmem:[#allocation6 + $0x20] sm:$0xff]
        %v4616 = vld [vmem:[#allocation6 + $0x28] sm:$0xff]
        %v4617 = vld [vmem:[#allocation6 + $0x30] sm:$0xff]
        %v4618 = vld [vmem:[#allocation6 + $0x38] sm:$0xff]
        %v4619 = vld [vmem:[#allocation6 + $0x40] sm:$0xff]
        %v4620 = vld [vmem:[#allocation6 + $0x48] sm:$0xff]
        %v4621 = vadd.f32 %v4611, %v4587
        %v4622 = vadd.f32 %v4612, %v4589
        %v4623 = vadd.f32 %v4613, %v4592
        %v4624 = vadd.f32 %v4614, %v4594
        %v4625 = vadd.f32 %v4615, %v4597
        %v4626 = vadd.f32 %v4616, %v4599
        %v4627 = vadd.f32 %v4617, %v4602
        %v4628 = vadd.f32 %v4618, %v4604
        %v4629 = vadd.f32 %v4619, %v4607
        %v4630 = vadd.f32 %v4620, %v4609
        %4631 = vst [vmem:[#allocation6] sm:$0xff] %v4621
        %4632 = vst [vmem:[#allocation6 + $0x8] sm:$0xff] %v4622
        %4633 = vst [vmem:[#allocation6 + $0x10] sm:$0xff] %v4623
        %4634 = vst [vmem:[#allocation6 + $0x18] sm:$0xff] %v4624
        %4635 = vst [vmem:[#allocation6 + $0x20] sm:$0xff] %v4625
        %4636 = vst [vmem:[#allocation6 + $0x28] sm:$0xff] %v4626
        %4637 = vst [vmem:[#allocation6 + $0x30] sm:$0xff] %v4627
        %4638 = vst [vmem:[#allocation6 + $0x38] sm:$0xff] %v4628
        %4639 = vst [vmem:[#allocation6 + $0x40] sm:$0xff] %v4629
        %4640 = vst [vmem:[#allocation6 + $0x48] sm:$0xff] %v4630
        %v4641 = vld [vmem:[#allocation2 + $0x16] sm:$0xff]
        %v4642 = vld [vmem:[#allocation2 + $0x1e] sm:$0xff]
        %v4643 = vld [vmem:[#allocation2 + $0x26] sm:$0xff]
        %v4644 = vld [vmem:[#allocation2 + $0x2e] sm:$0xff]
        %v4645 = vld [vmem:[#allocation2 + $0x36] sm:$0xff]
        %v4646 = vld [vmem:[#allocation2 + $0x3e] sm:$0xff]
        %v4647 = vld [vmem:[#allocation2 + $0x46] sm:$0xff]
        %v4648 = vld [vmem:[#allocation2 + $0x4e] sm:$0xff]
        %v4649 = vld [vmem:[#allocation2 + $0x56] sm:$0xff]
        %v4650 = vld [vmem:[#allocation2 + $0x5e] sm:$0xff]
        %v4651 = vpack.c.bf16 %v4642, %v4641
        %v4652 = vpack.c.bf16 %v4644, %v4643
        %v4653 = vpack.c.bf16 %v4646, %v4645
        %v4654 = vpack.c.bf16 %v4648, %v4647
        %v4655 = vpack.c.bf16 %v4650, %v4649
        %s4656 = scalar_lea.vmem [#allocation9], 512
        %v4657 = vld [vmem:[%s4656] sm:$0xf]
        %v4658 = vld [vmem:[%s4656 + $0x4] sm:$0xf]
        %v4659 = vld [vmem:[%s4656 + $0x8] sm:$0xf]
        %v4660 = vld [vmem:[%s4656 + $0xc] sm:$0xf]
        %v4661 = vld [vmem:[%s4656 + $0x10] sm:$0xf]
        %v4662 = vld [vmem:[%s4656 + $0x14] sm:$0xf]
        %v4663 = vld [vmem:[%s4656 + $0x18] sm:$0xf]
        %v4664 = vld [vmem:[%s4656 + $0x1c] sm:$0xf]
        %v4665 = vld [vmem:[%s4656 + $0x20] sm:$0xf]
        %v4666 = vld [vmem:[%s4656 + $0x24] sm:$0xf]
        %v4667 = vld [vmem:[%s4656 + $0x28] sm:$0xf]
        %v4668 = vld [vmem:[%s4656 + $0x2c] sm:$0xf]
        %v4669 = vld [vmem:[%s4656 + $0x30] sm:$0xf]
        %v4670 = vld [vmem:[%s4656 + $0x34] sm:$0xf]
        %v4671 = vld [vmem:[%s4656 + $0x38] sm:$0xf]
        %v4672 = vld [vmem:[%s4656 + $0x3c] sm:$0xf]
        %v4689 = vunpack.c.l.b16 %v4657
        %v4690 = vunpack.c.l.b16 %v4658
        %v4691 = vunpack.c.l.b16 %v4659
        %v4692 = vunpack.c.l.b16 %v4660
        %v4693 = vunpack.c.l.b16 %v4661
        %v4694 = vunpack.c.l.b16 %v4662
        %v4695 = vunpack.c.l.b16 %v4663
        %v4696 = vunpack.c.l.b16 %v4664
        %v4697 = vunpack.c.l.b16 %v4665
        %v4698 = vunpack.c.l.b16 %v4666
        %v4699 = vunpack.c.l.b16 %v4667
        %v4700 = vunpack.c.l.b16 %v4668
        %v4701 = vunpack.c.l.b16 %v4669
        %v4702 = vunpack.c.l.b16 %v4670
        %v4703 = vunpack.c.l.b16 %v4671
        %v4704 = vunpack.c.l.b16 %v4672
        %v4705 = vpack.c.b16 %v4690, %v4689
        %v4706 = vpack.c.b16 %v4692, %v4691
        %v4707 = vpack.c.b16 %v4694, %v4693
        %v4708 = vpack.c.b16 %v4696, %v4695
        %v4709 = vpack.c.b16 %v4698, %v4697
        %v4710 = vpack.c.b16 %v4700, %v4699
        %v4711 = vpack.c.b16 %v4702, %v4701
        %v4712 = vpack.c.b16 %v4704, %v4703
        %4721 = vmatpush.bf16.msra.mxu0 %v4712
        %4722 = vmatpush.bf16.msra.mxu0 %v4711
        %4723 = vmatpush.bf16.msra.mxu0 %v4710
        %4724 = vmatpush.bf16.msra.mxu0 %v4709
        %4725 = vmatpush.bf16.msra.mxu0 %v4708
        %4726 = vmatpush.bf16.msra.mxu0 %v4707
        %4727 = vmatpush.bf16.msra.mxu0 %v4706
        %4728 = vmatpush.bf16.msra.mxu0 %v4705
        %4729 = vmatmul.bf16.gmra.mxu0 %v4651
        %v4730 = vpop.f32.mrf.mxu0
        %v4731 = vadd.f32 0.0, %v4730
        %v4732 = vpop.f32.mrf.mxu0
        %v4733 = vadd.f32 0.0, %v4732
        %4734 = vmatmul.bf16.gmra.mxu0 %v4652
        %v4735 = vpop.f32.mrf.mxu0
        %v4736 = vadd.f32 0.0, %v4735
        %v4737 = vpop.f32.mrf.mxu0
        %v4738 = vadd.f32 0.0, %v4737
        %4739 = vmatmul.bf16.gmra.mxu0 %v4653
        %v4740 = vpop.f32.mrf.mxu0
        %v4741 = vadd.f32 0.0, %v4740
        %v4742 = vpop.f32.mrf.mxu0
        %v4743 = vadd.f32 0.0, %v4742
        %4744 = vmatmul.bf16.gmra.mxu0 %v4654
        %v4745 = vpop.f32.mrf.mxu0
        %v4746 = vadd.f32 0.0, %v4745
        %v4747 = vpop.f32.mrf.mxu0
        %v4748 = vadd.f32 0.0, %v4747
        %4749 = vmatmul.bf16.gmra.mxu0 %v4655
        %v4750 = vpop.f32.mrf.mxu0
        %v4751 = vadd.f32 0.0, %v4750
        %v4752 = vpop.f32.mrf.mxu0
        %v4753 = vadd.f32 0.0, %v4752
        %4754 = vdwg.mxu0
        %v4755 = vld [vmem:[#allocation6] sm:$0xff]
        %v4756 = vld [vmem:[#allocation6 + $0x8] sm:$0xff]
        %v4757 = vld [vmem:[#allocation6 + $0x10] sm:$0xff]
        %v4758 = vld [vmem:[#allocation6 + $0x18] sm:$0xff]
        %v4759 = vld [vmem:[#allocation6 + $0x20] sm:$0xff]
        %v4760 = vld [vmem:[#allocation6 + $0x28] sm:$0xff]
        %v4761 = vld [vmem:[#allocation6 + $0x30] sm:$0xff]
        %v4762 = vld [vmem:[#allocation6 + $0x38] sm:$0xff]
        %v4763 = vld [vmem:[#allocation6 + $0x40] sm:$0xff]
        %v4764 = vld [vmem:[#allocation6 + $0x48] sm:$0xff]
        %v4765 = vadd.f32 %v4755, %v4731
        %v4766 = vadd.f32 %v4756, %v4733
        %v4767 = vadd.f32 %v4757, %v4736
        %v4768 = vadd.f32 %v4758, %v4738
        %v4769 = vadd.f32 %v4759, %v4741
        %v4770 = vadd.f32 %v4760, %v4743
        %v4771 = vadd.f32 %v4761, %v4746
        %v4772 = vadd.f32 %v4762, %v4748
        %v4773 = vadd.f32 %v4763, %v4751
        %v4774 = vadd.f32 %v4764, %v4753
        %4775 = vst [vmem:[#allocation6] sm:$0xff] %v4765
        %4776 = vst [vmem:[#allocation6 + $0x8] sm:$0xff] %v4766
        %4777 = vst [vmem:[#allocation6 + $0x10] sm:$0xff] %v4767
        %4778 = vst [vmem:[#allocation6 + $0x18] sm:$0xff] %v4768
        %4779 = vst [vmem:[#allocation6 + $0x20] sm:$0xff] %v4769
        %4780 = vst [vmem:[#allocation6 + $0x28] sm:$0xff] %v4770
        %4781 = vst [vmem:[#allocation6 + $0x30] sm:$0xff] %v4771
        %4782 = vst [vmem:[#allocation6 + $0x38] sm:$0xff] %v4772
        %4783 = vst [vmem:[#allocation6 + $0x40] sm:$0xff] %v4773
        %4784 = vst [vmem:[#allocation6 + $0x48] sm:$0xff] %v4774
        %v4785 = vld [vmem:[#allocation6] sm:$0xff]
        %v4786 = vld [vmem:[#allocation6 + $0x8] sm:$0xff]
        %v4787 = vld [vmem:[#allocation6 + $0x10] sm:$0xff]
        %v4788 = vld [vmem:[#allocation6 + $0x18] sm:$0xff]
        %v4789 = vld [vmem:[#allocation6 + $0x20] sm:$0xff]
        %v4790 = vld [vmem:[#allocation6 + $0x28] sm:$0xff]
        %v4791 = vld [vmem:[#allocation6 + $0x30] sm:$0xff]
        %v4792 = vld [vmem:[#allocation6 + $0x38] sm:$0xff]
        %v4793 = vld [vmem:[#allocation6 + $0x40] sm:$0xff]
        %v4794 = vld [vmem:[#allocation6 + $0x48] sm:$0xff]
        %v4795 = vld [vmem:[%s4] sm:$0x1]
        %v4797 = vperm.slane %v4795, 0
        %v4799 = vadd.f32 %v4785, %v4797
        %v4800 = vadd.f32 %v4786, %v4797
        %v4801 = vadd.f32 %v4787, %v4797
        %v4802 = vadd.f32 %v4788, %v4797
        %v4803 = vadd.f32 %v4789, %v4797
        %v4804 = vadd.f32 %v4790, %v4797
        %v4805 = vadd.f32 %v4791, %v4797
        %v4806 = vadd.f32 %v4792, %v4797
        %v4807 = vadd.f32 %v4793, %v4797
        %v4808 = vadd.f32 %v4794, %v4797
        %v4809 = vmax.f32 %v4799, 0.0
        %v4810 = vmax.f32 %v4800, 0.0
        %v4811 = vmax.f32 %v4801, 0.0
        %v4812 = vmax.f32 %v4802, 0.0
        %v4813 = vmax.f32 %v4803, 0.0
        %v4814 = vmax.f32 %v4804, 0.0
        %v4815 = vmax.f32 %v4805, 0.0
        %v4816 = vmax.f32 %v4806, 0.0
        %v4817 = vmax.f32 %v4807, 0.0
        %v4818 = vmax.f32 %v4808, 0.0
        %4819 = vst [vmem:[#allocation6] sm:$0xff] %v4809
        %4820 = vst [vmem:[#allocation6 + $0x8] sm:$0xff] %v4810
        %4821 = vst [vmem:[#allocation6 + $0x10] sm:$0xff] %v4811
        %4822 = vst [vmem:[#allocation6 + $0x18] sm:$0xff] %v4812
        %4823 = vst [vmem:[#allocation6 + $0x20] sm:$0xff] %v4813
        %4824 = vst [vmem:[#allocation6 + $0x28] sm:$0xff] %v4814
        %4825 = vst [vmem:[#allocation6 + $0x30] sm:$0xff] %v4815
        %4826 = vst [vmem:[#allocation6 + $0x38] sm:$0xff] %v4816
        %4827 = vst [vmem:[#allocation6 + $0x40] sm:$0xff] %v4817
        %4828 = vst [vmem:[#allocation6 + $0x48] sm:$0xff] %v4818
        %v4829 = vld [vmem:[#allocation6] ss:$2 sm:$0xf]
        %s4830 = scalar_lea.vmem [#allocation6], 1
        %v4831 = vld [vmem:[%s4830] ss:$2 sm:$0xf]
        %s4832 = scalar_lea.vmem [#allocation6], 10
        %v4833 = vld [vmem:[%s4832] ss:$2 sm:$0xf]
        %s4834 = scalar_lea.vmem [#allocation6], 11
        %v4835 = vld [vmem:[%s4834] ss:$2 sm:$0xf]
        %v4836 = vmax.f32 %v4829, %v4831
        %v4837 = vmax.f32 %v4833, %v4835
        %v4838 = vmax.f32 %v4836, %v4837
        %4839 = vst [vmem:[#allocation3 + $0x7] sm:$0xf] %v4838
        %s4840 = scalar_lea.vmem [#allocation6], 20
        %v4841 = vld [vmem:[%s4840] ss:$2 sm:$0xf]
        %s4842 = scalar_lea.vmem [#allocation6], 21
        %v4843 = vld [vmem:[%s4842] ss:$2 sm:$0xf]
        %s4844 = scalar_lea.vmem [#allocation6], 30
        %v4845 = vld [vmem:[%s4844] ss:$2 sm:$0xf]
        %s4846 = scalar_lea.vmem [#allocation6], 31
        %v4847 = vld [vmem:[%s4846] ss:$2 sm:$0xf]
        %v4848 = vmax.f32 %v4841, %v4843
        %v4849 = vmax.f32 %v4845, %v4847
        %v4850 = vmax.f32 %v4848, %v4849
        %4851 = vst [vmem:[#allocation3 + $0xd] sm:$0xf] %v4850
        %s4852 = scalar_lea.vmem [#allocation6], 40
        %v4853 = vld [vmem:[%s4852] ss:$2 sm:$0xf]
        %s4854 = scalar_lea.vmem [#allocation6], 41
        %v4855 = vld [vmem:[%s4854] ss:$2 sm:$0xf]
        %s4856 = scalar_lea.vmem [#allocation6], 50
        %v4857 = vld [vmem:[%s4856] ss:$2 sm:$0xf]
        %s4858 = scalar_lea.vmem [#allocation6], 51
        %v4859 = vld [vmem:[%s4858] ss:$2 sm:$0xf]
        %v4860 = vmax.f32 %v4853, %v4855
        %v4861 = vmax.f32 %v4857, %v4859
        %v4862 = vmax.f32 %v4860, %v4861
        %4863 = vst [vmem:[#allocation3 + $0x13] sm:$0xf] %v4862
        %s4864 = scalar_lea.vmem [#allocation6], 60
        %v4865 = vld [vmem:[%s4864] ss:$2 sm:$0xf]
        %s4866 = scalar_lea.vmem [#allocation6], 61
        %v4867 = vld [vmem:[%s4866] ss:$2 sm:$0xf]
        %s4868 = scalar_lea.vmem [#allocation6], 70
        %v4869 = vld [vmem:[%s4868] ss:$2 sm:$0xf]
        %s4870 = scalar_lea.vmem [#allocation6], 71
        %v4871 = vld [vmem:[%s4870] ss:$2 sm:$0xf]
        %v4872 = vmax.f32 %v4865, %v4867
        %v4873 = vmax.f32 %v4869, %v4871
        %v4874 = vmax.f32 %v4872, %v4873
        %4875 = vst [vmem:[#allocation3 + $0x19] sm:$0xf] %v4874
        %v4876 = vld [vmem:[#allocation3] sm:$0xff]
        %v4877 = vld [vmem:[#allocation3 + $0x8] sm:$0xff]
        %v4878 = vld [vmem:[#allocation3 + $0x10] sm:$0xff]
        %v4879 = vpack.c.bf16 %v4877, %v4876
        %v4880 = vpack.c.bf16 %v4878, %v4878
        %v4881 = vld [vmem:[#allocation12] sm:$0xf]
        %v4882 = vld [vmem:[#allocation12 + $0x4] sm:$0xf]
        %v4883 = vld [vmem:[#allocation12 + $0x8] sm:$0xf]
        %v4884 = vld [vmem:[#allocation12 + $0xc] sm:$0xf]
        %v4885 = vld [vmem:[#allocation12 + $0x10] sm:$0xf]
        %v4886 = vld [vmem:[#allocation12 + $0x14] sm:$0xf]
        %v4887 = vld [vmem:[#allocation12 + $0x18] sm:$0xf]
        %v4888 = vld [vmem:[#allocation12 + $0x1c] sm:$0xf]
        %v4889 = vld [vmem:[#allocation12 + $0x20] sm:$0xf]
        %v4890 = vld [vmem:[#allocation12 + $0x24] sm:$0xf]
        %v4891 = vld [vmem:[#allocation12 + $0x28] sm:$0xf]
        %v4892 = vld [vmem:[#allocation12 + $0x2c] sm:$0xf]
        %v4893 = vld [vmem:[#allocation12 + $0x30] sm:$0xf]
        %v4894 = vld [vmem:[#allocation12 + $0x34] sm:$0xf]
        %v4895 = vld [vmem:[#allocation12 + $0x38] sm:$0xf]
        %v4896 = vld [vmem:[#allocation12 + $0x3c] sm:$0xf]
        %v4913 = vunpack.c.l.b16 %v4881
        %v4914 = vunpack.c.l.b16 %v4882
        %v4915 = vunpack.c.l.b16 %v4883
        %v4916 = vunpack.c.l.b16 %v4884
        %v4917 = vunpack.c.l.b16 %v4885
        %v4918 = vunpack.c.l.b16 %v4886
        %v4919 = vunpack.c.l.b16 %v4887
        %v4920 = vunpack.c.l.b16 %v4888
        %v4921 = vunpack.c.l.b16 %v4889
        %v4922 = vunpack.c.l.b16 %v4890
        %v4923 = vunpack.c.l.b16 %v4891
        %v4924 = vunpack.c.l.b16 %v4892
        %v4925 = vunpack.c.l.b16 %v4893
        %v4926 = vunpack.c.l.b16 %v4894
        %v4927 = vunpack.c.l.b16 %v4895
        %v4928 = vunpack.c.l.b16 %v4896
        %v4929 = vpack.c.b16 %v4914, %v4913
        %v4930 = vpack.c.b16 %v4916, %v4915
        %v4931 = vpack.c.b16 %v4918, %v4917
        %v4932 = vpack.c.b16 %v4920, %v4919
        %v4933 = vpack.c.b16 %v4922, %v4921
        %v4934 = vpack.c.b16 %v4924, %v4923
        %v4935 = vpack.c.b16 %v4926, %v4925
        %v4936 = vpack.c.b16 %v4928, %v4927
        %4945 = vmatpush.bf16.msra.mxu0 %v4936
        %4946 = vmatpush.bf16.msra.mxu0 %v4935
        %4947 = vmatpush.bf16.msra.mxu0 %v4934
        %4948 = vmatpush.bf16.msra.mxu0 %v4933
        %4949 = vmatpush.bf16.msra.mxu0 %v4932
        %4950 = vmatpush.bf16.msra.mxu0 %v4931
        %4951 = vmatpush.bf16.msra.mxu0 %v4930
        %4952 = vmatpush.bf16.msra.mxu0 %v4929
        %4953 = vmatmul.bf16.gmra.mxu0 %v4879
        %v4954 = vpop.f32.mrf.mxu0
        %v4955 = vadd.f32 0.0, %v4954
        %v4956 = vpop.f32.mrf.mxu0
        %v4957 = vadd.f32 0.0, %v4956
        %4958 = vmatmul.bf16.gmra.mxu0 %v4880
        %v4959 = vpop.f32.mrf.mxu0
        %v4960 = vadd.f32 0.0, %v4959
        %v4961 = vpop.f32.mrf.mxu0
        %4962 = vdwg.mxu0
        %4963 = vst [vmem:[#allocation7] sm:$0xff] %v4955
        %4964 = vst [vmem:[#allocation7 + $0x8] sm:$0xff] %v4957
        %4965 = vst [vmem:[#allocation7 + $0x10] sm:$0xff] %v4960
        %v4966 = vld [vmem:[#allocation3 + $0x1] sm:$0xff]
        %v4967 = vld [vmem:[#allocation3 + $0x9] sm:$0xff]
        %v4968 = vld [vmem:[#allocation3 + $0x11] sm:$0xff]
        %v4969 = vpack.c.bf16 %v4967, %v4966
        %v4970 = vpack.c.bf16 %v4968, %v4968
        %s4971 = scalar_lea.vmem [#allocation12], 64
        %v4972 = vld [vmem:[%s4971] sm:$0xf]
        %v4973 = vld [vmem:[%s4971 + $0x4] sm:$0xf]
        %v4974 = vld [vmem:[%s4971 + $0x8] sm:$0xf]
        %v4975 = vld [vmem:[%s4971 + $0xc] sm:$0xf]
        %v4976 = vld [vmem:[%s4971 + $0x10] sm:$0xf]
        %v4977 = vld [vmem:[%s4971 + $0x14] sm:$0xf]
        %v4978 = vld [vmem:[%s4971 + $0x18] sm:$0xf]
        %v4979 = vld [vmem:[%s4971 + $0x1c] sm:$0xf]
        %v4980 = vld [vmem:[%s4971 + $0x20] sm:$0xf]
        %v4981 = vld [vmem:[%s4971 + $0x24] sm:$0xf]
        %v4982 = vld [vmem:[%s4971 + $0x28] sm:$0xf]
        %v4983 = vld [vmem:[%s4971 + $0x2c] sm:$0xf]
        %v4984 = vld [vmem:[%s4971 + $0x30] sm:$0xf]
        %v4985 = vld [vmem:[%s4971 + $0x34] sm:$0xf]
        %v4986 = vld [vmem:[%s4971 + $0x38] sm:$0xf]
        %v4987 = vld [vmem:[%s4971 + $0x3c] sm:$0xf]
        %v5004 = vunpack.c.l.b16 %v4972
        %v5005 = vunpack.c.l.b16 %v4973
        %v5006 = vunpack.c.l.b16 %v4974
        %v5007 = vunpack.c.l.b16 %v4975
        %v5008 = vunpack.c.l.b16 %v4976
        %v5009 = vunpack.c.l.b16 %v4977
        %v5010 = vunpack.c.l.b16 %v4978
        %v5011 = vunpack.c.l.b16 %v4979
        %v5012 = vunpack.c.l.b16 %v4980
        %v5013 = vunpack.c.l.b16 %v4981
        %v5014 = vunpack.c.l.b16 %v4982
        %v5015 = vunpack.c.l.b16 %v4983
        %v5016 = vunpack.c.l.b16 %v4984
        %v5017 = vunpack.c.l.b16 %v4985
        %v5018 = vunpack.c.l.b16 %v4986
        %v5019 = vunpack.c.l.b16 %v4987
        %v5020 = vpack.c.b16 %v5005, %v5004
        %v5021 = vpack.c.b16 %v5007, %v5006
        %v5022 = vpack.c.b16 %v5009, %v5008
        %v5023 = vpack.c.b16 %v5011, %v5010
        %v5024 = vpack.c.b16 %v5013, %v5012
        %v5025 = vpack.c.b16 %v5015, %v5014
        %v5026 = vpack.c.b16 %v5017, %v5016
        %v5027 = vpack.c.b16 %v5019, %v5018
        %5036 = vmatpush.bf16.msra.mxu0 %v5027
        %5037 = vmatpush.bf16.msra.mxu0 %v5026
        %5038 = vmatpush.bf16.msra.mxu0 %v5025
        %5039 = vmatpush.bf16.msra.mxu0 %v5024
        %5040 = vmatpush.bf16.msra.mxu0 %v5023
        %5041 = vmatpush.bf16.msra.mxu0 %v5022
        %5042 = vmatpush.bf16.msra.mxu0 %v5021
        %5043 = vmatpush.bf16.msra.mxu0 %v5020
        %5044 = vmatmul.bf16.gmra.mxu0 %v4969
        %v5045 = vpop.f32.mrf.mxu0
        %v5046 = vadd.f32 0.0, %v5045
        %v5047 = vpop.f32.mrf.mxu0
        %v5048 = vadd.f32 0.0, %v5047
        %5049 = vmatmul.bf16.gmra.mxu0 %v4970
        %v5050 = vpop.f32.mrf.mxu0
        %v5051 = vadd.f32 0.0, %v5050
        %v5052 = vpop.f32.mrf.mxu0
        %5053 = vdwg.mxu0
        %v5054 = vld [vmem:[#allocation7] sm:$0xff]
        %v5055 = vld [vmem:[#allocation7 + $0x8] sm:$0xff]
        %v5056 = vld [vmem:[#allocation7 + $0x10] sm:$0xff]
        %v5057 = vadd.f32 %v5054, %v5046
        %v5058 = vadd.f32 %v5055, %v5048
        %v5059 = vadd.f32 %v5056, %v5051
        %5060 = vst [vmem:[#allocation7] sm:$0xff] %v5057
        %5061 = vst [vmem:[#allocation7 + $0x8] sm:$0xff] %v5058
        %5062 = vst [vmem:[#allocation7 + $0x10] sm:$0xff] %v5059
        %v5063 = vld [vmem:[#allocation3 + $0x2] sm:$0xff]
        %v5064 = vld [vmem:[#allocation3 + $0xa] sm:$0xff]
        %v5065 = vld [vmem:[#allocation3 + $0x12] sm:$0xff]
        %v5066 = vpack.c.bf16 %v5064, %v5063
        %v5067 = vpack.c.bf16 %v5065, %v5065
        %s5068 = scalar_lea.vmem [#allocation12], 128
        %v5069 = vld [vmem:[%s5068] sm:$0xf]
        %v5070 = vld [vmem:[%s5068 + $0x4] sm:$0xf]
        %v5071 = vld [vmem:[%s5068 + $0x8] sm:$0xf]
        %v5072 = vld [vmem:[%s5068 + $0xc] sm:$0xf]
        %v5073 = vld [vmem:[%s5068 + $0x10] sm:$0xf]
        %v5074 = vld [vmem:[%s5068 + $0x14] sm:$0xf]
        %v5075 = vld [vmem:[%s5068 + $0x18] sm:$0xf]
        %v5076 = vld [vmem:[%s5068 + $0x1c] sm:$0xf]
        %v5077 = vld [vmem:[%s5068 + $0x20] sm:$0xf]
        %v5078 = vld [vmem:[%s5068 + $0x24] sm:$0xf]
        %v5079 = vld [vmem:[%s5068 + $0x28] sm:$0xf]
        %v5080 = vld [vmem:[%s5068 + $0x2c] sm:$0xf]
        %v5081 = vld [vmem:[%s5068 + $0x30] sm:$0xf]
        %v5082 = vld [vmem:[%s5068 + $0x34] sm:$0xf]
        %v5083 = vld [vmem:[%s5068 + $0x38] sm:$0xf]
        %v5084 = vld [vmem:[%s5068 + $0x3c] sm:$0xf]
        %v5101 = vunpack.c.l.b16 %v5069
        %v5102 = vunpack.c.l.b16 %v5070
        %v5103 = vunpack.c.l.b16 %v5071
        %v5104 = vunpack.c.l.b16 %v5072
        %v5105 = vunpack.c.l.b16 %v5073
        %v5106 = vunpack.c.l.b16 %v5074
        %v5107 = vunpack.c.l.b16 %v5075
        %v5108 = vunpack.c.l.b16 %v5076
        %v5109 = vunpack.c.l.b16 %v5077
        %v5110 = vunpack.c.l.b16 %v5078
        %v5111 = vunpack.c.l.b16 %v5079
        %v5112 = vunpack.c.l.b16 %v5080
        %v5113 = vunpack.c.l.b16 %v5081
        %v5114 = vunpack.c.l.b16 %v5082
        %v5115 = vunpack.c.l.b16 %v5083
        %v5116 = vunpack.c.l.b16 %v5084
        %v5117 = vpack.c.b16 %v5102, %v5101
        %v5118 = vpack.c.b16 %v5104, %v5103
        %v5119 = vpack.c.b16 %v5106, %v5105
        %v5120 = vpack.c.b16 %v5108, %v5107
        %v5121 = vpack.c.b16 %v5110, %v5109
        %v5122 = vpack.c.b16 %v5112, %v5111
        %v5123 = vpack.c.b16 %v5114, %v5113
        %v5124 = vpack.c.b16 %v5116, %v5115
        %5133 = vmatpush.bf16.msra.mxu0 %v5124
        %5134 = vmatpush.bf16.msra.mxu0 %v5123
        %5135 = vmatpush.bf16.msra.mxu0 %v5122
        %5136 = vmatpush.bf16.msra.mxu0 %v5121
        %5137 = vmatpush.bf16.msra.mxu0 %v5120
        %5138 = vmatpush.bf16.msra.mxu0 %v5119
        %5139 = vmatpush.bf16.msra.mxu0 %v5118
        %5140 = vmatpush.bf16.msra.mxu0 %v5117
        %5141 = vmatmul.bf16.gmra.mxu0 %v5066
        %v5142 = vpop.f32.mrf.mxu0
        %v5143 = vadd.f32 0.0, %v5142
        %v5144 = vpop.f32.mrf.mxu0
        %v5145 = vadd.f32 0.0, %v5144
        %5146 = vmatmul.bf16.gmra.mxu0 %v5067
        %v5147 = vpop.f32.mrf.mxu0
        %v5148 = vadd.f32 0.0, %v5147
        %v5149 = vpop.f32.mrf.mxu0
        %5150 = vdwg.mxu0
        %v5151 = vld [vmem:[#allocation7] sm:$0xff]
        %v5152 = vld [vmem:[#allocation7 + $0x8] sm:$0xff]
        %v5153 = vld [vmem:[#allocation7 + $0x10] sm:$0xff]
        %v5154 = vadd.f32 %v5151, %v5143
        %v5155 = vadd.f32 %v5152, %v5145
        %v5156 = vadd.f32 %v5153, %v5148
        %5157 = vst [vmem:[#allocation7] sm:$0xff] %v5154
        %5158 = vst [vmem:[#allocation7 + $0x8] sm:$0xff] %v5155
        %5159 = vst [vmem:[#allocation7 + $0x10] sm:$0xff] %v5156
        %v5160 = vld [vmem:[#allocation3 + $0x6] sm:$0xff]
        %v5161 = vld [vmem:[#allocation3 + $0xe] sm:$0xff]
        %v5162 = vld [vmem:[#allocation3 + $0x16] sm:$0xff]
        %v5163 = vpack.c.bf16 %v5161, %v5160
        %v5164 = vpack.c.bf16 %v5162, %v5162
        %s5165 = scalar_lea.vmem [#allocation12], 192
        %v5166 = vld [vmem:[%s5165] sm:$0xf]
        %v5167 = vld [vmem:[%s5165 + $0x4] sm:$0xf]
        %v5168 = vld [vmem:[%s5165 + $0x8] sm:$0xf]
        %v5169 = vld [vmem:[%s5165 + $0xc] sm:$0xf]
        %v5170 = vld [vmem:[%s5165 + $0x10] sm:$0xf]
        %v5171 = vld [vmem:[%s5165 + $0x14] sm:$0xf]
        %v5172 = vld [vmem:[%s5165 + $0x18] sm:$0xf]
        %v5173 = vld [vmem:[%s5165 + $0x1c] sm:$0xf]
        %v5174 = vld [vmem:[%s5165 + $0x20] sm:$0xf]
        %v5175 = vld [vmem:[%s5165 + $0x24] sm:$0xf]
        %v5176 = vld [vmem:[%s5165 + $0x28] sm:$0xf]
        %v5177 = vld [vmem:[%s5165 + $0x2c] sm:$0xf]
        %v5178 = vld [vmem:[%s5165 + $0x30] sm:$0xf]
        %v5179 = vld [vmem:[%s5165 + $0x34] sm:$0xf]
        %v5180 = vld [vmem:[%s5165 + $0x38] sm:$0xf]
        %v5181 = vld [vmem:[%s5165 + $0x3c] sm:$0xf]
        %v5198 = vunpack.c.l.b16 %v5166
        %v5199 = vunpack.c.l.b16 %v5167
        %v5200 = vunpack.c.l.b16 %v5168
        %v5201 = vunpack.c.l.b16 %v5169
        %v5202 = vunpack.c.l.b16 %v5170
        %v5203 = vunpack.c.l.b16 %v5171
        %v5204 = vunpack.c.l.b16 %v5172
        %v5205 = vunpack.c.l.b16 %v5173
        %v5206 = vunpack.c.l.b16 %v5174
        %v5207 = vunpack.c.l.b16 %v5175
        %v5208 = vunpack.c.l.b16 %v5176
        %v5209 = vunpack.c.l.b16 %v5177
        %v5210 = vunpack.c.l.b16 %v5178
        %v5211 = vunpack.c.l.b16 %v5179
        %v5212 = vunpack.c.l.b16 %v5180
        %v5213 = vunpack.c.l.b16 %v5181
        %v5214 = vpack.c.b16 %v5199, %v5198
        %v5215 = vpack.c.b16 %v5201, %v5200
        %v5216 = vpack.c.b16 %v5203, %v5202
        %v5217 = vpack.c.b16 %v5205, %v5204
        %v5218 = vpack.c.b16 %v5207, %v5206
        %v5219 = vpack.c.b16 %v5209, %v5208
        %v5220 = vpack.c.b16 %v5211, %v5210
        %v5221 = vpack.c.b16 %v5213, %v5212
        %5230 = vmatpush.bf16.msra.mxu0 %v5221
        %5231 = vmatpush.bf16.msra.mxu0 %v5220
        %5232 = vmatpush.bf16.msra.mxu0 %v5219
        %5233 = vmatpush.bf16.msra.mxu0 %v5218
        %5234 = vmatpush.bf16.msra.mxu0 %v5217
        %5235 = vmatpush.bf16.msra.mxu0 %v5216
        %5236 = vmatpush.bf16.msra.mxu0 %v5215
        %5237 = vmatpush.bf16.msra.mxu0 %v5214
        %5238 = vmatmul.bf16.gmra.mxu0 %v5163
        %v5239 = vpop.f32.mrf.mxu0
        %v5240 = vadd.f32 0.0, %v5239
        %v5241 = vpop.f32.mrf.mxu0
        %v5242 = vadd.f32 0.0, %v5241
        %5243 = vmatmul.bf16.gmra.mxu0 %v5164
        %v5244 = vpop.f32.mrf.mxu0
        %v5245 = vadd.f32 0.0, %v5244
        %v5246 = vpop.f32.mrf.mxu0
        %5247 = vdwg.mxu0
        %v5248 = vld [vmem:[#allocation7] sm:$0xff]
        %v5249 = vld [vmem:[#allocation7 + $0x8] sm:$0xff]
        %v5250 = vld [vmem:[#allocation7 + $0x10] sm:$0xff]
        %v5251 = vadd.f32 %v5248, %v5240
        %v5252 = vadd.f32 %v5249, %v5242
        %v5253 = vadd.f32 %v5250, %v5245
        %5254 = vst [vmem:[#allocation7] sm:$0xff] %v5251
        %5255 = vst [vmem:[#allocation7 + $0x8] sm:$0xff] %v5252
        %5256 = vst [vmem:[#allocation7 + $0x10] sm:$0xff] %v5253
        %v5257 = vld [vmem:[#allocation3 + $0x7] sm:$0xff]
        %v5258 = vld [vmem:[#allocation3 + $0xf] sm:$0xff]
        %v5259 = vld [vmem:[#allocation3 + $0x17] sm:$0xff]
        %v5260 = vpack.c.bf16 %v5258, %v5257
        %v5261 = vpack.c.bf16 %v5259, %v5259
        %s5262 = scalar_lea.vmem [#allocation12], 256
        %v5263 = vld [vmem:[%s5262] sm:$0xf]
        %v5264 = vld [vmem:[%s5262 + $0x4] sm:$0xf]
        %v5265 = vld [vmem:[%s5262 + $0x8] sm:$0xf]
        %v5266 = vld [vmem:[%s5262 + $0xc] sm:$0xf]
        %v5267 = vld [vmem:[%s5262 + $0x10] sm:$0xf]
        %v5268 = vld [vmem:[%s5262 + $0x14] sm:$0xf]
        %v5269 = vld [vmem:[%s5262 + $0x18] sm:$0xf]
        %v5270 = vld [vmem:[%s5262 + $0x1c] sm:$0xf]
        %v5271 = vld [vmem:[%s5262 + $0x20] sm:$0xf]
        %v5272 = vld [vmem:[%s5262 + $0x24] sm:$0xf]
        %v5273 = vld [vmem:[%s5262 + $0x28] sm:$0xf]
        %v5274 = vld [vmem:[%s5262 + $0x2c] sm:$0xf]
        %v5275 = vld [vmem:[%s5262 + $0x30] sm:$0xf]
        %v5276 = vld [vmem:[%s5262 + $0x34] sm:$0xf]
        %v5277 = vld [vmem:[%s5262 + $0x38] sm:$0xf]
        %v5278 = vld [vmem:[%s5262 + $0x3c] sm:$0xf]
        %v5295 = vunpack.c.l.b16 %v5263
        %v5296 = vunpack.c.l.b16 %v5264
        %v5297 = vunpack.c.l.b16 %v5265
        %v5298 = vunpack.c.l.b16 %v5266
        %v5299 = vunpack.c.l.b16 %v5267
        %v5300 = vunpack.c.l.b16 %v5268
        %v5301 = vunpack.c.l.b16 %v5269
        %v5302 = vunpack.c.l.b16 %v5270
        %v5303 = vunpack.c.l.b16 %v5271
        %v5304 = vunpack.c.l.b16 %v5272
        %v5305 = vunpack.c.l.b16 %v5273
        %v5306 = vunpack.c.l.b16 %v5274
        %v5307 = vunpack.c.l.b16 %v5275
        %v5308 = vunpack.c.l.b16 %v5276
        %v5309 = vunpack.c.l.b16 %v5277
        %v5310 = vunpack.c.l.b16 %v5278
        %v5311 = vpack.c.b16 %v5296, %v5295
        %v5312 = vpack.c.b16 %v5298, %v5297
        %v5313 = vpack.c.b16 %v5300, %v5299
        %v5314 = vpack.c.b16 %v5302, %v5301
        %v5315 = vpack.c.b16 %v5304, %v5303
        %v5316 = vpack.c.b16 %v5306, %v5305
        %v5317 = vpack.c.b16 %v5308, %v5307
        %v5318 = vpack.c.b16 %v5310, %v5309
        %5327 = vmatpush.bf16.msra.mxu0 %v5318
        %5328 = vmatpush.bf16.msra.mxu0 %v5317
        %5329 = vmatpush.bf16.msra.mxu0 %v5316
        %5330 = vmatpush.bf16.msra.mxu0 %v5315
        %5331 = vmatpush.bf16.msra.mxu0 %v5314
        %5332 = vmatpush.bf16.msra.mxu0 %v5313
        %5333 = vmatpush.bf16.msra.mxu0 %v5312
        %5334 = vmatpush.bf16.msra.mxu0 %v5311
        %5335 = vmatmul.bf16.gmra.mxu0 %v5260
        %v5336 = vpop.f32.mrf.mxu0
        %v5337 = vadd.f32 0.0, %v5336
        %v5338 = vpop.f32.mrf.mxu0
        %v5339 = vadd.f32 0.0, %v5338
        %5340 = vmatmul.bf16.gmra.mxu0 %v5261
        %v5341 = vpop.f32.mrf.mxu0
        %v5342 = vadd.f32 0.0, %v5341
        %v5343 = vpop.f32.mrf.mxu0
        %5344 = vdwg.mxu0
        %v5345 = vld [vmem:[#allocation7] sm:$0xff]
        %v5346 = vld [vmem:[#allocation7 + $0x8] sm:$0xff]
        %v5347 = vld [vmem:[#allocation7 + $0x10] sm:$0xff]
        %v5348 = vadd.f32 %v5345, %v5337
        %v5349 = vadd.f32 %v5346, %v5339
        %v5350 = vadd.f32 %v5347, %v5342
        %5351 = vst [vmem:[#allocation7] sm:$0xff] %v5348
        %5352 = vst [vmem:[#allocation7 + $0x8] sm:$0xff] %v5349
        %5353 = vst [vmem:[#allocation7 + $0x10] sm:$0xff] %v5350
        %v5354 = vld [vmem:[#allocation3 + $0x8] sm:$0xff]
        %v5355 = vld [vmem:[#allocation3 + $0x10] sm:$0xff]
        %v5356 = vld [vmem:[#allocation3 + $0x18] sm:$0xff]
        %v5357 = vpack.c.bf16 %v5355, %v5354
        %v5358 = vpack.c.bf16 %v5356, %v5356
        %s5359 = scalar_lea.vmem [#allocation12], 320
        %v5360 = vld [vmem:[%s5359] sm:$0xf]
        %v5361 = vld [vmem:[%s5359 + $0x4] sm:$0xf]
        %v5362 = vld [vmem:[%s5359 + $0x8] sm:$0xf]
        %v5363 = vld [vmem:[%s5359 + $0xc] sm:$0xf]
        %v5364 = vld [vmem:[%s5359 + $0x10] sm:$0xf]
        %v5365 = vld [vmem:[%s5359 + $0x14] sm:$0xf]
        %v5366 = vld [vmem:[%s5359 + $0x18] sm:$0xf]
        %v5367 = vld [vmem:[%s5359 + $0x1c] sm:$0xf]
        %v5368 = vld [vmem:[%s5359 + $0x20] sm:$0xf]
        %v5369 = vld [vmem:[%s5359 + $0x24] sm:$0xf]
        %v5370 = vld [vmem:[%s5359 + $0x28] sm:$0xf]
        %v5371 = vld [vmem:[%s5359 + $0x2c] sm:$0xf]
        %v5372 = vld [vmem:[%s5359 + $0x30] sm:$0xf]
        %v5373 = vld [vmem:[%s5359 + $0x34] sm:$0xf]
        %v5374 = vld [vmem:[%s5359 + $0x38] sm:$0xf]
        %v5375 = vld [vmem:[%s5359 + $0x3c] sm:$0xf]
        %v5392 = vunpack.c.l.b16 %v5360
        %v5393 = vunpack.c.l.b16 %v5361
        %v5394 = vunpack.c.l.b16 %v5362
        %v5395 = vunpack.c.l.b16 %v5363
        %v5396 = vunpack.c.l.b16 %v5364
        %v5397 = vunpack.c.l.b16 %v5365
        %v5398 = vunpack.c.l.b16 %v5366
        %v5399 = vunpack.c.l.b16 %v5367
        %v5400 = vunpack.c.l.b16 %v5368
        %v5401 = vunpack.c.l.b16 %v5369
        %v5402 = vunpack.c.l.b16 %v5370
        %v5403 = vunpack.c.l.b16 %v5371
        %v5404 = vunpack.c.l.b16 %v5372
        %v5405 = vunpack.c.l.b16 %v5373
        %v5406 = vunpack.c.l.b16 %v5374
        %v5407 = vunpack.c.l.b16 %v5375
        %v5408 = vpack.c.b16 %v5393, %v5392
        %v5409 = vpack.c.b16 %v5395, %v5394
        %v5410 = vpack.c.b16 %v5397, %v5396
        %v5411 = vpack.c.b16 %v5399, %v5398
        %v5412 = vpack.c.b16 %v5401, %v5400
        %v5413 = vpack.c.b16 %v5403, %v5402
        %v5414 = vpack.c.b16 %v5405, %v5404
        %v5415 = vpack.c.b16 %v5407, %v5406
        %5424 = vmatpush.bf16.msra.mxu0 %v5415
        %5425 = vmatpush.bf16.msra.mxu0 %v5414
        %5426 = vmatpush.bf16.msra.mxu0 %v5413
        %5427 = vmatpush.bf16.msra.mxu0 %v5412
        %5428 = vmatpush.bf16.msra.mxu0 %v5411
        %5429 = vmatpush.bf16.msra.mxu0 %v5410
        %5430 = vmatpush.bf16.msra.mxu0 %v5409
        %5431 = vmatpush.bf16.msra.mxu0 %v5408
        %5432 = vmatmul.bf16.gmra.mxu0 %v5357
        %v5433 = vpop.f32.mrf.mxu0
        %v5434 = vadd.f32 0.0, %v5433
        %v5435 = vpop.f32.mrf.mxu0
        %v5436 = vadd.f32 0.0, %v5435
        %5437 = vmatmul.bf16.gmra.mxu0 %v5358
        %v5438 = vpop.f32.mrf.mxu0
        %v5439 = vadd.f32 0.0, %v5438
        %v5440 = vpop.f32.mrf.mxu0
        %5441 = vdwg.mxu0
        %v5442 = vld [vmem:[#allocation7] sm:$0xff]
        %v5443 = vld [vmem:[#allocation7 + $0x8] sm:$0xff]
        %v5444 = vld [vmem:[#allocation7 + $0x10] sm:$0xff]
        %v5445 = vadd.f32 %v5442, %v5434
        %v5446 = vadd.f32 %v5443, %v5436
        %v5447 = vadd.f32 %v5444, %v5439
        %5448 = vst [vmem:[#allocation7] sm:$0xff] %v5445
        %5449 = vst [vmem:[#allocation7 + $0x8] sm:$0xff] %v5446
        %5450 = vst [vmem:[#allocation7 + $0x10] sm:$0xff] %v5447
        %v5451 = vld [vmem:[#allocation3 + $0xc] sm:$0xff]
        %v5452 = vld [vmem:[#allocation3 + $0x14] sm:$0xff]
        %v5453 = vld [vmem:[#allocation3 + $0x1c] sm:$0xff]
        %v5454 = vpack.c.bf16 %v5452, %v5451
        %v5455 = vpack.c.bf16 %v5453, %v5453
        %s5456 = scalar_lea.vmem [#allocation12], 384
        %v5457 = vld [vmem:[%s5456] sm:$0xf]
        %v5458 = vld [vmem:[%s5456 + $0x4] sm:$0xf]
        %v5459 = vld [vmem:[%s5456 + $0x8] sm:$0xf]
        %v5460 = vld [vmem:[%s5456 + $0xc] sm:$0xf]
        %v5461 = vld [vmem:[%s5456 + $0x10] sm:$0xf]
        %v5462 = vld [vmem:[%s5456 + $0x14] sm:$0xf]
        %v5463 = vld [vmem:[%s5456 + $0x18] sm:$0xf]
        %v5464 = vld [vmem:[%s5456 + $0x1c] sm:$0xf]
        %v5465 = vld [vmem:[%s5456 + $0x20] sm:$0xf]
        %v5466 = vld [vmem:[%s5456 + $0x24] sm:$0xf]
        %v5467 = vld [vmem:[%s5456 + $0x28] sm:$0xf]
        %v5468 = vld [vmem:[%s5456 + $0x2c] sm:$0xf]
        %v5469 = vld [vmem:[%s5456 + $0x30] sm:$0xf]
        %v5470 = vld [vmem:[%s5456 + $0x34] sm:$0xf]
        %v5471 = vld [vmem:[%s5456 + $0x38] sm:$0xf]
        %v5472 = vld [vmem:[%s5456 + $0x3c] sm:$0xf]
        %v5489 = vunpack.c.l.b16 %v5457
        %v5490 = vunpack.c.l.b16 %v5458
        %v5491 = vunpack.c.l.b16 %v5459
        %v5492 = vunpack.c.l.b16 %v5460
        %v5493 = vunpack.c.l.b16 %v5461
        %v5494 = vunpack.c.l.b16 %v5462
        %v5495 = vunpack.c.l.b16 %v5463
        %v5496 = vunpack.c.l.b16 %v5464
        %v5497 = vunpack.c.l.b16 %v5465
        %v5498 = vunpack.c.l.b16 %v5466
        %v5499 = vunpack.c.l.b16 %v5467
        %v5500 = vunpack.c.l.b16 %v5468
        %v5501 = vunpack.c.l.b16 %v5469
        %v5502 = vunpack.c.l.b16 %v5470
        %v5503 = vunpack.c.l.b16 %v5471
        %v5504 = vunpack.c.l.b16 %v5472
        %v5505 = vpack.c.b16 %v5490, %v5489
        %v5506 = vpack.c.b16 %v5492, %v5491
        %v5507 = vpack.c.b16 %v5494, %v5493
        %v5508 = vpack.c.b16 %v5496, %v5495
        %v5509 = vpack.c.b16 %v5498, %v5497
        %v5510 = vpack.c.b16 %v5500, %v5499
        %v5511 = vpack.c.b16 %v5502, %v5501
        %v5512 = vpack.c.b16 %v5504, %v5503
        %5521 = vmatpush.bf16.msra.mxu0 %v5512
        %5522 = vmatpush.bf16.msra.mxu0 %v5511
        %5523 = vmatpush.bf16.msra.mxu0 %v5510
        %5524 = vmatpush.bf16.msra.mxu0 %v5509
        %5525 = vmatpush.bf16.msra.mxu0 %v5508
        %5526 = vmatpush.bf16.msra.mxu0 %v5507
        %5527 = vmatpush.bf16.msra.mxu0 %v5506
        %5528 = vmatpush.bf16.msra.mxu0 %v5505
        %5529 = vmatmul.bf16.gmra.mxu0 %v5454
        %v5530 = vpop.f32.mrf.mxu0
        %v5531 = vadd.f32 0.0, %v5530
        %v5532 = vpop.f32.mrf.mxu0
        %v5533 = vadd.f32 0.0, %v5532
        %5534 = vmatmul.bf16.gmra.mxu0 %v5455
        %v5535 = vpop.f32.mrf.mxu0
        %v5536 = vadd.f32 0.0, %v5535
        %v5537 = vpop.f32.mrf.mxu0
        %5538 = vdwg.mxu0
        %v5539 = vld [vmem:[#allocation7] sm:$0xff]
        %v5540 = vld [vmem:[#allocation7 + $0x8] sm:$0xff]
        %v5541 = vld [vmem:[#allocation7 + $0x10] sm:$0xff]
        %v5542 = vadd.f32 %v5539, %v5531
        %v5543 = vadd.f32 %v5540, %v5533
        %v5544 = vadd.f32 %v5541, %v5536
        %5545 = vst [vmem:[#allocation7] sm:$0xff] %v5542
        %5546 = vst [vmem:[#allocation7 + $0x8] sm:$0xff] %v5543
        %5547 = vst [vmem:[#allocation7 + $0x10] sm:$0xff] %v5544
        %v5548 = vld [vmem:[#allocation3 + $0xd] sm:$0xff]
        %v5549 = vld [vmem:[#allocation3 + $0x15] sm:$0xff]
        %v5550 = vld [vmem:[#allocation3 + $0x1d] sm:$0xff]
        %v5551 = vpack.c.bf16 %v5549, %v5548
        %v5552 = vpack.c.bf16 %v5550, %v5550
        %s5553 = scalar_lea.vmem [#allocation12], 448
        %v5554 = vld [vmem:[%s5553] sm:$0xf]
        %v5555 = vld [vmem:[%s5553 + $0x4] sm:$0xf]
        %v5556 = vld [vmem:[%s5553 + $0x8] sm:$0xf]
        %v5557 = vld [vmem:[%s5553 + $0xc] sm:$0xf]
        %v5558 = vld [vmem:[%s5553 + $0x10] sm:$0xf]
        %v5559 = vld [vmem:[%s5553 + $0x14] sm:$0xf]
        %v5560 = vld [vmem:[%s5553 + $0x18] sm:$0xf]
        %v5561 = vld [vmem:[%s5553 + $0x1c] sm:$0xf]
        %v5562 = vld [vmem:[%s5553 + $0x20] sm:$0xf]
        %v5563 = vld [vmem:[%s5553 + $0x24] sm:$0xf]
        %v5564 = vld [vmem:[%s5553 + $0x28] sm:$0xf]
        %v5565 = vld [vmem:[%s5553 + $0x2c] sm:$0xf]
        %v5566 = vld [vmem:[%s5553 + $0x30] sm:$0xf]
        %v5567 = vld [vmem:[%s5553 + $0x34] sm:$0xf]
        %v5568 = vld [vmem:[%s5553 + $0x38] sm:$0xf]
        %v5569 = vld [vmem:[%s5553 + $0x3c] sm:$0xf]
        %v5586 = vunpack.c.l.b16 %v5554
        %v5587 = vunpack.c.l.b16 %v5555
        %v5588 = vunpack.c.l.b16 %v5556
        %v5589 = vunpack.c.l.b16 %v5557
        %v5590 = vunpack.c.l.b16 %v5558
        %v5591 = vunpack.c.l.b16 %v5559
        %v5592 = vunpack.c.l.b16 %v5560
        %v5593 = vunpack.c.l.b16 %v5561
        %v5594 = vunpack.c.l.b16 %v5562
        %v5595 = vunpack.c.l.b16 %v5563
        %v5596 = vunpack.c.l.b16 %v5564
        %v5597 = vunpack.c.l.b16 %v5565
        %v5598 = vunpack.c.l.b16 %v5566
        %v5599 = vunpack.c.l.b16 %v5567
        %v5600 = vunpack.c.l.b16 %v5568
        %v5601 = vunpack.c.l.b16 %v5569
        %v5602 = vpack.c.b16 %v5587, %v5586
        %v5603 = vpack.c.b16 %v5589, %v5588
        %v5604 = vpack.c.b16 %v5591, %v5590
        %v5605 = vpack.c.b16 %v5593, %v5592
        %v5606 = vpack.c.b16 %v5595, %v5594
        %v5607 = vpack.c.b16 %v5597, %v5596
        %v5608 = vpack.c.b16 %v5599, %v5598
        %v5609 = vpack.c.b16 %v5601, %v5600
        %5618 = vmatpush.bf16.msra.mxu0 %v5609
        %5619 = vmatpush.bf16.msra.mxu0 %v5608
        %5620 = vmatpush.bf16.msra.mxu0 %v5607
        %5621 = vmatpush.bf16.msra.mxu0 %v5606
        %5622 = vmatpush.bf16.msra.mxu0 %v5605
        %5623 = vmatpush.bf16.msra.mxu0 %v5604
        %5624 = vmatpush.bf16.msra.mxu0 %v5603
        %5625 = vmatpush.bf16.msra.mxu0 %v5602
        %5626 = vmatmul.bf16.gmra.mxu0 %v5551
        %v5627 = vpop.f32.mrf.mxu0
        %v5628 = vadd.f32 0.0, %v5627
        %v5629 = vpop.f32.mrf.mxu0
        %v5630 = vadd.f32 0.0, %v5629
        %5631 = vmatmul.bf16.gmra.mxu0 %v5552
        %v5632 = vpop.f32.mrf.mxu0
        %v5633 = vadd.f32 0.0, %v5632
        %v5634 = vpop.f32.mrf.mxu0
        %5635 = vdwg.mxu0
        %v5636 = vld [vmem:[#allocation7] sm:$0xff]
        %v5637 = vld [vmem:[#allocation7 + $0x8] sm:$0xff]
        %v5638 = vld [vmem:[#allocation7 + $0x10] sm:$0xff]
        %v5639 = vadd.f32 %v5636, %v5628
        %v5640 = vadd.f32 %v5637, %v5630
        %v5641 = vadd.f32 %v5638, %v5633
        %5642 = vst [vmem:[#allocation7] sm:$0xff] %v5639
        %5643 = vst [vmem:[#allocation7 + $0x8] sm:$0xff] %v5640
        %5644 = vst [vmem:[#allocation7 + $0x10] sm:$0xff] %v5641
        %v5645 = vld [vmem:[#allocation3 + $0xe] sm:$0xff]
        %v5646 = vld [vmem:[#allocation3 + $0x16] sm:$0xff]
        %v5647 = vld [vmem:[#allocation3 + $0x1e] sm:$0xff]
        %v5648 = vpack.c.bf16 %v5646, %v5645
        %v5649 = vpack.c.bf16 %v5647, %v5647
        %s5650 = scalar_lea.vmem [#allocation12], 512
        %v5651 = vld [vmem:[%s5650] sm:$0xf]
        %v5652 = vld [vmem:[%s5650 + $0x4] sm:$0xf]
        %v5653 = vld [vmem:[%s5650 + $0x8] sm:$0xf]
        %v5654 = vld [vmem:[%s5650 + $0xc] sm:$0xf]
        %v5655 = vld [vmem:[%s5650 + $0x10] sm:$0xf]
        %v5656 = vld [vmem:[%s5650 + $0x14] sm:$0xf]
        %v5657 = vld [vmem:[%s5650 + $0x18] sm:$0xf]
        %v5658 = vld [vmem:[%s5650 + $0x1c] sm:$0xf]
        %v5659 = vld [vmem:[%s5650 + $0x20] sm:$0xf]
        %v5660 = vld [vmem:[%s5650 + $0x24] sm:$0xf]
        %v5661 = vld [vmem:[%s5650 + $0x28] sm:$0xf]
        %v5662 = vld [vmem:[%s5650 + $0x2c] sm:$0xf]
        %v5663 = vld [vmem:[%s5650 + $0x30] sm:$0xf]
        %v5664 = vld [vmem:[%s5650 + $0x34] sm:$0xf]
        %v5665 = vld [vmem:[%s5650 + $0x38] sm:$0xf]
        %v5666 = vld [vmem:[%s5650 + $0x3c] sm:$0xf]
        %v5683 = vunpack.c.l.b16 %v5651
        %v5684 = vunpack.c.l.b16 %v5652
        %v5685 = vunpack.c.l.b16 %v5653
        %v5686 = vunpack.c.l.b16 %v5654
        %v5687 = vunpack.c.l.b16 %v5655
        %v5688 = vunpack.c.l.b16 %v5656
        %v5689 = vunpack.c.l.b16 %v5657
        %v5690 = vunpack.c.l.b16 %v5658
        %v5691 = vunpack.c.l.b16 %v5659
        %v5692 = vunpack.c.l.b16 %v5660
        %v5693 = vunpack.c.l.b16 %v5661
        %v5694 = vunpack.c.l.b16 %v5662
        %v5695 = vunpack.c.l.b16 %v5663
        %v5696 = vunpack.c.l.b16 %v5664
        %v5697 = vunpack.c.l.b16 %v5665
        %v5698 = vunpack.c.l.b16 %v5666
        %v5699 = vpack.c.b16 %v5684, %v5683
        %v5700 = vpack.c.b16 %v5686, %v5685
        %v5701 = vpack.c.b16 %v5688, %v5687
        %v5702 = vpack.c.b16 %v5690, %v5689
        %v5703 = vpack.c.b16 %v5692, %v5691
        %v5704 = vpack.c.b16 %v5694, %v5693
        %v5705 = vpack.c.b16 %v5696, %v5695
        %v5706 = vpack.c.b16 %v5698, %v5697
        %5715 = vmatpush.bf16.msra.mxu0 %v5706
        %5716 = vmatpush.bf16.msra.mxu0 %v5705
        %5717 = vmatpush.bf16.msra.mxu0 %v5704
        %5718 = vmatpush.bf16.msra.mxu0 %v5703
        %5719 = vmatpush.bf16.msra.mxu0 %v5702
        %5720 = vmatpush.bf16.msra.mxu0 %v5701
        %5721 = vmatpush.bf16.msra.mxu0 %v5700
        %5722 = vmatpush.bf16.msra.mxu0 %v5699
        %5723 = vmatmul.bf16.gmra.mxu0 %v5648
        %v5724 = vpop.f32.mrf.mxu0
        %v5725 = vadd.f32 0.0, %v5724
        %v5726 = vpop.f32.mrf.mxu0
        %v5727 = vadd.f32 0.0, %v5726
        %5728 = vmatmul.bf16.gmra.mxu0 %v5649
        %v5729 = vpop.f32.mrf.mxu0
        %v5730 = vadd.f32 0.0, %v5729
        %v5731 = vpop.f32.mrf.mxu0
        %5732 = vdwg.mxu0
        %v5733 = vld [vmem:[#allocation7] sm:$0xff]
        %v5734 = vld [vmem:[#allocation7 + $0x8] sm:$0xff]
        %v5735 = vld [vmem:[#allocation7 + $0x10] sm:$0xff]
        %v5736 = vadd.f32 %v5733, %v5725
        %v5737 = vadd.f32 %v5734, %v5727
        %v5738 = vadd.f32 %v5735, %v5730
        %5739 = vst [vmem:[#allocation7] sm:$0xff] %v5736
        %5740 = vst [vmem:[#allocation7 + $0x8] sm:$0xff] %v5737
        %5741 = vst [vmem:[#allocation7 + $0x10] sm:$0xff] %v5738
        %v5742 = vld [vmem:[#allocation7] sm:$0xff]
        %v5743 = vld [vmem:[#allocation7 + $0x8] sm:$0xff]
        %v5744 = vld [vmem:[#allocation7 + $0x10] sm:$0xff]
        %v5745 = vld [vmem:[%s6] sm:$0x1]
        %v5747 = vperm.slane %v5745, 0
        %v5749 = vadd.f32 %v5742, %v5747
        %v5750 = vadd.f32 %v5743, %v5747
        %v5751 = vadd.f32 %v5744, %v5747
        %v5752 = vmax.f32 %v5749, 0.0
        %v5753 = vmax.f32 %v5750, 0.0
        %v5754 = vmax.f32 %v5751, 0.0
        %5755 = vst [vmem:[#allocation7] sm:$0xff] %v5752
        %5756 = vst [vmem:[#allocation7 + $0x8] sm:$0xff] %v5753
        %5757 = vst [vmem:[#allocation7 + $0x10] sm:$0xff] %v5754
        %v5758 = vld [vmem:[#allocation7] ss:$2 sm:$0x3]
        %s5759 = scalar_lea.vmem [#allocation7], 1
        %v5760 = vld [vmem:[%s5759] ss:$2 sm:$0x3]
        %s5761 = scalar_lea.vmem [#allocation7], 6
        %v5762 = vld [vmem:[%s5761] ss:$2 sm:$0x3]
        %s5763 = scalar_lea.vmem [#allocation7], 7
        %v5764 = vld [vmem:[%s5763] ss:$2 sm:$0x3]
        %v5765 = vmax.f32 %v5758, %v5760
        %v5766 = vmax.f32 %v5762, %v5764
        %v5767 = vmax.f32 %v5765, %v5766
        %5768 = vst [vmem:[#allocation4 + $0x5] sm:$0x3] %v5767
        %s5769 = scalar_lea.vmem [#allocation7], 12
        %v5770 = vld [vmem:[%s5769] ss:$2 sm:$0x3]
        %s5771 = scalar_lea.vmem [#allocation7], 13
        %v5772 = vld [vmem:[%s5771] ss:$2 sm:$0x3]
        %s5773 = scalar_lea.vmem [#allocation7], 18
        %v5774 = vld [vmem:[%s5773] ss:$2 sm:$0x3]
        %s5775 = scalar_lea.vmem [#allocation7], 19
        %v5776 = vld [vmem:[%s5775] ss:$2 sm:$0x3]
        %v5777 = vmax.f32 %v5770, %v5772
        %v5778 = vmax.f32 %v5774, %v5776
        %v5779 = vmax.f32 %v5777, %v5778
        %5780 = vst [vmem:[#allocation4 + $0x9] sm:$0x3] %v5779
        %v5781 = vld [vmem:[#allocation4] sm:$0xff]
        %v5782 = vpack.c.bf16 %v5781, %v5781
        %v5783 = vld [vmem:[%s7] sm:$0xff]
        %v5784 = vld [vmem:[%s7 + $0x8] sm:$0xff]
        %v5785 = vld [vmem:[%s7 + $0x10] sm:$0xff]
        %v5786 = vld [vmem:[%s7 + $0x18] sm:$0xff]
        %v5787 = vld [vmem:[%s7 + $0x20] sm:$0xff]
        %v5788 = vld [vmem:[%s7 + $0x28] sm:$0xff]
        %v5789 = vld [vmem:[%s7 + $0x30] sm:$0xff]
        %v5790 = vld [vmem:[%s7 + $0x38] sm:$0xff]
        %v5791 = vld [vmem:[%s7 + $0x40] sm:$0xff]
        %v5792 = vld [vmem:[%s7 + $0x48] sm:$0xff]
        %v5793 = vld [vmem:[%s7 + $0x50] sm:$0xff]
        %v5794 = vld [vmem:[%s7 + $0x58] sm:$0xff]
        %v5795 = vld [vmem:[%s7 + $0x60] sm:$0xff]
        %v5796 = vld [vmem:[%s7 + $0x68] sm:$0xff]
        %v5797 = vld [vmem:[%s7 + $0x70] sm:$0xff]
        %v5798 = vld [vmem:[%s7 + $0x78] sm:$0xff]
        %v5815 = vunpack.c.l.b16 %v5783
        %v5816 = vunpack.c.h.b16 %v5783
        %v5817 = vunpack.c.l.b16 %v5784
        %v5818 = vunpack.c.h.b16 %v5784
        %v5819 = vunpack.c.l.b16 %v5785
        %v5820 = vunpack.c.h.b16 %v5785
        %v5821 = vunpack.c.l.b16 %v5786
        %v5822 = vunpack.c.h.b16 %v5786
        %v5823 = vunpack.c.l.b16 %v5787
        %v5824 = vunpack.c.h.b16 %v5787
        %v5825 = vunpack.c.l.b16 %v5788
        %v5826 = vunpack.c.h.b16 %v5788
        %v5827 = vunpack.c.l.b16 %v5789
        %v5828 = vunpack.c.h.b16 %v5789
        %v5829 = vunpack.c.l.b16 %v5790
        %v5830 = vunpack.c.h.b16 %v5790
        %v5831 = vunpack.c.l.b16 %v5791
        %v5832 = vunpack.c.h.b16 %v5791
        %v5833 = vunpack.c.l.b16 %v5792
        %v5834 = vunpack.c.h.b16 %v5792
        %v5835 = vunpack.c.l.b16 %v5793
        %v5836 = vunpack.c.h.b16 %v5793
        %v5837 = vunpack.c.l.b16 %v5794
        %v5838 = vunpack.c.h.b16 %v5794
        %v5839 = vunpack.c.l.b16 %v5795
        %v5840 = vunpack.c.h.b16 %v5795
        %v5841 = vunpack.c.l.b16 %v5796
        %v5842 = vunpack.c.h.b16 %v5796
        %v5843 = vunpack.c.l.b16 %v5797
        %v5844 = vunpack.c.h.b16 %v5797
        %v5845 = vunpack.c.l.b16 %v5798
        %v5846 = vunpack.c.h.b16 %v5798
        %v5847 = vpack.c.b16 %v5817, %v5815
        %v5848 = vpack.c.b16 %v5818, %v5816
        %v5849 = vpack.c.b16 %v5821, %v5819
        %v5850 = vpack.c.b16 %v5822, %v5820
        %v5851 = vpack.c.b16 %v5825, %v5823
        %v5852 = vpack.c.b16 %v5826, %v5824
        %v5853 = vpack.c.b16 %v5829, %v5827
        %v5854 = vpack.c.b16 %v5830, %v5828
        %v5855 = vpack.c.b16 %v5833, %v5831
        %v5856 = vpack.c.b16 %v5834, %v5832
        %v5857 = vpack.c.b16 %v5837, %v5835
        %v5858 = vpack.c.b16 %v5838, %v5836
        %v5859 = vpack.c.b16 %v5841, %v5839
        %v5860 = vpack.c.b16 %v5842, %v5840
        %v5861 = vpack.c.b16 %v5845, %v5843
        %v5862 = vpack.c.b16 %v5846, %v5844
        %5879 = vmatpush.bf16.msra.mxu0 %v5861
        %5880 = vmatpush.bf16.msra.mxu0 %v5859
        %5881 = vmatpush.bf16.msra.mxu0 %v5857
        %5882 = vmatpush.bf16.msra.mxu0 %v5855
        %5883 = vmatpush.bf16.msra.mxu0 %v5853
        %5884 = vmatpush.bf16.msra.mxu0 %v5851
        %5885 = vmatpush.bf16.msra.mxu0 %v5849
        %5886 = vmatpush.bf16.msra.mxu0 %v5847
        %5887 = vmatmul.bf16.gmra.mxu0 %v5782
        %v5888 = vpop.f32.mrf.mxu0
        %v5889 = vadd.f32 0.0, %v5888
        %v5890 = vpop.f32.mrf.mxu0
        %5891 = vdwg.mxu0
        %5892 = vmatpush.bf16.msra.mxu0 %v5862
        %5893 = vmatpush.bf16.msra.mxu0 %v5860
        %5894 = vmatpush.bf16.msra.mxu0 %v5858
        %5895 = vmatpush.bf16.msra.mxu0 %v5856
        %5896 = vmatpush.bf16.msra.mxu0 %v5854
        %5897 = vmatpush.bf16.msra.mxu0 %v5852
        %5898 = vmatpush.bf16.msra.mxu0 %v5850
        %5899 = vmatpush.bf16.msra.mxu0 %v5848
        %5900 = vmatmul.bf16.gmra.mxu0 %v5782
        %v5901 = vpop.f32.mrf.mxu0
        %v5902 = vadd.f32 0.0, %v5901
        %v5903 = vpop.f32.mrf.mxu0
        %5904 = vdwg.mxu0
        %5905 = vst [vmem:[#allocation8] sm:$0xff] %v5889
        %5906 = vst [vmem:[#allocation8 + $0x8] sm:$0xff] %v5902
        %v5907 = vld [vmem:[#allocation4 + $0x1] sm:$0xff]
        %v5908 = vpack.c.bf16 %v5907, %v5907
        %s5909 = scalar_lea.vmem %s7, 128
        %v5910 = vld [vmem:[%s5909] sm:$0xff]
        %v5911 = vld [vmem:[%s5909 + $0x8] sm:$0xff]
        %v5912 = vld [vmem:[%s5909 + $0x10] sm:$0xff]
        %v5913 = vld [vmem:[%s5909 + $0x18] sm:$0xff]
        %v5914 = vld [vmem:[%s5909 + $0x20] sm:$0xff]
        %v5915 = vld [vmem:[%s5909 + $0x28] sm:$0xff]
        %v5916 = vld [vmem:[%s5909 + $0x30] sm:$0xff]
        %v5917 = vld [vmem:[%s5909 + $0x38] sm:$0xff]
        %v5918 = vld [vmem:[%s5909 + $0x40] sm:$0xff]
        %v5919 = vld [vmem:[%s5909 + $0x48] sm:$0xff]
        %v5920 = vld [vmem:[%s5909 + $0x50] sm:$0xff]
        %v5921 = vld [vmem:[%s5909 + $0x58] sm:$0xff]
        %v5922 = vld [vmem:[%s5909 + $0x60] sm:$0xff]
        %v5923 = vld [vmem:[%s5909 + $0x68] sm:$0xff]
        %v5924 = vld [vmem:[%s5909 + $0x70] sm:$0xff]
        %v5925 = vld [vmem:[%s5909 + $0x78] sm:$0xff]
        %v5942 = vunpack.c.l.b16 %v5910
        %v5943 = vunpack.c.h.b16 %v5910
        %v5944 = vunpack.c.l.b16 %v5911
        %v5945 = vunpack.c.h.b16 %v5911
        %v5946 = vunpack.c.l.b16 %v5912
        %v5947 = vunpack.c.h.b16 %v5912
        %v5948 = vunpack.c.l.b16 %v5913
        %v5949 = vunpack.c.h.b16 %v5913
        %v5950 = vunpack.c.l.b16 %v5914
        %v5951 = vunpack.c.h.b16 %v5914
        %v5952 = vunpack.c.l.b16 %v5915
        %v5953 = vunpack.c.h.b16 %v5915
        %v5954 = vunpack.c.l.b16 %v5916
        %v5955 = vunpack.c.h.b16 %v5916
        %v5956 = vunpack.c.l.b16 %v5917
        %v5957 = vunpack.c.h.b16 %v5917
        %v5958 = vunpack.c.l.b16 %v5918
        %v5959 = vunpack.c.h.b16 %v5918
        %v5960 = vunpack.c.l.b16 %v5919
        %v5961 = vunpack.c.h.b16 %v5919
        %v5962 = vunpack.c.l.b16 %v5920
        %v5963 = vunpack.c.h.b16 %v5920
        %v5964 = vunpack.c.l.b16 %v5921
        %v5965 = vunpack.c.h.b16 %v5921
        %v5966 = vunpack.c.l.b16 %v5922
        %v5967 = vunpack.c.h.b16 %v5922
        %v5968 = vunpack.c.l.b16 %v5923
        %v5969 = vunpack.c.h.b16 %v5923
        %v5970 = vunpack.c.l.b16 %v5924
        %v5971 = vunpack.c.h.b16 %v5924
        %v5972 = vunpack.c.l.b16 %v5925
        %v5973 = vunpack.c.h.b16 %v5925
        %v5974 = vpack.c.b16 %v5944, %v5942
        %v5975 = vpack.c.b16 %v5945, %v5943
        %v5976 = vpack.c.b16 %v5948, %v5946
        %v5977 = vpack.c.b16 %v5949, %v5947
        %v5978 = vpack.c.b16 %v5952, %v5950
        %v5979 = vpack.c.b16 %v5953, %v5951
        %v5980 = vpack.c.b16 %v5956, %v5954
        %v5981 = vpack.c.b16 %v5957, %v5955
        %v5982 = vpack.c.b16 %v5960, %v5958
        %v5983 = vpack.c.b16 %v5961, %v5959
        %v5984 = vpack.c.b16 %v5964, %v5962
        %v5985 = vpack.c.b16 %v5965, %v5963
        %v5986 = vpack.c.b16 %v5968, %v5966
        %v5987 = vpack.c.b16 %v5969, %v5967
        %v5988 = vpack.c.b16 %v5972, %v5970
        %v5989 = vpack.c.b16 %v5973, %v5971
        %6006 = vmatpush.bf16.msra.mxu0 %v5988
        %6007 = vmatpush.bf16.msra.mxu0 %v5986
        %6008 = vmatpush.bf16.msra.mxu0 %v5984
        %6009 = vmatpush.bf16.msra.mxu0 %v5982
        %6010 = vmatpush.bf16.msra.mxu0 %v5980
        %6011 = vmatpush.bf16.msra.mxu0 %v5978
        %6012 = vmatpush.bf16.msra.mxu0 %v5976
        %6013 = vmatpush.bf16.msra.mxu0 %v5974
        %6014 = vmatmul.bf16.gmra.mxu0 %v5908
        %v6015 = vpop.f32.mrf.mxu0
        %v6016 = vadd.f32 0.0, %v6015
        %v6017 = vpop.f32.mrf.mxu0
        %6018 = vdwg.mxu0
        %6019 = vmatpush.bf16.msra.mxu0 %v5989
        %6020 = vmatpush.bf16.msra.mxu0 %v5987
        %6021 = vmatpush.bf16.msra.mxu0 %v5985
        %6022 = vmatpush.bf16.msra.mxu0 %v5983
        %6023 = vmatpush.bf16.msra.mxu0 %v5981
        %6024 = vmatpush.bf16.msra.mxu0 %v5979
        %6025 = vmatpush.bf16.msra.mxu0 %v5977
        %6026 = vmatpush.bf16.msra.mxu0 %v5975
        %6027 = vmatmul.bf16.gmra.mxu0 %v5908
        %v6028 = vpop.f32.mrf.mxu0
        %v6029 = vadd.f32 0.0, %v6028
        %v6030 = vpop.f32.mrf.mxu0
        %6031 = vdwg.mxu0
        %v6032 = vld [vmem:[#allocation8] sm:$0xff]
        %v6033 = vld [vmem:[#allocation8 + $0x8] sm:$0xff]
        %v6034 = vadd.f32 %v6032, %v6016
        %v6035 = vadd.f32 %v6033, %v6029
        %6036 = vst [vmem:[#allocation8] sm:$0xff] %v6034
        %6037 = vst [vmem:[#allocation8 + $0x8] sm:$0xff] %v6035
        %v6038 = vld [vmem:[#allocation4 + $0x2] sm:$0xff]
        %v6039 = vpack.c.bf16 %v6038, %v6038
        %s6040 = scalar_lea.vmem %s7, 256
        %v6041 = vld [vmem:[%s6040] sm:$0xff]
        %v6042 = vld [vmem:[%s6040 + $0x8] sm:$0xff]
        %v6043 = vld [vmem:[%s6040 + $0x10] sm:$0xff]
        %v6044 = vld [vmem:[%s6040 + $0x18] sm:$0xff]
        %v6045 = vld [vmem:[%s6040 + $0x20] sm:$0xff]
        %v6046 = vld [vmem:[%s6040 + $0x28] sm:$0xff]
        %v6047 = vld [vmem:[%s6040 + $0x30] sm:$0xff]
        %v6048 = vld [vmem:[%s6040 + $0x38] sm:$0xff]
        %v6049 = vld [vmem:[%s6040 + $0x40] sm:$0xff]
        %v6050 = vld [vmem:[%s6040 + $0x48] sm:$0xff]
        %v6051 = vld [vmem:[%s6040 + $0x50] sm:$0xff]
        %v6052 = vld [vmem:[%s6040 + $0x58] sm:$0xff]
        %v6053 = vld [vmem:[%s6040 + $0x60] sm:$0xff]
        %v6054 = vld [vmem:[%s6040 + $0x68] sm:$0xff]
        %v6055 = vld [vmem:[%s6040 + $0x70] sm:$0xff]
        %v6056 = vld [vmem:[%s6040 + $0x78] sm:$0xff]
        %v6073 = vunpack.c.l.b16 %v6041
        %v6074 = vunpack.c.h.b16 %v6041
        %v6075 = vunpack.c.l.b16 %v6042
        %v6076 = vunpack.c.h.b16 %v6042
        %v6077 = vunpack.c.l.b16 %v6043
        %v6078 = vunpack.c.h.b16 %v6043
        %v6079 = vunpack.c.l.b16 %v6044
        %v6080 = vunpack.c.h.b16 %v6044
        %v6081 = vunpack.c.l.b16 %v6045
        %v6082 = vunpack.c.h.b16 %v6045
        %v6083 = vunpack.c.l.b16 %v6046
        %v6084 = vunpack.c.h.b16 %v6046
        %v6085 = vunpack.c.l.b16 %v6047
        %v6086 = vunpack.c.h.b16 %v6047
        %v6087 = vunpack.c.l.b16 %v6048
        %v6088 = vunpack.c.h.b16 %v6048
        %v6089 = vunpack.c.l.b16 %v6049
        %v6090 = vunpack.c.h.b16 %v6049
        %v6091 = vunpack.c.l.b16 %v6050
        %v6092 = vunpack.c.h.b16 %v6050
        %v6093 = vunpack.c.l.b16 %v6051
        %v6094 = vunpack.c.h.b16 %v6051
        %v6095 = vunpack.c.l.b16 %v6052
        %v6096 = vunpack.c.h.b16 %v6052
        %v6097 = vunpack.c.l.b16 %v6053
        %v6098 = vunpack.c.h.b16 %v6053
        %v6099 = vunpack.c.l.b16 %v6054
        %v6100 = vunpack.c.h.b16 %v6054
        %v6101 = vunpack.c.l.b16 %v6055
        %v6102 = vunpack.c.h.b16 %v6055
        %v6103 = vunpack.c.l.b16 %v6056
        %v6104 = vunpack.c.h.b16 %v6056
        %v6105 = vpack.c.b16 %v6075, %v6073
        %v6106 = vpack.c.b16 %v6076, %v6074
        %v6107 = vpack.c.b16 %v6079, %v6077
        %v6108 = vpack.c.b16 %v6080, %v6078
        %v6109 = vpack.c.b16 %v6083, %v6081
        %v6110 = vpack.c.b16 %v6084, %v6082
        %v6111 = vpack.c.b16 %v6087, %v6085
        %v6112 = vpack.c.b16 %v6088, %v6086
        %v6113 = vpack.c.b16 %v6091, %v6089
        %v6114 = vpack.c.b16 %v6092, %v6090
        %v6115 = vpack.c.b16 %v6095, %v6093
        %v6116 = vpack.c.b16 %v6096, %v6094
        %v6117 = vpack.c.b16 %v6099, %v6097
        %v6118 = vpack.c.b16 %v6100, %v6098
        %v6119 = vpack.c.b16 %v6103, %v6101
        %v6120 = vpack.c.b16 %v6104, %v6102
        %6137 = vmatpush.bf16.msra.mxu0 %v6119
        %6138 = vmatpush.bf16.msra.mxu0 %v6117
        %6139 = vmatpush.bf16.msra.mxu0 %v6115
        %6140 = vmatpush.bf16.msra.mxu0 %v6113
        %6141 = vmatpush.bf16.msra.mxu0 %v6111
        %6142 = vmatpush.bf16.msra.mxu0 %v6109
        %6143 = vmatpush.bf16.msra.mxu0 %v6107
        %6144 = vmatpush.bf16.msra.mxu0 %v6105
        %6145 = vmatmul.bf16.gmra.mxu0 %v6039
        %v6146 = vpop.f32.mrf.mxu0
        %v6147 = vadd.f32 0.0, %v6146
        %v6148 = vpop.f32.mrf.mxu0
        %6149 = vdwg.mxu0
        %6150 = vmatpush.bf16.msra.mxu0 %v6120
        %6151 = vmatpush.bf16.msra.mxu0 %v6118
        %6152 = vmatpush.bf16.msra.mxu0 %v6116
        %6153 = vmatpush.bf16.msra.mxu0 %v6114
        %6154 = vmatpush.bf16.msra.mxu0 %v6112
        %6155 = vmatpush.bf16.msra.mxu0 %v6110
        %6156 = vmatpush.bf16.msra.mxu0 %v6108
        %6157 = vmatpush.bf16.msra.mxu0 %v6106
        %6158 = vmatmul.bf16.gmra.mxu0 %v6039
        %v6159 = vpop.f32.mrf.mxu0
        %v6160 = vadd.f32 0.0, %v6159
        %v6161 = vpop.f32.mrf.mxu0
        %6162 = vdwg.mxu0
        %v6163 = vld [vmem:[#allocation8] sm:$0xff]
        %v6164 = vld [vmem:[#allocation8 + $0x8] sm:$0xff]
        %v6165 = vadd.f32 %v6163, %v6147
        %v6166 = vadd.f32 %v6164, %v6160
        %6167 = vst [vmem:[#allocation8] sm:$0xff] %v6165
        %6168 = vst [vmem:[#allocation8 + $0x8] sm:$0xff] %v6166
        %v6169 = vld [vmem:[#allocation4 + $0x4] sm:$0xff]
        %v6170 = vpack.c.bf16 %v6169, %v6169
        %s6171 = scalar_lea.vmem %s7, 384
        %v6172 = vld [vmem:[%s6171] sm:$0xff]
        %v6173 = vld [vmem:[%s6171 + $0x8] sm:$0xff]
        %v6174 = vld [vmem:[%s6171 + $0x10] sm:$0xff]
        %v6175 = vld [vmem:[%s6171 + $0x18] sm:$0xff]
        %v6176 = vld [vmem:[%s6171 + $0x20] sm:$0xff]
        %v6177 = vld [vmem:[%s6171 + $0x28] sm:$0xff]
        %v6178 = vld [vmem:[%s6171 + $0x30] sm:$0xff]
        %v6179 = vld [vmem:[%s6171 + $0x38] sm:$0xff]
        %v6180 = vld [vmem:[%s6171 + $0x40] sm:$0xff]
        %v6181 = vld [vmem:[%s6171 + $0x48] sm:$0xff]
        %v6182 = vld [vmem:[%s6171 + $0x50] sm:$0xff]
        %v6183 = vld [vmem:[%s6171 + $0x58] sm:$0xff]
        %v6184 = vld [vmem:[%s6171 + $0x60] sm:$0xff]
        %v6185 = vld [vmem:[%s6171 + $0x68] sm:$0xff]
        %v6186 = vld [vmem:[%s6171 + $0x70] sm:$0xff]
        %v6187 = vld [vmem:[%s6171 + $0x78] sm:$0xff]
        %v6204 = vunpack.c.l.b16 %v6172
        %v6205 = vunpack.c.h.b16 %v6172
        %v6206 = vunpack.c.l.b16 %v6173
        %v6207 = vunpack.c.h.b16 %v6173
        %v6208 = vunpack.c.l.b16 %v6174
        %v6209 = vunpack.c.h.b16 %v6174
        %v6210 = vunpack.c.l.b16 %v6175
        %v6211 = vunpack.c.h.b16 %v6175
        %v6212 = vunpack.c.l.b16 %v6176
        %v6213 = vunpack.c.h.b16 %v6176
        %v6214 = vunpack.c.l.b16 %v6177
        %v6215 = vunpack.c.h.b16 %v6177
        %v6216 = vunpack.c.l.b16 %v6178
        %v6217 = vunpack.c.h.b16 %v6178
        %v6218 = vunpack.c.l.b16 %v6179
        %v6219 = vunpack.c.h.b16 %v6179
        %v6220 = vunpack.c.l.b16 %v6180
        %v6221 = vunpack.c.h.b16 %v6180
        %v6222 = vunpack.c.l.b16 %v6181
        %v6223 = vunpack.c.h.b16 %v6181
        %v6224 = vunpack.c.l.b16 %v6182
        %v6225 = vunpack.c.h.b16 %v6182
        %v6226 = vunpack.c.l.b16 %v6183
        %v6227 = vunpack.c.h.b16 %v6183
        %v6228 = vunpack.c.l.b16 %v6184
        %v6229 = vunpack.c.h.b16 %v6184
        %v6230 = vunpack.c.l.b16 %v6185
        %v6231 = vunpack.c.h.b16 %v6185
        %v6232 = vunpack.c.l.b16 %v6186
        %v6233 = vunpack.c.h.b16 %v6186
        %v6234 = vunpack.c.l.b16 %v6187
        %v6235 = vunpack.c.h.b16 %v6187
        %v6236 = vpack.c.b16 %v6206, %v6204
        %v6237 = vpack.c.b16 %v6207, %v6205
        %v6238 = vpack.c.b16 %v6210, %v6208
        %v6239 = vpack.c.b16 %v6211, %v6209
        %v6240 = vpack.c.b16 %v6214, %v6212
        %v6241 = vpack.c.b16 %v6215, %v6213
        %v6242 = vpack.c.b16 %v6218, %v6216
        %v6243 = vpack.c.b16 %v6219, %v6217
        %v6244 = vpack.c.b16 %v6222, %v6220
        %v6245 = vpack.c.b16 %v6223, %v6221
        %v6246 = vpack.c.b16 %v6226, %v6224
        %v6247 = vpack.c.b16 %v6227, %v6225
        %v6248 = vpack.c.b16 %v6230, %v6228
        %v6249 = vpack.c.b16 %v6231, %v6229
        %v6250 = vpack.c.b16 %v6234, %v6232
        %v6251 = vpack.c.b16 %v6235, %v6233
        %6268 = vmatpush.bf16.msra.mxu0 %v6250
        %6269 = vmatpush.bf16.msra.mxu0 %v6248
        %6270 = vmatpush.bf16.msra.mxu0 %v6246
        %6271 = vmatpush.bf16.msra.mxu0 %v6244
        %6272 = vmatpush.bf16.msra.mxu0 %v6242
        %6273 = vmatpush.bf16.msra.mxu0 %v6240
        %6274 = vmatpush.bf16.msra.mxu0 %v6238
        %6275 = vmatpush.bf16.msra.mxu0 %v6236
        %6276 = vmatmul.bf16.gmra.mxu0 %v6170
        %v6277 = vpop.f32.mrf.mxu0
        %v6278 = vadd.f32 0.0, %v6277
        %v6279 = vpop.f32.mrf.mxu0
        %6280 = vdwg.mxu0
        %6281 = vmatpush.bf16.msra.mxu0 %v6251
        %6282 = vmatpush.bf16.msra.mxu0 %v6249
        %6283 = vmatpush.bf16.msra.mxu0 %v6247
        %6284 = vmatpush.bf16.msra.mxu0 %v6245
        %6285 = vmatpush.bf16.msra.mxu0 %v6243
        %6286 = vmatpush.bf16.msra.mxu0 %v6241
        %6287 = vmatpush.bf16.msra.mxu0 %v6239
        %6288 = vmatpush.bf16.msra.mxu0 %v6237
        %6289 = vmatmul.bf16.gmra.mxu0 %v6170
        %v6290 = vpop.f32.mrf.mxu0
        %v6291 = vadd.f32 0.0, %v6290
        %v6292 = vpop.f32.mrf.mxu0
        %6293 = vdwg.mxu0
        %v6294 = vld [vmem:[#allocation8] sm:$0xff]
        %v6295 = vld [vmem:[#allocation8 + $0x8] sm:$0xff]
        %v6296 = vadd.f32 %v6294, %v6278
        %v6297 = vadd.f32 %v6295, %v6291
        %6298 = vst [vmem:[#allocation8] sm:$0xff] %v6296
        %6299 = vst [vmem:[#allocation8 + $0x8] sm:$0xff] %v6297
        %v6300 = vld [vmem:[#allocation4 + $0x5] sm:$0xff]
        %v6301 = vpack.c.bf16 %v6300, %v6300
        %s6302 = scalar_lea.vmem %s7, 512
        %v6303 = vld [vmem:[%s6302] sm:$0xff]
        %v6304 = vld [vmem:[%s6302 + $0x8] sm:$0xff]
        %v6305 = vld [vmem:[%s6302 + $0x10] sm:$0xff]
        %v6306 = vld [vmem:[%s6302 + $0x18] sm:$0xff]
        %v6307 = vld [vmem:[%s6302 + $0x20] sm:$0xff]
        %v6308 = vld [vmem:[%s6302 + $0x28] sm:$0xff]
        %v6309 = vld [vmem:[%s6302 + $0x30] sm:$0xff]
        %v6310 = vld [vmem:[%s6302 + $0x38] sm:$0xff]
        %v6311 = vld [vmem:[%s6302 + $0x40] sm:$0xff]
        %v6312 = vld [vmem:[%s6302 + $0x48] sm:$0xff]
        %v6313 = vld [vmem:[%s6302 + $0x50] sm:$0xff]
        %v6314 = vld [vmem:[%s6302 + $0x58] sm:$0xff]
        %v6315 = vld [vmem:[%s6302 + $0x60] sm:$0xff]
        %v6316 = vld [vmem:[%s6302 + $0x68] sm:$0xff]
        %v6317 = vld [vmem:[%s6302 + $0x70] sm:$0xff]
        %v6318 = vld [vmem:[%s6302 + $0x78] sm:$0xff]
        %v6335 = vunpack.c.l.b16 %v6303
        %v6336 = vunpack.c.h.b16 %v6303
        %v6337 = vunpack.c.l.b16 %v6304
        %v6338 = vunpack.c.h.b16 %v6304
        %v6339 = vunpack.c.l.b16 %v6305
        %v6340 = vunpack.c.h.b16 %v6305
        %v6341 = vunpack.c.l.b16 %v6306
        %v6342 = vunpack.c.h.b16 %v6306
        %v6343 = vunpack.c.l.b16 %v6307
        %v6344 = vunpack.c.h.b16 %v6307
        %v6345 = vunpack.c.l.b16 %v6308
        %v6346 = vunpack.c.h.b16 %v6308
        %v6347 = vunpack.c.l.b16 %v6309
        %v6348 = vunpack.c.h.b16 %v6309
        %v6349 = vunpack.c.l.b16 %v6310
        %v6350 = vunpack.c.h.b16 %v6310
        %v6351 = vunpack.c.l.b16 %v6311
        %v6352 = vunpack.c.h.b16 %v6311
        %v6353 = vunpack.c.l.b16 %v6312
        %v6354 = vunpack.c.h.b16 %v6312
        %v6355 = vunpack.c.l.b16 %v6313
        %v6356 = vunpack.c.h.b16 %v6313
        %v6357 = vunpack.c.l.b16 %v6314
        %v6358 = vunpack.c.h.b16 %v6314
        %v6359 = vunpack.c.l.b16 %v6315
        %v6360 = vunpack.c.h.b16 %v6315
        %v6361 = vunpack.c.l.b16 %v6316
        %v6362 = vunpack.c.h.b16 %v6316
        %v6363 = vunpack.c.l.b16 %v6317
        %v6364 = vunpack.c.h.b16 %v6317
        %v6365 = vunpack.c.l.b16 %v6318
        %v6366 = vunpack.c.h.b16 %v6318
        %v6367 = vpack.c.b16 %v6337, %v6335
        %v6368 = vpack.c.b16 %v6338, %v6336
        %v6369 = vpack.c.b16 %v6341, %v6339
        %v6370 = vpack.c.b16 %v6342, %v6340
        %v6371 = vpack.c.b16 %v6345, %v6343
        %v6372 = vpack.c.b16 %v6346, %v6344
        %v6373 = vpack.c.b16 %v6349, %v6347
        %v6374 = vpack.c.b16 %v6350, %v6348
        %v6375 = vpack.c.b16 %v6353, %v6351
        %v6376 = vpack.c.b16 %v6354, %v6352
        %v6377 = vpack.c.b16 %v6357, %v6355
        %v6378 = vpack.c.b16 %v6358, %v6356
        %v6379 = vpack.c.b16 %v6361, %v6359
        %v6380 = vpack.c.b16 %v6362, %v6360
        %v6381 = vpack.c.b16 %v6365, %v6363
        %v6382 = vpack.c.b16 %v6366, %v6364
        %6399 = vmatpush.bf16.msra.mxu0 %v6381
        %6400 = vmatpush.bf16.msra.mxu0 %v6379
        %6401 = vmatpush.bf16.msra.mxu0 %v6377
        %6402 = vmatpush.bf16.msra.mxu0 %v6375
        %6403 = vmatpush.bf16.msra.mxu0 %v6373
        %6404 = vmatpush.bf16.msra.mxu0 %v6371
        %6405 = vmatpush.bf16.msra.mxu0 %v6369
        %6406 = vmatpush.bf16.msra.mxu0 %v6367
        %6407 = vmatmul.bf16.gmra.mxu0 %v6301
        %v6408 = vpop.f32.mrf.mxu0
        %v6409 = vadd.f32 0.0, %v6408
        %v6410 = vpop.f32.mrf.mxu0
        %6411 = vdwg.mxu0
        %6412 = vmatpush.bf16.msra.mxu0 %v6382
        %6413 = vmatpush.bf16.msra.mxu0 %v6380
        %6414 = vmatpush.bf16.msra.mxu0 %v6378
        %6415 = vmatpush.bf16.msra.mxu0 %v6376
        %6416 = vmatpush.bf16.msra.mxu0 %v6374
        %6417 = vmatpush.bf16.msra.mxu0 %v6372
        %6418 = vmatpush.bf16.msra.mxu0 %v6370
        %6419 = vmatpush.bf16.msra.mxu0 %v6368
        %6420 = vmatmul.bf16.gmra.mxu0 %v6301
        %v6421 = vpop.f32.mrf.mxu0
        %v6422 = vadd.f32 0.0, %v6421
        %v6423 = vpop.f32.mrf.mxu0
        %6424 = vdwg.mxu0
        %v6425 = vld [vmem:[#allocation8] sm:$0xff]
        %v6426 = vld [vmem:[#allocation8 + $0x8] sm:$0xff]
        %v6427 = vadd.f32 %v6425, %v6409
        %v6428 = vadd.f32 %v6426, %v6422
        %6429 = vst [vmem:[#allocation8] sm:$0xff] %v6427
        %6430 = vst [vmem:[#allocation8 + $0x8] sm:$0xff] %v6428
        %v6431 = vld [vmem:[#allocation4 + $0x6] sm:$0xff]
        %v6432 = vpack.c.bf16 %v6431, %v6431
        %s6433 = scalar_lea.vmem %s7, 640
        %v6434 = vld [vmem:[%s6433] sm:$0xff]
        %v6435 = vld [vmem:[%s6433 + $0x8] sm:$0xff]
        %v6436 = vld [vmem:[%s6433 + $0x10] sm:$0xff]
        %v6437 = vld [vmem:[%s6433 + $0x18] sm:$0xff]
        %v6438 = vld [vmem:[%s6433 + $0x20] sm:$0xff]
        %v6439 = vld [vmem:[%s6433 + $0x28] sm:$0xff]
        %v6440 = vld [vmem:[%s6433 + $0x30] sm:$0xff]
        %v6441 = vld [vmem:[%s6433 + $0x38] sm:$0xff]
        %v6442 = vld [vmem:[%s6433 + $0x40] sm:$0xff]
        %v6443 = vld [vmem:[%s6433 + $0x48] sm:$0xff]
        %v6444 = vld [vmem:[%s6433 + $0x50] sm:$0xff]
        %v6445 = vld [vmem:[%s6433 + $0x58] sm:$0xff]
        %v6446 = vld [vmem:[%s6433 + $0x60] sm:$0xff]
        %v6447 = vld [vmem:[%s6433 + $0x68] sm:$0xff]
        %v6448 = vld [vmem:[%s6433 + $0x70] sm:$0xff]
        %v6449 = vld [vmem:[%s6433 + $0x78] sm:$0xff]
        %v6466 = vunpack.c.l.b16 %v6434
        %v6467 = vunpack.c.h.b16 %v6434
        %v6468 = vunpack.c.l.b16 %v6435
        %v6469 = vunpack.c.h.b16 %v6435
        %v6470 = vunpack.c.l.b16 %v6436
        %v6471 = vunpack.c.h.b16 %v6436
        %v6472 = vunpack.c.l.b16 %v6437
        %v6473 = vunpack.c.h.b16 %v6437
        %v6474 = vunpack.c.l.b16 %v6438
        %v6475 = vunpack.c.h.b16 %v6438
        %v6476 = vunpack.c.l.b16 %v6439
        %v6477 = vunpack.c.h.b16 %v6439
        %v6478 = vunpack.c.l.b16 %v6440
        %v6479 = vunpack.c.h.b16 %v6440
        %v6480 = vunpack.c.l.b16 %v6441
        %v6481 = vunpack.c.h.b16 %v6441
        %v6482 = vunpack.c.l.b16 %v6442
        %v6483 = vunpack.c.h.b16 %v6442
        %v6484 = vunpack.c.l.b16 %v6443
        %v6485 = vunpack.c.h.b16 %v6443
        %v6486 = vunpack.c.l.b16 %v6444
        %v6487 = vunpack.c.h.b16 %v6444
        %v6488 = vunpack.c.l.b16 %v6445
        %v6489 = vunpack.c.h.b16 %v6445
        %v6490 = vunpack.c.l.b16 %v6446
        %v6491 = vunpack.c.h.b16 %v6446
        %v6492 = vunpack.c.l.b16 %v6447
        %v6493 = vunpack.c.h.b16 %v6447
        %v6494 = vunpack.c.l.b16 %v6448
        %v6495 = vunpack.c.h.b16 %v6448
        %v6496 = vunpack.c.l.b16 %v6449
        %v6497 = vunpack.c.h.b16 %v6449
        %v6498 = vpack.c.b16 %v6468, %v6466
        %v6499 = vpack.c.b16 %v6469, %v6467
        %v6500 = vpack.c.b16 %v6472, %v6470
        %v6501 = vpack.c.b16 %v6473, %v6471
        %v6502 = vpack.c.b16 %v6476, %v6474
        %v6503 = vpack.c.b16 %v6477, %v6475
        %v6504 = vpack.c.b16 %v6480, %v6478
        %v6505 = vpack.c.b16 %v6481, %v6479
        %v6506 = vpack.c.b16 %v6484, %v6482
        %v6507 = vpack.c.b16 %v6485, %v6483
        %v6508 = vpack.c.b16 %v6488, %v6486
        %v6509 = vpack.c.b16 %v6489, %v6487
        %v6510 = vpack.c.b16 %v6492, %v6490
        %v6511 = vpack.c.b16 %v6493, %v6491
        %v6512 = vpack.c.b16 %v6496, %v6494
        %v6513 = vpack.c.b16 %v6497, %v6495
        %6530 = vmatpush.bf16.msra.mxu0 %v6512
        %6531 = vmatpush.bf16.msra.mxu0 %v6510
        %6532 = vmatpush.bf16.msra.mxu0 %v6508
        %6533 = vmatpush.bf16.msra.mxu0 %v6506
        %6534 = vmatpush.bf16.msra.mxu0 %v6504
        %6535 = vmatpush.bf16.msra.mxu0 %v6502
        %6536 = vmatpush.bf16.msra.mxu0 %v6500
        %6537 = vmatpush.bf16.msra.mxu0 %v6498
        %6538 = vmatmul.bf16.gmra.mxu0 %v6432
        %v6539 = vpop.f32.mrf.mxu0
        %v6540 = vadd.f32 0.0, %v6539
        %v6541 = vpop.f32.mrf.mxu0
        %6542 = vdwg.mxu0
        %6543 = vmatpush.bf16.msra.mxu0 %v6513
        %6544 = vmatpush.bf16.msra.mxu0 %v6511
        %6545 = vmatpush.bf16.msra.mxu0 %v6509
        %6546 = vmatpush.bf16.msra.mxu0 %v6507
        %6547 = vmatpush.bf16.msra.mxu0 %v6505
        %6548 = vmatpush.bf16.msra.mxu0 %v6503
        %6549 = vmatpush.bf16.msra.mxu0 %v6501
        %6550 = vmatpush.bf16.msra.mxu0 %v6499
        %6551 = vmatmul.bf16.gmra.mxu0 %v6432
        %v6552 = vpop.f32.mrf.mxu0
        %v6553 = vadd.f32 0.0, %v6552
        %v6554 = vpop.f32.mrf.mxu0
        %6555 = vdwg.mxu0
        %v6556 = vld [vmem:[#allocation8] sm:$0xff]
        %v6557 = vld [vmem:[#allocation8 + $0x8] sm:$0xff]
        %v6558 = vadd.f32 %v6556, %v6540
        %v6559 = vadd.f32 %v6557, %v6553
        %6560 = vst [vmem:[#allocation8] sm:$0xff] %v6558
        %6561 = vst [vmem:[#allocation8 + $0x8] sm:$0xff] %v6559
        %v6562 = vld [vmem:[#allocation4 + $0x8] sm:$0xff]
        %v6563 = vpack.c.bf16 %v6562, %v6562
        %s6564 = scalar_lea.vmem %s7, 768
        %v6565 = vld [vmem:[%s6564] sm:$0xff]
        %v6566 = vld [vmem:[%s6564 + $0x8] sm:$0xff]
        %v6567 = vld [vmem:[%s6564 + $0x10] sm:$0xff]
        %v6568 = vld [vmem:[%s6564 + $0x18] sm:$0xff]
        %v6569 = vld [vmem:[%s6564 + $0x20] sm:$0xff]
        %v6570 = vld [vmem:[%s6564 + $0x28] sm:$0xff]
        %v6571 = vld [vmem:[%s6564 + $0x30] sm:$0xff]
        %v6572 = vld [vmem:[%s6564 + $0x38] sm:$0xff]
        %v6573 = vld [vmem:[%s6564 + $0x40] sm:$0xff]
        %v6574 = vld [vmem:[%s6564 + $0x48] sm:$0xff]
        %v6575 = vld [vmem:[%s6564 + $0x50] sm:$0xff]
        %v6576 = vld [vmem:[%s6564 + $0x58] sm:$0xff]
        %v6577 = vld [vmem:[%s6564 + $0x60] sm:$0xff]
        %v6578 = vld [vmem:[%s6564 + $0x68] sm:$0xff]
        %v6579 = vld [vmem:[%s6564 + $0x70] sm:$0xff]
        %v6580 = vld [vmem:[%s6564 + $0x78] sm:$0xff]
        %v6597 = vunpack.c.l.b16 %v6565
        %v6598 = vunpack.c.h.b16 %v6565
        %v6599 = vunpack.c.l.b16 %v6566
        %v6600 = vunpack.c.h.b16 %v6566
        %v6601 = vunpack.c.l.b16 %v6567
        %v6602 = vunpack.c.h.b16 %v6567
        %v6603 = vunpack.c.l.b16 %v6568
        %v6604 = vunpack.c.h.b16 %v6568
        %v6605 = vunpack.c.l.b16 %v6569
        %v6606 = vunpack.c.h.b16 %v6569
        %v6607 = vunpack.c.l.b16 %v6570
        %v6608 = vunpack.c.h.b16 %v6570
        %v6609 = vunpack.c.l.b16 %v6571
        %v6610 = vunpack.c.h.b16 %v6571
        %v6611 = vunpack.c.l.b16 %v6572
        %v6612 = vunpack.c.h.b16 %v6572
        %v6613 = vunpack.c.l.b16 %v6573
        %v6614 = vunpack.c.h.b16 %v6573
        %v6615 = vunpack.c.l.b16 %v6574
        %v6616 = vunpack.c.h.b16 %v6574
        %v6617 = vunpack.c.l.b16 %v6575
        %v6618 = vunpack.c.h.b16 %v6575
        %v6619 = vunpack.c.l.b16 %v6576
        %v6620 = vunpack.c.h.b16 %v6576
        %v6621 = vunpack.c.l.b16 %v6577
        %v6622 = vunpack.c.h.b16 %v6577
        %v6623 = vunpack.c.l.b16 %v6578
        %v6624 = vunpack.c.h.b16 %v6578
        %v6625 = vunpack.c.l.b16 %v6579
        %v6626 = vunpack.c.h.b16 %v6579
        %v6627 = vunpack.c.l.b16 %v6580
        %v6628 = vunpack.c.h.b16 %v6580
        %v6629 = vpack.c.b16 %v6599, %v6597
        %v6630 = vpack.c.b16 %v6600, %v6598
        %v6631 = vpack.c.b16 %v6603, %v6601
        %v6632 = vpack.c.b16 %v6604, %v6602
        %v6633 = vpack.c.b16 %v6607, %v6605
        %v6634 = vpack.c.b16 %v6608, %v6606
        %v6635 = vpack.c.b16 %v6611, %v6609
        %v6636 = vpack.c.b16 %v6612, %v6610
        %v6637 = vpack.c.b16 %v6615, %v6613
        %v6638 = vpack.c.b16 %v6616, %v6614
        %v6639 = vpack.c.b16 %v6619, %v6617
        %v6640 = vpack.c.b16 %v6620, %v6618
        %v6641 = vpack.c.b16 %v6623, %v6621
        %v6642 = vpack.c.b16 %v6624, %v6622
        %v6643 = vpack.c.b16 %v6627, %v6625
        %v6644 = vpack.c.b16 %v6628, %v6626
        %6661 = vmatpush.bf16.msra.mxu0 %v6643
        %6662 = vmatpush.bf16.msra.mxu0 %v6641
        %6663 = vmatpush.bf16.msra.mxu0 %v6639
        %6664 = vmatpush.bf16.msra.mxu0 %v6637
        %6665 = vmatpush.bf16.msra.mxu0 %v6635
        %6666 = vmatpush.bf16.msra.mxu0 %v6633
        %6667 = vmatpush.bf16.msra.mxu0 %v6631
        %6668 = vmatpush.bf16.msra.mxu0 %v6629
        %6669 = vmatmul.bf16.gmra.mxu0 %v6563
        %v6670 = vpop.f32.mrf.mxu0
        %v6671 = vadd.f32 0.0, %v6670
        %v6672 = vpop.f32.mrf.mxu0
        %6673 = vdwg.mxu0
        %6674 = vmatpush.bf16.msra.mxu0 %v6644
        %6675 = vmatpush.bf16.msra.mxu0 %v6642
        %6676 = vmatpush.bf16.msra.mxu0 %v6640
        %6677 = vmatpush.bf16.msra.mxu0 %v6638
        %6678 = vmatpush.bf16.msra.mxu0 %v6636
        %6679 = vmatpush.bf16.msra.mxu0 %v6634
        %6680 = vmatpush.bf16.msra.mxu0 %v6632
        %6681 = vmatpush.bf16.msra.mxu0 %v6630
        %6682 = vmatmul.bf16.gmra.mxu0 %v6563
        %v6683 = vpop.f32.mrf.mxu0
        %v6684 = vadd.f32 0.0, %v6683
        %v6685 = vpop.f32.mrf.mxu0
        %6686 = vdwg.mxu0
        %v6687 = vld [vmem:[#allocation8] sm:$0xff]
        %v6688 = vld [vmem:[#allocation8 + $0x8] sm:$0xff]
        %v6689 = vadd.f32 %v6687, %v6671
        %v6690 = vadd.f32 %v6688, %v6684
        %6691 = vst [vmem:[#allocation8] sm:$0xff] %v6689
        %6692 = vst [vmem:[#allocation8 + $0x8] sm:$0xff] %v6690
        %v6693 = vld [vmem:[#allocation4 + $0x9] sm:$0xff]
        %v6694 = vpack.c.bf16 %v6693, %v6693
        %s6695 = scalar_lea.vmem %s7, 896
        %v6696 = vld [vmem:[%s6695] sm:$0xff]
        %v6697 = vld [vmem:[%s6695 + $0x8] sm:$0xff]
        %v6698 = vld [vmem:[%s6695 + $0x10] sm:$0xff]
        %v6699 = vld [vmem:[%s6695 + $0x18] sm:$0xff]
        %v6700 = vld [vmem:[%s6695 + $0x20] sm:$0xff]
        %v6701 = vld [vmem:[%s6695 + $0x28] sm:$0xff]
        %v6702 = vld [vmem:[%s6695 + $0x30] sm:$0xff]
        %v6703 = vld [vmem:[%s6695 + $0x38] sm:$0xff]
        %v6704 = vld [vmem:[%s6695 + $0x40] sm:$0xff]
        %v6705 = vld [vmem:[%s6695 + $0x48] sm:$0xff]
        %v6706 = vld [vmem:[%s6695 + $0x50] sm:$0xff]
        %v6707 = vld [vmem:[%s6695 + $0x58] sm:$0xff]
        %v6708 = vld [vmem:[%s6695 + $0x60] sm:$0xff]
        %v6709 = vld [vmem:[%s6695 + $0x68] sm:$0xff]
        %v6710 = vld [vmem:[%s6695 + $0x70] sm:$0xff]
        %v6711 = vld [vmem:[%s6695 + $0x78] sm:$0xff]
        %v6728 = vunpack.c.l.b16 %v6696
        %v6729 = vunpack.c.h.b16 %v6696
        %v6730 = vunpack.c.l.b16 %v6697
        %v6731 = vunpack.c.h.b16 %v6697
        %v6732 = vunpack.c.l.b16 %v6698
        %v6733 = vunpack.c.h.b16 %v6698
        %v6734 = vunpack.c.l.b16 %v6699
        %v6735 = vunpack.c.h.b16 %v6699
        %v6736 = vunpack.c.l.b16 %v6700
        %v6737 = vunpack.c.h.b16 %v6700
        %v6738 = vunpack.c.l.b16 %v6701
        %v6739 = vunpack.c.h.b16 %v6701
        %v6740 = vunpack.c.l.b16 %v6702
        %v6741 = vunpack.c.h.b16 %v6702
        %v6742 = vunpack.c.l.b16 %v6703
        %v6743 = vunpack.c.h.b16 %v6703
        %v6744 = vunpack.c.l.b16 %v6704
        %v6745 = vunpack.c.h.b16 %v6704
        %v6746 = vunpack.c.l.b16 %v6705
        %v6747 = vunpack.c.h.b16 %v6705
        %v6748 = vunpack.c.l.b16 %v6706
        %v6749 = vunpack.c.h.b16 %v6706
        %v6750 = vunpack.c.l.b16 %v6707
        %v6751 = vunpack.c.h.b16 %v6707
        %v6752 = vunpack.c.l.b16 %v6708
        %v6753 = vunpack.c.h.b16 %v6708
        %v6754 = vunpack.c.l.b16 %v6709
        %v6755 = vunpack.c.h.b16 %v6709
        %v6756 = vunpack.c.l.b16 %v6710
        %v6757 = vunpack.c.h.b16 %v6710
        %v6758 = vunpack.c.l.b16 %v6711
        %v6759 = vunpack.c.h.b16 %v6711
        %v6760 = vpack.c.b16 %v6730, %v6728
        %v6761 = vpack.c.b16 %v6731, %v6729
        %v6762 = vpack.c.b16 %v6734, %v6732
        %v6763 = vpack.c.b16 %v6735, %v6733
        %v6764 = vpack.c.b16 %v6738, %v6736
        %v6765 = vpack.c.b16 %v6739, %v6737
        %v6766 = vpack.c.b16 %v6742, %v6740
        %v6767 = vpack.c.b16 %v6743, %v6741
        %v6768 = vpack.c.b16 %v6746, %v6744
        %v6769 = vpack.c.b16 %v6747, %v6745
        %v6770 = vpack.c.b16 %v6750, %v6748
        %v6771 = vpack.c.b16 %v6751, %v6749
        %v6772 = vpack.c.b16 %v6754, %v6752
        %v6773 = vpack.c.b16 %v6755, %v6753
        %v6774 = vpack.c.b16 %v6758, %v6756
        %v6775 = vpack.c.b16 %v6759, %v6757
        %6792 = vmatpush.bf16.msra.mxu0 %v6774
        %6793 = vmatpush.bf16.msra.mxu0 %v6772
        %6794 = vmatpush.bf16.msra.mxu0 %v6770
        %6795 = vmatpush.bf16.msra.mxu0 %v6768
        %6796 = vmatpush.bf16.msra.mxu0 %v6766
        %6797 = vmatpush.bf16.msra.mxu0 %v6764
        %6798 = vmatpush.bf16.msra.mxu0 %v6762
        %6799 = vmatpush.bf16.msra.mxu0 %v6760
        %6800 = vmatmul.bf16.gmra.mxu0 %v6694
        %v6801 = vpop.f32.mrf.mxu0
        %v6802 = vadd.f32 0.0, %v6801
        %v6803 = vpop.f32.mrf.mxu0
        %6804 = vdwg.mxu0
        %6805 = vmatpush.bf16.msra.mxu0 %v6775
        %6806 = vmatpush.bf16.msra.mxu0 %v6773
        %6807 = vmatpush.bf16.msra.mxu0 %v6771
        %6808 = vmatpush.bf16.msra.mxu0 %v6769
        %6809 = vmatpush.bf16.msra.mxu0 %v6767
        %6810 = vmatpush.bf16.msra.mxu0 %v6765
        %6811 = vmatpush.bf16.msra.mxu0 %v6763
        %6812 = vmatpush.bf16.msra.mxu0 %v6761
        %6813 = vmatmul.bf16.gmra.mxu0 %v6694
        %v6814 = vpop.f32.mrf.mxu0
        %v6815 = vadd.f32 0.0, %v6814
        %v6816 = vpop.f32.mrf.mxu0
        %6817 = vdwg.mxu0
        %v6818 = vld [vmem:[#allocation8] sm:$0xff]
        %v6819 = vld [vmem:[#allocation8 + $0x8] sm:$0xff]
        %v6820 = vadd.f32 %v6818, %v6802
        %v6821 = vadd.f32 %v6819, %v6815
        %6822 = vst [vmem:[#allocation8] sm:$0xff] %v6820
        %6823 = vst [vmem:[#allocation8 + $0x8] sm:$0xff] %v6821
        %v6824 = vld [vmem:[#allocation4 + $0xa] sm:$0xff]
        %v6825 = vpack.c.bf16 %v6824, %v6824
        %s6826 = scalar_lea.vmem %s7, 1024
        %v6827 = vld [vmem:[%s6826] sm:$0xff]
        %v6828 = vld [vmem:[%s6826 + $0x8] sm:$0xff]
        %v6829 = vld [vmem:[%s6826 + $0x10] sm:$0xff]
        %v6830 = vld [vmem:[%s6826 + $0x18] sm:$0xff]
        %v6831 = vld [vmem:[%s6826 + $0x20] sm:$0xff]
        %v6832 = vld [vmem:[%s6826 + $0x28] sm:$0xff]
        %v6833 = vld [vmem:[%s6826 + $0x30] sm:$0xff]
        %v6834 = vld [vmem:[%s6826 + $0x38] sm:$0xff]
        %v6835 = vld [vmem:[%s6826 + $0x40] sm:$0xff]
        %v6836 = vld [vmem:[%s6826 + $0x48] sm:$0xff]
        %v6837 = vld [vmem:[%s6826 + $0x50] sm:$0xff]
        %v6838 = vld [vmem:[%s6826 + $0x58] sm:$0xff]
        %v6839 = vld [vmem:[%s6826 + $0x60] sm:$0xff]
        %v6840 = vld [vmem:[%s6826 + $0x68] sm:$0xff]
        %v6841 = vld [vmem:[%s6826 + $0x70] sm:$0xff]
        %v6842 = vld [vmem:[%s6826 + $0x78] sm:$0xff]
        %v6859 = vunpack.c.l.b16 %v6827
        %v6860 = vunpack.c.h.b16 %v6827
        %v6861 = vunpack.c.l.b16 %v6828
        %v6862 = vunpack.c.h.b16 %v6828
        %v6863 = vunpack.c.l.b16 %v6829
        %v6864 = vunpack.c.h.b16 %v6829
        %v6865 = vunpack.c.l.b16 %v6830
        %v6866 = vunpack.c.h.b16 %v6830
        %v6867 = vunpack.c.l.b16 %v6831
        %v6868 = vunpack.c.h.b16 %v6831
        %v6869 = vunpack.c.l.b16 %v6832
        %v6870 = vunpack.c.h.b16 %v6832
        %v6871 = vunpack.c.l.b16 %v6833
        %v6872 = vunpack.c.h.b16 %v6833
        %v6873 = vunpack.c.l.b16 %v6834
        %v6874 = vunpack.c.h.b16 %v6834
        %v6875 = vunpack.c.l.b16 %v6835
        %v6876 = vunpack.c.h.b16 %v6835
        %v6877 = vunpack.c.l.b16 %v6836
        %v6878 = vunpack.c.h.b16 %v6836
        %v6879 = vunpack.c.l.b16 %v6837
        %v6880 = vunpack.c.h.b16 %v6837
        %v6881 = vunpack.c.l.b16 %v6838
        %v6882 = vunpack.c.h.b16 %v6838
        %v6883 = vunpack.c.l.b16 %v6839
        %v6884 = vunpack.c.h.b16 %v6839
        %v6885 = vunpack.c.l.b16 %v6840
        %v6886 = vunpack.c.h.b16 %v6840
        %v6887 = vunpack.c.l.b16 %v6841
        %v6888 = vunpack.c.h.b16 %v6841
        %v6889 = vunpack.c.l.b16 %v6842
        %v6890 = vunpack.c.h.b16 %v6842
        %v6891 = vpack.c.b16 %v6861, %v6859
        %v6892 = vpack.c.b16 %v6862, %v6860
        %v6893 = vpack.c.b16 %v6865, %v6863
        %v6894 = vpack.c.b16 %v6866, %v6864
        %v6895 = vpack.c.b16 %v6869, %v6867
        %v6896 = vpack.c.b16 %v6870, %v6868
        %v6897 = vpack.c.b16 %v6873, %v6871
        %v6898 = vpack.c.b16 %v6874, %v6872
        %v6899 = vpack.c.b16 %v6877, %v6875
        %v6900 = vpack.c.b16 %v6878, %v6876
        %v6901 = vpack.c.b16 %v6881, %v6879
        %v6902 = vpack.c.b16 %v6882, %v6880
        %v6903 = vpack.c.b16 %v6885, %v6883
        %v6904 = vpack.c.b16 %v6886, %v6884
        %v6905 = vpack.c.b16 %v6889, %v6887
        %v6906 = vpack.c.b16 %v6890, %v6888
        %6923 = vmatpush.bf16.msra.mxu0 %v6905
        %6924 = vmatpush.bf16.msra.mxu0 %v6903
        %6925 = vmatpush.bf16.msra.mxu0 %v6901
        %6926 = vmatpush.bf16.msra.mxu0 %v6899
        %6927 = vmatpush.bf16.msra.mxu0 %v6897
        %6928 = vmatpush.bf16.msra.mxu0 %v6895
        %6929 = vmatpush.bf16.msra.mxu0 %v6893
        %6930 = vmatpush.bf16.msra.mxu0 %v6891
        %6931 = vmatmul.bf16.gmra.mxu0 %v6825
        %v6932 = vpop.f32.mrf.mxu0
        %v6933 = vadd.f32 0.0, %v6932
        %v6934 = vpop.f32.mrf.mxu0
        %6935 = vdwg.mxu0
        %6936 = vmatpush.bf16.msra.mxu0 %v6906
        %6937 = vmatpush.bf16.msra.mxu0 %v6904
        %6938 = vmatpush.bf16.msra.mxu0 %v6902
        %6939 = vmatpush.bf16.msra.mxu0 %v6900
        %6940 = vmatpush.bf16.msra.mxu0 %v6898
        %6941 = vmatpush.bf16.msra.mxu0 %v6896
        %6942 = vmatpush.bf16.msra.mxu0 %v6894
        %6943 = vmatpush.bf16.msra.mxu0 %v6892
        %6944 = vmatmul.bf16.gmra.mxu0 %v6825
        %v6945 = vpop.f32.mrf.mxu0
        %v6946 = vadd.f32 0.0, %v6945
        %v6947 = vpop.f32.mrf.mxu0
        %6948 = vdwg.mxu0
        %v6949 = vld [vmem:[#allocation8] sm:$0xff]
        %v6950 = vld [vmem:[#allocation8 + $0x8] sm:$0xff]
        %v6951 = vadd.f32 %v6949, %v6933
        %v6952 = vadd.f32 %v6950, %v6946
        %6953 = vst [vmem:[#allocation8] sm:$0xff] %v6951
        %6954 = vst [vmem:[#allocation8 + $0x8] sm:$0xff] %v6952
        %v6955 = vld [vmem:[#allocation8] sm:$0xff]
        %v6956 = vld [vmem:[#allocation8 + $0x8] sm:$0xff]
        %v6957 = vld [vmem:[%s8] sm:$0x3]
        %v6959 = vperm.slane %v6957, 0
        %v6960 = vperm.slane %v6957, 1
        %v6963 = vadd.f32 %v6955, %v6959
        %v6964 = vadd.f32 %v6956, %v6960
        %v6965 = vmax.f32 %v6963, 0.0
        %v6966 = vmax.f32 %v6964, 0.0
        %6967 = vst [vmem:[#allocation8] sm:$0xff] %v6965
        %6968 = vst [vmem:[#allocation8 + $0x8] sm:$0xff] %v6966
        %v6969 = vld [vmem:[#allocation8] sm:$0x3]
        %v6970 = vld [vmem:[#allocation8 + $0x8] sm:$0x3]
        %v6971 = vsel %vm568, %v6969, 0.0
        %v6972 = vrot.slane %v6971, 4
        %v6973 = vadd.f32 %v6971, %v6972
        %v6974 = vrot.slane %v6973, 2
        %v6975 = vadd.f32 %v6973, %v6974
        %v6976 = vrot.slane %v6975, 1
        %v6977 = vadd.f32 %v6975, %v6976
        %v6978 = vsel %vm568, %v6970, 0.0
        %v6979 = vrot.slane %v6978, 4
        %v6980 = vadd.f32 %v6978, %v6979
        %v6981 = vrot.slane %v6980, 2
        %v6982 = vadd.f32 %v6980, %v6981
        %v6983 = vrot.slane %v6982, 1
        %v6984 = vadd.f32 %v6982, %v6983
        %v6985 = vadd.f32 %v6977, 0.0
        %v6986 = vadd.f32 %v6984, 0.0
        %v6987 = vld [vmem:[#allocation8] sm:$0x30]
        %v6988 = vld [vmem:[#allocation8 + $0x8] sm:$0x30]
        %v6991 = vrot.slane %v6987, 4
        %v6992 = vrot.slane %v6988, 4
        %v6995 = vsel %vm568, %v6991, 0.0
        %v6996 = vrot.slane %v6995, 4
        %v6997 = vadd.f32 %v6995, %v6996
        %v6998 = vrot.slane %v6997, 2
        %v6999 = vadd.f32 %v6997, %v6998
        %v7000 = vrot.slane %v6999, 1
        %v7001 = vadd.f32 %v6999, %v7000
        %v7002 = vsel %vm568, %v6992, 0.0
        %v7003 = vrot.slane %v7002, 4
        %v7004 = vadd.f32 %v7002, %v7003
        %v7005 = vrot.slane %v7004, 2
        %v7006 = vadd.f32 %v7004, %v7005
        %v7007 = vrot.slane %v7006, 1
        %v7008 = vadd.f32 %v7006, %v7007
        %v7009 = vadd.f32 %v6985, %v7001
        %v7010 = vadd.f32 %v6986, %v7008
        %v7011 = vmul.f32 %v7009, 0.25
        %v7012 = vmul.f32 %v7010, 0.25
        %v7013 = vld [vmem:[#allocation14] sm:$0xff]
        %v7014 = vld [vmem:[#allocation14 + $0x8] sm:$0xff]
        %v7015 = vld [vmem:[#allocation14 + $0x10] sm:$0xff]
        %v7016 = vld [vmem:[#allocation14 + $0x18] sm:$0xff]
        %v7017 = vld [vmem:[#allocation14 + $0x20] sm:$0xff]
        %v7018 = vld [vmem:[#allocation14 + $0x28] sm:$0xff]
        %v7019 = vld [vmem:[#allocation14 + $0x30] sm:$0xff]
        %v7020 = vld [vmem:[#allocation14 + $0x38] sm:$0xff]
        %v7021 = vld [vmem:[#allocation14 + $0x40] sm:$0xff]
        %v7022 = vld [vmem:[#allocation14 + $0x48] sm:$0xff]
        %v7023 = vld [vmem:[#allocation14 + $0x50] sm:$0xff]
        %v7024 = vld [vmem:[#allocation14 + $0x58] sm:$0xff]
        %v7025 = vld [vmem:[#allocation14 + $0x60] sm:$0xff]
        %v7026 = vld [vmem:[#allocation14 + $0x68] sm:$0xff]
        %v7027 = vld [vmem:[#allocation14 + $0x70] sm:$0xff]
        %v7028 = vld [vmem:[#allocation14 + $0x78] sm:$0xff]
        %v7029 = vld [vmem:[#allocation14 + $0x80] sm:$0xff]
        %v7030 = vld [vmem:[#allocation14 + $0x88] sm:$0xff]
        %v7031 = vld [vmem:[#allocation14 + $0x90] sm:$0xff]
        %v7032 = vld [vmem:[#allocation14 + $0x98] sm:$0xff]
        %v7033 = vld [vmem:[#allocation14 + $0xa0] sm:$0xff]
        %v7034 = vld [vmem:[#allocation14 + $0xa8] sm:$0xff]
        %v7035 = vld [vmem:[#allocation14 + $0xb0] sm:$0xff]
        %v7036 = vld [vmem:[#allocation14 + $0xb8] sm:$0xff]
        %v7037 = vld [vmem:[#allocation14 + $0xc0] sm:$0xff]
        %v7038 = vld [vmem:[#allocation14 + $0xc8] sm:$0xff]
        %v7039 = vld [vmem:[#allocation14 + $0xd0] sm:$0xff]
        %v7040 = vld [vmem:[#allocation14 + $0xd8] sm:$0xff]
        %v7041 = vld [vmem:[#allocation14 + $0xe0] sm:$0xff]
        %v7042 = vld [vmem:[#allocation14 + $0xe8] sm:$0xff]
        %v7043 = vld [vmem:[#allocation14 + $0xf0] sm:$0xff]
        %v7044 = vld [vmem:[#allocation14 + $0xf8] sm:$0xff]
        %v7045 = vld [vmem:[%s10] sm:$0x1]
        %7046 = vmatpush.msra.mxu0 %v7028
        %7047 = vmatpush.msra.mxu0 %v7027
        %7048 = vmatpush.msra.mxu0 %v7026
        %7049 = vmatpush.msra.mxu0 %v7025
        %7050 = vmatpush.msra.mxu0 %v7024
        %7051 = vmatpush.msra.mxu0 %v7023
        %7052 = vmatpush.msra.mxu0 %v7022
        %7053 = vmatpush.msra.mxu0 %v7021
        %7054 = vmatpush.msra.mxu0 %v7020
        %7055 = vmatpush.msra.mxu0 %v7019
        %7056 = vmatpush.msra.mxu0 %v7018
        %7057 = vmatpush.msra.mxu0 %v7017
        %7058 = vmatpush.msra.mxu0 %v7016
        %7059 = vmatpush.msra.mxu0 %v7015
        %7060 = vmatpush.msra.mxu0 %v7014
        %7061 = vmatpush.msra.mxu0 %v7013
        %7062 = vmatmul.f32.gmra.mxu0 %v7011
        %v7063 = vpop.f32.mrf.mxu0
        %v7064 = vadd.f32 %v7045, %v7063
        %7065 = vdwg.mxu0
        %7066 = vmatpush.msra.mxu0 %v7044
        %7067 = vmatpush.msra.mxu0 %v7043
        %7068 = vmatpush.msra.mxu0 %v7042
        %7069 = vmatpush.msra.mxu0 %v7041
        %7070 = vmatpush.msra.mxu0 %v7040
        %7071 = vmatpush.msra.mxu0 %v7039
        %7072 = vmatpush.msra.mxu0 %v7038
        %7073 = vmatpush.msra.mxu0 %v7037
        %7074 = vmatpush.msra.mxu0 %v7036
        %7075 = vmatpush.msra.mxu0 %v7035
        %7076 = vmatpush.msra.mxu0 %v7034
        %7077 = vmatpush.msra.mxu0 %v7033
        %7078 = vmatpush.msra.mxu0 %v7032
        %7079 = vmatpush.msra.mxu0 %v7031
        %7080 = vmatpush.msra.mxu0 %v7030
        %7081 = vmatpush.msra.mxu0 %v7029
        %7082 = vmatmul.f32.gmra.mxu0 %v7012
        %v7083 = vpop.f32.mrf.mxu0
        %v7084 = vadd.f32 %v7064, %v7083
        %7085 = vdwg.mxu0
        %7086 = vst [vmem:[%s428] sm:$0x1] %v7084
        %s7087 = sand.u32 %s271, 1
        %s7088 = scalar_lea.sflag [#allocation11], %s7087
        %s7089 = sand.u32 %s271, 1
        %s7090 = scalar_lea.vmem [#allocation15], %s7089
        // Predicated region
        $region77: #{_lambda_.1} parent=63 // pred_check
          %p7091 = pneg %p281
        $region78: #{_lambda_.1} parent=63 // pred_check_branch
          %7093 = sbr.rel (%p7091) target = $region80
        $region79: #{_lambda_.1} parent=63 // pred_region
          %7095 = vsyncadd %s7088, 0
          %s7096 = scalar_lea.hbm %s11, %s27
          %s7098 = sshll.u32 %s7090, 4
          %s7099 = int_to_ptr.vmem [resolvable:$true] %s7098
          %s7100 = sshll.u32 %s7096, 4
          %s7101 = int_to_ptr.hbm [resolvable:$true] %s7100
          %7103 = dma.vmem_to_hbm [thread:$0]  %s7099, 16, %s7101, %s7088
        $region80: #{_lambda_.1} parent=63 // pred_fallthru
          _
      $region64: #{_lambda_.1} parent=5 // pred_fallthru
        _
      %p7104 = scmp.le.s32.totalorder 2, %s22
      // Predicated region
      $region81: #{_lambda_.1} parent=5 // pred_check
        %p7105 = pneg %p7104
      $region82: #{_lambda_.1} parent=5 // pred_check_branch
        %7107 = sbr.rel (%p7105) target = $region84
      $region83: #{_lambda_.1} parent=5 // pred_region
        %s7108 = ssub.s32 %s22, 2
        // Predicated region
        $region85: #{_lambda_.1} parent=83 // pred_check
          %p7109 = pneg %p287
        $region86: #{_lambda_.1} parent=83 // pred_check_branch
          %7111 = sbr.rel (%p7109) target = $region88
        $region87: #{_lambda_.1} parent=83 // pred_region
          %s7112 = sand.u32 %s272, 1
          %s7113 = scalar_lea.sflag [#allocation11], %s7112
          %s7114 = sand.u32 %s272, 1
          %s7115 = scalar_lea.vmem [#allocation15], %s7114
          %7117 = dma.done %s7113, 16
        $region88: #{_lambda_.1} parent=83 // pred_fallthru
          _
      $region84: #{_lambda_.1} parent=5 // pred_fallthru
        _
    $region6: #{_lambda_.1} parent=1 // loop_footer
      %s26 = sadd.s32 1, %s22
    $region7: #{_lambda_.1} parent=1 // loop_footer_branch
      %21 = sbr.rel target = $region3
    $region8: #{_lambda_.1} parent=1 // loop_exit
      _
    %7118 = vsyncpa [#allocation10], 1
    %s7119 = scalar_lea.sflag [#allocation10], 1
    %7120 = vsyncpa %s7119, 1
    %7121 = vsyncpa [#allocation13], 1
    %7122 = vsyncpa [#allocation11], 1
    %s7123 = scalar_lea.sflag [#allocation11], 1
    %7124 = vsyncpa %s7123, 1

</llo_original>
